<compile_context>
chip_gen: v7x
topology: tpu7x:2x2x1
jax: 0.10.0
libtpu: 0.0.40
codegen_flags: <defaults>
</compile_context>

<pallas_src>
import jax
import jax.numpy as jnp
from jax.experimental import pallas as pl
from jax.experimental.pallas import tpu as pltpu

KSIZE = 4            # kernel_size == stride == 4, padding == 0, output_padding == 0
K3 = KSIZE ** 3      # 64 sub-positions per transposed conv


# ----------------------------- Pallas kernel -------------------------------
def _fsa_fused_kernel(x_ref, w1_ref, w2_ref, o_ref, y1w_ref, y1s_ref):
    """Fused (ConvT k4s4) -> (ConvT k4s4), each as one big MXU matmul.

    x_ref   : (R, Cin)         rows = (n, d, h, w), channels-last
    w1_ref  : (Cin, K3*C1)     conv1 weight, cols = (kd1, kh1, kw1, c1)   [lane-dense]
    w2_ref  : (C1, TN)         conv2 weight block, cols = (co, kd2, kh2, kw2) slice
    o_ref   : (K3*R, TN)       rows = (p1=(kd1,kh1,kw1), r), cols = this column block
    y1w_ref : (R, K3*C1)       VMEM scratch: conv1 output, matmul-native layout
    y1s_ref : (K3*R, C1)       VMEM scratch: conv1 output staged as conv2 LHS
    """
    R = x_ref.shape[0]
    C1 = w2_ref.shape[0]
    P = w1_ref.shape[1] // C1          # = K3 = 64 (static)

    # conv1 + staging run once; the scratch persists across the sequential grid.
    @pl.when(pl.program_id(0) == 0)
    def _conv1_and_stage():
        # ONE batched conv1 matmul: (R, Cin) @ (Cin, K3*C1).
        y1w_ref[...] = jnp.dot(
            x_ref[...], w1_ref[...], preferred_element_type=jnp.float32
        )
        # Stage to (K3*R, C1): rows become (p1, r).  64 small VMEM-only copies
        # (~128 KiB total); this is the im2col of the second transposed conv and
        # never touches HBM.
        for p in range(P):
            y1s_ref[p * R:(p + 1) * R, :] = y1w_ref[:, p * C1:(p + 1) * C1]

    # ONE batched conv2 matmul per column block + ONE lane-dense block store.
    o_ref[...] = jnp.dot(
        y1s_ref[...], w2_ref[...], preferred_element_type=jnp.float32
    ).astype(o_ref.dtype)


def _fsa_fused_pallas(x_flat, w1_flat, w2_flat, tn=512):
    """x_flat: (R, Cin), w1_flat: (Cin, K3*C1), w2_flat: (C1, Cout*K3).

    Returns (K3*R, Cout*K3) with rows ordered (kd1, kh1, kw1, n, d, h, w) and
    columns ordered (co, kd2, kh2, kw2).
    """
    R, Cin = x_flat.shape
    Cin2, PC1 = w1_flat.shape
    C1, Ncols = w2_flat.shape
    assert Cin == Cin2 and PC1 % C1 == 0
    P = PC1 // C1
    assert P == K3

    tn = min(tn, Ncols)
    assert Ncols % tn == 0, f"Ncols={Ncols} not divisible by tn={tn}"
    grid = (Ncols // tn,)                 # 4 steps for the test shapes (tn=512)

    return pl.pallas_call(
        _fsa_fused_kernel,
        out_shape=jax.ShapeDtypeStruct((P * R, Ncols), x_flat.dtype),
        grid=grid,
        in_specs=[
            # Constant index_maps: each operand is DMA'd into VMEM exactly once.
            pl.BlockSpec((R, Cin), lambda j: (0, 0)),
            pl.BlockSpec((Cin, PC1), lambda j: (0, 0)),
            pl.BlockSpec((C1, tn), lambda j: (0, j)),
        ],
        out_specs=pl.BlockSpec((P * R, tn), lambda j: (0, j)),
        scratch_shapes=[
            pltpu.VMEM((R, PC1), jnp.float32),      # conv1 output (matmul layout)
            pltpu.VMEM((P * R, C1), jnp.float32),   # conv1 output staged for conv2
        ],
        compiler_params=pltpu.CompilerParams(
            # Sequential grid: the staged conv1 scratch is written at step 0 and
            # reused by later steps, which is only valid on a single core.
            dimension_semantics=("arbitrary",),
        ),
    )(x_flat, w1_flat, w2_flat)


# ------------------------------- forward (JAX glue) -------------------------
@jax.jit
def fsa_forward(x1, x2, w1_flat, w2_flat):
    """x1: (N, Cin, D, H, W) NCDHW; returns (x13 NCDHW upsampled x16, x2)."""
    N, Cin, D, H, W = x1.shape
    Cout = w2_flat.shape[1] // K3
    up = KSIZE * KSIZE                  # 16x total upsampling per spatial dim

    # Channels-last flatten of the (tiny) input: rows ordered (n, d, h, w).
    x_flat = jnp.transpose(x1, (0, 2, 3, 4, 1)).reshape(N * D * H * W, Cin)

    # One fused Pallas call for both transposed convs.
    y = _fsa_fused_pallas(x_flat, w1_flat, w2_flat)     # (K3*N*D*H*W, Cout*K3)

    # rows: (kd1, kh1, kw1, n, d, h, w) ; cols: (co, kd2, kh2, kw2)
    y = y.reshape(KSIZE, KSIZE, KSIZE, N, D, H, W, Cout, KSIZE, KSIZE, KSIZE)
    # -> (n, co, d, kd1, kd2, h, kh1, kh2, w, kw1, kw2): one NCDHW relayout.
    y = jnp.transpose(y, (3, 7, 4, 0, 8, 5, 1, 9, 6, 2, 10))
    x13 = y.reshape(N, Cout, D * up, H * up, W * up)
    return x13, x2


class FSAPallas:
    """JAX/Pallas re-implementation of FSA(exp=0) forward."""

    def __init__(self, channels=(64, 32, 32), key=jax.random.PRNGKey(0)):
        c0, c1, c2 = channels
        k1, k2 = jax.random.split(key)
        # Deterministic synthetic weights in PyTorch ConvTranspose3d layout
        # (Cin, Cout, kd, kh, kw).
        self.w1 = jax.random.normal(k1, (c0, c1, KSIZE, KSIZE, KSIZE), jnp.float32) * 0.05
        self.w2 = jax.random.normal(k2, (c1, c2, KSIZE, KSIZE, KSIZE), jnp.float32) * 0.05
        # Pre-flattened, lane-dense kernel layouts (computed once at init):
        #   w1_flat[ci, (kd1,kh1,kw1, c1)]  -> conv1 as one (Cin, K3*C1) matmul weight
        #   w2_flat[c1, (co, kd2,kh2,kw2)]  -> conv2 weight; kw2 contiguous in output
        self.w1_flat = jnp.transpose(self.w1, (0, 2, 3, 4, 1)).reshape(c0, K3 * c1)
        self.w2_flat = self.w2.reshape(c1, c2 * K3)
        # TODO(synk): self.swin (BasicLayer) and self.pad (ReflectionPad3d) are
        # never used in forward(exp=0), so they are intentionally not translated.

    def __call__(self, x1, x2):
        return fsa_forward(x1, x2, self.w1_flat, self.w2_flat)


# ----------------------------- reference check ------------------------------
def _ref_transp_conv3d_k4s4(x, w):
    """Pure-JAX ConvTranspose3d (k=s=4, pad=0, no bias) reference."""
    N, Cin, D, H, W = x.shape
    Cout = w.shape[1]
    # out[b, o, 4d+i, 4h+j, 4w+k] = sum_c x[b,c,d,h,w] * w[c,o,i,j,k]
    y = jnp.einsum("bcdhw,coijk->bodihjwk", x, w)
    return y.reshape(N, Cout, D * KSIZE, H * KSIZE, W * KSIZE)


if __name__ == "__main__":
    key = jax.random.PRNGKey(0)
    kx1, kx2, kw = jax.random.split(key, 3)

    # Small shapes consistent with the module: channels = (64, 32, 32), 3-D data.
    x1 = jax.random.normal(kx1, (2, 64, 2, 2, 2), jnp.float32)   # NCDHW
    x2 = jax.random.normal(kx2, (2, 32, 8, 8, 8), jnp.float32)   # passthrough

    model = FSAPallas(channels=(64, 32, 32), key=kw)
    x13, x2_out = model(x1, x2)
    jax.block_until_ready(x13)
    jax.block_until_ready(x2_out)

    # Shapes match PyTorch semantics (each transposed conv upsamples x4).
    assert x13.shape == (2, 32, 32, 32, 32), x13.shape
    assert x2_out.shape == x2.shape

    # Numerical check against a pure-JAX reference of the same forward.
    ref = _ref_transp_conv3d_k4s4(_ref_transp_conv3d_k4s4(x1, model.w1), model.w2)
    assert jnp.allclose(x13, ref, atol=1e-4, rtol=1e-4), float(jnp.max(jnp.abs(x13 - ref)))
    assert jnp.allclose(x2_out, x2)

    print("KERNEL_OK")
</pallas_src>

<mosaic_0001>
module attributes {stable_mosaic.version = 11 : i64} {
  func.func @_fsa_fused_kernel(%arg0: i32, %arg1: memref<16x64xf32, #tpu.memory_space<vmem>>, %arg2: memref<64x2048xf32, #tpu.memory_space<vmem>>, %arg3: memref<32x512xf32, #tpu.memory_space<vmem>>, %arg4: memref<1024x512xf32, #tpu.memory_space<vmem>>, %arg5: memref<16x2048xf32, #tpu.memory_space<vmem>>, %arg6: memref<1024x32xf32, #tpu.memory_space<vmem>>) attributes {dimension_semantics = [#tpu.dimension_semantics<arbitrary>], iteration_bounds = array<i64: 4>, scalar_prefetch = 0 : i64, scratch_operands = 2 : i64, tpu.core_type = #tpu.core_type<tc>, window_params = [{pipeline_mode = #tpu.pipeline_mode<synchronous>, transform_indices = @transform_0, window_bounds = array<i64: 16, 64>}, {pipeline_mode = #tpu.pipeline_mode<synchronous>, transform_indices = @transform_1, window_bounds = array<i64: 64, 2048>}, {transform_indices = @transform_2, window_bounds = array<i64: 32, 512>}, {transform_indices = @transform_3, window_bounds = array<i64: 1024, 512>}]} {
    %c0_i32 = arith.constant 0 : i32
    %0 = arith.cmpi eq, %arg0, %c0_i32 : i32
    %1 = arith.extui %0 : i1 to i32
    %c0_i32_0 = arith.constant 0 : i32
    %2 = arith.cmpi ne, %1, %c0_i32_0 : i32
    scf.if %2 {
      %c0_6 = arith.constant 0 : index
      %c0_7 = arith.constant 0 : index
      %7 = vector.load %arg1[%c0_6, %c0_7] : memref<16x64xf32, #tpu.memory_space<vmem>>, vector<16x64xf32>
      %c0_8 = arith.constant 0 : index
      %c0_9 = arith.constant 0 : index
      %8 = vector.load %arg2[%c0_8, %c0_9] : memref<64x2048xf32, #tpu.memory_space<vmem>>, vector<64x2048xf32>
      %cst_10 = arith.constant dense<0.000000e+00> : vector<16x2048xf32>
      %9 = tpu.matmul %7, %8, %cst_10 {dimension_numbers = #tpu.dot_dimension_numbers<[1], [0], [0], [1], [0, 0, 1, 1], [], []>} : vector<16x64xf32>, vector<64x2048xf32>, vector<16x2048xf32> -> vector<16x2048xf32>
      %c0_11 = arith.constant 0 : index
      %c0_12 = arith.constant 0 : index
      %10 = vector.load %arg5[%c0_11, %c0_12] : memref<16x2048xf32, #tpu.memory_space<vmem>>, vector<16x2048xf32>
      tpu.vector_store %arg5[%c0_11, %c0_12], %9 {strides = array<i32>} : memref<16x2048xf32, #tpu.memory_space<vmem>>, vector<16x2048xf32>,
      %c0_13 = arith.constant 0 : index
      %c0_14 = arith.constant 0 : index
      %11 = vector.load %arg5[%c0_13, %c0_14] : memref<16x2048xf32, #tpu.memory_space<vmem>>, vector<16x32xf32>
      %c0_15 = arith.constant 0 : index
      %c0_16 = arith.constant 0 : index
      %12 = vector.load %arg6[%c0_15, %c0_16] : memref<1024x32xf32, #tpu.memory_space<vmem>>, vector<16x32xf32>
      tpu.vector_store %arg6[%c0_15, %c0_16], %11 {strides = array<i32>} : memref<1024x32xf32, #tpu.memory_space<vmem>>, vector<16x32xf32>,
      %c0_17 = arith.constant 0 : index
      %c32 = arith.constant 32 : index
      %13 = vector.load %arg5[%c0_17, %c32] : memref<16x2048xf32, #tpu.memory_space<vmem>>, vector<16x32xf32>
      %c16 = arith.constant 16 : index
      %c0_18 = arith.constant 0 : index
      %14 = vector.load %arg6[%c16, %c0_18] : memref<1024x32xf32, #tpu.memory_space<vmem>>, vector<16x32xf32>
      tpu.vector_store %arg6[%c16, %c0_18], %13 {strides = array<i32>} : memref<1024x32xf32, #tpu.memory_space<vmem>>, vector<16x32xf32>,
      %c0_19 = arith.constant 0 : index
      %c64 = arith.constant 64 : index
      %15 = vector.load %arg5[%c0_19, %c64] : memref<16x2048xf32, #tpu.memory_space<vmem>>, vector<16x32xf32>
      %c32_20 = arith.constant 32 : index
      %c0_21 = arith.constant 0 : index
      %16 = vector.load %arg6[%c32_20, %c0_21] : memref<1024x32xf32, #tpu.memory_space<vmem>>, vector<16x32xf32>
      tpu.vector_store %arg6[%c32_20, %c0_21], %15 {strides = array<i32>} : memref<1024x32xf32, #tpu.memory_space<vmem>>, vector<16x32xf32>,
      %c0_22 = arith.constant 0 : index
      %c96 = arith.constant 96 : index
      %17 = vector.load %arg5[%c0_22, %c96] : memref<16x2048xf32, #tpu.memory_space<vmem>>, vector<16x32xf32>
      %c48 = arith.constant 48 : index
      %c0_23 = arith.constant 0 : index
      %18 = vector.load %arg6[%c48, %c0_23] : memref<1024x32xf32, #tpu.memory_space<vmem>>, vector<16x32xf32>
      tpu.vector_store %arg6[%c48, %c0_23], %17 {strides = array<i32>} : memref<1024x32xf32, #tpu.memory_space<vmem>>, vector<16x32xf32>,
      %c0_24 = arith.constant 0 : index
      %c128 = arith.constant 128 : index
      %19 = vector.load %arg5[%c0_24, %c128] : memref<16x2048xf32, #tpu.memory_space<vmem>>, vector<16x32xf32>
      %c64_25 = arith.constant 64 : index
      %c0_26 = arith.constant 0 : index
      %20 = vector.load %arg6[%c64_25, %c0_26] : memref<1024x32xf32, #tpu.memory_space<vmem>>, vector<16x32xf32>
      tpu.vector_store %arg6[%c64_25, %c0_26], %19 {strides = array<i32>} : memref<1024x32xf32, #tpu.memory_space<vmem>>, vector<16x32xf32>,
      %c0_27 = arith.constant 0 : index
      %c160 = arith.constant 160 : index
      %21 = vector.load %arg5[%c0_27, %c160] : memref<16x2048xf32, #tpu.memory_space<vmem>>, vector<16x32xf32>
      %c80 = arith.constant 80 : index
      %c0_28 = arith.constant 0 : index
      %22 = vector.load %arg6[%c80, %c0_28] : memref<1024x32xf32, #tpu.memory_space<vmem>>, vector<16x32xf32>
      tpu.vector_store %arg6[%c80, %c0_28], %21 {strides = array<i32>} : memref<1024x32xf32, #tpu.memory_space<vmem>>, vector<16x32xf32>,
      %c0_29 = arith.constant 0 : index
      %c192 = arith.constant 192 : index
      %23 = vector.load %arg5[%c0_29, %c192] : memref<16x2048xf32, #tpu.memory_space<vmem>>, vector<16x32xf32>
      %c96_30 = arith.constant 96 : index
      %c0_31 = arith.constant 0 : index
      %24 = vector.load %arg6[%c96_30, %c0_31] : memref<1024x32xf32, #tpu.memory_space<vmem>>, vector<16x32xf32>
      tpu.vector_store %arg6[%c96_30, %c0_31], %23 {strides = array<i32>} : memref<1024x32xf32, #tpu.memory_space<vmem>>, vector<16x32xf32>,
      %c0_32 = arith.constant 0 : index
      %c224 = arith.constant 224 : index
      %25 = vector.load %arg5[%c0_32, %c224] : memref<16x2048xf32, #tpu.memory_space<vmem>>, vector<16x32xf32>
      %c112 = arith.constant 112 : index
      %c0_33 = arith.constant 0 : index
      %26 = vector.load %arg6[%c112, %c0_33] : memref<1024x32xf32, #tpu.memory_space<vmem>>, vector<16x32xf32>
      tpu.vector_store %arg6[%c112, %c0_33], %25 {strides = array<i32>} : memref<1024x32xf32, #tpu.memory_space<vmem>>, vector<16x32xf32>,
      %c0_34 = arith.constant 0 : index
      %c256 = arith.constant 256 : index
      %27 = vector.load %arg5[%c0_34, %c256] : memref<16x2048xf32, #tpu.memory_space<vmem>>, vector<16x32xf32>
      %c128_35 = arith.constant 128 : index
      %c0_36 = arith.constant 0 : index
      %28 = vector.load %arg6[%c128_35, %c0_36] : memref<1024x32xf32, #tpu.memory_space<vmem>>, vector<16x32xf32>
      tpu.vector_store %arg6[%c128_35, %c0_36], %27 {strides = array<i32>} : memref<1024x32xf32, #tpu.memory_space<vmem>>, vector<16x32xf32>,
      %c0_37 = arith.constant 0 : index
      %c288 = arith.constant 288 : index
      %29 = vector.load %arg5[%c0_37, %c288] : memref<16x2048xf32, #tpu.memory_space<vmem>>, vector<16x32xf32>
      %c144 = arith.constant 144 : index
      %c0_38 = arith.constant 0 : index
      %30 = vector.load %arg6[%c144, %c0_38] : memref<1024x32xf32, #tpu.memory_space<vmem>>, vector<16x32xf32>
      tpu.vector_store %arg6[%c144, %c0_38], %29 {strides = array<i32>} : memref<1024x32xf32, #tpu.memory_space<vmem>>, vector<16x32xf32>,
      %c0_39 = arith.constant 0 : index
      %c320 = arith.constant 320 : index
      %31 = vector.load %arg5[%c0_39, %c320] : memref<16x2048xf32, #tpu.memory_space<vmem>>, vector<16x32xf32>
      %c160_40 = arith.constant 160 : index
      %c0_41 = arith.constant 0 : index
      %32 = vector.load %arg6[%c160_40, %c0_41] : memref<1024x32xf32, #tpu.memory_space<vmem>>, vector<16x32xf32>
      tpu.vector_store %arg6[%c160_40, %c0_41], %31 {strides = array<i32>} : memref<1024x32xf32, #tpu.memory_space<vmem>>, vector<16x32xf32>,
      %c0_42 = arith.constant 0 : index
      %c352 = arith.constant 352 : index
      %33 = vector.load %arg5[%c0_42, %c352] : memref<16x2048xf32, #tpu.memory_space<vmem>>, vector<16x32xf32>
      %c176 = arith.constant 176 : index
      %c0_43 = arith.constant 0 : index
      %34 = vector.load %arg6[%c176, %c0_43] : memref<1024x32xf32, #tpu.memory_space<vmem>>, vector<16x32xf32>
      tpu.vector_store %arg6[%c176, %c0_43], %33 {strides = array<i32>} : memref<1024x32xf32, #tpu.memory_space<vmem>>, vector<16x32xf32>,
      %c0_44 = arith.constant 0 : index
      %c384 = arith.constant 384 : index
      %35 = vector.load %arg5[%c0_44, %c384] : memref<16x2048xf32, #tpu.memory_space<vmem>>, vector<16x32xf32>
      %c192_45 = arith.constant 192 : index
      %c0_46 = arith.constant 0 : index
      %36 = vector.load %arg6[%c192_45, %c0_46] : memref<1024x32xf32, #tpu.memory_space<vmem>>, vector<16x32xf32>
      tpu.vector_store %arg6[%c192_45, %c0_46], %35 {strides = array<i32>} : memref<1024x32xf32, #tpu.memory_space<vmem>>, vector<16x32xf32>,
      %c0_47 = arith.constant 0 : index
      %c416 = arith.constant 416 : index
      %37 = vector.load %arg5[%c0_47, %c416] : memref<16x2048xf32, #tpu.memory_space<vmem>>, vector<16x32xf32>
      %c208 = arith.constant 208 : index
      %c0_48 = arith.constant 0 : index
      %38 = vector.load %arg6[%c208, %c0_48] : memref<1024x32xf32, #tpu.memory_space<vmem>>, vector<16x32xf32>
      tpu.vector_store %arg6[%c208, %c0_48], %37 {strides = array<i32>} : memref<1024x32xf32, #tpu.memory_space<vmem>>, vector<16x32xf32>,
      %c0_49 = arith.constant 0 : index
      %c448 = arith.constant 448 : index
      %39 = vector.load %arg5[%c0_49, %c448] : memref<16x2048xf32, #tpu.memory_space<vmem>>, vector<16x32xf32>
      %c224_50 = arith.constant 224 : index
      %c0_51 = arith.constant 0 : index
      %40 = vector.load %arg6[%c224_50, %c0_51] : memref<1024x32xf32, #tpu.memory_space<vmem>>, vector<16x32xf32>
      tpu.vector_store %arg6[%c224_50, %c0_51], %39 {strides = array<i32>} : memref<1024x32xf32, #tpu.memory_space<vmem>>, vector<16x32xf32>,
      %c0_52 = arith.constant 0 : index
      %c480 = arith.constant 480 : index
      %41 = vector.load %arg5[%c0_52, %c480] : memref<16x2048xf32, #tpu.memory_space<vmem>>, vector<16x32xf32>
      %c240 = arith.constant 240 : index
      %c0_53 = arith.constant 0 : index
      %42 = vector.load %arg6[%c240, %c0_53] : memref<1024x32xf32, #tpu.memory_space<vmem>>, vector<16x32xf32>
      tpu.vector_store %arg6[%c240, %c0_53], %41 {strides = array<i32>} : memref<1024x32xf32, #tpu.memory_space<vmem>>, vector<16x32xf32>,
      %c0_54 = arith.constant 0 : index
      %c512 = arith.constant 512 : index
      %43 = vector.load %arg5[%c0_54, %c512] : memref<16x2048xf32, #tpu.memory_space<vmem>>, vector<16x32xf32>
      %c256_55 = arith.constant 256 : index
      %c0_56 = arith.constant 0 : index
      %44 = vector.load %arg6[%c256_55, %c0_56] : memref<1024x32xf32, #tpu.memory_space<vmem>>, vector<16x32xf32>
      tpu.vector_store %arg6[%c256_55, %c0_56], %43 {strides = array<i32>} : memref<1024x32xf32, #tpu.memory_space<vmem>>, vector<16x32xf32>,
      %c0_57 = arith.constant 0 : index
      %c544 = arith.constant 544 : index
      %45 = vector.load %arg5[%c0_57, %c544] : memref<16x2048xf32, #tpu.memory_space<vmem>>, vector<16x32xf32>
      %c272 = arith.constant 272 : index
      %c0_58 = arith.constant 0 : index
      %46 = vector.load %arg6[%c272, %c0_58] : memref<1024x32xf32, #tpu.memory_space<vmem>>, vector<16x32xf32>
      tpu.vector_store %arg6[%c272, %c0_58], %45 {strides = array<i32>} : memref<1024x32xf32, #tpu.memory_space<vmem>>, vector<16x32xf32>,
      %c0_59 = arith.constant 0 : index
      %c576 = arith.constant 576 : index
      %47 = vector.load %arg5[%c0_59, %c576] : memref<16x2048xf32, #tpu.memory_space<vmem>>, vector<16x32xf32>
      %c288_60 = arith.constant 288 : index
      %c0_61 = arith.constant 0 : index
      %48 = vector.load %arg6[%c288_60, %c0_61] : memref<1024x32xf32, #tpu.memory_space<vmem>>, vector<16x32xf32>
      tpu.vector_store %arg6[%c288_60, %c0_61], %47 {strides = array<i32>} : memref<1024x32xf32, #tpu.memory_space<vmem>>, vector<16x32xf32>,
      %c0_62 = arith.constant 0 : index
      %c608 = arith.constant 608 : index
      %49 = vector.load %arg5[%c0_62, %c608] : memref<16x2048xf32, #tpu.memory_space<vmem>>, vector<16x32xf32>
      %c304 = arith.constant 304 : index
      %c0_63 = arith.constant 0 : index
      %50 = vector.load %arg6[%c304, %c0_63] : memref<1024x32xf32, #tpu.memory_space<vmem>>, vector<16x32xf32>
      tpu.vector_store %arg6[%c304, %c0_63], %49 {strides = array<i32>} : memref<1024x32xf32, #tpu.memory_space<vmem>>, vector<16x32xf32>,
      %c0_64 = arith.constant 0 : index
      %c640 = arith.constant 640 : index
      %51 = vector.load %arg5[%c0_64, %c640] : memref<16x2048xf32, #tpu.memory_space<vmem>>, vector<16x32xf32>
      %c320_65 = arith.constant 320 : index
      %c0_66 = arith.constant 0 : index
      %52 = vector.load %arg6[%c320_65, %c0_66] : memref<1024x32xf32, #tpu.memory_space<vmem>>, vector<16x32xf32>
      tpu.vector_store %arg6[%c320_65, %c0_66], %51 {strides = array<i32>} : memref<1024x32xf32, #tpu.memory_space<vmem>>, vector<16x32xf32>,
      %c0_67 = arith.constant 0 : index
      %c672 = arith.constant 672 : index
      %53 = vector.load %arg5[%c0_67, %c672] : memref<16x2048xf32, #tpu.memory_space<vmem>>, vector<16x32xf32>
      %c336 = arith.constant 336 : index
      %c0_68 = arith.constant 0 : index
      %54 = vector.load %arg6[%c336, %c0_68] : memref<1024x32xf32, #tpu.memory_space<vmem>>, vector<16x32xf32>
      tpu.vector_store %arg6[%c336, %c0_68], %53 {strides = array<i32>} : memref<1024x32xf32, #tpu.memory_space<vmem>>, vector<16x32xf32>,
      %c0_69 = arith.constant 0 : index
      %c704 = arith.constant 704 : index
      %55 = vector.load %arg5[%c0_69, %c704] : memref<16x2048xf32, #tpu.memory_space<vmem>>, vector<16x32xf32>
      %c352_70 = arith.constant 352 : index
      %c0_71 = arith.constant 0 : index
      %56 = vector.load %arg6[%c352_70, %c0_71] : memref<1024x32xf32, #tpu.memory_space<vmem>>, vector<16x32xf32>
      tpu.vector_store %arg6[%c352_70, %c0_71], %55 {strides = array<i32>} : memref<1024x32xf32, #tpu.memory_space<vmem>>, vector<16x32xf32>,
      %c0_72 = arith.constant 0 : index
      %c736 = arith.constant 736 : index
      %57 = vector.load %arg5[%c0_72, %c736] : memref<16x2048xf32, #tpu.memory_space<vmem>>, vector<16x32xf32>
      %c368 = arith.constant 368 : index
      %c0_73 = arith.constant 0 : index
      %58 = vector.load %arg6[%c368, %c0_73] : memref<1024x32xf32, #tpu.memory_space<vmem>>, vector<16x32xf32>
      tpu.vector_store %arg6[%c368, %c0_73], %57 {strides = array<i32>} : memref<1024x32xf32, #tpu.memory_space<vmem>>, vector<16x32xf32>,
      %c0_74 = arith.constant 0 : index
      %c768 = arith.constant 768 : index
      %59 = vector.load %arg5[%c0_74, %c768] : memref<16x2048xf32, #tpu.memory_space<vmem>>, vector<16x32xf32>
      %c384_75 = arith.constant 384 : index
      %c0_76 = arith.constant 0 : index
      %60 = vector.load %arg6[%c384_75, %c0_76] : memref<1024x32xf32, #tpu.memory_space<vmem>>, vector<16x32xf32>
      tpu.vector_store %arg6[%c384_75, %c0_76], %59 {strides = array<i32>} : memref<1024x32xf32, #tpu.memory_space<vmem>>, vector<16x32xf32>,
      %c0_77 = arith.constant 0 : index
      %c800 = arith.constant 800 : index
      %61 = vector.load %arg5[%c0_77, %c800] : memref<16x2048xf32, #tpu.memory_space<vmem>>, vector<16x32xf32>
      %c400 = arith.constant 400 : index
      %c0_78 = arith.constant 0 : index
      %62 = vector.load %arg6[%c400, %c0_78] : memref<1024x32xf32, #tpu.memory_space<vmem>>, vector<16x32xf32>
      tpu.vector_store %arg6[%c400, %c0_78], %61 {strides = array<i32>} : memref<1024x32xf32, #tpu.memory_space<vmem>>, vector<16x32xf32>,
      %c0_79 = arith.constant 0 : index
      %c832 = arith.constant 832 : index
      %63 = vector.load %arg5[%c0_79, %c832] : memref<16x2048xf32, #tpu.memory_space<vmem>>, vector<16x32xf32>
      %c416_80 = arith.constant 416 : index
      %c0_81 = arith.constant 0 : index
      %64 = vector.load %arg6[%c416_80, %c0_81] : memref<1024x32xf32, #tpu.memory_space<vmem>>, vector<16x32xf32>
      tpu.vector_store %arg6[%c416_80, %c0_81], %63 {strides = array<i32>} : memref<1024x32xf32, #tpu.memory_space<vmem>>, vector<16x32xf32>,
      %c0_82 = arith.constant 0 : index
      %c864 = arith.constant 864 : index
      %65 = vector.load %arg5[%c0_82, %c864] : memref<16x2048xf32, #tpu.memory_space<vmem>>, vector<16x32xf32>
      %c432 = arith.constant 432 : index
      %c0_83 = arith.constant 0 : index
      %66 = vector.load %arg6[%c432, %c0_83] : memref<1024x32xf32, #tpu.memory_space<vmem>>, vector<16x32xf32>
      tpu.vector_store %arg6[%c432, %c0_83], %65 {strides = array<i32>} : memref<1024x32xf32, #tpu.memory_space<vmem>>, vector<16x32xf32>,
      %c0_84 = arith.constant 0 : index
      %c896 = arith.constant 896 : index
      %67 = vector.load %arg5[%c0_84, %c896] : memref<16x2048xf32, #tpu.memory_space<vmem>>, vector<16x32xf32>
      %c448_85 = arith.constant 448 : index
      %c0_86 = arith.constant 0 : index
      %68 = vector.load %arg6[%c448_85, %c0_86] : memref<1024x32xf32, #tpu.memory_space<vmem>>, vector<16x32xf32>
      tpu.vector_store %arg6[%c448_85, %c0_86], %67 {strides = array<i32>} : memref<1024x32xf32, #tpu.memory_space<vmem>>, vector<16x32xf32>,
      %c0_87 = arith.constant 0 : index
      %c928 = arith.constant 928 : index
      %69 = vector.load %arg5[%c0_87, %c928] : memref<16x2048xf32, #tpu.memory_space<vmem>>, vector<16x32xf32>
      %c464 = arith.constant 464 : index
      %c0_88 = arith.constant 0 : index
      %70 = vector.load %arg6[%c464, %c0_88] : memref<1024x32xf32, #tpu.memory_space<vmem>>, vector<16x32xf32>
      tpu.vector_store %arg6[%c464, %c0_88], %69 {strides = array<i32>} : memref<1024x32xf32, #tpu.memory_space<vmem>>, vector<16x32xf32>,
      %c0_89 = arith.constant 0 : index
      %c960 = arith.constant 960 : index
      %71 = vector.load %arg5[%c0_89, %c960] : memref<16x2048xf32, #tpu.memory_space<vmem>>, vector<16x32xf32>
      %c480_90 = arith.constant 480 : index
      %c0_91 = arith.constant 0 : index
      %72 = vector.load %arg6[%c480_90, %c0_91] : memref<1024x32xf32, #tpu.memory_space<vmem>>, vector<16x32xf32>
      tpu.vector_store %arg6[%c480_90, %c0_91], %71 {strides = array<i32>} : memref<1024x32xf32, #tpu.memory_space<vmem>>, vector<16x32xf32>,
      %c0_92 = arith.constant 0 : index
      %c992 = arith.constant 992 : index
      %73 = vector.load %arg5[%c0_92, %c992] : memref<16x2048xf32, #tpu.memory_space<vmem>>, vector<16x32xf32>
      %c496 = arith.constant 496 : index
      %c0_93 = arith.constant 0 : index
      %74 = vector.load %arg6[%c496, %c0_93] : memref<1024x32xf32, #tpu.memory_space<vmem>>, vector<16x32xf32>
      tpu.vector_store %arg6[%c496, %c0_93], %73 {strides = array<i32>} : memref<1024x32xf32, #tpu.memory_space<vmem>>, vector<16x32xf32>,
      %c0_94 = arith.constant 0 : index
      %c1024 = arith.constant 1024 : index
      %75 = vector.load %arg5[%c0_94, %c1024] : memref<16x2048xf32, #tpu.memory_space<vmem>>, vector<16x32xf32>
      %c512_95 = arith.constant 512 : index
      %c0_96 = arith.constant 0 : index
      %76 = vector.load %arg6[%c512_95, %c0_96] : memref<1024x32xf32, #tpu.memory_space<vmem>>, vector<16x32xf32>
      tpu.vector_store %arg6[%c512_95, %c0_96], %75 {strides = array<i32>} : memref<1024x32xf32, #tpu.memory_space<vmem>>, vector<16x32xf32>,
      %c0_97 = arith.constant 0 : index
      %c1056 = arith.constant 1056 : index
      %77 = vector.load %arg5[%c0_97, %c1056] : memref<16x2048xf32, #tpu.memory_space<vmem>>, vector<16x32xf32>
      %c528 = arith.constant 528 : index
      %c0_98 = arith.constant 0 : index
      %78 = vector.load %arg6[%c528, %c0_98] : memref<1024x32xf32, #tpu.memory_space<vmem>>, vector<16x32xf32>
      tpu.vector_store %arg6[%c528, %c0_98], %77 {strides = array<i32>} : memref<1024x32xf32, #tpu.memory_space<vmem>>, vector<16x32xf32>,
      %c0_99 = arith.constant 0 : index
      %c1088 = arith.constant 1088 : index
      %79 = vector.load %arg5[%c0_99, %c1088] : memref<16x2048xf32, #tpu.memory_space<vmem>>, vector<16x32xf32>
      %c544_100 = arith.constant 544 : index
      %c0_101 = arith.constant 0 : index
      %80 = vector.load %arg6[%c544_100, %c0_101] : memref<1024x32xf32, #tpu.memory_space<vmem>>, vector<16x32xf32>
      tpu.vector_store %arg6[%c544_100, %c0_101], %79 {strides = array<i32>} : memref<1024x32xf32, #tpu.memory_space<vmem>>, vector<16x32xf32>,
      %c0_102 = arith.constant 0 : index
      %c1120 = arith.constant 1120 : index
      %81 = vector.load %arg5[%c0_102, %c1120] : memref<16x2048xf32, #tpu.memory_space<vmem>>, vector<16x32xf32>
      %c560 = arith.constant 560 : index
      %c0_103 = arith.constant 0 : index
      %82 = vector.load %arg6[%c560, %c0_103] : memref<1024x32xf32, #tpu.memory_space<vmem>>, vector<16x32xf32>
      tpu.vector_store %arg6[%c560, %c0_103], %81 {strides = array<i32>} : memref<1024x32xf32, #tpu.memory_space<vmem>>, vector<16x32xf32>,
      %c0_104 = arith.constant 0 : index
      %c1152 = arith.constant 1152 : index
      %83 = vector.load %arg5[%c0_104, %c1152] : memref<16x2048xf32, #tpu.memory_space<vmem>>, vector<16x32xf32>
      %c576_105 = arith.constant 576 : index
      %c0_106 = arith.constant 0 : index
      %84 = vector.load %arg6[%c576_105, %c0_106] : memref<1024x32xf32, #tpu.memory_space<vmem>>, vector<16x32xf32>
      tpu.vector_store %arg6[%c576_105, %c0_106], %83 {strides = array<i32>} : memref<1024x32xf32, #tpu.memory_space<vmem>>, vector<16x32xf32>,
      %c0_107 = arith.constant 0 : index
      %c1184 = arith.constant 1184 : index
      %85 = vector.load %arg5[%c0_107, %c1184] : memref<16x2048xf32, #tpu.memory_space<vmem>>, vector<16x32xf32>
      %c592 = arith.constant 592 : index
      %c0_108 = arith.constant 0 : index
      %86 = vector.load %arg6[%c592, %c0_108] : memref<1024x32xf32, #tpu.memory_space<vmem>>, vector<16x32xf32>
      tpu.vector_store %arg6[%c592, %c0_108], %85 {strides = array<i32>} : memref<1024x32xf32, #tpu.memory_space<vmem>>, vector<16x32xf32>,
      %c0_109 = arith.constant 0 : index
      %c1216 = arith.constant 1216 : index
      %87 = vector.load %arg5[%c0_109, %c1216] : memref<16x2048xf32, #tpu.memory_space<vmem>>, vector<16x32xf32>
      %c608_110 = arith.constant 608 : index
      %c0_111 = arith.constant 0 : index
      %88 = vector.load %arg6[%c608_110, %c0_111] : memref<1024x32xf32, #tpu.memory_space<vmem>>, vector<16x32xf32>
      tpu.vector_store %arg6[%c608_110, %c0_111], %87 {strides = array<i32>} : memref<1024x32xf32, #tpu.memory_space<vmem>>, vector<16x32xf32>,
      %c0_112 = arith.constant 0 : index
      %c1248 = arith.constant 1248 : index
      %89 = vector.load %arg5[%c0_112, %c1248] : memref<16x2048xf32, #tpu.memory_space<vmem>>, vector<16x32xf32>
      %c624 = arith.constant 624 : index
      %c0_113 = arith.constant 0 : index
      %90 = vector.load %arg6[%c624, %c0_113] : memref<1024x32xf32, #tpu.memory_space<vmem>>, vector<16x32xf32>
      tpu.vector_store %arg6[%c624, %c0_113], %89 {strides = array<i32>} : memref<1024x32xf32, #tpu.memory_space<vmem>>, vector<16x32xf32>,
      %c0_114 = arith.constant 0 : index
      %c1280 = arith.constant 1280 : index
      %91 = vector.load %arg5[%c0_114, %c1280] : memref<16x2048xf32, #tpu.memory_space<vmem>>, vector<16x32xf32>
      %c640_115 = arith.constant 640 : index
      %c0_116 = arith.constant 0 : index
      %92 = vector.load %arg6[%c640_115, %c0_116] : memref<1024x32xf32, #tpu.memory_space<vmem>>, vector<16x32xf32>
      tpu.vector_store %arg6[%c640_115, %c0_116], %91 {strides = array<i32>} : memref<1024x32xf32, #tpu.memory_space<vmem>>, vector<16x32xf32>,
      %c0_117 = arith.constant 0 : index
      %c1312 = arith.constant 1312 : index
      %93 = vector.load %arg5[%c0_117, %c1312] : memref<16x2048xf32, #tpu.memory_space<vmem>>, vector<16x32xf32>
      %c656 = arith.constant 656 : index
      %c0_118 = arith.constant 0 : index
      %94 = vector.load %arg6[%c656, %c0_118] : memref<1024x32xf32, #tpu.memory_space<vmem>>, vector<16x32xf32>
      tpu.vector_store %arg6[%c656, %c0_118], %93 {strides = array<i32>} : memref<1024x32xf32, #tpu.memory_space<vmem>>, vector<16x32xf32>,
      %c0_119 = arith.constant 0 : index
      %c1344 = arith.constant 1344 : index
      %95 = vector.load %arg5[%c0_119, %c1344] : memref<16x2048xf32, #tpu.memory_space<vmem>>, vector<16x32xf32>
      %c672_120 = arith.constant 672 : index
      %c0_121 = arith.constant 0 : index
      %96 = vector.load %arg6[%c672_120, %c0_121] : memref<1024x32xf32, #tpu.memory_space<vmem>>, vector<16x32xf32>
      tpu.vector_store %arg6[%c672_120, %c0_121], %95 {strides = array<i32>} : memref<1024x32xf32, #tpu.memory_space<vmem>>, vector<16x32xf32>,
      %c0_122 = arith.constant 0 : index
      %c1376 = arith.constant 1376 : index
      %97 = vector.load %arg5[%c0_122, %c1376] : memref<16x2048xf32, #tpu.memory_space<vmem>>, vector<16x32xf32>
      %c688 = arith.constant 688 : index
      %c0_123 = arith.constant 0 : index
      %98 = vector.load %arg6[%c688, %c0_123] : memref<1024x32xf32, #tpu.memory_space<vmem>>, vector<16x32xf32>
      tpu.vector_store %arg6[%c688, %c0_123], %97 {strides = array<i32>} : memref<1024x32xf32, #tpu.memory_space<vmem>>, vector<16x32xf32>,
      %c0_124 = arith.constant 0 : index
      %c1408 = arith.constant 1408 : index
      %99 = vector.load %arg5[%c0_124, %c1408] : memref<16x2048xf32, #tpu.memory_space<vmem>>, vector<16x32xf32>
      %c704_125 = arith.constant 704 : index
      %c0_126 = arith.constant 0 : index
      %100 = vector.load %arg6[%c704_125, %c0_126] : memref<1024x32xf32, #tpu.memory_space<vmem>>, vector<16x32xf32>
      tpu.vector_store %arg6[%c704_125, %c0_126], %99 {strides = array<i32>} : memref<1024x32xf32, #tpu.memory_space<vmem>>, vector<16x32xf32>,
      %c0_127 = arith.constant 0 : index
      %c1440 = arith.constant 1440 : index
      %101 = vector.load %arg5[%c0_127, %c1440] : memref<16x2048xf32, #tpu.memory_space<vmem>>, vector<16x32xf32>
      %c720 = arith.constant 720 : index
      %c0_128 = arith.constant 0 : index
      %102 = vector.load %arg6[%c720, %c0_128] : memref<1024x32xf32, #tpu.memory_space<vmem>>, vector<16x32xf32>
      tpu.vector_store %arg6[%c720, %c0_128], %101 {strides = array<i32>} : memref<1024x32xf32, #tpu.memory_space<vmem>>, vector<16x32xf32>,
      %c0_129 = arith.constant 0 : index
      %c1472 = arith.constant 1472 : index
      %103 = vector.load %arg5[%c0_129, %c1472] : memref<16x2048xf32, #tpu.memory_space<vmem>>, vector<16x32xf32>
      %c736_130 = arith.constant 736 : index
      %c0_131 = arith.constant 0 : index
      %104 = vector.load %arg6[%c736_130, %c0_131] : memref<1024x32xf32, #tpu.memory_space<vmem>>, vector<16x32xf32>
      tpu.vector_store %arg6[%c736_130, %c0_131], %103 {strides = array<i32>} : memref<1024x32xf32, #tpu.memory_space<vmem>>, vector<16x32xf32>,
      %c0_132 = arith.constant 0 : index
      %c1504 = arith.constant 1504 : index
      %105 = vector.load %arg5[%c0_132, %c1504] : memref<16x2048xf32, #tpu.memory_space<vmem>>, vector<16x32xf32>
      %c752 = arith.constant 752 : index
      %c0_133 = arith.constant 0 : index
      %106 = vector.load %arg6[%c752, %c0_133] : memref<1024x32xf32, #tpu.memory_space<vmem>>, vector<16x32xf32>
      tpu.vector_store %arg6[%c752, %c0_133], %105 {strides = array<i32>} : memref<1024x32xf32, #tpu.memory_space<vmem>>, vector<16x32xf32>,
      %c0_134 = arith.constant 0 : index
      %c1536 = arith.constant 1536 : index
      %107 = vector.load %arg5[%c0_134, %c1536] : memref<16x2048xf32, #tpu.memory_space<vmem>>, vector<16x32xf32>
      %c768_135 = arith.constant 768 : index
      %c0_136 = arith.constant 0 : index
      %108 = vector.load %arg6[%c768_135, %c0_136] : memref<1024x32xf32, #tpu.memory_space<vmem>>, vector<16x32xf32>
      tpu.vector_store %arg6[%c768_135, %c0_136], %107 {strides = array<i32>} : memref<1024x32xf32, #tpu.memory_space<vmem>>, vector<16x32xf32>,
      %c0_137 = arith.constant 0 : index
      %c1568 = arith.constant 1568 : index
      %109 = vector.load %arg5[%c0_137, %c1568] : memref<16x2048xf32, #tpu.memory_space<vmem>>, vector<16x32xf32>
      %c784 = arith.constant 784 : index
      %c0_138 = arith.constant 0 : index
      %110 = vector.load %arg6[%c784, %c0_138] : memref<1024x32xf32, #tpu.memory_space<vmem>>, vector<16x32xf32>
      tpu.vector_store %arg6[%c784, %c0_138], %109 {strides = array<i32>} : memref<1024x32xf32, #tpu.memory_space<vmem>>, vector<16x32xf32>,
      %c0_139 = arith.constant 0 : index
      %c1600 = arith.constant 1600 : index
      %111 = vector.load %arg5[%c0_139, %c1600] : memref<16x2048xf32, #tpu.memory_space<vmem>>, vector<16x32xf32>
      %c800_140 = arith.constant 800 : index
      %c0_141 = arith.constant 0 : index
      %112 = vector.load %arg6[%c800_140, %c0_141] : memref<1024x32xf32, #tpu.memory_space<vmem>>, vector<16x32xf32>
      tpu.vector_store %arg6[%c800_140, %c0_141], %111 {strides = array<i32>} : memref<1024x32xf32, #tpu.memory_space<vmem>>, vector<16x32xf32>,
      %c0_142 = arith.constant 0 : index
      %c1632 = arith.constant 1632 : index
      %113 = vector.load %arg5[%c0_142, %c1632] : memref<16x2048xf32, #tpu.memory_space<vmem>>, vector<16x32xf32>
      %c816 = arith.constant 816 : index
      %c0_143 = arith.constant 0 : index
      %114 = vector.load %arg6[%c816, %c0_143] : memref<1024x32xf32, #tpu.memory_space<vmem>>, vector<16x32xf32>
      tpu.vector_store %arg6[%c816, %c0_143], %113 {strides = array<i32>} : memref<1024x32xf32, #tpu.memory_space<vmem>>, vector<16x32xf32>,
      %c0_144 = arith.constant 0 : index
      %c1664 = arith.constant 1664 : index
      %115 = vector.load %arg5[%c0_144, %c1664] : memref<16x2048xf32, #tpu.memory_space<vmem>>, vector<16x32xf32>
      %c832_145 = arith.constant 832 : index
      %c0_146 = arith.constant 0 : index
      %116 = vector.load %arg6[%c832_145, %c0_146] : memref<1024x32xf32, #tpu.memory_space<vmem>>, vector<16x32xf32>
      tpu.vector_store %arg6[%c832_145, %c0_146], %115 {strides = array<i32>} : memref<1024x32xf32, #tpu.memory_space<vmem>>, vector<16x32xf32>,
      %c0_147 = arith.constant 0 : index
      %c1696 = arith.constant 1696 : index
      %117 = vector.load %arg5[%c0_147, %c1696] : memref<16x2048xf32, #tpu.memory_space<vmem>>, vector<16x32xf32>
      %c848 = arith.constant 848 : index
      %c0_148 = arith.constant 0 : index
      %118 = vector.load %arg6[%c848, %c0_148] : memref<1024x32xf32, #tpu.memory_space<vmem>>, vector<16x32xf32>
      tpu.vector_store %arg6[%c848, %c0_148], %117 {strides = array<i32>} : memref<1024x32xf32, #tpu.memory_space<vmem>>, vector<16x32xf32>,
      %c0_149 = arith.constant 0 : index
      %c1728 = arith.constant 1728 : index
      %119 = vector.load %arg5[%c0_149, %c1728] : memref<16x2048xf32, #tpu.memory_space<vmem>>, vector<16x32xf32>
      %c864_150 = arith.constant 864 : index
      %c0_151 = arith.constant 0 : index
      %120 = vector.load %arg6[%c864_150, %c0_151] : memref<1024x32xf32, #tpu.memory_space<vmem>>, vector<16x32xf32>
      tpu.vector_store %arg6[%c864_150, %c0_151], %119 {strides = array<i32>} : memref<1024x32xf32, #tpu.memory_space<vmem>>, vector<16x32xf32>,
      %c0_152 = arith.constant 0 : index
      %c1760 = arith.constant 1760 : index
      %121 = vector.load %arg5[%c0_152, %c1760] : memref<16x2048xf32, #tpu.memory_space<vmem>>, vector<16x32xf32>
      %c880 = arith.constant 880 : index
      %c0_153 = arith.constant 0 : index
      %122 = vector.load %arg6[%c880, %c0_153] : memref<1024x32xf32, #tpu.memory_space<vmem>>, vector<16x32xf32>
      tpu.vector_store %arg6[%c880, %c0_153], %121 {strides = array<i32>} : memref<1024x32xf32, #tpu.memory_space<vmem>>, vector<16x32xf32>,
      %c0_154 = arith.constant 0 : index
      %c1792 = arith.constant 1792 : index
      %123 = vector.load %arg5[%c0_154, %c1792] : memref<16x2048xf32, #tpu.memory_space<vmem>>, vector<16x32xf32>
      %c896_155 = arith.constant 896 : index
      %c0_156 = arith.constant 0 : index
      %124 = vector.load %arg6[%c896_155, %c0_156] : memref<1024x32xf32, #tpu.memory_space<vmem>>, vector<16x32xf32>
      tpu.vector_store %arg6[%c896_155, %c0_156], %123 {strides = array<i32>} : memref<1024x32xf32, #tpu.memory_space<vmem>>, vector<16x32xf32>,
      %c0_157 = arith.constant 0 : index
      %c1824 = arith.constant 1824 : index
      %125 = vector.load %arg5[%c0_157, %c1824] : memref<16x2048xf32, #tpu.memory_space<vmem>>, vector<16x32xf32>
      %c912 = arith.constant 912 : index
      %c0_158 = arith.constant 0 : index
      %126 = vector.load %arg6[%c912, %c0_158] : memref<1024x32xf32, #tpu.memory_space<vmem>>, vector<16x32xf32>
      tpu.vector_store %arg6[%c912, %c0_158], %125 {strides = array<i32>} : memref<1024x32xf32, #tpu.memory_space<vmem>>, vector<16x32xf32>,
      %c0_159 = arith.constant 0 : index
      %c1856 = arith.constant 1856 : index
      %127 = vector.load %arg5[%c0_159, %c1856] : memref<16x2048xf32, #tpu.memory_space<vmem>>, vector<16x32xf32>
      %c928_160 = arith.constant 928 : index
      %c0_161 = arith.constant 0 : index
      %128 = vector.load %arg6[%c928_160, %c0_161] : memref<1024x32xf32, #tpu.memory_space<vmem>>, vector<16x32xf32>
      tpu.vector_store %arg6[%c928_160, %c0_161], %127 {strides = array<i32>} : memref<1024x32xf32, #tpu.memory_space<vmem>>, vector<16x32xf32>,
      %c0_162 = arith.constant 0 : index
      %c1888 = arith.constant 1888 : index
      %129 = vector.load %arg5[%c0_162, %c1888] : memref<16x2048xf32, #tpu.memory_space<vmem>>, vector<16x32xf32>
      %c944 = arith.constant 944 : index
      %c0_163 = arith.constant 0 : index
      %130 = vector.load %arg6[%c944, %c0_163] : memref<1024x32xf32, #tpu.memory_space<vmem>>, vector<16x32xf32>
      tpu.vector_store %arg6[%c944, %c0_163], %129 {strides = array<i32>} : memref<1024x32xf32, #tpu.memory_space<vmem>>, vector<16x32xf32>,
      %c0_164 = arith.constant 0 : index
      %c1920 = arith.constant 1920 : index
      %131 = vector.load %arg5[%c0_164, %c1920] : memref<16x2048xf32, #tpu.memory_space<vmem>>, vector<16x32xf32>
      %c960_165 = arith.constant 960 : index
      %c0_166 = arith.constant 0 : index
      %132 = vector.load %arg6[%c960_165, %c0_166] : memref<1024x32xf32, #tpu.memory_space<vmem>>, vector<16x32xf32>
      tpu.vector_store %arg6[%c960_165, %c0_166], %131 {strides = array<i32>} : memref<1024x32xf32, #tpu.memory_space<vmem>>, vector<16x32xf32>,
      %c0_167 = arith.constant 0 : index
      %c1952 = arith.constant 1952 : index
      %133 = vector.load %arg5[%c0_167, %c1952] : memref<16x2048xf32, #tpu.memory_space<vmem>>, vector<16x32xf32>
      %c976 = arith.constant 976 : index
      %c0_168 = arith.constant 0 : index
      %134 = vector.load %arg6[%c976, %c0_168] : memref<1024x32xf32, #tpu.memory_space<vmem>>, vector<16x32xf32>
      tpu.vector_store %arg6[%c976, %c0_168], %133 {strides = array<i32>} : memref<1024x32xf32, #tpu.memory_space<vmem>>, vector<16x32xf32>,
      %c0_169 = arith.constant 0 : index
      %c1984 = arith.constant 1984 : index
      %135 = vector.load %arg5[%c0_169, %c1984] : memref<16x2048xf32, #tpu.memory_space<vmem>>, vector<16x32xf32>
      %c992_170 = arith.constant 992 : index
      %c0_171 = arith.constant 0 : index
      %136 = vector.load %arg6[%c992_170, %c0_171] : memref<1024x32xf32, #tpu.memory_space<vmem>>, vector<16x32xf32>
      tpu.vector_store %arg6[%c992_170, %c0_171], %135 {strides = array<i32>} : memref<1024x32xf32, #tpu.memory_space<vmem>>, vector<16x32xf32>,
      %c0_172 = arith.constant 0 : index
      %c2016 = arith.constant 2016 : index
      %137 = vector.load %arg5[%c0_172, %c2016] : memref<16x2048xf32, #tpu.memory_space<vmem>>, vector<16x32xf32>
      %c1008 = arith.constant 1008 : index
      %c0_173 = arith.constant 0 : index
      %138 = vector.load %arg6[%c1008, %c0_173] : memref<1024x32xf32, #tpu.memory_space<vmem>>, vector<16x32xf32>
      tpu.vector_store %arg6[%c1008, %c0_173], %137 {strides = array<i32>} : memref<1024x32xf32, #tpu.memory_space<vmem>>, vector<16x32xf32>,
    } else {
    }
    %c0 = arith.constant 0 : index
    %c0_1 = arith.constant 0 : index
    %3 = vector.load %arg6[%c0, %c0_1] : memref<1024x32xf32, #tpu.memory_space<vmem>>, vector<1024x32xf32>
    %c0_2 = arith.constant 0 : index
    %c0_3 = arith.constant 0 : index
    %4 = vector.load %arg3[%c0_2, %c0_3] : memref<32x512xf32, #tpu.memory_space<vmem>>, vector<32x512xf32>
    %cst = arith.constant dense<0.000000e+00> : vector<1024x512xf32>
    %5 = tpu.matmul %3, %4, %cst {dimension_numbers = #tpu.dot_dimension_numbers<[1], [0], [0], [1], [0, 0, 1, 1], [], []>} : vector<1024x32xf32>, vector<32x512xf32>, vector<1024x512xf32> -> vector<1024x512xf32>
    %c0_4 = arith.constant 0 : index
    %c0_5 = arith.constant 0 : index
    %6 = vector.load %arg4[%c0_4, %c0_5] : memref<1024x512xf32, #tpu.memory_space<vmem>>, vector<1024x512xf32>
    tpu.vector_store %arg4[%c0_4, %c0_5], %5 {strides = array<i32>} : memref<1024x512xf32, #tpu.memory_space<vmem>>, vector<1024x512xf32>,
    return
  }
  func.func @transform_0(%arg0: i32) -> (i32, i32) {
    %c0_i32 = arith.constant 0 : i32
    %c0_i32_0 = arith.constant 0 : i32
    %c0_i32_1 = arith.constant 0 : i32
    return %c0_i32, %c0_i32_0 : i32, i32
  }
  func.func @transform_1(%arg0: i32) -> (i32, i32) {
    %c0_i32 = arith.constant 0 : i32
    %c0_i32_0 = arith.constant 0 : i32
    %c0_i32_1 = arith.constant 0 : i32
    return %c0_i32, %c0_i32_0 : i32, i32
  }
  func.func @transform_2(%arg0: i32) -> (i32, i32) {
    %c0_i32 = arith.constant 0 : i32
    %c0_i32_0 = arith.constant 0 : i32
    return %c0_i32, %arg0 : i32, i32
  }
  func.func @transform_3(%arg0: i32) -> (i32, i32) {
    %c0_i32 = arith.constant 0 : i32
    %c0_i32_0 = arith.constant 0 : i32
    return %c0_i32, %arg0 : i32, i32
  }
}

</mosaic_0001>

<llo_original>
// kernel: fsa_forward.1
$region0: #{fsa_forward.1}
  #allocation0 [shape = 'u32[]', space=smem, size = 0x4, offset = 0x4, fixed_abs, tag = 'smem constant byte address 0x4 - core index']
  #allocation1 [shape = 'u32[144,128]{1,0:T(1,128)}', space=vmem, size = 0x12000, scoped, tag = 'internal scratch']
  #allocation2 [shape = 'f32[16,2048]{1,0:T(8,128)}', space=vmem, size = 0x20000, scoped, tag = 'scratch operand']
  #allocation3 [shape = 'f32[1024,32]{1,0:T(8,128)}', space=vmem, size = 0x80000, scoped, tag = 'scratch operand']
  %s0 = inlined_call_operand.hbm [shape: f32[16,64], index: 0, kind: input, shape index: {}]
  %s1 = inlined_call_operand.hbm [shape: f32[64,2048], index: 1, kind: input, shape index: {}]
  %s2 = inlined_call_operand.hbm [shape: f32[32,2048], index: 2, kind: input, shape index: {}]
  %s3 = inlined_call_operand.vmem [shape: f32[1024,2048], index: 3, kind: output, shape index: {}]
  %s4 = sld [smem:[#allocation0]]
  $region80: #{fsa_forward.1} parent=0
    _
  %s6 = ssub.s32 1, %s4
  %s7 = scalar_select 0, %s6, %s4
  $region1: #{fsa_forward.1} parent=0
    #allocation4 [shape = 'u8[8192]{0}', space=vmem, size = 0x2000, scoped, tag = 'input window, operand 0, single buffered']
    #allocation5 [shape = 's32[2]{0}', space=sflag, size = 0x8, scoped, tag = 'scoped memory for fsa_forward.1']
    #allocation6 [shape = 'u8[524288]{0}', space=vmem, size = 0x80000, scoped, tag = 'input window, operand 1, single buffered']
    #allocation7 [shape = 's32[1]{0}', space=sflag, size = 0x4, scoped, tag = 'scoped memory for fsa_forward.1']
    #allocation8 [shape = 'u8[131072]{0}', space=vmem, size = 0x20000, scoped, tag = 'input window, operand 2']
    #allocation9 [shape = 'u8[4194304]{0}', space=vmem, size = 0x400000, scoped, tag = 'output window, operand 0']
    %8 = vsyncpa [#allocation5], 0
    %9 = vsyncpa [#allocation7], 0
    loop: start=0, step=1, limit=6
    $region2: #{fsa_forward.1} parent=1 // loop_pre_header
      _
    $region3: #{fsa_forward.1} parent=1 // loop_header
      %s11 = sphi 0, %s15
      %p12 = scmp.ge.s32.totalorder %s11, 6
      %s19 = sphi 0, %s19
      %s21 = sphi 0, %s19
      %s22 = sphi 0, %s21
      %s36 = sphi 0, %s22
      %s40 = sphi 0, %s40
      %s42 = sphi 0, %s40
      %s43 = sphi 0, %s42
      %s57 = sphi 0, %s43
      %s63 = sphi 0, %s65
      %s66 = sphi 0, %s63
      %s67 = sphi 0, %s66
      %s83 = sphi 0, %s67
      %s89 = sphi 0, %s91
      %s92 = sphi 0, %s89
      %s93 = sphi 0, %s92
      %s109 = sphi 0, %s93
    $region4: #{fsa_forward.1} parent=1 // loop_header_branch
      %14 = sbr.rel (%p12) target = $region8
    $region5: #{fsa_forward.1} parent=1 // loop_body
      %s16 = ssub.s32 %s11, 1
      %s17 = ssub.s32 %s11, 2
      %s18 = sadd.s32 %s11, 1
      %s20 = sadd.s32 %s19, 1
      %p23 = scmp.eq.s32.totalorder %s11, 3
      %p24 = scmp.ne.s32.totalorder %s19, %s21
      %p25 = scmp.eq.s32.totalorder %s11, 0
      %p26 = por %p24, %p25
      %p27 = scmp.ne.s32.totalorder %s19, %s21
      %p28 = scmp.eq.s32.totalorder %s16, 3
      %p29 = por %p27, %p28
      %p30 = scmp.ne.s32.totalorder %s21, %s22
      %p31 = scmp.eq.s32.totalorder %s16, 0
      %p32 = por %p30, %p31
      %p33 = scmp.ne.s32.totalorder %s21, %s22
      %p34 = scmp.eq.s32.totalorder %s17, 3
      %p35 = por %p33, %p34
      %p37 = scmp.ne.s32.totalorder %s22, %s36
      %p38 = scmp.eq.s32.totalorder %s17, 0
      %p39 = por %p37, %p38
      %s41 = sadd.s32 %s40, 1
      %p44 = scmp.eq.s32.totalorder %s11, 3
      %p45 = scmp.ne.s32.totalorder %s40, %s42
      %p46 = scmp.eq.s32.totalorder %s11, 0
      %p47 = por %p45, %p46
      %p48 = scmp.ne.s32.totalorder %s40, %s42
      %p49 = scmp.eq.s32.totalorder %s16, 3
      %p50 = por %p48, %p49
      %p51 = scmp.ne.s32.totalorder %s42, %s43
      %p52 = scmp.eq.s32.totalorder %s16, 0
      %p53 = por %p51, %p52
      %p54 = scmp.ne.s32.totalorder %s42, %s43
      %p55 = scmp.eq.s32.totalorder %s17, 3
      %p56 = por %p54, %p55
      %p58 = scmp.ne.s32.totalorder %s43, %s57
      %p59 = scmp.eq.s32.totalorder %s17, 0
      %p60 = por %p58, %p59
      %s61 = ssub.s32 %s11, %s18
      %p62 = scmp.eq.s32.totalorder %s61, 0
      %s64 = sadd.s32 %s63, 1
      %s65 = scalar_select %p62, %s63, %s64
      %p68 = pneg %p62
      %p69 = scmp.eq.s32.totalorder %s11, 3
      %p70 = por %p68, %p69
      %p71 = scmp.ne.s32.totalorder %s63, %s66
      %p72 = scmp.eq.s32.totalorder %s11, 0
      %p73 = por %p71, %p72
      %p74 = scmp.ne.s32.totalorder %s63, %s66
      %p75 = scmp.eq.s32.totalorder %s16, 3
      %p76 = por %p74, %p75
      %p77 = scmp.ne.s32.totalorder %s66, %s67
      %p78 = scmp.eq.s32.totalorder %s16, 0
      %p79 = por %p77, %p78
      %p80 = scmp.ne.s32.totalorder %s66, %s67
      %p81 = scmp.eq.s32.totalorder %s17, 3
      %p82 = por %p80, %p81
      %p84 = scmp.ne.s32.totalorder %s67, %s83
      %p85 = scmp.eq.s32.totalorder %s17, 0
      %p86 = por %p84, %p85
      %s87 = ssub.s32 %s11, %s18
      %p88 = scmp.eq.s32.totalorder %s87, 0
      %s90 = sadd.s32 %s89, 1
      %s91 = scalar_select %p88, %s89, %s90
      %p94 = pneg %p88
      %p95 = scmp.eq.s32.totalorder %s11, 3
      %p96 = por %p94, %p95
      %p97 = scmp.ne.s32.totalorder %s89, %s92
      %p98 = scmp.eq.s32.totalorder %s11, 0
      %p99 = por %p97, %p98
      %p100 = scmp.ne.s32.totalorder %s89, %s92
      %p101 = scmp.eq.s32.totalorder %s16, 3
      %p102 = por %p100, %p101
      %p103 = scmp.ne.s32.totalorder %s92, %s93
      %p104 = scmp.eq.s32.totalorder %s16, 0
      %p105 = por %p103, %p104
      %p106 = scmp.ne.s32.totalorder %s92, %s93
      %p107 = scmp.eq.s32.totalorder %s17, 3
      %p108 = por %p106, %p107
      %p110 = scmp.ne.s32.totalorder %s93, %s109
      %p111 = scmp.eq.s32.totalorder %s17, 0
      %p112 = por %p110, %p111
      %p113 = scmp.le.s32.totalorder 1, %s11
      %p114 = scmp.lt.s32.totalorder %s11, 5
      %p115 = pnand %p113, %p114
      %p116 = pneg %p115
      // Predicated region
      $region9: #{fsa_forward.1} parent=5 // pred_check
        _
      $region10: #{fsa_forward.1} parent=5 // pred_check_branch
        %118 = sbr.rel (%p115) target = $region12
      $region11: #{fsa_forward.1} parent=5 // pred_region
        %s119 = ssub.s32 %s11, 1
        // Predicated region
        $region13: #{fsa_forward.1} parent=11 // pred_check
          %p120 = pneg %p32
        $region14: #{fsa_forward.1} parent=11 // pred_check_branch
          %122 = sbr.rel (%p120) target = $region16
        $region15: #{fsa_forward.1} parent=11 // pred_region
          %s124 = ssub.s32 256, 256
          %125 = vsyncadd [#allocation5], %s124
          %s126 = sshll.u32 [#allocation4], 4
          %s127 = int_to_ptr.vmem [resolvable:$true] %s126
          %132 = dma.hbm_to_vmem [thread:$0]  %s0, 256, %s127, [#allocation5], 128, 128, 8
        $region16: #{fsa_forward.1} parent=11 // pred_fallthru
          _
        // Predicated region
        $region17: #{fsa_forward.1} parent=11 // pred_check
          %p133 = pneg %p53
        $region18: #{fsa_forward.1} parent=11 // pred_check_branch
          %135 = sbr.rel (%p133) target = $region20
        $region19: #{fsa_forward.1} parent=11 // pred_region
          %s137 = ssub.s32 16384, 16384
          %138 = vsyncadd [#allocation7], %s137
          %s139 = sshll.u32 [#allocation6], 4
          %s140 = int_to_ptr.vmem [resolvable:$true] %s139
          %145 = dma.hbm_to_vmem [thread:$0]  %s1, 16384, %s140, [#allocation7], 2048, 2048, 128
        $region20: #{fsa_forward.1} parent=11 // pred_fallthru
          _
      $region12: #{fsa_forward.1} parent=5 // pred_fallthru
        _
      %p146 = scmp.lt.s32.totalorder %s11, 4
      // Predicated region
      $region21: #{fsa_forward.1} parent=5 // pred_check
        %p147 = pneg %p146
      $region22: #{fsa_forward.1} parent=5 // pred_check_branch
        %149 = sbr.rel (%p147) target = $region24
      $region23: #{fsa_forward.1} parent=5 // pred_region
        // Predicated region
        $region25: #{fsa_forward.1} parent=23 // pred_check
          %p150 = pneg %p73
        $region26: #{fsa_forward.1} parent=23 // pred_check_branch
          %152 = sbr.rel (%p150) target = $region28
        $region27: #{fsa_forward.1} parent=23 // pred_region
          %s153 = sand.u32 %s11, 1
          %s154 = scalar_lea.sflag [#allocation5], %s153
          %s155 = sand.u32 %s63, 1
          %s156 = smul.addr %s155, 128
          %s157 = scalar_lea.vmem [#allocation8], %s156
          %s158 = smul.u32 4, %s11
          %s160 = ssub.s32 2048, 2048
          %161 = vsyncadd %s154, %s160
          %s162 = smul.addr %s158, 128
          %s163 = scalar_lea.hbm %s2, %s162
          %s164 = sshll.u32 %s157, 4
          %s165 = int_to_ptr.vmem [resolvable:$true] %s164
          %170 = dma.hbm_to_vmem [thread:$0]  %s163, 2048, %s165, %s154, 2048, 512, 32
        $region28: #{fsa_forward.1} parent=23 // pred_fallthru
          _
      $region24: #{fsa_forward.1} parent=5 // pred_fallthru
        _
      %p171 = scmp.le.s32.totalorder 1, %s11
      %p172 = scmp.lt.s32.totalorder %s11, 5
      %p173 = pnand %p171, %p172
      %p174 = pneg %p173
      // Predicated region
      $region29: #{fsa_forward.1} parent=5 // pred_check
        _
      $region30: #{fsa_forward.1} parent=5 // pred_check_branch
        %176 = sbr.rel (%p173) target = $region32
      $region31: #{fsa_forward.1} parent=5 // pred_region
        %s177 = ssub.s32 %s11, 1
        // Predicated region
        $region33: #{fsa_forward.1} parent=31 // pred_check
          %p178 = pneg %p32
        $region34: #{fsa_forward.1} parent=31 // pred_check_branch
          %180 = sbr.rel (%p178) target = $region36
        $region35: #{fsa_forward.1} parent=31 // pred_region
          %181 = dma.done [#allocation5], 256
        $region36: #{fsa_forward.1} parent=31 // pred_fallthru
          _
        // Predicated region
        $region37: #{fsa_forward.1} parent=31 // pred_check
          %p182 = pneg %p53
        $region38: #{fsa_forward.1} parent=31 // pred_check_branch
          %184 = sbr.rel (%p182) target = $region40
        $region39: #{fsa_forward.1} parent=31 // pred_region
          %185 = dma.done [#allocation7], 16384
        $region40: #{fsa_forward.1} parent=31 // pred_fallthru
          _
        %s186 = sand.u32 %s16, 1
        %s187 = scalar_lea.sflag [#allocation5], %s186
        %s188 = sand.u32 %s66, 1
        %s189 = smul.addr %s188, 128
        %s190 = scalar_lea.vmem [#allocation8], %s189
        // Predicated region
        $region41: #{fsa_forward.1} parent=31 // pred_check
          %p191 = pneg %p79
        $region42: #{fsa_forward.1} parent=31 // pred_check_branch
          %193 = sbr.rel (%p191) target = $region44
        $region43: #{fsa_forward.1} parent=31 // pred_region
          %194 = dma.done %s187, 2048
        $region44: #{fsa_forward.1} parent=31 // pred_fallthru
          _
        %p195 = pneg %p32
        %p196 = pneg %p29
        %p197 = pneg %p53
        %p198 = pneg %p50
        %s199 = sand.u32 %s16, 1
        %s200 = scalar_lea.sflag [#allocation5], %s199
        %s201 = sand.u32 %s66, 1
        %s202 = smul.addr %s201, 128
        %s203 = scalar_lea.vmem [#allocation8], %s202
        %p204 = pneg %p79
        %p205 = pneg %p76
        %p206 = pneg %p105
        %p207 = pneg %p102
        %s208 = sand.u32 %s92, 1
        %s209 = sand.u32 %s92, 1
        %s210 = smul.addr %s209, 4096
        %s211 = scalar_lea.vmem [#allocation9], %s210
        %s212 = smul.u32 4, %s16
        %s213 = smul.u32 4, %s16
        %p214 = scmp.eq.s32.totalorder %s16, 0
        // Predicated region
        $region45: #{fsa_forward.1} parent=31 // pred_check
          %p215 = pneg %p214
        $region46: #{fsa_forward.1} parent=31 // pred_check_branch
          %217 = sbr.rel (%p215) target = $region48
        $region47: #{fsa_forward.1} parent=31 // pred_region
          %v218 = vld [vmem:[#allocation4] sm:$0xff]
          %v219 = vld [vmem:[#allocation4 + $0x8] sm:$0xff]
          %v220 = vld [vmem:[#allocation6] sm:$0xff]
          %v221 = vld [vmem:[#allocation6 + $0x8] sm:$0xff]
          %v222 = vld [vmem:[#allocation6 + $0x10] sm:$0xff]
          %v223 = vld [vmem:[#allocation6 + $0x18] sm:$0xff]
          %v224 = vld [vmem:[#allocation6 + $0x20] sm:$0xff]
          %v225 = vld [vmem:[#allocation6 + $0x28] sm:$0xff]
          %v226 = vld [vmem:[#allocation6 + $0x30] sm:$0xff]
          %v227 = vld [vmem:[#allocation6 + $0x38] sm:$0xff]
          %v228 = vld [vmem:[#allocation6 + $0x40] sm:$0xff]
          %v229 = vld [vmem:[#allocation6 + $0x48] sm:$0xff]
          %v230 = vld [vmem:[#allocation6 + $0x50] sm:$0xff]
          %v231 = vld [vmem:[#allocation6 + $0x58] sm:$0xff]
          %v232 = vld [vmem:[#allocation6 + $0x60] sm:$0xff]
          %v233 = vld [vmem:[#allocation6 + $0x68] sm:$0xff]
          %v234 = vld [vmem:[#allocation6 + $0x70] sm:$0xff]
          %v235 = vld [vmem:[#allocation6 + $0x78] sm:$0xff]
          %v236 = vld [vmem:[#allocation6 + $0x80] sm:$0xff]
          %v237 = vld [vmem:[#allocation6 + $0x88] sm:$0xff]
          %v238 = vld [vmem:[#allocation6 + $0x90] sm:$0xff]
          %v239 = vld [vmem:[#allocation6 + $0x98] sm:$0xff]
          %v240 = vld [vmem:[#allocation6 + $0xa0] sm:$0xff]
          %v241 = vld [vmem:[#allocation6 + $0xa8] sm:$0xff]
          %v242 = vld [vmem:[#allocation6 + $0xb0] sm:$0xff]
          %v243 = vld [vmem:[#allocation6 + $0xb8] sm:$0xff]
          %v244 = vld [vmem:[#allocation6 + $0xc0] sm:$0xff]
          %v245 = vld [vmem:[#allocation6 + $0xc8] sm:$0xff]
          %v246 = vld [vmem:[#allocation6 + $0xd0] sm:$0xff]
          %v247 = vld [vmem:[#allocation6 + $0xd8] sm:$0xff]
          %v248 = vld [vmem:[#allocation6 + $0xe0] sm:$0xff]
          %v249 = vld [vmem:[#allocation6 + $0xe8] sm:$0xff]
          %v250 = vld [vmem:[#allocation6 + $0xf0] sm:$0xff]
          %v251 = vld [vmem:[#allocation6 + $0xf8] sm:$0xff]
          %v252 = vld [vmem:[#allocation6 + $0x100] sm:$0xff]
          %v253 = vld [vmem:[#allocation6 + $0x108] sm:$0xff]
          %v254 = vld [vmem:[#allocation6 + $0x110] sm:$0xff]
          %v255 = vld [vmem:[#allocation6 + $0x118] sm:$0xff]
          %v256 = vld [vmem:[#allocation6 + $0x120] sm:$0xff]
          %v257 = vld [vmem:[#allocation6 + $0x128] sm:$0xff]
          %v258 = vld [vmem:[#allocation6 + $0x130] sm:$0xff]
          %v259 = vld [vmem:[#allocation6 + $0x138] sm:$0xff]
          %v260 = vld [vmem:[#allocation6 + $0x140] sm:$0xff]
          %v261 = vld [vmem:[#allocation6 + $0x148] sm:$0xff]
          %v262 = vld [vmem:[#allocation6 + $0x150] sm:$0xff]
          %v263 = vld [vmem:[#allocation6 + $0x158] sm:$0xff]
          %v264 = vld [vmem:[#allocation6 + $0x160] sm:$0xff]
          %v265 = vld [vmem:[#allocation6 + $0x168] sm:$0xff]
          %v266 = vld [vmem:[#allocation6 + $0x170] sm:$0xff]
          %v267 = vld [vmem:[#allocation6 + $0x178] sm:$0xff]
          %v268 = vld [vmem:[#allocation6 + $0x180] sm:$0xff]
          %v269 = vld [vmem:[#allocation6 + $0x188] sm:$0xff]
          %v270 = vld [vmem:[#allocation6 + $0x190] sm:$0xff]
          %v271 = vld [vmem:[#allocation6 + $0x198] sm:$0xff]
          %v272 = vld [vmem:[#allocation6 + $0x1a0] sm:$0xff]
          %v273 = vld [vmem:[#allocation6 + $0x1a8] sm:$0xff]
          %v274 = vld [vmem:[#allocation6 + $0x1b0] sm:$0xff]
          %v275 = vld [vmem:[#allocation6 + $0x1b8] sm:$0xff]
          %v276 = vld [vmem:[#allocation6 + $0x1c0] sm:$0xff]
          %v277 = vld [vmem:[#allocation6 + $0x1c8] sm:$0xff]
          %v278 = vld [vmem:[#allocation6 + $0x1d0] sm:$0xff]
          %v279 = vld [vmem:[#allocation6 + $0x1d8] sm:$0xff]
          %v280 = vld [vmem:[#allocation6 + $0x1e0] sm:$0xff]
          %v281 = vld [vmem:[#allocation6 + $0x1e8] sm:$0xff]
          %v282 = vld [vmem:[#allocation6 + $0x1f0] sm:$0xff]
          %v283 = vld [vmem:[#allocation6 + $0x1f8] sm:$0xff]
          %v284 = vld [vmem:[#allocation6 + $0x200] sm:$0xff]
          %v285 = vld [vmem:[#allocation6 + $0x208] sm:$0xff]
          %v286 = vld [vmem:[#allocation6 + $0x210] sm:$0xff]
          %v287 = vld [vmem:[#allocation6 + $0x218] sm:$0xff]
          %v288 = vld [vmem:[#allocation6 + $0x220] sm:$0xff]
          %v289 = vld [vmem:[#allocation6 + $0x228] sm:$0xff]
          %v290 = vld [vmem:[#allocation6 + $0x230] sm:$0xff]
          %v291 = vld [vmem:[#allocation6 + $0x238] sm:$0xff]
          %v292 = vld [vmem:[#allocation6 + $0x240] sm:$0xff]
          %v293 = vld [vmem:[#allocation6 + $0x248] sm:$0xff]
          %v294 = vld [vmem:[#allocation6 + $0x250] sm:$0xff]
          %v295 = vld [vmem:[#allocation6 + $0x258] sm:$0xff]
          %v296 = vld [vmem:[#allocation6 + $0x260] sm:$0xff]
          %v297 = vld [vmem:[#allocation6 + $0x268] sm:$0xff]
          %v298 = vld [vmem:[#allocation6 + $0x270] sm:$0xff]
          %v299 = vld [vmem:[#allocation6 + $0x278] sm:$0xff]
          %v300 = vld [vmem:[#allocation6 + $0x280] sm:$0xff]
          %v301 = vld [vmem:[#allocation6 + $0x288] sm:$0xff]
          %v302 = vld [vmem:[#allocation6 + $0x290] sm:$0xff]
          %v303 = vld [vmem:[#allocation6 + $0x298] sm:$0xff]
          %v304 = vld [vmem:[#allocation6 + $0x2a0] sm:$0xff]
          %v305 = vld [vmem:[#allocation6 + $0x2a8] sm:$0xff]
          %v306 = vld [vmem:[#allocation6 + $0x2b0] sm:$0xff]
          %v307 = vld [vmem:[#allocation6 + $0x2b8] sm:$0xff]
          %v308 = vld [vmem:[#allocation6 + $0x2c0] sm:$0xff]
          %v309 = vld [vmem:[#allocation6 + $0x2c8] sm:$0xff]
          %v310 = vld [vmem:[#allocation6 + $0x2d0] sm:$0xff]
          %v311 = vld [vmem:[#allocation6 + $0x2d8] sm:$0xff]
          %v312 = vld [vmem:[#allocation6 + $0x2e0] sm:$0xff]
          %v313 = vld [vmem:[#allocation6 + $0x2e8] sm:$0xff]
          %v314 = vld [vmem:[#allocation6 + $0x2f0] sm:$0xff]
          %v315 = vld [vmem:[#allocation6 + $0x2f8] sm:$0xff]
          %v316 = vld [vmem:[#allocation6 + $0x300] sm:$0xff]
          %v317 = vld [vmem:[#allocation6 + $0x308] sm:$0xff]
          %v318 = vld [vmem:[#allocation6 + $0x310] sm:$0xff]
          %v319 = vld [vmem:[#allocation6 + $0x318] sm:$0xff]
          %v320 = vld [vmem:[#allocation6 + $0x320] sm:$0xff]
          %v321 = vld [vmem:[#allocation6 + $0x328] sm:$0xff]
          %v322 = vld [vmem:[#allocation6 + $0x330] sm:$0xff]
          %v323 = vld [vmem:[#allocation6 + $0x338] sm:$0xff]
          %v324 = vld [vmem:[#allocation6 + $0x340] sm:$0xff]
          %v325 = vld [vmem:[#allocation6 + $0x348] sm:$0xff]
          %v326 = vld [vmem:[#allocation6 + $0x350] sm:$0xff]
          %v327 = vld [vmem:[#allocation6 + $0x358] sm:$0xff]
          %v328 = vld [vmem:[#allocation6 + $0x360] sm:$0xff]
          %v329 = vld [vmem:[#allocation6 + $0x368] sm:$0xff]
          %v330 = vld [vmem:[#allocation6 + $0x370] sm:$0xff]
          %v331 = vld [vmem:[#allocation6 + $0x378] sm:$0xff]
          %v332 = vld [vmem:[#allocation6 + $0x380] sm:$0xff]
          %v333 = vld [vmem:[#allocation6 + $0x388] sm:$0xff]
          %v334 = vld [vmem:[#allocation6 + $0x390] sm:$0xff]
          %v335 = vld [vmem:[#allocation6 + $0x398] sm:$0xff]
          %v336 = vld [vmem:[#allocation6 + $0x3a0] sm:$0xff]
          %v337 = vld [vmem:[#allocation6 + $0x3a8] sm:$0xff]
          %v338 = vld [vmem:[#allocation6 + $0x3b0] sm:$0xff]
          %v339 = vld [vmem:[#allocation6 + $0x3b8] sm:$0xff]
          %v340 = vld [vmem:[#allocation6 + $0x3c0] sm:$0xff]
          %v341 = vld [vmem:[#allocation6 + $0x3c8] sm:$0xff]
          %v342 = vld [vmem:[#allocation6 + $0x3d0] sm:$0xff]
          %v343 = vld [vmem:[#allocation6 + $0x3d8] sm:$0xff]
          %v344 = vld [vmem:[#allocation6 + $0x3e0] sm:$0xff]
          %v345 = vld [vmem:[#allocation6 + $0x3e8] sm:$0xff]
          %v346 = vld [vmem:[#allocation6 + $0x3f0] sm:$0xff]
          %v347 = vld [vmem:[#allocation6 + $0x3f8] sm:$0xff]
          %vm348 = vcmask 523264
          %v350 = vsel %vm348, %v218, 0
          %v353 = vsel %vm348, %v219, 0
          %355 = vmatprep.subr.mxu0 %v221
          %356 = vmatpush1.msra.mxu0 %v220
          %357 = vmatprep.subr.mxu0 %v237
          %358 = vmatpush1.msra.mxu0 %v236
          %359 = vmatprep.subr.mxu0 %v253
          %360 = vmatpush1.msra.mxu0 %v252
          %361 = vmatprep.subr.mxu0 %v269
          %362 = vmatpush1.msra.mxu0 %v268
          %363 = vmatprep.subr.mxu0 %v285
          %364 = vmatpush1.msra.mxu0 %v284
          %365 = vmatprep.subr.mxu0 %v301
          %366 = vmatpush1.msra.mxu0 %v300
          %367 = vmatprep.subr.mxu0 %v317
          %368 = vmatpush1.msra.mxu0 %v316
          %369 = vmatprep.subr.mxu0 %v333
          %370 = vmatpush1.msra.mxu0 %v332
          %371 = vmatprep.subr.mxu0 0.0
          %372 = vmatpush1.msra.mxu0 0.0
          %373 = vmatprep.subr.mxu0 0.0
          %374 = vmatpush1.msra.mxu0 0.0
          %375 = vmatprep.subr.mxu0 0.0
          %376 = vmatpush1.msra.mxu0 0.0
          %377 = vmatprep.subr.mxu0 0.0
          %378 = vmatpush1.msra.mxu0 0.0
          %379 = vmatprep.subr.mxu0 0.0
          %380 = vmatpush1.msra.mxu0 0.0
          %381 = vmatprep.subr.mxu0 0.0
          %382 = vmatpush1.msra.mxu0 0.0
          %383 = vmatprep.subr.mxu0 0.0
          %384 = vmatpush1.msra.mxu0 0.0
          %385 = vmatprep.subr.mxu0 0.0
          %386 = vmatpush1.msra.mxu0 0.0
          %387 = vmatprep.subr.mxu0 0.0
          %388 = vmatpush1.msra.mxu0 0.0
          %389 = vmatprep.subr.mxu0 0.0
          %390 = vmatpush1.msra.mxu0 0.0
          %391 = vmatprep.subr.mxu0 0.0
          %392 = vmatpush1.msra.mxu0 0.0
          %393 = vmatprep.subr.mxu0 0.0
          %394 = vmatpush1.msra.mxu0 0.0
          %395 = vmatprep.subr.mxu0 0.0
          %396 = vmatpush1.msra.mxu0 0.0
          %397 = vmatprep.subr.mxu0 0.0
          %398 = vmatpush1.msra.mxu0 0.0
          %399 = vmatprep.subr.mxu0 0.0
          %400 = vmatpush1.msra.mxu0 0.0
          %401 = vmatprep.subr.mxu0 0.0
          %402 = vmatpush1.msra.mxu0 0.0
          %403 = vmatprep.subr.mxu0 0.0
          %404 = vmatpush1.msra.mxu0 0.0
          %405 = vmatprep.subr.mxu0 0.0
          %406 = vmatpush1.msra.mxu0 0.0
          %407 = vmatprep.subr.mxu0 0.0
          %408 = vmatpush1.msra.mxu0 0.0
          %409 = vmatprep.subr.mxu0 0.0
          %410 = vmatpush1.msra.mxu0 0.0
          %411 = vmatprep.subr.mxu0 0.0
          %412 = vmatpush1.msra.mxu0 0.0
          %413 = vmatprep.subr.mxu0 0.0
          %414 = vmatpush1.msra.mxu0 0.0
          %415 = vmatprep.subr.mxu0 0.0
          %416 = vmatpush1.msra.mxu0 0.0
          %417 = vmatprep.subr.mxu0 0.0
          %418 = vmatpush1.msra.mxu0 0.0
          %419 = vmatprep.mubr.f32.mxu0 0.0
          %420 = vmatmul.mubr.f32.gmra.mrb[0].mxu0 %v350
          %v421 = vpop.f32.mrb[0].mxu0
          %v422 = vadd.f32 0.0, %v421
          %v423 = vpop.f32.mrb[0].mxu0
          %v424 = vadd.f32 0.0, %v423
          %425 = vmatprep.mubr.f32.mxu0 0.0
          %426 = vmatmul.mubr.f32.gmra.mrb[0].mxu0 %v353
          %v427 = vpop.f32.mrb[0].mxu0
          %v428 = vadd.f32 0.0, %v427
          %v429 = vpop.f32.mrb[0].mxu0
          %v430 = vadd.f32 0.0, %v429
          %431 = vdwg.mxu0
          %432 = vmatprep.subr.mxu0 %v223
          %433 = vmatpush1.msra.mxu0 %v222
          %434 = vmatprep.subr.mxu0 %v239
          %435 = vmatpush1.msra.mxu0 %v238
          %436 = vmatprep.subr.mxu0 %v255
          %437 = vmatpush1.msra.mxu0 %v254
          %438 = vmatprep.subr.mxu0 %v271
          %439 = vmatpush1.msra.mxu0 %v270
          %440 = vmatprep.subr.mxu0 %v287
          %441 = vmatpush1.msra.mxu0 %v286
          %442 = vmatprep.subr.mxu0 %v303
          %443 = vmatpush1.msra.mxu0 %v302
          %444 = vmatprep.subr.mxu0 %v319
          %445 = vmatpush1.msra.mxu0 %v318
          %446 = vmatprep.subr.mxu0 %v335
          %447 = vmatpush1.msra.mxu0 %v334
          %448 = vmatprep.subr.mxu0 0.0
          %449 = vmatpush1.msra.mxu0 0.0
          %450 = vmatprep.subr.mxu0 0.0
          %451 = vmatpush1.msra.mxu0 0.0
          %452 = vmatprep.subr.mxu0 0.0
          %453 = vmatpush1.msra.mxu0 0.0
          %454 = vmatprep.subr.mxu0 0.0
          %455 = vmatpush1.msra.mxu0 0.0
          %456 = vmatprep.subr.mxu0 0.0
          %457 = vmatpush1.msra.mxu0 0.0
          %458 = vmatprep.subr.mxu0 0.0
          %459 = vmatpush1.msra.mxu0 0.0
          %460 = vmatprep.subr.mxu0 0.0
          %461 = vmatpush1.msra.mxu0 0.0
          %462 = vmatprep.subr.mxu0 0.0
          %463 = vmatpush1.msra.mxu0 0.0
          %464 = vmatprep.subr.mxu0 0.0
          %465 = vmatpush1.msra.mxu0 0.0
          %466 = vmatprep.subr.mxu0 0.0
          %467 = vmatpush1.msra.mxu0 0.0
          %468 = vmatprep.subr.mxu0 0.0
          %469 = vmatpush1.msra.mxu0 0.0
          %470 = vmatprep.subr.mxu0 0.0
          %471 = vmatpush1.msra.mxu0 0.0
          %472 = vmatprep.subr.mxu0 0.0
          %473 = vmatpush1.msra.mxu0 0.0
          %474 = vmatprep.subr.mxu0 0.0
          %475 = vmatpush1.msra.mxu0 0.0
          %476 = vmatprep.subr.mxu0 0.0
          %477 = vmatpush1.msra.mxu0 0.0
          %478 = vmatprep.subr.mxu0 0.0
          %479 = vmatpush1.msra.mxu0 0.0
          %480 = vmatprep.subr.mxu0 0.0
          %481 = vmatpush1.msra.mxu0 0.0
          %482 = vmatprep.subr.mxu0 0.0
          %483 = vmatpush1.msra.mxu0 0.0
          %484 = vmatprep.subr.mxu0 0.0
          %485 = vmatpush1.msra.mxu0 0.0
          %486 = vmatprep.subr.mxu0 0.0
          %487 = vmatpush1.msra.mxu0 0.0
          %488 = vmatprep.subr.mxu0 0.0
          %489 = vmatpush1.msra.mxu0 0.0
          %490 = vmatprep.subr.mxu0 0.0
          %491 = vmatpush1.msra.mxu0 0.0
          %492 = vmatprep.subr.mxu0 0.0
          %493 = vmatpush1.msra.mxu0 0.0
          %494 = vmatprep.subr.mxu0 0.0
          %495 = vmatpush1.msra.mxu0 0.0
          %496 = vmatprep.mubr.f32.mxu0 0.0
          %497 = vmatmul.mubr.f32.gmra.mrb[0].mxu0 %v350
          %v498 = vpop.f32.mrb[0].mxu0
          %v499 = vadd.f32 0.0, %v498
          %v500 = vpop.f32.mrb[0].mxu0
          %v501 = vadd.f32 0.0, %v500
          %502 = vmatprep.mubr.f32.mxu0 0.0
          %503 = vmatmul.mubr.f32.gmra.mrb[0].mxu0 %v353
          %v504 = vpop.f32.mrb[0].mxu0
          %v505 = vadd.f32 0.0, %v504
          %v506 = vpop.f32.mrb[0].mxu0
          %v507 = vadd.f32 0.0, %v506
          %508 = vdwg.mxu0
          %509 = vmatprep.subr.mxu0 %v225
          %510 = vmatpush1.msra.mxu0 %v224
          %511 = vmatprep.subr.mxu0 %v241
          %512 = vmatpush1.msra.mxu0 %v240
          %513 = vmatprep.subr.mxu0 %v257
          %514 = vmatpush1.msra.mxu0 %v256
          %515 = vmatprep.subr.mxu0 %v273
          %516 = vmatpush1.msra.mxu0 %v272
          %517 = vmatprep.subr.mxu0 %v289
          %518 = vmatpush1.msra.mxu0 %v288
          %519 = vmatprep.subr.mxu0 %v305
          %520 = vmatpush1.msra.mxu0 %v304
          %521 = vmatprep.subr.mxu0 %v321
          %522 = vmatpush1.msra.mxu0 %v320
          %523 = vmatprep.subr.mxu0 %v337
          %524 = vmatpush1.msra.mxu0 %v336
          %525 = vmatprep.subr.mxu0 0.0
          %526 = vmatpush1.msra.mxu0 0.0
          %527 = vmatprep.subr.mxu0 0.0
          %528 = vmatpush1.msra.mxu0 0.0
          %529 = vmatprep.subr.mxu0 0.0
          %530 = vmatpush1.msra.mxu0 0.0
          %531 = vmatprep.subr.mxu0 0.0
          %532 = vmatpush1.msra.mxu0 0.0
          %533 = vmatprep.subr.mxu0 0.0
          %534 = vmatpush1.msra.mxu0 0.0
          %535 = vmatprep.subr.mxu0 0.0
          %536 = vmatpush1.msra.mxu0 0.0
          %537 = vmatprep.subr.mxu0 0.0
          %538 = vmatpush1.msra.mxu0 0.0
          %539 = vmatprep.subr.mxu0 0.0
          %540 = vmatpush1.msra.mxu0 0.0
          %541 = vmatprep.subr.mxu0 0.0
          %542 = vmatpush1.msra.mxu0 0.0
          %543 = vmatprep.subr.mxu0 0.0
          %544 = vmatpush1.msra.mxu0 0.0
          %545 = vmatprep.subr.mxu0 0.0
          %546 = vmatpush1.msra.mxu0 0.0
          %547 = vmatprep.subr.mxu0 0.0
          %548 = vmatpush1.msra.mxu0 0.0
          %549 = vmatprep.subr.mxu0 0.0
          %550 = vmatpush1.msra.mxu0 0.0
          %551 = vmatprep.subr.mxu0 0.0
          %552 = vmatpush1.msra.mxu0 0.0
          %553 = vmatprep.subr.mxu0 0.0
          %554 = vmatpush1.msra.mxu0 0.0
          %555 = vmatprep.subr.mxu0 0.0
          %556 = vmatpush1.msra.mxu0 0.0
          %557 = vmatprep.subr.mxu0 0.0
          %558 = vmatpush1.msra.mxu0 0.0
          %559 = vmatprep.subr.mxu0 0.0
          %560 = vmatpush1.msra.mxu0 0.0
          %561 = vmatprep.subr.mxu0 0.0
          %562 = vmatpush1.msra.mxu0 0.0
          %563 = vmatprep.subr.mxu0 0.0
          %564 = vmatpush1.msra.mxu0 0.0
          %565 = vmatprep.subr.mxu0 0.0
          %566 = vmatpush1.msra.mxu0 0.0
          %567 = vmatprep.subr.mxu0 0.0
          %568 = vmatpush1.msra.mxu0 0.0
          %569 = vmatprep.subr.mxu0 0.0
          %570 = vmatpush1.msra.mxu0 0.0
          %571 = vmatprep.subr.mxu0 0.0
          %572 = vmatpush1.msra.mxu0 0.0
          %573 = vmatprep.mubr.f32.mxu0 0.0
          %574 = vmatmul.mubr.f32.gmra.mrb[0].mxu0 %v350
          %v575 = vpop.f32.mrb[0].mxu0
          %v576 = vadd.f32 0.0, %v575
          %v577 = vpop.f32.mrb[0].mxu0
          %v578 = vadd.f32 0.0, %v577
          %579 = vmatprep.mubr.f32.mxu0 0.0
          %580 = vmatmul.mubr.f32.gmra.mrb[0].mxu0 %v353
          %v581 = vpop.f32.mrb[0].mxu0
          %v582 = vadd.f32 0.0, %v581
          %v583 = vpop.f32.mrb[0].mxu0
          %v584 = vadd.f32 0.0, %v583
          %585 = vdwg.mxu0
          %586 = vmatprep.subr.mxu0 %v227
          %587 = vmatpush1.msra.mxu0 %v226
          %588 = vmatprep.subr.mxu0 %v243
          %589 = vmatpush1.msra.mxu0 %v242
          %590 = vmatprep.subr.mxu0 %v259
          %591 = vmatpush1.msra.mxu0 %v258
          %592 = vmatprep.subr.mxu0 %v275
          %593 = vmatpush1.msra.mxu0 %v274
          %594 = vmatprep.subr.mxu0 %v291
          %595 = vmatpush1.msra.mxu0 %v290
          %596 = vmatprep.subr.mxu0 %v307
          %597 = vmatpush1.msra.mxu0 %v306
          %598 = vmatprep.subr.mxu0 %v323
          %599 = vmatpush1.msra.mxu0 %v322
          %600 = vmatprep.subr.mxu0 %v339
          %601 = vmatpush1.msra.mxu0 %v338
          %602 = vmatprep.subr.mxu0 0.0
          %603 = vmatpush1.msra.mxu0 0.0
          %604 = vmatprep.subr.mxu0 0.0
          %605 = vmatpush1.msra.mxu0 0.0
          %606 = vmatprep.subr.mxu0 0.0
          %607 = vmatpush1.msra.mxu0 0.0
          %608 = vmatprep.subr.mxu0 0.0
          %609 = vmatpush1.msra.mxu0 0.0
          %610 = vmatprep.subr.mxu0 0.0
          %611 = vmatpush1.msra.mxu0 0.0
          %612 = vmatprep.subr.mxu0 0.0
          %613 = vmatpush1.msra.mxu0 0.0
          %614 = vmatprep.subr.mxu0 0.0
          %615 = vmatpush1.msra.mxu0 0.0
          %616 = vmatprep.subr.mxu0 0.0
          %617 = vmatpush1.msra.mxu0 0.0
          %618 = vmatprep.subr.mxu0 0.0
          %619 = vmatpush1.msra.mxu0 0.0
          %620 = vmatprep.subr.mxu0 0.0
          %621 = vmatpush1.msra.mxu0 0.0
          %622 = vmatprep.subr.mxu0 0.0
          %623 = vmatpush1.msra.mxu0 0.0
          %624 = vmatprep.subr.mxu0 0.0
          %625 = vmatpush1.msra.mxu0 0.0
          %626 = vmatprep.subr.mxu0 0.0
          %627 = vmatpush1.msra.mxu0 0.0
          %628 = vmatprep.subr.mxu0 0.0
          %629 = vmatpush1.msra.mxu0 0.0
          %630 = vmatprep.subr.mxu0 0.0
          %631 = vmatpush1.msra.mxu0 0.0
          %632 = vmatprep.subr.mxu0 0.0
          %633 = vmatpush1.msra.mxu0 0.0
          %634 = vmatprep.subr.mxu0 0.0
          %635 = vmatpush1.msra.mxu0 0.0
          %636 = vmatprep.subr.mxu0 0.0
          %637 = vmatpush1.msra.mxu0 0.0
          %638 = vmatprep.subr.mxu0 0.0
          %639 = vmatpush1.msra.mxu0 0.0
          %640 = vmatprep.subr.mxu0 0.0
          %641 = vmatpush1.msra.mxu0 0.0
          %642 = vmatprep.subr.mxu0 0.0
          %643 = vmatpush1.msra.mxu0 0.0
          %644 = vmatprep.subr.mxu0 0.0
          %645 = vmatpush1.msra.mxu0 0.0
          %646 = vmatprep.subr.mxu0 0.0
          %647 = vmatpush1.msra.mxu0 0.0
          %648 = vmatprep.subr.mxu0 0.0
          %649 = vmatpush1.msra.mxu0 0.0
          %650 = vmatprep.mubr.f32.mxu0 0.0
          %651 = vmatmul.mubr.f32.gmra.mrb[0].mxu0 %v350
          %v652 = vpop.f32.mrb[0].mxu0
          %v653 = vadd.f32 0.0, %v652
          %v654 = vpop.f32.mrb[0].mxu0
          %v655 = vadd.f32 0.0, %v654
          %656 = vmatprep.mubr.f32.mxu0 0.0
          %657 = vmatmul.mubr.f32.gmra.mrb[0].mxu0 %v353
          %v658 = vpop.f32.mrb[0].mxu0
          %v659 = vadd.f32 0.0, %v658
          %v660 = vpop.f32.mrb[0].mxu0
          %v661 = vadd.f32 0.0, %v660
          %662 = vdwg.mxu0
          %663 = vmatprep.subr.mxu0 %v229
          %664 = vmatpush1.msra.mxu0 %v228
          %665 = vmatprep.subr.mxu0 %v245
          %666 = vmatpush1.msra.mxu0 %v244
          %667 = vmatprep.subr.mxu0 %v261
          %668 = vmatpush1.msra.mxu0 %v260
          %669 = vmatprep.subr.mxu0 %v277
          %670 = vmatpush1.msra.mxu0 %v276
          %671 = vmatprep.subr.mxu0 %v293
          %672 = vmatpush1.msra.mxu0 %v292
          %673 = vmatprep.subr.mxu0 %v309
          %674 = vmatpush1.msra.mxu0 %v308
          %675 = vmatprep.subr.mxu0 %v325
          %676 = vmatpush1.msra.mxu0 %v324
          %677 = vmatprep.subr.mxu0 %v341
          %678 = vmatpush1.msra.mxu0 %v340
          %679 = vmatprep.subr.mxu0 0.0
          %680 = vmatpush1.msra.mxu0 0.0
          %681 = vmatprep.subr.mxu0 0.0
          %682 = vmatpush1.msra.mxu0 0.0
          %683 = vmatprep.subr.mxu0 0.0
          %684 = vmatpush1.msra.mxu0 0.0
          %685 = vmatprep.subr.mxu0 0.0
          %686 = vmatpush1.msra.mxu0 0.0
          %687 = vmatprep.subr.mxu0 0.0
          %688 = vmatpush1.msra.mxu0 0.0
          %689 = vmatprep.subr.mxu0 0.0
          %690 = vmatpush1.msra.mxu0 0.0
          %691 = vmatprep.subr.mxu0 0.0
          %692 = vmatpush1.msra.mxu0 0.0
          %693 = vmatprep.subr.mxu0 0.0
          %694 = vmatpush1.msra.mxu0 0.0
          %695 = vmatprep.subr.mxu0 0.0
          %696 = vmatpush1.msra.mxu0 0.0
          %697 = vmatprep.subr.mxu0 0.0
          %698 = vmatpush1.msra.mxu0 0.0
          %699 = vmatprep.subr.mxu0 0.0
          %700 = vmatpush1.msra.mxu0 0.0
          %701 = vmatprep.subr.mxu0 0.0
          %702 = vmatpush1.msra.mxu0 0.0
          %703 = vmatprep.subr.mxu0 0.0
          %704 = vmatpush1.msra.mxu0 0.0
          %705 = vmatprep.subr.mxu0 0.0
          %706 = vmatpush1.msra.mxu0 0.0
          %707 = vmatprep.subr.mxu0 0.0
          %708 = vmatpush1.msra.mxu0 0.0
          %709 = vmatprep.subr.mxu0 0.0
          %710 = vmatpush1.msra.mxu0 0.0
          %711 = vmatprep.subr.mxu0 0.0
          %712 = vmatpush1.msra.mxu0 0.0
          %713 = vmatprep.subr.mxu0 0.0
          %714 = vmatpush1.msra.mxu0 0.0
          %715 = vmatprep.subr.mxu0 0.0
          %716 = vmatpush1.msra.mxu0 0.0
          %717 = vmatprep.subr.mxu0 0.0
          %718 = vmatpush1.msra.mxu0 0.0
          %719 = vmatprep.subr.mxu0 0.0
          %720 = vmatpush1.msra.mxu0 0.0
          %721 = vmatprep.subr.mxu0 0.0
          %722 = vmatpush1.msra.mxu0 0.0
          %723 = vmatprep.subr.mxu0 0.0
          %724 = vmatpush1.msra.mxu0 0.0
          %725 = vmatprep.subr.mxu0 0.0
          %726 = vmatpush1.msra.mxu0 0.0
          %727 = vmatprep.mubr.f32.mxu0 0.0
          %728 = vmatmul.mubr.f32.gmra.mrb[0].mxu0 %v350
          %v729 = vpop.f32.mrb[0].mxu0
          %v730 = vadd.f32 0.0, %v729
          %v731 = vpop.f32.mrb[0].mxu0
          %v732 = vadd.f32 0.0, %v731
          %733 = vmatprep.mubr.f32.mxu0 0.0
          %734 = vmatmul.mubr.f32.gmra.mrb[0].mxu0 %v353
          %v735 = vpop.f32.mrb[0].mxu0
          %v736 = vadd.f32 0.0, %v735
          %v737 = vpop.f32.mrb[0].mxu0
          %v738 = vadd.f32 0.0, %v737
          %739 = vdwg.mxu0
          %740 = vmatprep.subr.mxu0 %v231
          %741 = vmatpush1.msra.mxu0 %v230
          %742 = vmatprep.subr.mxu0 %v247
          %743 = vmatpush1.msra.mxu0 %v246
          %744 = vmatprep.subr.mxu0 %v263
          %745 = vmatpush1.msra.mxu0 %v262
          %746 = vmatprep.subr.mxu0 %v279
          %747 = vmatpush1.msra.mxu0 %v278
          %748 = vmatprep.subr.mxu0 %v295
          %749 = vmatpush1.msra.mxu0 %v294
          %750 = vmatprep.subr.mxu0 %v311
          %751 = vmatpush1.msra.mxu0 %v310
          %752 = vmatprep.subr.mxu0 %v327
          %753 = vmatpush1.msra.mxu0 %v326
          %754 = vmatprep.subr.mxu0 %v343
          %755 = vmatpush1.msra.mxu0 %v342
          %756 = vmatprep.subr.mxu0 0.0
          %757 = vmatpush1.msra.mxu0 0.0
          %758 = vmatprep.subr.mxu0 0.0
          %759 = vmatpush1.msra.mxu0 0.0
          %760 = vmatprep.subr.mxu0 0.0
          %761 = vmatpush1.msra.mxu0 0.0
          %762 = vmatprep.subr.mxu0 0.0
          %763 = vmatpush1.msra.mxu0 0.0
          %764 = vmatprep.subr.mxu0 0.0
          %765 = vmatpush1.msra.mxu0 0.0
          %766 = vmatprep.subr.mxu0 0.0
          %767 = vmatpush1.msra.mxu0 0.0
          %768 = vmatprep.subr.mxu0 0.0
          %769 = vmatpush1.msra.mxu0 0.0
          %770 = vmatprep.subr.mxu0 0.0
          %771 = vmatpush1.msra.mxu0 0.0
          %772 = vmatprep.subr.mxu0 0.0
          %773 = vmatpush1.msra.mxu0 0.0
          %774 = vmatprep.subr.mxu0 0.0
          %775 = vmatpush1.msra.mxu0 0.0
          %776 = vmatprep.subr.mxu0 0.0
          %777 = vmatpush1.msra.mxu0 0.0
          %778 = vmatprep.subr.mxu0 0.0
          %779 = vmatpush1.msra.mxu0 0.0
          %780 = vmatprep.subr.mxu0 0.0
          %781 = vmatpush1.msra.mxu0 0.0
          %782 = vmatprep.subr.mxu0 0.0
          %783 = vmatpush1.msra.mxu0 0.0
          %784 = vmatprep.subr.mxu0 0.0
          %785 = vmatpush1.msra.mxu0 0.0
          %786 = vmatprep.subr.mxu0 0.0
          %787 = vmatpush1.msra.mxu0 0.0
          %788 = vmatprep.subr.mxu0 0.0
          %789 = vmatpush1.msra.mxu0 0.0
          %790 = vmatprep.subr.mxu0 0.0
          %791 = vmatpush1.msra.mxu0 0.0
          %792 = vmatprep.subr.mxu0 0.0
          %793 = vmatpush1.msra.mxu0 0.0
          %794 = vmatprep.subr.mxu0 0.0
          %795 = vmatpush1.msra.mxu0 0.0
          %796 = vmatprep.subr.mxu0 0.0
          %797 = vmatpush1.msra.mxu0 0.0
          %798 = vmatprep.subr.mxu0 0.0
          %799 = vmatpush1.msra.mxu0 0.0
          %800 = vmatprep.subr.mxu0 0.0
          %801 = vmatpush1.msra.mxu0 0.0
          %802 = vmatprep.subr.mxu0 0.0
          %803 = vmatpush1.msra.mxu0 0.0
          %804 = vmatprep.mubr.f32.mxu0 0.0
          %805 = vmatmul.mubr.f32.gmra.mrb[0].mxu0 %v350
          %v806 = vpop.f32.mrb[0].mxu0
          %v807 = vadd.f32 0.0, %v806
          %v808 = vpop.f32.mrb[0].mxu0
          %v809 = vadd.f32 0.0, %v808
          %810 = vmatprep.mubr.f32.mxu0 0.0
          %811 = vmatmul.mubr.f32.gmra.mrb[0].mxu0 %v353
          %v812 = vpop.f32.mrb[0].mxu0
          %v813 = vadd.f32 0.0, %v812
          %v814 = vpop.f32.mrb[0].mxu0
          %v815 = vadd.f32 0.0, %v814
          %816 = vdwg.mxu0
          %817 = vmatprep.subr.mxu0 %v233
          %818 = vmatpush1.msra.mxu0 %v232
          %819 = vmatprep.subr.mxu0 %v249
          %820 = vmatpush1.msra.mxu0 %v248
          %821 = vmatprep.subr.mxu0 %v265
          %822 = vmatpush1.msra.mxu0 %v264
          %823 = vmatprep.subr.mxu0 %v281
          %824 = vmatpush1.msra.mxu0 %v280
          %825 = vmatprep.subr.mxu0 %v297
          %826 = vmatpush1.msra.mxu0 %v296
          %827 = vmatprep.subr.mxu0 %v313
          %828 = vmatpush1.msra.mxu0 %v312
          %829 = vmatprep.subr.mxu0 %v329
          %830 = vmatpush1.msra.mxu0 %v328
          %831 = vmatprep.subr.mxu0 %v345
          %832 = vmatpush1.msra.mxu0 %v344
          %833 = vmatprep.subr.mxu0 0.0
          %834 = vmatpush1.msra.mxu0 0.0
          %835 = vmatprep.subr.mxu0 0.0
          %836 = vmatpush1.msra.mxu0 0.0
          %837 = vmatprep.subr.mxu0 0.0
          %838 = vmatpush1.msra.mxu0 0.0
          %839 = vmatprep.subr.mxu0 0.0
          %840 = vmatpush1.msra.mxu0 0.0
          %841 = vmatprep.subr.mxu0 0.0
          %842 = vmatpush1.msra.mxu0 0.0
          %843 = vmatprep.subr.mxu0 0.0
          %844 = vmatpush1.msra.mxu0 0.0
          %845 = vmatprep.subr.mxu0 0.0
          %846 = vmatpush1.msra.mxu0 0.0
          %847 = vmatprep.subr.mxu0 0.0
          %848 = vmatpush1.msra.mxu0 0.0
          %849 = vmatprep.subr.mxu0 0.0
          %850 = vmatpush1.msra.mxu0 0.0
          %851 = vmatprep.subr.mxu0 0.0
          %852 = vmatpush1.msra.mxu0 0.0
          %853 = vmatprep.subr.mxu0 0.0
          %854 = vmatpush1.msra.mxu0 0.0
          %855 = vmatprep.subr.mxu0 0.0
          %856 = vmatpush1.msra.mxu0 0.0
          %857 = vmatprep.subr.mxu0 0.0
          %858 = vmatpush1.msra.mxu0 0.0
          %859 = vmatprep.subr.mxu0 0.0
          %860 = vmatpush1.msra.mxu0 0.0
          %861 = vmatprep.subr.mxu0 0.0
          %862 = vmatpush1.msra.mxu0 0.0
          %863 = vmatprep.subr.mxu0 0.0
          %864 = vmatpush1.msra.mxu0 0.0
          %865 = vmatprep.subr.mxu0 0.0
          %866 = vmatpush1.msra.mxu0 0.0
          %867 = vmatprep.subr.mxu0 0.0
          %868 = vmatpush1.msra.mxu0 0.0
          %869 = vmatprep.subr.mxu0 0.0
          %870 = vmatpush1.msra.mxu0 0.0
          %871 = vmatprep.subr.mxu0 0.0
          %872 = vmatpush1.msra.mxu0 0.0
          %873 = vmatprep.subr.mxu0 0.0
          %874 = vmatpush1.msra.mxu0 0.0
          %875 = vmatprep.subr.mxu0 0.0
          %876 = vmatpush1.msra.mxu0 0.0
          %877 = vmatprep.subr.mxu0 0.0
          %878 = vmatpush1.msra.mxu0 0.0
          %879 = vmatprep.subr.mxu0 0.0
          %880 = vmatpush1.msra.mxu0 0.0
          %881 = vmatprep.mubr.f32.mxu0 0.0
          %882 = vmatmul.mubr.f32.gmra.mrb[0].mxu0 %v350
          %v883 = vpop.f32.mrb[0].mxu0
          %v884 = vadd.f32 0.0, %v883
          %v885 = vpop.f32.mrb[0].mxu0
          %v886 = vadd.f32 0.0, %v885
          %887 = vmatprep.mubr.f32.mxu0 0.0
          %888 = vmatmul.mubr.f32.gmra.mrb[0].mxu0 %v353
          %v889 = vpop.f32.mrb[0].mxu0
          %v890 = vadd.f32 0.0, %v889
          %v891 = vpop.f32.mrb[0].mxu0
          %v892 = vadd.f32 0.0, %v891
          %893 = vdwg.mxu0
          %894 = vmatprep.subr.mxu0 %v235
          %895 = vmatpush1.msra.mxu0 %v234
          %896 = vmatprep.subr.mxu0 %v251
          %897 = vmatpush1.msra.mxu0 %v250
          %898 = vmatprep.subr.mxu0 %v267
          %899 = vmatpush1.msra.mxu0 %v266
          %900 = vmatprep.subr.mxu0 %v283
          %901 = vmatpush1.msra.mxu0 %v282
          %902 = vmatprep.subr.mxu0 %v299
          %903 = vmatpush1.msra.mxu0 %v298
          %904 = vmatprep.subr.mxu0 %v315
          %905 = vmatpush1.msra.mxu0 %v314
          %906 = vmatprep.subr.mxu0 %v331
          %907 = vmatpush1.msra.mxu0 %v330
          %908 = vmatprep.subr.mxu0 %v347
          %909 = vmatpush1.msra.mxu0 %v346
          %910 = vmatprep.subr.mxu0 0.0
          %911 = vmatpush1.msra.mxu0 0.0
          %912 = vmatprep.subr.mxu0 0.0
          %913 = vmatpush1.msra.mxu0 0.0
          %914 = vmatprep.subr.mxu0 0.0
          %915 = vmatpush1.msra.mxu0 0.0
          %916 = vmatprep.subr.mxu0 0.0
          %917 = vmatpush1.msra.mxu0 0.0
          %918 = vmatprep.subr.mxu0 0.0
          %919 = vmatpush1.msra.mxu0 0.0
          %920 = vmatprep.subr.mxu0 0.0
          %921 = vmatpush1.msra.mxu0 0.0
          %922 = vmatprep.subr.mxu0 0.0
          %923 = vmatpush1.msra.mxu0 0.0
          %924 = vmatprep.subr.mxu0 0.0
          %925 = vmatpush1.msra.mxu0 0.0
          %926 = vmatprep.subr.mxu0 0.0
          %927 = vmatpush1.msra.mxu0 0.0
          %928 = vmatprep.subr.mxu0 0.0
          %929 = vmatpush1.msra.mxu0 0.0
          %930 = vmatprep.subr.mxu0 0.0
          %931 = vmatpush1.msra.mxu0 0.0
          %932 = vmatprep.subr.mxu0 0.0
          %933 = vmatpush1.msra.mxu0 0.0
          %934 = vmatprep.subr.mxu0 0.0
          %935 = vmatpush1.msra.mxu0 0.0
          %936 = vmatprep.subr.mxu0 0.0
          %937 = vmatpush1.msra.mxu0 0.0
          %938 = vmatprep.subr.mxu0 0.0
          %939 = vmatpush1.msra.mxu0 0.0
          %940 = vmatprep.subr.mxu0 0.0
          %941 = vmatpush1.msra.mxu0 0.0
          %942 = vmatprep.subr.mxu0 0.0
          %943 = vmatpush1.msra.mxu0 0.0
          %944 = vmatprep.subr.mxu0 0.0
          %945 = vmatpush1.msra.mxu0 0.0
          %946 = vmatprep.subr.mxu0 0.0
          %947 = vmatpush1.msra.mxu0 0.0
          %948 = vmatprep.subr.mxu0 0.0
          %949 = vmatpush1.msra.mxu0 0.0
          %950 = vmatprep.subr.mxu0 0.0
          %951 = vmatpush1.msra.mxu0 0.0
          %952 = vmatprep.subr.mxu0 0.0
          %953 = vmatpush1.msra.mxu0 0.0
          %954 = vmatprep.subr.mxu0 0.0
          %955 = vmatpush1.msra.mxu0 0.0
          %956 = vmatprep.subr.mxu0 0.0
          %957 = vmatpush1.msra.mxu0 0.0
          %958 = vmatprep.mubr.f32.mxu0 0.0
          %959 = vmatmul.mubr.f32.gmra.mrb[0].mxu0 %v350
          %v960 = vpop.f32.mrb[0].mxu0
          %v961 = vadd.f32 0.0, %v960
          %v962 = vpop.f32.mrb[0].mxu0
          %v963 = vadd.f32 0.0, %v962
          %964 = vmatprep.mubr.f32.mxu0 0.0
          %965 = vmatmul.mubr.f32.gmra.mrb[0].mxu0 %v353
          %v966 = vpop.f32.mrb[0].mxu0
          %v967 = vadd.f32 0.0, %v966
          %v968 = vpop.f32.mrb[0].mxu0
          %v969 = vadd.f32 0.0, %v968
          %970 = vdwg.mxu0
          %971 = vst [vmem:[#allocation2] sm:$0xff] %v422
          %972 = vst [vmem:[#allocation2 + $0x8] sm:$0xff] %v424
          %973 = vst [vmem:[#allocation2 + $0x10] sm:$0xff] %v499
          %974 = vst [vmem:[#allocation2 + $0x18] sm:$0xff] %v501
          %975 = vst [vmem:[#allocation2 + $0x20] sm:$0xff] %v576
          %976 = vst [vmem:[#allocation2 + $0x28] sm:$0xff] %v578
          %977 = vst [vmem:[#allocation2 + $0x30] sm:$0xff] %v653
          %978 = vst [vmem:[#allocation2 + $0x38] sm:$0xff] %v655
          %979 = vst [vmem:[#allocation2 + $0x40] sm:$0xff] %v730
          %980 = vst [vmem:[#allocation2 + $0x48] sm:$0xff] %v732
          %981 = vst [vmem:[#allocation2 + $0x50] sm:$0xff] %v807
          %982 = vst [vmem:[#allocation2 + $0x58] sm:$0xff] %v809
          %983 = vst [vmem:[#allocation2 + $0x60] sm:$0xff] %v884
          %984 = vst [vmem:[#allocation2 + $0x68] sm:$0xff] %v886
          %985 = vst [vmem:[#allocation2 + $0x70] sm:$0xff] %v961
          %986 = vst [vmem:[#allocation2 + $0x78] sm:$0xff] %v963
          %987 = vst [vmem:[#allocation2 + $0x80] sm:$0xff] %v428
          %988 = vst [vmem:[#allocation2 + $0x88] sm:$0xff] %v430
          %989 = vst [vmem:[#allocation2 + $0x90] sm:$0xff] %v505
          %990 = vst [vmem:[#allocation2 + $0x98] sm:$0xff] %v507
          %991 = vst [vmem:[#allocation2 + $0xa0] sm:$0xff] %v582
          %992 = vst [vmem:[#allocation2 + $0xa8] sm:$0xff] %v584
          %993 = vst [vmem:[#allocation2 + $0xb0] sm:$0xff] %v659
          %994 = vst [vmem:[#allocation2 + $0xb8] sm:$0xff] %v661
          %995 = vst [vmem:[#allocation2 + $0xc0] sm:$0xff] %v736
          %996 = vst [vmem:[#allocation2 + $0xc8] sm:$0xff] %v738
          %997 = vst [vmem:[#allocation2 + $0xd0] sm:$0xff] %v813
          %998 = vst [vmem:[#allocation2 + $0xd8] sm:$0xff] %v815
          %999 = vst [vmem:[#allocation2 + $0xe0] sm:$0xff] %v890
          %1000 = vst [vmem:[#allocation2 + $0xe8] sm:$0xff] %v892
          %1001 = vst [vmem:[#allocation2 + $0xf0] sm:$0xff] %v967
          %1002 = vst [vmem:[#allocation2 + $0xf8] sm:$0xff] %v969
          %v1003 = vld [vmem:[#allocation2] sm:$0xff]
          %v1004 = vld [vmem:[#allocation2 + $0x80] sm:$0xff]
          %vm1005 = vcmask 261120
          %1006 = vst.msk [vmem:[#allocation3] sm:$0xff] %vm1005, %v1003
          %1007 = vst.msk [vmem:[#allocation3 + $0x8] sm:$0xff] %vm1005, %v1004
          %v1008 = vld [vmem:[#allocation2] sm:$0xff]
          %v1009 = vld [vmem:[#allocation2 + $0x80] sm:$0xff]
          %1012 = vrot.lane.b32.xlu0 %v1008, 96
          %v1013 = vpop.permute.xlu0 %1012
          %1014 = vrot.lane.b32.xlu0 %v1009, 96
          %v1015 = vpop.permute.xlu0 %1014
          %1018 = vst.msk [vmem:[#allocation3 + $0x10] sm:$0xff] %vm1005, %v1013
          %1019 = vst.msk [vmem:[#allocation3 + $0x18] sm:$0xff] %vm1005, %v1015
          %v1020 = vld [vmem:[#allocation2] sm:$0xff]
          %v1021 = vld [vmem:[#allocation2 + $0x80] sm:$0xff]
          %1024 = vrot.lane.b32.xlu0 %v1020, 64
          %v1025 = vpop.permute.xlu0 %1024
          %1026 = vrot.lane.b32.xlu0 %v1021, 64
          %v1027 = vpop.permute.xlu0 %1026
          %1030 = vst.msk [vmem:[#allocation3 + $0x20] sm:$0xff] %vm1005, %v1025
          %1031 = vst.msk [vmem:[#allocation3 + $0x28] sm:$0xff] %vm1005, %v1027
          %v1032 = vld [vmem:[#allocation2] sm:$0xff]
          %v1033 = vld [vmem:[#allocation2 + $0x80] sm:$0xff]
          %1036 = vrot.lane.b32.xlu0 %v1032, 32
          %v1037 = vpop.permute.xlu0 %1036
          %1038 = vrot.lane.b32.xlu0 %v1033, 32
          %v1039 = vpop.permute.xlu0 %1038
          %1042 = vst.msk [vmem:[#allocation3 + $0x30] sm:$0xff] %vm1005, %v1037
          %1043 = vst.msk [vmem:[#allocation3 + $0x38] sm:$0xff] %vm1005, %v1039
          %v1044 = vld [vmem:[#allocation2 + $0x8] sm:$0xff]
          %v1045 = vld [vmem:[#allocation2 + $0x88] sm:$0xff]
          %1046 = vst.msk [vmem:[#allocation3 + $0x40] sm:$0xff] %vm1005, %v1044
          %1047 = vst.msk [vmem:[#allocation3 + $0x48] sm:$0xff] %vm1005, %v1045
          %v1048 = vld [vmem:[#allocation2 + $0x8] sm:$0xff]
          %v1049 = vld [vmem:[#allocation2 + $0x88] sm:$0xff]
          %1052 = vrot.lane.b32.xlu0 %v1048, 96
          %v1053 = vpop.permute.xlu0 %1052
          %1054 = vrot.lane.b32.xlu0 %v1049, 96
          %v1055 = vpop.permute.xlu0 %1054
          %1058 = vst.msk [vmem:[#allocation3 + $0x50] sm:$0xff] %vm1005, %v1053
          %1059 = vst.msk [vmem:[#allocation3 + $0x58] sm:$0xff] %vm1005, %v1055
          %v1060 = vld [vmem:[#allocation2 + $0x8] sm:$0xff]
          %v1061 = vld [vmem:[#allocation2 + $0x88] sm:$0xff]
          %1064 = vrot.lane.b32.xlu0 %v1060, 64
          %v1065 = vpop.permute.xlu0 %1064
          %1066 = vrot.lane.b32.xlu0 %v1061, 64
          %v1067 = vpop.permute.xlu0 %1066
          %1070 = vst.msk [vmem:[#allocation3 + $0x60] sm:$0xff] %vm1005, %v1065
          %1071 = vst.msk [vmem:[#allocation3 + $0x68] sm:$0xff] %vm1005, %v1067
          %v1072 = vld [vmem:[#allocation2 + $0x8] sm:$0xff]
          %v1073 = vld [vmem:[#allocation2 + $0x88] sm:$0xff]
          %1076 = vrot.lane.b32.xlu0 %v1072, 32
          %v1077 = vpop.permute.xlu0 %1076
          %1078 = vrot.lane.b32.xlu0 %v1073, 32
          %v1079 = vpop.permute.xlu0 %1078
          %1082 = vst.msk [vmem:[#allocation3 + $0x70] sm:$0xff] %vm1005, %v1077
          %1083 = vst.msk [vmem:[#allocation3 + $0x78] sm:$0xff] %vm1005, %v1079
          %v1084 = vld [vmem:[#allocation2 + $0x10] sm:$0xff]
          %v1085 = vld [vmem:[#allocation2 + $0x90] sm:$0xff]
          %1086 = vst.msk [vmem:[#allocation3 + $0x80] sm:$0xff] %vm1005, %v1084
          %1087 = vst.msk [vmem:[#allocation3 + $0x88] sm:$0xff] %vm1005, %v1085
          %v1088 = vld [vmem:[#allocation2 + $0x10] sm:$0xff]
          %v1089 = vld [vmem:[#allocation2 + $0x90] sm:$0xff]
          %1092 = vrot.lane.b32.xlu0 %v1088, 96
          %v1093 = vpop.permute.xlu0 %1092
          %1094 = vrot.lane.b32.xlu0 %v1089, 96
          %v1095 = vpop.permute.xlu0 %1094
          %1098 = vst.msk [vmem:[#allocation3 + $0x90] sm:$0xff] %vm1005, %v1093
          %1099 = vst.msk [vmem:[#allocation3 + $0x98] sm:$0xff] %vm1005, %v1095
          %v1100 = vld [vmem:[#allocation2 + $0x10] sm:$0xff]
          %v1101 = vld [vmem:[#allocation2 + $0x90] sm:$0xff]
          %1104 = vrot.lane.b32.xlu0 %v1100, 64
          %v1105 = vpop.permute.xlu0 %1104
          %1106 = vrot.lane.b32.xlu0 %v1101, 64
          %v1107 = vpop.permute.xlu0 %1106
          %1110 = vst.msk [vmem:[#allocation3 + $0xa0] sm:$0xff] %vm1005, %v1105
          %1111 = vst.msk [vmem:[#allocation3 + $0xa8] sm:$0xff] %vm1005, %v1107
          %v1112 = vld [vmem:[#allocation2 + $0x10] sm:$0xff]
          %v1113 = vld [vmem:[#allocation2 + $0x90] sm:$0xff]
          %1116 = vrot.lane.b32.xlu0 %v1112, 32
          %v1117 = vpop.permute.xlu0 %1116
          %1118 = vrot.lane.b32.xlu0 %v1113, 32
          %v1119 = vpop.permute.xlu0 %1118
          %1122 = vst.msk [vmem:[#allocation3 + $0xb0] sm:$0xff] %vm1005, %v1117
          %1123 = vst.msk [vmem:[#allocation3 + $0xb8] sm:$0xff] %vm1005, %v1119
          %v1124 = vld [vmem:[#allocation2 + $0x18] sm:$0xff]
          %v1125 = vld [vmem:[#allocation2 + $0x98] sm:$0xff]
          %1126 = vst.msk [vmem:[#allocation3 + $0xc0] sm:$0xff] %vm1005, %v1124
          %1127 = vst.msk [vmem:[#allocation3 + $0xc8] sm:$0xff] %vm1005, %v1125
          %v1128 = vld [vmem:[#allocation2 + $0x18] sm:$0xff]
          %v1129 = vld [vmem:[#allocation2 + $0x98] sm:$0xff]
          %1132 = vrot.lane.b32.xlu0 %v1128, 96
          %v1133 = vpop.permute.xlu0 %1132
          %1134 = vrot.lane.b32.xlu0 %v1129, 96
          %v1135 = vpop.permute.xlu0 %1134
          %1138 = vst.msk [vmem:[#allocation3 + $0xd0] sm:$0xff] %vm1005, %v1133
          %1139 = vst.msk [vmem:[#allocation3 + $0xd8] sm:$0xff] %vm1005, %v1135
          %v1140 = vld [vmem:[#allocation2 + $0x18] sm:$0xff]
          %v1141 = vld [vmem:[#allocation2 + $0x98] sm:$0xff]
          %1144 = vrot.lane.b32.xlu0 %v1140, 64
          %v1145 = vpop.permute.xlu0 %1144
          %1146 = vrot.lane.b32.xlu0 %v1141, 64
          %v1147 = vpop.permute.xlu0 %1146
          %1150 = vst.msk [vmem:[#allocation3 + $0xe0] sm:$0xff] %vm1005, %v1145
          %1151 = vst.msk [vmem:[#allocation3 + $0xe8] sm:$0xff] %vm1005, %v1147
          %v1152 = vld [vmem:[#allocation2 + $0x18] sm:$0xff]
          %v1153 = vld [vmem:[#allocation2 + $0x98] sm:$0xff]
          %1156 = vrot.lane.b32.xlu0 %v1152, 32
          %v1157 = vpop.permute.xlu0 %1156
          %1158 = vrot.lane.b32.xlu0 %v1153, 32
          %v1159 = vpop.permute.xlu0 %1158
          %1162 = vst.msk [vmem:[#allocation3 + $0xf0] sm:$0xff] %vm1005, %v1157
          %1163 = vst.msk [vmem:[#allocation3 + $0xf8] sm:$0xff] %vm1005, %v1159
          %v1164 = vld [vmem:[#allocation2 + $0x20] sm:$0xff]
          %v1165 = vld [vmem:[#allocation2 + $0xa0] sm:$0xff]
          %1166 = vst.msk [vmem:[#allocation3 + $0x100] sm:$0xff] %vm1005, %v1164
          %1167 = vst.msk [vmem:[#allocation3 + $0x108] sm:$0xff] %vm1005, %v1165
          %v1168 = vld [vmem:[#allocation2 + $0x20] sm:$0xff]
          %v1169 = vld [vmem:[#allocation2 + $0xa0] sm:$0xff]
          %1172 = vrot.lane.b32.xlu0 %v1168, 96
          %v1173 = vpop.permute.xlu0 %1172
          %1174 = vrot.lane.b32.xlu0 %v1169, 96
          %v1175 = vpop.permute.xlu0 %1174
          %1178 = vst.msk [vmem:[#allocation3 + $0x110] sm:$0xff] %vm1005, %v1173
          %1179 = vst.msk [vmem:[#allocation3 + $0x118] sm:$0xff] %vm1005, %v1175
          %v1180 = vld [vmem:[#allocation2 + $0x20] sm:$0xff]
          %v1181 = vld [vmem:[#allocation2 + $0xa0] sm:$0xff]
          %1184 = vrot.lane.b32.xlu0 %v1180, 64
          %v1185 = vpop.permute.xlu0 %1184
          %1186 = vrot.lane.b32.xlu0 %v1181, 64
          %v1187 = vpop.permute.xlu0 %1186
          %1190 = vst.msk [vmem:[#allocation3 + $0x120] sm:$0xff] %vm1005, %v1185
          %1191 = vst.msk [vmem:[#allocation3 + $0x128] sm:$0xff] %vm1005, %v1187
          %v1192 = vld [vmem:[#allocation2 + $0x20] sm:$0xff]
          %v1193 = vld [vmem:[#allocation2 + $0xa0] sm:$0xff]
          %1196 = vrot.lane.b32.xlu0 %v1192, 32
          %v1197 = vpop.permute.xlu0 %1196
          %1198 = vrot.lane.b32.xlu0 %v1193, 32
          %v1199 = vpop.permute.xlu0 %1198
          %1202 = vst.msk [vmem:[#allocation3 + $0x130] sm:$0xff] %vm1005, %v1197
          %1203 = vst.msk [vmem:[#allocation3 + $0x138] sm:$0xff] %vm1005, %v1199
          %v1204 = vld [vmem:[#allocation2 + $0x28] sm:$0xff]
          %v1205 = vld [vmem:[#allocation2 + $0xa8] sm:$0xff]
          %1206 = vst.msk [vmem:[#allocation3 + $0x140] sm:$0xff] %vm1005, %v1204
          %1207 = vst.msk [vmem:[#allocation3 + $0x148] sm:$0xff] %vm1005, %v1205
          %v1208 = vld [vmem:[#allocation2 + $0x28] sm:$0xff]
          %v1209 = vld [vmem:[#allocation2 + $0xa8] sm:$0xff]
          %1212 = vrot.lane.b32.xlu0 %v1208, 96
          %v1213 = vpop.permute.xlu0 %1212
          %1214 = vrot.lane.b32.xlu0 %v1209, 96
          %v1215 = vpop.permute.xlu0 %1214
          %1218 = vst.msk [vmem:[#allocation3 + $0x150] sm:$0xff] %vm1005, %v1213
          %1219 = vst.msk [vmem:[#allocation3 + $0x158] sm:$0xff] %vm1005, %v1215
          %v1220 = vld [vmem:[#allocation2 + $0x28] sm:$0xff]
          %v1221 = vld [vmem:[#allocation2 + $0xa8] sm:$0xff]
          %1224 = vrot.lane.b32.xlu0 %v1220, 64
          %v1225 = vpop.permute.xlu0 %1224
          %1226 = vrot.lane.b32.xlu0 %v1221, 64
          %v1227 = vpop.permute.xlu0 %1226
          %1230 = vst.msk [vmem:[#allocation3 + $0x160] sm:$0xff] %vm1005, %v1225
          %1231 = vst.msk [vmem:[#allocation3 + $0x168] sm:$0xff] %vm1005, %v1227
          %v1232 = vld [vmem:[#allocation2 + $0x28] sm:$0xff]
          %v1233 = vld [vmem:[#allocation2 + $0xa8] sm:$0xff]
          %1236 = vrot.lane.b32.xlu0 %v1232, 32
          %v1237 = vpop.permute.xlu0 %1236
          %1238 = vrot.lane.b32.xlu0 %v1233, 32
          %v1239 = vpop.permute.xlu0 %1238
          %1242 = vst.msk [vmem:[#allocation3 + $0x170] sm:$0xff] %vm1005, %v1237
          %1243 = vst.msk [vmem:[#allocation3 + $0x178] sm:$0xff] %vm1005, %v1239
          %v1244 = vld [vmem:[#allocation2 + $0x30] sm:$0xff]
          %v1245 = vld [vmem:[#allocation2 + $0xb0] sm:$0xff]
          %1246 = vst.msk [vmem:[#allocation3 + $0x180] sm:$0xff] %vm1005, %v1244
          %1247 = vst.msk [vmem:[#allocation3 + $0x188] sm:$0xff] %vm1005, %v1245
          %v1248 = vld [vmem:[#allocation2 + $0x30] sm:$0xff]
          %v1249 = vld [vmem:[#allocation2 + $0xb0] sm:$0xff]
          %1252 = vrot.lane.b32.xlu0 %v1248, 96
          %v1253 = vpop.permute.xlu0 %1252
          %1254 = vrot.lane.b32.xlu0 %v1249, 96
          %v1255 = vpop.permute.xlu0 %1254
          %1258 = vst.msk [vmem:[#allocation3 + $0x190] sm:$0xff] %vm1005, %v1253
          %1259 = vst.msk [vmem:[#allocation3 + $0x198] sm:$0xff] %vm1005, %v1255
          %v1260 = vld [vmem:[#allocation2 + $0x30] sm:$0xff]
          %v1261 = vld [vmem:[#allocation2 + $0xb0] sm:$0xff]
          %1264 = vrot.lane.b32.xlu0 %v1260, 64
          %v1265 = vpop.permute.xlu0 %1264
          %1266 = vrot.lane.b32.xlu0 %v1261, 64
          %v1267 = vpop.permute.xlu0 %1266
          %1270 = vst.msk [vmem:[#allocation3 + $0x1a0] sm:$0xff] %vm1005, %v1265
          %1271 = vst.msk [vmem:[#allocation3 + $0x1a8] sm:$0xff] %vm1005, %v1267
          %v1272 = vld [vmem:[#allocation2 + $0x30] sm:$0xff]
          %v1273 = vld [vmem:[#allocation2 + $0xb0] sm:$0xff]
          %1276 = vrot.lane.b32.xlu0 %v1272, 32
          %v1277 = vpop.permute.xlu0 %1276
          %1278 = vrot.lane.b32.xlu0 %v1273, 32
          %v1279 = vpop.permute.xlu0 %1278
          %1282 = vst.msk [vmem:[#allocation3 + $0x1b0] sm:$0xff] %vm1005, %v1277
          %1283 = vst.msk [vmem:[#allocation3 + $0x1b8] sm:$0xff] %vm1005, %v1279
          %v1284 = vld [vmem:[#allocation2 + $0x38] sm:$0xff]
          %v1285 = vld [vmem:[#allocation2 + $0xb8] sm:$0xff]
          %1286 = vst.msk [vmem:[#allocation3 + $0x1c0] sm:$0xff] %vm1005, %v1284
          %1287 = vst.msk [vmem:[#allocation3 + $0x1c8] sm:$0xff] %vm1005, %v1285
          %v1288 = vld [vmem:[#allocation2 + $0x38] sm:$0xff]
          %v1289 = vld [vmem:[#allocation2 + $0xb8] sm:$0xff]
          %1292 = vrot.lane.b32.xlu0 %v1288, 96
          %v1293 = vpop.permute.xlu0 %1292
          %1294 = vrot.lane.b32.xlu0 %v1289, 96
          %v1295 = vpop.permute.xlu0 %1294
          %1298 = vst.msk [vmem:[#allocation3 + $0x1d0] sm:$0xff] %vm1005, %v1293
          %1299 = vst.msk [vmem:[#allocation3 + $0x1d8] sm:$0xff] %vm1005, %v1295
          %v1300 = vld [vmem:[#allocation2 + $0x38] sm:$0xff]
          %v1301 = vld [vmem:[#allocation2 + $0xb8] sm:$0xff]
          %1304 = vrot.lane.b32.xlu0 %v1300, 64
          %v1305 = vpop.permute.xlu0 %1304
          %1306 = vrot.lane.b32.xlu0 %v1301, 64
          %v1307 = vpop.permute.xlu0 %1306
          %1310 = vst.msk [vmem:[#allocation3 + $0x1e0] sm:$0xff] %vm1005, %v1305
          %1311 = vst.msk [vmem:[#allocation3 + $0x1e8] sm:$0xff] %vm1005, %v1307
          %v1312 = vld [vmem:[#allocation2 + $0x38] sm:$0xff]
          %v1313 = vld [vmem:[#allocation2 + $0xb8] sm:$0xff]
          %1316 = vrot.lane.b32.xlu0 %v1312, 32
          %v1317 = vpop.permute.xlu0 %1316
          %1318 = vrot.lane.b32.xlu0 %v1313, 32
          %v1319 = vpop.permute.xlu0 %1318
          %1322 = vst.msk [vmem:[#allocation3 + $0x1f0] sm:$0xff] %vm1005, %v1317
          %1323 = vst.msk [vmem:[#allocation3 + $0x1f8] sm:$0xff] %vm1005, %v1319
          %v1324 = vld [vmem:[#allocation2 + $0x40] sm:$0xff]
          %v1325 = vld [vmem:[#allocation2 + $0xc0] sm:$0xff]
          %1326 = vst.msk [vmem:[#allocation3 + $0x200] sm:$0xff] %vm1005, %v1324
          %1327 = vst.msk [vmem:[#allocation3 + $0x208] sm:$0xff] %vm1005, %v1325
          %v1328 = vld [vmem:[#allocation2 + $0x40] sm:$0xff]
          %v1329 = vld [vmem:[#allocation2 + $0xc0] sm:$0xff]
          %1332 = vrot.lane.b32.xlu0 %v1328, 96
          %v1333 = vpop.permute.xlu0 %1332
          %1334 = vrot.lane.b32.xlu0 %v1329, 96
          %v1335 = vpop.permute.xlu0 %1334
          %1338 = vst.msk [vmem:[#allocation3 + $0x210] sm:$0xff] %vm1005, %v1333
          %1339 = vst.msk [vmem:[#allocation3 + $0x218] sm:$0xff] %vm1005, %v1335
          %v1340 = vld [vmem:[#allocation2 + $0x40] sm:$0xff]
          %v1341 = vld [vmem:[#allocation2 + $0xc0] sm:$0xff]
          %1344 = vrot.lane.b32.xlu0 %v1340, 64
          %v1345 = vpop.permute.xlu0 %1344
          %1346 = vrot.lane.b32.xlu0 %v1341, 64
          %v1347 = vpop.permute.xlu0 %1346
          %1350 = vst.msk [vmem:[#allocation3 + $0x220] sm:$0xff] %vm1005, %v1345
          %1351 = vst.msk [vmem:[#allocation3 + $0x228] sm:$0xff] %vm1005, %v1347
          %v1352 = vld [vmem:[#allocation2 + $0x40] sm:$0xff]
          %v1353 = vld [vmem:[#allocation2 + $0xc0] sm:$0xff]
          %1356 = vrot.lane.b32.xlu0 %v1352, 32
          %v1357 = vpop.permute.xlu0 %1356
          %1358 = vrot.lane.b32.xlu0 %v1353, 32
          %v1359 = vpop.permute.xlu0 %1358
          %1362 = vst.msk [vmem:[#allocation3 + $0x230] sm:$0xff] %vm1005, %v1357
          %1363 = vst.msk [vmem:[#allocation3 + $0x238] sm:$0xff] %vm1005, %v1359
          %v1364 = vld [vmem:[#allocation2 + $0x48] sm:$0xff]
          %v1365 = vld [vmem:[#allocation2 + $0xc8] sm:$0xff]
          %1366 = vst.msk [vmem:[#allocation3 + $0x240] sm:$0xff] %vm1005, %v1364
          %1367 = vst.msk [vmem:[#allocation3 + $0x248] sm:$0xff] %vm1005, %v1365
          %v1368 = vld [vmem:[#allocation2 + $0x48] sm:$0xff]
          %v1369 = vld [vmem:[#allocation2 + $0xc8] sm:$0xff]
          %1372 = vrot.lane.b32.xlu0 %v1368, 96
          %v1373 = vpop.permute.xlu0 %1372
          %1374 = vrot.lane.b32.xlu0 %v1369, 96
          %v1375 = vpop.permute.xlu0 %1374
          %1378 = vst.msk [vmem:[#allocation3 + $0x250] sm:$0xff] %vm1005, %v1373
          %1379 = vst.msk [vmem:[#allocation3 + $0x258] sm:$0xff] %vm1005, %v1375
          %v1380 = vld [vmem:[#allocation2 + $0x48] sm:$0xff]
          %v1381 = vld [vmem:[#allocation2 + $0xc8] sm:$0xff]
          %1384 = vrot.lane.b32.xlu0 %v1380, 64
          %v1385 = vpop.permute.xlu0 %1384
          %1386 = vrot.lane.b32.xlu0 %v1381, 64
          %v1387 = vpop.permute.xlu0 %1386
          %1390 = vst.msk [vmem:[#allocation3 + $0x260] sm:$0xff] %vm1005, %v1385
          %1391 = vst.msk [vmem:[#allocation3 + $0x268] sm:$0xff] %vm1005, %v1387
          %v1392 = vld [vmem:[#allocation2 + $0x48] sm:$0xff]
          %v1393 = vld [vmem:[#allocation2 + $0xc8] sm:$0xff]
          %1396 = vrot.lane.b32.xlu0 %v1392, 32
          %v1397 = vpop.permute.xlu0 %1396
          %1398 = vrot.lane.b32.xlu0 %v1393, 32
          %v1399 = vpop.permute.xlu0 %1398
          %1402 = vst.msk [vmem:[#allocation3 + $0x270] sm:$0xff] %vm1005, %v1397
          %1403 = vst.msk [vmem:[#allocation3 + $0x278] sm:$0xff] %vm1005, %v1399
          %v1404 = vld [vmem:[#allocation2 + $0x50] sm:$0xff]
          %v1405 = vld [vmem:[#allocation2 + $0xd0] sm:$0xff]
          %1406 = vst.msk [vmem:[#allocation3 + $0x280] sm:$0xff] %vm1005, %v1404
          %1407 = vst.msk [vmem:[#allocation3 + $0x288] sm:$0xff] %vm1005, %v1405
          %v1408 = vld [vmem:[#allocation2 + $0x50] sm:$0xff]
          %v1409 = vld [vmem:[#allocation2 + $0xd0] sm:$0xff]
          %1412 = vrot.lane.b32.xlu0 %v1408, 96
          %v1413 = vpop.permute.xlu0 %1412
          %1414 = vrot.lane.b32.xlu0 %v1409, 96
          %v1415 = vpop.permute.xlu0 %1414
          %1418 = vst.msk [vmem:[#allocation3 + $0x290] sm:$0xff] %vm1005, %v1413
          %1419 = vst.msk [vmem:[#allocation3 + $0x298] sm:$0xff] %vm1005, %v1415
          %v1420 = vld [vmem:[#allocation2 + $0x50] sm:$0xff]
          %v1421 = vld [vmem:[#allocation2 + $0xd0] sm:$0xff]
          %1424 = vrot.lane.b32.xlu0 %v1420, 64
          %v1425 = vpop.permute.xlu0 %1424
          %1426 = vrot.lane.b32.xlu0 %v1421, 64
          %v1427 = vpop.permute.xlu0 %1426
          %1430 = vst.msk [vmem:[#allocation3 + $0x2a0] sm:$0xff] %vm1005, %v1425
          %1431 = vst.msk [vmem:[#allocation3 + $0x2a8] sm:$0xff] %vm1005, %v1427
          %v1432 = vld [vmem:[#allocation2 + $0x50] sm:$0xff]
          %v1433 = vld [vmem:[#allocation2 + $0xd0] sm:$0xff]
          %1436 = vrot.lane.b32.xlu0 %v1432, 32
          %v1437 = vpop.permute.xlu0 %1436
          %1438 = vrot.lane.b32.xlu0 %v1433, 32
          %v1439 = vpop.permute.xlu0 %1438
          %1442 = vst.msk [vmem:[#allocation3 + $0x2b0] sm:$0xff] %vm1005, %v1437
          %1443 = vst.msk [vmem:[#allocation3 + $0x2b8] sm:$0xff] %vm1005, %v1439
          %v1444 = vld [vmem:[#allocation2 + $0x58] sm:$0xff]
          %v1445 = vld [vmem:[#allocation2 + $0xd8] sm:$0xff]
          %1446 = vst.msk [vmem:[#allocation3 + $0x2c0] sm:$0xff] %vm1005, %v1444
          %1447 = vst.msk [vmem:[#allocation3 + $0x2c8] sm:$0xff] %vm1005, %v1445
          %v1448 = vld [vmem:[#allocation2 + $0x58] sm:$0xff]
          %v1449 = vld [vmem:[#allocation2 + $0xd8] sm:$0xff]
          %1452 = vrot.lane.b32.xlu0 %v1448, 96
          %v1453 = vpop.permute.xlu0 %1452
          %1454 = vrot.lane.b32.xlu0 %v1449, 96
          %v1455 = vpop.permute.xlu0 %1454
          %1458 = vst.msk [vmem:[#allocation3 + $0x2d0] sm:$0xff] %vm1005, %v1453
          %1459 = vst.msk [vmem:[#allocation3 + $0x2d8] sm:$0xff] %vm1005, %v1455
          %v1460 = vld [vmem:[#allocation2 + $0x58] sm:$0xff]
          %v1461 = vld [vmem:[#allocation2 + $0xd8] sm:$0xff]
          %1464 = vrot.lane.b32.xlu0 %v1460, 64
          %v1465 = vpop.permute.xlu0 %1464
          %1466 = vrot.lane.b32.xlu0 %v1461, 64
          %v1467 = vpop.permute.xlu0 %1466
          %1470 = vst.msk [vmem:[#allocation3 + $0x2e0] sm:$0xff] %vm1005, %v1465
          %1471 = vst.msk [vmem:[#allocation3 + $0x2e8] sm:$0xff] %vm1005, %v1467
          %v1472 = vld [vmem:[#allocation2 + $0x58] sm:$0xff]
          %v1473 = vld [vmem:[#allocation2 + $0xd8] sm:$0xff]
          %1476 = vrot.lane.b32.xlu0 %v1472, 32
          %v1477 = vpop.permute.xlu0 %1476
          %1478 = vrot.lane.b32.xlu0 %v1473, 32
          %v1479 = vpop.permute.xlu0 %1478
          %1482 = vst.msk [vmem:[#allocation3 + $0x2f0] sm:$0xff] %vm1005, %v1477
          %1483 = vst.msk [vmem:[#allocation3 + $0x2f8] sm:$0xff] %vm1005, %v1479
          %v1484 = vld [vmem:[#allocation2 + $0x60] sm:$0xff]
          %v1485 = vld [vmem:[#allocation2 + $0xe0] sm:$0xff]
          %1486 = vst.msk [vmem:[#allocation3 + $0x300] sm:$0xff] %vm1005, %v1484
          %1487 = vst.msk [vmem:[#allocation3 + $0x308] sm:$0xff] %vm1005, %v1485
          %v1488 = vld [vmem:[#allocation2 + $0x60] sm:$0xff]
          %v1489 = vld [vmem:[#allocation2 + $0xe0] sm:$0xff]
          %1492 = vrot.lane.b32.xlu0 %v1488, 96
          %v1493 = vpop.permute.xlu0 %1492
          %1494 = vrot.lane.b32.xlu0 %v1489, 96
          %v1495 = vpop.permute.xlu0 %1494
          %1498 = vst.msk [vmem:[#allocation3 + $0x310] sm:$0xff] %vm1005, %v1493
          %1499 = vst.msk [vmem:[#allocation3 + $0x318] sm:$0xff] %vm1005, %v1495
          %v1500 = vld [vmem:[#allocation2 + $0x60] sm:$0xff]
          %v1501 = vld [vmem:[#allocation2 + $0xe0] sm:$0xff]
          %1504 = vrot.lane.b32.xlu0 %v1500, 64
          %v1505 = vpop.permute.xlu0 %1504
          %1506 = vrot.lane.b32.xlu0 %v1501, 64
          %v1507 = vpop.permute.xlu0 %1506
          %1510 = vst.msk [vmem:[#allocation3 + $0x320] sm:$0xff] %vm1005, %v1505
          %1511 = vst.msk [vmem:[#allocation3 + $0x328] sm:$0xff] %vm1005, %v1507
          %v1512 = vld [vmem:[#allocation2 + $0x60] sm:$0xff]
          %v1513 = vld [vmem:[#allocation2 + $0xe0] sm:$0xff]
          %1516 = vrot.lane.b32.xlu0 %v1512, 32
          %v1517 = vpop.permute.xlu0 %1516
          %1518 = vrot.lane.b32.xlu0 %v1513, 32
          %v1519 = vpop.permute.xlu0 %1518
          %1522 = vst.msk [vmem:[#allocation3 + $0x330] sm:$0xff] %vm1005, %v1517
          %1523 = vst.msk [vmem:[#allocation3 + $0x338] sm:$0xff] %vm1005, %v1519
          %v1524 = vld [vmem:[#allocation2 + $0x68] sm:$0xff]
          %v1525 = vld [vmem:[#allocation2 + $0xe8] sm:$0xff]
          %1526 = vst.msk [vmem:[#allocation3 + $0x340] sm:$0xff] %vm1005, %v1524
          %1527 = vst.msk [vmem:[#allocation3 + $0x348] sm:$0xff] %vm1005, %v1525
          %v1528 = vld [vmem:[#allocation2 + $0x68] sm:$0xff]
          %v1529 = vld [vmem:[#allocation2 + $0xe8] sm:$0xff]
          %1532 = vrot.lane.b32.xlu0 %v1528, 96
          %v1533 = vpop.permute.xlu0 %1532
          %1534 = vrot.lane.b32.xlu0 %v1529, 96
          %v1535 = vpop.permute.xlu0 %1534
          %1538 = vst.msk [vmem:[#allocation3 + $0x350] sm:$0xff] %vm1005, %v1533
          %1539 = vst.msk [vmem:[#allocation3 + $0x358] sm:$0xff] %vm1005, %v1535
          %v1540 = vld [vmem:[#allocation2 + $0x68] sm:$0xff]
          %v1541 = vld [vmem:[#allocation2 + $0xe8] sm:$0xff]
          %1544 = vrot.lane.b32.xlu0 %v1540, 64
          %v1545 = vpop.permute.xlu0 %1544
          %1546 = vrot.lane.b32.xlu0 %v1541, 64
          %v1547 = vpop.permute.xlu0 %1546
          %1550 = vst.msk [vmem:[#allocation3 + $0x360] sm:$0xff] %vm1005, %v1545
          %1551 = vst.msk [vmem:[#allocation3 + $0x368] sm:$0xff] %vm1005, %v1547
          %v1552 = vld [vmem:[#allocation2 + $0x68] sm:$0xff]
          %v1553 = vld [vmem:[#allocation2 + $0xe8] sm:$0xff]
          %1556 = vrot.lane.b32.xlu0 %v1552, 32
          %v1557 = vpop.permute.xlu0 %1556
          %1558 = vrot.lane.b32.xlu0 %v1553, 32
          %v1559 = vpop.permute.xlu0 %1558
          %1562 = vst.msk [vmem:[#allocation3 + $0x370] sm:$0xff] %vm1005, %v1557
          %1563 = vst.msk [vmem:[#allocation3 + $0x378] sm:$0xff] %vm1005, %v1559
          %v1564 = vld [vmem:[#allocation2 + $0x70] sm:$0xff]
          %v1565 = vld [vmem:[#allocation2 + $0xf0] sm:$0xff]
          %1566 = vst.msk [vmem:[#allocation3 + $0x380] sm:$0xff] %vm1005, %v1564
          %1567 = vst.msk [vmem:[#allocation3 + $0x388] sm:$0xff] %vm1005, %v1565
          %v1568 = vld [vmem:[#allocation2 + $0x70] sm:$0xff]
          %v1569 = vld [vmem:[#allocation2 + $0xf0] sm:$0xff]
          %1572 = vrot.lane.b32.xlu0 %v1568, 96
          %v1573 = vpop.permute.xlu0 %1572
          %1574 = vrot.lane.b32.xlu0 %v1569, 96
          %v1575 = vpop.permute.xlu0 %1574
          %1578 = vst.msk [vmem:[#allocation3 + $0x390] sm:$0xff] %vm1005, %v1573
          %1579 = vst.msk [vmem:[#allocation3 + $0x398] sm:$0xff] %vm1005, %v1575
          %v1580 = vld [vmem:[#allocation2 + $0x70] sm:$0xff]
          %v1581 = vld [vmem:[#allocation2 + $0xf0] sm:$0xff]
          %1584 = vrot.lane.b32.xlu0 %v1580, 64
          %v1585 = vpop.permute.xlu0 %1584
          %1586 = vrot.lane.b32.xlu0 %v1581, 64
          %v1587 = vpop.permute.xlu0 %1586
          %1590 = vst.msk [vmem:[#allocation3 + $0x3a0] sm:$0xff] %vm1005, %v1585
          %1591 = vst.msk [vmem:[#allocation3 + $0x3a8] sm:$0xff] %vm1005, %v1587
          %v1592 = vld [vmem:[#allocation2 + $0x70] sm:$0xff]
          %v1593 = vld [vmem:[#allocation2 + $0xf0] sm:$0xff]
          %1596 = vrot.lane.b32.xlu0 %v1592, 32
          %v1597 = vpop.permute.xlu0 %1596
          %1598 = vrot.lane.b32.xlu0 %v1593, 32
          %v1599 = vpop.permute.xlu0 %1598
          %1602 = vst.msk [vmem:[#allocation3 + $0x3b0] sm:$0xff] %vm1005, %v1597
          %1603 = vst.msk [vmem:[#allocation3 + $0x3b8] sm:$0xff] %vm1005, %v1599
          %v1604 = vld [vmem:[#allocation2 + $0x78] sm:$0xff]
          %v1605 = vld [vmem:[#allocation2 + $0xf8] sm:$0xff]
          %1606 = vst.msk [vmem:[#allocation3 + $0x3c0] sm:$0xff] %vm1005, %v1604
          %1607 = vst.msk [vmem:[#allocation3 + $0x3c8] sm:$0xff] %vm1005, %v1605
          %v1608 = vld [vmem:[#allocation2 + $0x78] sm:$0xff]
          %v1609 = vld [vmem:[#allocation2 + $0xf8] sm:$0xff]
          %1612 = vrot.lane.b32.xlu0 %v1608, 96
          %v1613 = vpop.permute.xlu0 %1612
          %1614 = vrot.lane.b32.xlu0 %v1609, 96
          %v1615 = vpop.permute.xlu0 %1614
          %1618 = vst.msk [vmem:[#allocation3 + $0x3d0] sm:$0xff] %vm1005, %v1613
          %1619 = vst.msk [vmem:[#allocation3 + $0x3d8] sm:$0xff] %vm1005, %v1615
          %v1620 = vld [vmem:[#allocation2 + $0x78] sm:$0xff]
          %v1621 = vld [vmem:[#allocation2 + $0xf8] sm:$0xff]
          %1624 = vrot.lane.b32.xlu0 %v1620, 64
          %v1625 = vpop.permute.xlu0 %1624
          %1626 = vrot.lane.b32.xlu0 %v1621, 64
          %v1627 = vpop.permute.xlu0 %1626
          %1630 = vst.msk [vmem:[#allocation3 + $0x3e0] sm:$0xff] %vm1005, %v1625
          %1631 = vst.msk [vmem:[#allocation3 + $0x3e8] sm:$0xff] %vm1005, %v1627
          %v1632 = vld [vmem:[#allocation2 + $0x78] sm:$0xff]
          %v1633 = vld [vmem:[#allocation2 + $0xf8] sm:$0xff]
          %1636 = vrot.lane.b32.xlu0 %v1632, 32
          %v1637 = vpop.permute.xlu0 %1636
          %1638 = vrot.lane.b32.xlu0 %v1633, 32
          %v1639 = vpop.permute.xlu0 %1638
          %1642 = vst.msk [vmem:[#allocation3 + $0x3f0] sm:$0xff] %vm1005, %v1637
          %1643 = vst.msk [vmem:[#allocation3 + $0x3f8] sm:$0xff] %vm1005, %v1639
        $region48: #{fsa_forward.1} parent=31 // pred_fallthru
          _
        %v1644 = vld [vmem:[#allocation3] sm:$0xff]
        %v1645 = vld [vmem:[#allocation3 + $0x8] sm:$0xff]
        %v1646 = vld [vmem:[#allocation3 + $0x10] sm:$0xff]
        %v1647 = vld [vmem:[#allocation3 + $0x18] sm:$0xff]
        %v1648 = vld [vmem:[#allocation3 + $0x20] sm:$0xff]
        %v1649 = vld [vmem:[#allocation3 + $0x28] sm:$0xff]
        %v1650 = vld [vmem:[#allocation3 + $0x30] sm:$0xff]
        %v1651 = vld [vmem:[#allocation3 + $0x38] sm:$0xff]
        %v1652 = vld [vmem:[#allocation3 + $0x40] sm:$0xff]
        %v1653 = vld [vmem:[#allocation3 + $0x48] sm:$0xff]
        %v1654 = vld [vmem:[#allocation3 + $0x50] sm:$0xff]
        %v1655 = vld [vmem:[#allocation3 + $0x58] sm:$0xff]
        %v1656 = vld [vmem:[#allocation3 + $0x60] sm:$0xff]
        %v1657 = vld [vmem:[#allocation3 + $0x68] sm:$0xff]
        %v1658 = vld [vmem:[#allocation3 + $0x70] sm:$0xff]
        %v1659 = vld [vmem:[#allocation3 + $0x78] sm:$0xff]
        %v1660 = vld [vmem:[#allocation3 + $0x80] sm:$0xff]
        %v1661 = vld [vmem:[#allocation3 + $0x88] sm:$0xff]
        %v1662 = vld [vmem:[#allocation3 + $0x90] sm:$0xff]
        %v1663 = vld [vmem:[#allocation3 + $0x98] sm:$0xff]
        %v1664 = vld [vmem:[#allocation3 + $0xa0] sm:$0xff]
        %v1665 = vld [vmem:[#allocation3 + $0xa8] sm:$0xff]
        %v1666 = vld [vmem:[#allocation3 + $0xb0] sm:$0xff]
        %v1667 = vld [vmem:[#allocation3 + $0xb8] sm:$0xff]
        %v1668 = vld [vmem:[#allocation3 + $0xc0] sm:$0xff]
        %v1669 = vld [vmem:[#allocation3 + $0xc8] sm:$0xff]
        %v1670 = vld [vmem:[#allocation3 + $0xd0] sm:$0xff]
        %v1671 = vld [vmem:[#allocation3 + $0xd8] sm:$0xff]
        %v1672 = vld [vmem:[#allocation3 + $0xe0] sm:$0xff]
        %v1673 = vld [vmem:[#allocation3 + $0xe8] sm:$0xff]
        %v1674 = vld [vmem:[#allocation3 + $0xf0] sm:$0xff]
        %v1675 = vld [vmem:[#allocation3 + $0xf8] sm:$0xff]
        %v1676 = vld [vmem:[#allocation3 + $0x100] sm:$0xff]
        %v1677 = vld [vmem:[#allocation3 + $0x108] sm:$0xff]
        %v1678 = vld [vmem:[#allocation3 + $0x110] sm:$0xff]
        %v1679 = vld [vmem:[#allocation3 + $0x118] sm:$0xff]
        %v1680 = vld [vmem:[#allocation3 + $0x120] sm:$0xff]
        %v1681 = vld [vmem:[#allocation3 + $0x128] sm:$0xff]
        %v1682 = vld [vmem:[#allocation3 + $0x130] sm:$0xff]
        %v1683 = vld [vmem:[#allocation3 + $0x138] sm:$0xff]
        %v1684 = vld [vmem:[#allocation3 + $0x140] sm:$0xff]
        %v1685 = vld [vmem:[#allocation3 + $0x148] sm:$0xff]
        %v1686 = vld [vmem:[#allocation3 + $0x150] sm:$0xff]
        %v1687 = vld [vmem:[#allocation3 + $0x158] sm:$0xff]
        %v1688 = vld [vmem:[#allocation3 + $0x160] sm:$0xff]
        %v1689 = vld [vmem:[#allocation3 + $0x168] sm:$0xff]
        %v1690 = vld [vmem:[#allocation3 + $0x170] sm:$0xff]
        %v1691 = vld [vmem:[#allocation3 + $0x178] sm:$0xff]
        %v1692 = vld [vmem:[#allocation3 + $0x180] sm:$0xff]
        %v1693 = vld [vmem:[#allocation3 + $0x188] sm:$0xff]
        %v1694 = vld [vmem:[#allocation3 + $0x190] sm:$0xff]
        %v1695 = vld [vmem:[#allocation3 + $0x198] sm:$0xff]
        %v1696 = vld [vmem:[#allocation3 + $0x1a0] sm:$0xff]
        %v1697 = vld [vmem:[#allocation3 + $0x1a8] sm:$0xff]
        %v1698 = vld [vmem:[#allocation3 + $0x1b0] sm:$0xff]
        %v1699 = vld [vmem:[#allocation3 + $0x1b8] sm:$0xff]
        %v1700 = vld [vmem:[#allocation3 + $0x1c0] sm:$0xff]
        %v1701 = vld [vmem:[#allocation3 + $0x1c8] sm:$0xff]
        %v1702 = vld [vmem:[#allocation3 + $0x1d0] sm:$0xff]
        %v1703 = vld [vmem:[#allocation3 + $0x1d8] sm:$0xff]
        %v1704 = vld [vmem:[#allocation3 + $0x1e0] sm:$0xff]
        %v1705 = vld [vmem:[#allocation3 + $0x1e8] sm:$0xff]
        %v1706 = vld [vmem:[#allocation3 + $0x1f0] sm:$0xff]
        %v1707 = vld [vmem:[#allocation3 + $0x1f8] sm:$0xff]
        %v1708 = vld [vmem:[#allocation3 + $0x200] sm:$0xff]
        %v1709 = vld [vmem:[#allocation3 + $0x208] sm:$0xff]
        %v1710 = vld [vmem:[#allocation3 + $0x210] sm:$0xff]
        %v1711 = vld [vmem:[#allocation3 + $0x218] sm:$0xff]
        %v1712 = vld [vmem:[#allocation3 + $0x220] sm:$0xff]
        %v1713 = vld [vmem:[#allocation3 + $0x228] sm:$0xff]
        %v1714 = vld [vmem:[#allocation3 + $0x230] sm:$0xff]
        %v1715 = vld [vmem:[#allocation3 + $0x238] sm:$0xff]
        %v1716 = vld [vmem:[#allocation3 + $0x240] sm:$0xff]
        %v1717 = vld [vmem:[#allocation3 + $0x248] sm:$0xff]
        %v1718 = vld [vmem:[#allocation3 + $0x250] sm:$0xff]
        %v1719 = vld [vmem:[#allocation3 + $0x258] sm:$0xff]
        %v1720 = vld [vmem:[#allocation3 + $0x260] sm:$0xff]
        %v1721 = vld [vmem:[#allocation3 + $0x268] sm:$0xff]
        %v1722 = vld [vmem:[#allocation3 + $0x270] sm:$0xff]
        %v1723 = vld [vmem:[#allocation3 + $0x278] sm:$0xff]
        %v1724 = vld [vmem:[#allocation3 + $0x280] sm:$0xff]
        %v1725 = vld [vmem:[#allocation3 + $0x288] sm:$0xff]
        %v1726 = vld [vmem:[#allocation3 + $0x290] sm:$0xff]
        %v1727 = vld [vmem:[#allocation3 + $0x298] sm:$0xff]
        %v1728 = vld [vmem:[#allocation3 + $0x2a0] sm:$0xff]
        %v1729 = vld [vmem:[#allocation3 + $0x2a8] sm:$0xff]
        %v1730 = vld [vmem:[#allocation3 + $0x2b0] sm:$0xff]
        %v1731 = vld [vmem:[#allocation3 + $0x2b8] sm:$0xff]
        %v1732 = vld [vmem:[#allocation3 + $0x2c0] sm:$0xff]
        %v1733 = vld [vmem:[#allocation3 + $0x2c8] sm:$0xff]
        %v1734 = vld [vmem:[#allocation3 + $0x2d0] sm:$0xff]
        %v1735 = vld [vmem:[#allocation3 + $0x2d8] sm:$0xff]
        %v1736 = vld [vmem:[#allocation3 + $0x2e0] sm:$0xff]
        %v1737 = vld [vmem:[#allocation3 + $0x2e8] sm:$0xff]
        %v1738 = vld [vmem:[#allocation3 + $0x2f0] sm:$0xff]
        %v1739 = vld [vmem:[#allocation3 + $0x2f8] sm:$0xff]
        %v1740 = vld [vmem:[#allocation3 + $0x300] sm:$0xff]
        %v1741 = vld [vmem:[#allocation3 + $0x308] sm:$0xff]
        %v1742 = vld [vmem:[#allocation3 + $0x310] sm:$0xff]
        %v1743 = vld [vmem:[#allocation3 + $0x318] sm:$0xff]
        %v1744 = vld [vmem:[#allocation3 + $0x320] sm:$0xff]
        %v1745 = vld [vmem:[#allocation3 + $0x328] sm:$0xff]
        %v1746 = vld [vmem:[#allocation3 + $0x330] sm:$0xff]
        %v1747 = vld [vmem:[#allocation3 + $0x338] sm:$0xff]
        %v1748 = vld [vmem:[#allocation3 + $0x340] sm:$0xff]
        %v1749 = vld [vmem:[#allocation3 + $0x348] sm:$0xff]
        %v1750 = vld [vmem:[#allocation3 + $0x350] sm:$0xff]
        %v1751 = vld [vmem:[#allocation3 + $0x358] sm:$0xff]
        %v1752 = vld [vmem:[#allocation3 + $0x360] sm:$0xff]
        %v1753 = vld [vmem:[#allocation3 + $0x368] sm:$0xff]
        %v1754 = vld [vmem:[#allocation3 + $0x370] sm:$0xff]
        %v1755 = vld [vmem:[#allocation3 + $0x378] sm:$0xff]
        %v1756 = vld [vmem:[#allocation3 + $0x380] sm:$0xff]
        %v1757 = vld [vmem:[#allocation3 + $0x388] sm:$0xff]
        %v1758 = vld [vmem:[#allocation3 + $0x390] sm:$0xff]
        %v1759 = vld [vmem:[#allocation3 + $0x398] sm:$0xff]
        %v1760 = vld [vmem:[#allocation3 + $0x3a0] sm:$0xff]
        %v1761 = vld [vmem:[#allocation3 + $0x3a8] sm:$0xff]
        %v1762 = vld [vmem:[#allocation3 + $0x3b0] sm:$0xff]
        %v1763 = vld [vmem:[#allocation3 + $0x3b8] sm:$0xff]
        %v1764 = vld [vmem:[#allocation3 + $0x3c0] sm:$0xff]
        %v1765 = vld [vmem:[#allocation3 + $0x3c8] sm:$0xff]
        %v1766 = vld [vmem:[#allocation3 + $0x3d0] sm:$0xff]
        %v1767 = vld [vmem:[#allocation3 + $0x3d8] sm:$0xff]
        %v1768 = vld [vmem:[#allocation3 + $0x3e0] sm:$0xff]
        %v1769 = vld [vmem:[#allocation3 + $0x3e8] sm:$0xff]
        %v1770 = vld [vmem:[#allocation3 + $0x3f0] sm:$0xff]
        %v1771 = vld [vmem:[#allocation3 + $0x3f8] sm:$0xff]
        %v1772 = vld [vmem:[%s190] sm:$0xff]
        %v1773 = vld [vmem:[%s190 + $0x8] sm:$0xff]
        %v1774 = vld [vmem:[%s190 + $0x10] sm:$0xff]
        %v1775 = vld [vmem:[%s190 + $0x18] sm:$0xff]
        %v1776 = vld [vmem:[%s190 + $0x20] sm:$0xff]
        %v1777 = vld [vmem:[%s190 + $0x28] sm:$0xff]
        %v1778 = vld [vmem:[%s190 + $0x30] sm:$0xff]
        %v1779 = vld [vmem:[%s190 + $0x38] sm:$0xff]
        %v1780 = vld [vmem:[%s190 + $0x40] sm:$0xff]
        %v1781 = vld [vmem:[%s190 + $0x48] sm:$0xff]
        %v1782 = vld [vmem:[%s190 + $0x50] sm:$0xff]
        %v1783 = vld [vmem:[%s190 + $0x58] sm:$0xff]
        %v1784 = vld [vmem:[%s190 + $0x60] sm:$0xff]
        %v1785 = vld [vmem:[%s190 + $0x68] sm:$0xff]
        %v1786 = vld [vmem:[%s190 + $0x70] sm:$0xff]
        %v1787 = vld [vmem:[%s190 + $0x78] sm:$0xff]
        %vm1788 = vcmask 261120
        %v1790 = vsel %vm1788, %v1644, 0
        %v1793 = vsel %vm1788, %v1645, 0
        %v1796 = vsel %vm1788, %v1646, 0
        %v1799 = vsel %vm1788, %v1647, 0
        %v1802 = vsel %vm1788, %v1648, 0
        %v1805 = vsel %vm1788, %v1649, 0
        %v1808 = vsel %vm1788, %v1650, 0
        %v1811 = vsel %vm1788, %v1651, 0
        %v1814 = vsel %vm1788, %v1652, 0
        %v1817 = vsel %vm1788, %v1653, 0
        %v1820 = vsel %vm1788, %v1654, 0
        %v1823 = vsel %vm1788, %v1655, 0
        %v1826 = vsel %vm1788, %v1656, 0
        %v1829 = vsel %vm1788, %v1657, 0
        %v1832 = vsel %vm1788, %v1658, 0
        %v1835 = vsel %vm1788, %v1659, 0
        %v1838 = vsel %vm1788, %v1660, 0
        %v1841 = vsel %vm1788, %v1661, 0
        %v1844 = vsel %vm1788, %v1662, 0
        %v1847 = vsel %vm1788, %v1663, 0
        %v1850 = vsel %vm1788, %v1664, 0
        %v1853 = vsel %vm1788, %v1665, 0
        %v1856 = vsel %vm1788, %v1666, 0
        %v1859 = vsel %vm1788, %v1667, 0
        %v1862 = vsel %vm1788, %v1668, 0
        %v1865 = vsel %vm1788, %v1669, 0
        %v1868 = vsel %vm1788, %v1670, 0
        %v1871 = vsel %vm1788, %v1671, 0
        %v1874 = vsel %vm1788, %v1672, 0
        %v1877 = vsel %vm1788, %v1673, 0
        %v1880 = vsel %vm1788, %v1674, 0
        %v1883 = vsel %vm1788, %v1675, 0
        %v1886 = vsel %vm1788, %v1676, 0
        %v1889 = vsel %vm1788, %v1677, 0
        %v1892 = vsel %vm1788, %v1678, 0
        %v1895 = vsel %vm1788, %v1679, 0
        %v1898 = vsel %vm1788, %v1680, 0
        %v1901 = vsel %vm1788, %v1681, 0
        %v1904 = vsel %vm1788, %v1682, 0
        %v1907 = vsel %vm1788, %v1683, 0
        %v1910 = vsel %vm1788, %v1684, 0
        %v1913 = vsel %vm1788, %v1685, 0
        %v1916 = vsel %vm1788, %v1686, 0
        %v1919 = vsel %vm1788, %v1687, 0
        %v1922 = vsel %vm1788, %v1688, 0
        %v1925 = vsel %vm1788, %v1689, 0
        %v1928 = vsel %vm1788, %v1690, 0
        %v1931 = vsel %vm1788, %v1691, 0
        %v1934 = vsel %vm1788, %v1692, 0
        %v1937 = vsel %vm1788, %v1693, 0
        %v1940 = vsel %vm1788, %v1694, 0
        %v1943 = vsel %vm1788, %v1695, 0
        %v1946 = vsel %vm1788, %v1696, 0
        %v1949 = vsel %vm1788, %v1697, 0
        %v1952 = vsel %vm1788, %v1698, 0
        %v1955 = vsel %vm1788, %v1699, 0
        %v1958 = vsel %vm1788, %v1700, 0
        %v1961 = vsel %vm1788, %v1701, 0
        %v1964 = vsel %vm1788, %v1702, 0
        %v1967 = vsel %vm1788, %v1703, 0
        %v1970 = vsel %vm1788, %v1704, 0
        %v1973 = vsel %vm1788, %v1705, 0
        %v1976 = vsel %vm1788, %v1706, 0
        %v1979 = vsel %vm1788, %v1707, 0
        %v1982 = vsel %vm1788, %v1708, 0
        %v1985 = vsel %vm1788, %v1709, 0
        %v1988 = vsel %vm1788, %v1710, 0
        %v1991 = vsel %vm1788, %v1711, 0
        %v1994 = vsel %vm1788, %v1712, 0
        %v1997 = vsel %vm1788, %v1713, 0
        %v2000 = vsel %vm1788, %v1714, 0
        %v2003 = vsel %vm1788, %v1715, 0
        %v2006 = vsel %vm1788, %v1716, 0
        %v2009 = vsel %vm1788, %v1717, 0
        %v2012 = vsel %vm1788, %v1718, 0
        %v2015 = vsel %vm1788, %v1719, 0
        %v2018 = vsel %vm1788, %v1720, 0
        %v2021 = vsel %vm1788, %v1721, 0
        %v2024 = vsel %vm1788, %v1722, 0
        %v2027 = vsel %vm1788, %v1723, 0
        %v2030 = vsel %vm1788, %v1724, 0
        %v2033 = vsel %vm1788, %v1725, 0
        %v2036 = vsel %vm1788, %v1726, 0
        %v2039 = vsel %vm1788, %v1727, 0
        %v2042 = vsel %vm1788, %v1728, 0
        %v2045 = vsel %vm1788, %v1729, 0
        %v2048 = vsel %vm1788, %v1730, 0
        %v2051 = vsel %vm1788, %v1731, 0
        %v2054 = vsel %vm1788, %v1732, 0
        %v2057 = vsel %vm1788, %v1733, 0
        %v2060 = vsel %vm1788, %v1734, 0
        %v2063 = vsel %vm1788, %v1735, 0
        %v2066 = vsel %vm1788, %v1736, 0
        %v2069 = vsel %vm1788, %v1737, 0
        %v2072 = vsel %vm1788, %v1738, 0
        %v2075 = vsel %vm1788, %v1739, 0
        %v2078 = vsel %vm1788, %v1740, 0
        %v2081 = vsel %vm1788, %v1741, 0
        %v2084 = vsel %vm1788, %v1742, 0
        %v2087 = vsel %vm1788, %v1743, 0
        %v2090 = vsel %vm1788, %v1744, 0
        %v2093 = vsel %vm1788, %v1745, 0
        %v2096 = vsel %vm1788, %v1746, 0
        %v2099 = vsel %vm1788, %v1747, 0
        %v2102 = vsel %vm1788, %v1748, 0
        %v2105 = vsel %vm1788, %v1749, 0
        %v2108 = vsel %vm1788, %v1750, 0
        %v2111 = vsel %vm1788, %v1751, 0
        %v2114 = vsel %vm1788, %v1752, 0
        %v2117 = vsel %vm1788, %v1753, 0
        %v2120 = vsel %vm1788, %v1754, 0
        %v2123 = vsel %vm1788, %v1755, 0
        %v2126 = vsel %vm1788, %v1756, 0
        %v2129 = vsel %vm1788, %v1757, 0
        %v2132 = vsel %vm1788, %v1758, 0
        %v2135 = vsel %vm1788, %v1759, 0
        %v2138 = vsel %vm1788, %v1760, 0
        %v2141 = vsel %vm1788, %v1761, 0
        %v2144 = vsel %vm1788, %v1762, 0
        %v2147 = vsel %vm1788, %v1763, 0
        %v2150 = vsel %vm1788, %v1764, 0
        %v2153 = vsel %vm1788, %v1765, 0
        %v2156 = vsel %vm1788, %v1766, 0
        %v2159 = vsel %vm1788, %v1767, 0
        %v2162 = vsel %vm1788, %v1768, 0
        %v2165 = vsel %vm1788, %v1769, 0
        %v2168 = vsel %vm1788, %v1770, 0
        %v2171 = vsel %vm1788, %v1771, 0
        %2173 = vmatprep.subr.mxu0 %v1773
        %2174 = vmatpush1.msra.mxu0 %v1772
        %2175 = vmatprep.subr.mxu0 %v1777
        %2176 = vmatpush1.msra.mxu0 %v1776
        %2177 = vmatprep.subr.mxu0 %v1781
        %2178 = vmatpush1.msra.mxu0 %v1780
        %2179 = vmatprep.subr.mxu0 %v1785
        %2180 = vmatpush1.msra.mxu0 %v1784
        %2181 = vmatprep.subr.mxu0 0.0
        %2182 = vmatpush1.msra.mxu0 0.0
        %2183 = vmatprep.subr.mxu0 0.0
        %2184 = vmatpush1.msra.mxu0 0.0
        %2185 = vmatprep.subr.mxu0 0.0
        %2186 = vmatpush1.msra.mxu0 0.0
        %2187 = vmatprep.subr.mxu0 0.0
        %2188 = vmatpush1.msra.mxu0 0.0
        %2189 = vmatprep.subr.mxu0 0.0
        %2190 = vmatpush1.msra.mxu0 0.0
        %2191 = vmatprep.subr.mxu0 0.0
        %2192 = vmatpush1.msra.mxu0 0.0
        %2193 = vmatprep.subr.mxu0 0.0
        %2194 = vmatpush1.msra.mxu0 0.0
        %2195 = vmatprep.subr.mxu0 0.0
        %2196 = vmatpush1.msra.mxu0 0.0
        %2197 = vmatprep.subr.mxu0 0.0
        %2198 = vmatpush1.msra.mxu0 0.0
        %2199 = vmatprep.subr.mxu0 0.0
        %2200 = vmatpush1.msra.mxu0 0.0
        %2201 = vmatprep.subr.mxu0 0.0
        %2202 = vmatpush1.msra.mxu0 0.0
        %2203 = vmatprep.subr.mxu0 0.0
        %2204 = vmatpush1.msra.mxu0 0.0
        %2205 = vmatprep.subr.mxu0 0.0
        %2206 = vmatpush1.msra.mxu0 0.0
        %2207 = vmatprep.subr.mxu0 0.0
        %2208 = vmatpush1.msra.mxu0 0.0
        %2209 = vmatprep.subr.mxu0 0.0
        %2210 = vmatpush1.msra.mxu0 0.0
        %2211 = vmatprep.subr.mxu0 0.0
        %2212 = vmatpush1.msra.mxu0 0.0
        %2213 = vmatprep.subr.mxu0 0.0
        %2214 = vmatpush1.msra.mxu0 0.0
        %2215 = vmatprep.subr.mxu0 0.0
        %2216 = vmatpush1.msra.mxu0 0.0
        %2217 = vmatprep.subr.mxu0 0.0
        %2218 = vmatpush1.msra.mxu0 0.0
        %2219 = vmatprep.subr.mxu0 0.0
        %2220 = vmatpush1.msra.mxu0 0.0
        %2221 = vmatprep.subr.mxu0 0.0
        %2222 = vmatpush1.msra.mxu0 0.0
        %2223 = vmatprep.subr.mxu0 0.0
        %2224 = vmatpush1.msra.mxu0 0.0
        %2225 = vmatprep.subr.mxu0 0.0
        %2226 = vmatpush1.msra.mxu0 0.0
        %2227 = vmatprep.subr.mxu0 0.0
        %2228 = vmatpush1.msra.mxu0 0.0
        %2229 = vmatprep.subr.mxu0 0.0
        %2230 = vmatpush1.msra.mxu0 0.0
        %2231 = vmatprep.subr.mxu0 0.0
        %2232 = vmatpush1.msra.mxu0 0.0
        %2233 = vmatprep.subr.mxu0 0.0
        %2234 = vmatpush1.msra.mxu0 0.0
        %2235 = vmatprep.subr.mxu0 0.0
        %2236 = vmatpush1.msra.mxu0 0.0
        %2237 = vmatprep.mubr.f32.mxu0 0.0
        %2238 = vmatmul.mubr.f32.gmra.mrb[0].mxu0 %v1790
        %v2239 = vpop.f32.mrb[0].mxu0
        %v2240 = vadd.f32 0.0, %v2239
        %v2241 = vpop.f32.mrb[0].mxu0
        %v2242 = vadd.f32 0.0, %v2241
        %2243 = vmatprep.mubr.f32.mxu0 0.0
        %2244 = vmatmul.mubr.f32.gmra.mrb[0].mxu0 %v1793
        %v2245 = vpop.f32.mrb[0].mxu0
        %v2246 = vadd.f32 0.0, %v2245
        %v2247 = vpop.f32.mrb[0].mxu0
        %v2248 = vadd.f32 0.0, %v2247
        %2249 = vmatprep.mubr.f32.mxu0 0.0
        %2250 = vmatmul.mubr.f32.gmra.mrb[0].mxu0 %v1796
        %v2251 = vpop.f32.mrb[0].mxu0
        %v2252 = vadd.f32 0.0, %v2251
        %v2253 = vpop.f32.mrb[0].mxu0
        %v2254 = vadd.f32 0.0, %v2253
        %2255 = vmatprep.mubr.f32.mxu0 0.0
        %2256 = vmatmul.mubr.f32.gmra.mrb[0].mxu0 %v1799
        %v2257 = vpop.f32.mrb[0].mxu0
        %v2258 = vadd.f32 0.0, %v2257
        %v2259 = vpop.f32.mrb[0].mxu0
        %v2260 = vadd.f32 0.0, %v2259
        %2261 = vmatprep.mubr.f32.mxu0 0.0
        %2262 = vmatmul.mubr.f32.gmra.mrb[0].mxu0 %v1802
        %v2263 = vpop.f32.mrb[0].mxu0
        %v2264 = vadd.f32 0.0, %v2263
        %v2265 = vpop.f32.mrb[0].mxu0
        %v2266 = vadd.f32 0.0, %v2265
        %2267 = vmatprep.mubr.f32.mxu0 0.0
        %2268 = vmatmul.mubr.f32.gmra.mrb[0].mxu0 %v1805
        %v2269 = vpop.f32.mrb[0].mxu0
        %v2270 = vadd.f32 0.0, %v2269
        %v2271 = vpop.f32.mrb[0].mxu0
        %v2272 = vadd.f32 0.0, %v2271
        %2273 = vmatprep.mubr.f32.mxu0 0.0
        %2274 = vmatmul.mubr.f32.gmra.mrb[0].mxu0 %v1808
        %v2275 = vpop.f32.mrb[0].mxu0
        %v2276 = vadd.f32 0.0, %v2275
        %v2277 = vpop.f32.mrb[0].mxu0
        %v2278 = vadd.f32 0.0, %v2277
        %2279 = vmatprep.mubr.f32.mxu0 0.0
        %2280 = vmatmul.mubr.f32.gmra.mrb[0].mxu0 %v1811
        %v2281 = vpop.f32.mrb[0].mxu0
        %v2282 = vadd.f32 0.0, %v2281
        %v2283 = vpop.f32.mrb[0].mxu0
        %v2284 = vadd.f32 0.0, %v2283
        %2285 = vmatprep.mubr.f32.mxu0 0.0
        %2286 = vmatmul.mubr.f32.gmra.mrb[0].mxu0 %v1814
        %v2287 = vpop.f32.mrb[0].mxu0
        %v2288 = vadd.f32 0.0, %v2287
        %v2289 = vpop.f32.mrb[0].mxu0
        %v2290 = vadd.f32 0.0, %v2289
        %2291 = vmatprep.mubr.f32.mxu0 0.0
        %2292 = vmatmul.mubr.f32.gmra.mrb[0].mxu0 %v1817
        %v2293 = vpop.f32.mrb[0].mxu0
        %v2294 = vadd.f32 0.0, %v2293
        %v2295 = vpop.f32.mrb[0].mxu0
        %v2296 = vadd.f32 0.0, %v2295
        %2297 = vmatprep.mubr.f32.mxu0 0.0
        %2298 = vmatmul.mubr.f32.gmra.mrb[0].mxu0 %v1820
        %v2299 = vpop.f32.mrb[0].mxu0
        %v2300 = vadd.f32 0.0, %v2299
        %v2301 = vpop.f32.mrb[0].mxu0
        %v2302 = vadd.f32 0.0, %v2301
        %2303 = vmatprep.mubr.f32.mxu0 0.0
        %2304 = vmatmul.mubr.f32.gmra.mrb[0].mxu0 %v1823
        %v2305 = vpop.f32.mrb[0].mxu0
        %v2306 = vadd.f32 0.0, %v2305
        %v2307 = vpop.f32.mrb[0].mxu0
        %v2308 = vadd.f32 0.0, %v2307
        %2309 = vmatprep.mubr.f32.mxu0 0.0
        %2310 = vmatmul.mubr.f32.gmra.mrb[0].mxu0 %v1826
        %v2311 = vpop.f32.mrb[0].mxu0
        %v2312 = vadd.f32 0.0, %v2311
        %v2313 = vpop.f32.mrb[0].mxu0
        %v2314 = vadd.f32 0.0, %v2313
        %2315 = vmatprep.mubr.f32.mxu0 0.0
        %2316 = vmatmul.mubr.f32.gmra.mrb[0].mxu0 %v1829
        %v2317 = vpop.f32.mrb[0].mxu0
        %v2318 = vadd.f32 0.0, %v2317
        %v2319 = vpop.f32.mrb[0].mxu0
        %v2320 = vadd.f32 0.0, %v2319
        %2321 = vmatprep.mubr.f32.mxu0 0.0
        %2322 = vmatmul.mubr.f32.gmra.mrb[0].mxu0 %v1832
        %v2323 = vpop.f32.mrb[0].mxu0
        %v2324 = vadd.f32 0.0, %v2323
        %v2325 = vpop.f32.mrb[0].mxu0
        %v2326 = vadd.f32 0.0, %v2325
        %2327 = vmatprep.mubr.f32.mxu0 0.0
        %2328 = vmatmul.mubr.f32.gmra.mrb[0].mxu0 %v1835
        %v2329 = vpop.f32.mrb[0].mxu0
        %v2330 = vadd.f32 0.0, %v2329
        %v2331 = vpop.f32.mrb[0].mxu0
        %v2332 = vadd.f32 0.0, %v2331
        %2333 = vmatprep.mubr.f32.mxu0 0.0
        %2334 = vmatmul.mubr.f32.gmra.mrb[0].mxu0 %v1838
        %v2335 = vpop.f32.mrb[0].mxu0
        %v2336 = vadd.f32 0.0, %v2335
        %v2337 = vpop.f32.mrb[0].mxu0
        %v2338 = vadd.f32 0.0, %v2337
        %2339 = vmatprep.mubr.f32.mxu0 0.0
        %2340 = vmatmul.mubr.f32.gmra.mrb[0].mxu0 %v1841
        %v2341 = vpop.f32.mrb[0].mxu0
        %v2342 = vadd.f32 0.0, %v2341
        %v2343 = vpop.f32.mrb[0].mxu0
        %v2344 = vadd.f32 0.0, %v2343
        %2345 = vmatprep.mubr.f32.mxu0 0.0
        %2346 = vmatmul.mubr.f32.gmra.mrb[0].mxu0 %v1844
        %v2347 = vpop.f32.mrb[0].mxu0
        %v2348 = vadd.f32 0.0, %v2347
        %v2349 = vpop.f32.mrb[0].mxu0
        %v2350 = vadd.f32 0.0, %v2349
        %2351 = vmatprep.mubr.f32.mxu0 0.0
        %2352 = vmatmul.mubr.f32.gmra.mrb[0].mxu0 %v1847
        %v2353 = vpop.f32.mrb[0].mxu0
        %v2354 = vadd.f32 0.0, %v2353
        %v2355 = vpop.f32.mrb[0].mxu0
        %v2356 = vadd.f32 0.0, %v2355
        %2357 = vmatprep.mubr.f32.mxu0 0.0
        %2358 = vmatmul.mubr.f32.gmra.mrb[0].mxu0 %v1850
        %v2359 = vpop.f32.mrb[0].mxu0
        %v2360 = vadd.f32 0.0, %v2359
        %v2361 = vpop.f32.mrb[0].mxu0
        %v2362 = vadd.f32 0.0, %v2361
        %2363 = vmatprep.mubr.f32.mxu0 0.0
        %2364 = vmatmul.mubr.f32.gmra.mrb[0].mxu0 %v1853
        %v2365 = vpop.f32.mrb[0].mxu0
        %v2366 = vadd.f32 0.0, %v2365
        %v2367 = vpop.f32.mrb[0].mxu0
        %v2368 = vadd.f32 0.0, %v2367
        %2369 = vmatprep.mubr.f32.mxu0 0.0
        %2370 = vmatmul.mubr.f32.gmra.mrb[0].mxu0 %v1856
        %v2371 = vpop.f32.mrb[0].mxu0
        %v2372 = vadd.f32 0.0, %v2371
        %v2373 = vpop.f32.mrb[0].mxu0
        %v2374 = vadd.f32 0.0, %v2373
        %2375 = vmatprep.mubr.f32.mxu0 0.0
        %2376 = vmatmul.mubr.f32.gmra.mrb[0].mxu0 %v1859
        %v2377 = vpop.f32.mrb[0].mxu0
        %v2378 = vadd.f32 0.0, %v2377
        %v2379 = vpop.f32.mrb[0].mxu0
        %v2380 = vadd.f32 0.0, %v2379
        %2381 = vmatprep.mubr.f32.mxu0 0.0
        %2382 = vmatmul.mubr.f32.gmra.mrb[0].mxu0 %v1862
        %v2383 = vpop.f32.mrb[0].mxu0
        %v2384 = vadd.f32 0.0, %v2383
        %v2385 = vpop.f32.mrb[0].mxu0
        %v2386 = vadd.f32 0.0, %v2385
        %2387 = vmatprep.mubr.f32.mxu0 0.0
        %2388 = vmatmul.mubr.f32.gmra.mrb[0].mxu0 %v1865
        %v2389 = vpop.f32.mrb[0].mxu0
        %v2390 = vadd.f32 0.0, %v2389
        %v2391 = vpop.f32.mrb[0].mxu0
        %v2392 = vadd.f32 0.0, %v2391
        %2393 = vmatprep.mubr.f32.mxu0 0.0
        %2394 = vmatmul.mubr.f32.gmra.mrb[0].mxu0 %v1868
        %v2395 = vpop.f32.mrb[0].mxu0
        %v2396 = vadd.f32 0.0, %v2395
        %v2397 = vpop.f32.mrb[0].mxu0
        %v2398 = vadd.f32 0.0, %v2397
        %2399 = vmatprep.mubr.f32.mxu0 0.0
        %2400 = vmatmul.mubr.f32.gmra.mrb[0].mxu0 %v1871
        %v2401 = vpop.f32.mrb[0].mxu0
        %v2402 = vadd.f32 0.0, %v2401
        %v2403 = vpop.f32.mrb[0].mxu0
        %v2404 = vadd.f32 0.0, %v2403
        %2405 = vmatprep.mubr.f32.mxu0 0.0
        %2406 = vmatmul.mubr.f32.gmra.mrb[0].mxu0 %v1874
        %v2407 = vpop.f32.mrb[0].mxu0
        %v2408 = vadd.f32 0.0, %v2407
        %v2409 = vpop.f32.mrb[0].mxu0
        %v2410 = vadd.f32 0.0, %v2409
        %2411 = vmatprep.mubr.f32.mxu0 0.0
        %2412 = vmatmul.mubr.f32.gmra.mrb[0].mxu0 %v1877
        %v2413 = vpop.f32.mrb[0].mxu0
        %v2414 = vadd.f32 0.0, %v2413
        %v2415 = vpop.f32.mrb[0].mxu0
        %v2416 = vadd.f32 0.0, %v2415
        %2417 = vmatprep.mubr.f32.mxu0 0.0
        %2418 = vmatmul.mubr.f32.gmra.mrb[0].mxu0 %v1880
        %v2419 = vpop.f32.mrb[0].mxu0
        %v2420 = vadd.f32 0.0, %v2419
        %v2421 = vpop.f32.mrb[0].mxu0
        %v2422 = vadd.f32 0.0, %v2421
        %2423 = vmatprep.mubr.f32.mxu0 0.0
        %2424 = vmatmul.mubr.f32.gmra.mrb[0].mxu0 %v1883
        %v2425 = vpop.f32.mrb[0].mxu0
        %v2426 = vadd.f32 0.0, %v2425
        %v2427 = vpop.f32.mrb[0].mxu0
        %v2428 = vadd.f32 0.0, %v2427
        %2429 = vmatprep.mubr.f32.mxu0 0.0
        %2430 = vmatmul.mubr.f32.gmra.mrb[0].mxu0 %v1886
        %v2431 = vpop.f32.mrb[0].mxu0
        %v2432 = vadd.f32 0.0, %v2431
        %v2433 = vpop.f32.mrb[0].mxu0
        %v2434 = vadd.f32 0.0, %v2433
        %2435 = vmatprep.mubr.f32.mxu0 0.0
        %2436 = vmatmul.mubr.f32.gmra.mrb[0].mxu0 %v1889
        %v2437 = vpop.f32.mrb[0].mxu0
        %v2438 = vadd.f32 0.0, %v2437
        %v2439 = vpop.f32.mrb[0].mxu0
        %v2440 = vadd.f32 0.0, %v2439
        %2441 = vmatprep.mubr.f32.mxu0 0.0
        %2442 = vmatmul.mubr.f32.gmra.mrb[0].mxu0 %v1892
        %v2443 = vpop.f32.mrb[0].mxu0
        %v2444 = vadd.f32 0.0, %v2443
        %v2445 = vpop.f32.mrb[0].mxu0
        %v2446 = vadd.f32 0.0, %v2445
        %2447 = vmatprep.mubr.f32.mxu0 0.0
        %2448 = vmatmul.mubr.f32.gmra.mrb[0].mxu0 %v1895
        %v2449 = vpop.f32.mrb[0].mxu0
        %v2450 = vadd.f32 0.0, %v2449
        %v2451 = vpop.f32.mrb[0].mxu0
        %v2452 = vadd.f32 0.0, %v2451
        %2453 = vmatprep.mubr.f32.mxu0 0.0
        %2454 = vmatmul.mubr.f32.gmra.mrb[0].mxu0 %v1898
        %v2455 = vpop.f32.mrb[0].mxu0
        %v2456 = vadd.f32 0.0, %v2455
        %v2457 = vpop.f32.mrb[0].mxu0
        %v2458 = vadd.f32 0.0, %v2457
        %2459 = vmatprep.mubr.f32.mxu0 0.0
        %2460 = vmatmul.mubr.f32.gmra.mrb[0].mxu0 %v1901
        %v2461 = vpop.f32.mrb[0].mxu0
        %v2462 = vadd.f32 0.0, %v2461
        %v2463 = vpop.f32.mrb[0].mxu0
        %v2464 = vadd.f32 0.0, %v2463
        %2465 = vmatprep.mubr.f32.mxu0 0.0
        %2466 = vmatmul.mubr.f32.gmra.mrb[0].mxu0 %v1904
        %v2467 = vpop.f32.mrb[0].mxu0
        %v2468 = vadd.f32 0.0, %v2467
        %v2469 = vpop.f32.mrb[0].mxu0
        %v2470 = vadd.f32 0.0, %v2469
        %2471 = vmatprep.mubr.f32.mxu0 0.0
        %2472 = vmatmul.mubr.f32.gmra.mrb[0].mxu0 %v1907
        %v2473 = vpop.f32.mrb[0].mxu0
        %v2474 = vadd.f32 0.0, %v2473
        %v2475 = vpop.f32.mrb[0].mxu0
        %v2476 = vadd.f32 0.0, %v2475
        %2477 = vmatprep.mubr.f32.mxu0 0.0
        %2478 = vmatmul.mubr.f32.gmra.mrb[0].mxu0 %v1910
        %v2479 = vpop.f32.mrb[0].mxu0
        %v2480 = vadd.f32 0.0, %v2479
        %v2481 = vpop.f32.mrb[0].mxu0
        %v2482 = vadd.f32 0.0, %v2481
        %2483 = vmatprep.mubr.f32.mxu0 0.0
        %2484 = vmatmul.mubr.f32.gmra.mrb[0].mxu0 %v1913
        %v2485 = vpop.f32.mrb[0].mxu0
        %v2486 = vadd.f32 0.0, %v2485
        %v2487 = vpop.f32.mrb[0].mxu0
        %v2488 = vadd.f32 0.0, %v2487
        %2489 = vmatprep.mubr.f32.mxu0 0.0
        %2490 = vmatmul.mubr.f32.gmra.mrb[0].mxu0 %v1916
        %v2491 = vpop.f32.mrb[0].mxu0
        %v2492 = vadd.f32 0.0, %v2491
        %v2493 = vpop.f32.mrb[0].mxu0
        %v2494 = vadd.f32 0.0, %v2493
        %2495 = vmatprep.mubr.f32.mxu0 0.0
        %2496 = vmatmul.mubr.f32.gmra.mrb[0].mxu0 %v1919
        %v2497 = vpop.f32.mrb[0].mxu0
        %v2498 = vadd.f32 0.0, %v2497
        %v2499 = vpop.f32.mrb[0].mxu0
        %v2500 = vadd.f32 0.0, %v2499
        %2501 = vmatprep.mubr.f32.mxu0 0.0
        %2502 = vmatmul.mubr.f32.gmra.mrb[0].mxu0 %v1922
        %v2503 = vpop.f32.mrb[0].mxu0
        %v2504 = vadd.f32 0.0, %v2503
        %v2505 = vpop.f32.mrb[0].mxu0
        %v2506 = vadd.f32 0.0, %v2505
        %2507 = vmatprep.mubr.f32.mxu0 0.0
        %2508 = vmatmul.mubr.f32.gmra.mrb[0].mxu0 %v1925
        %v2509 = vpop.f32.mrb[0].mxu0
        %v2510 = vadd.f32 0.0, %v2509
        %v2511 = vpop.f32.mrb[0].mxu0
        %v2512 = vadd.f32 0.0, %v2511
        %2513 = vmatprep.mubr.f32.mxu0 0.0
        %2514 = vmatmul.mubr.f32.gmra.mrb[0].mxu0 %v1928
        %v2515 = vpop.f32.mrb[0].mxu0
        %v2516 = vadd.f32 0.0, %v2515
        %v2517 = vpop.f32.mrb[0].mxu0
        %v2518 = vadd.f32 0.0, %v2517
        %2519 = vmatprep.mubr.f32.mxu0 0.0
        %2520 = vmatmul.mubr.f32.gmra.mrb[0].mxu0 %v1931
        %v2521 = vpop.f32.mrb[0].mxu0
        %v2522 = vadd.f32 0.0, %v2521
        %v2523 = vpop.f32.mrb[0].mxu0
        %v2524 = vadd.f32 0.0, %v2523
        %2525 = vmatprep.mubr.f32.mxu0 0.0
        %2526 = vmatmul.mubr.f32.gmra.mrb[0].mxu0 %v1934
        %v2527 = vpop.f32.mrb[0].mxu0
        %v2528 = vadd.f32 0.0, %v2527
        %v2529 = vpop.f32.mrb[0].mxu0
        %v2530 = vadd.f32 0.0, %v2529
        %2531 = vmatprep.mubr.f32.mxu0 0.0
        %2532 = vmatmul.mubr.f32.gmra.mrb[0].mxu0 %v1937
        %v2533 = vpop.f32.mrb[0].mxu0
        %v2534 = vadd.f32 0.0, %v2533
        %v2535 = vpop.f32.mrb[0].mxu0
        %v2536 = vadd.f32 0.0, %v2535
        %2537 = vmatprep.mubr.f32.mxu0 0.0
        %2538 = vmatmul.mubr.f32.gmra.mrb[0].mxu0 %v1940
        %v2539 = vpop.f32.mrb[0].mxu0
        %v2540 = vadd.f32 0.0, %v2539
        %v2541 = vpop.f32.mrb[0].mxu0
        %v2542 = vadd.f32 0.0, %v2541
        %2543 = vmatprep.mubr.f32.mxu0 0.0
        %2544 = vmatmul.mubr.f32.gmra.mrb[0].mxu0 %v1943
        %v2545 = vpop.f32.mrb[0].mxu0
        %v2546 = vadd.f32 0.0, %v2545
        %v2547 = vpop.f32.mrb[0].mxu0
        %v2548 = vadd.f32 0.0, %v2547
        %2549 = vmatprep.mubr.f32.mxu0 0.0
        %2550 = vmatmul.mubr.f32.gmra.mrb[0].mxu0 %v1946
        %v2551 = vpop.f32.mrb[0].mxu0
        %v2552 = vadd.f32 0.0, %v2551
        %v2553 = vpop.f32.mrb[0].mxu0
        %v2554 = vadd.f32 0.0, %v2553
        %2555 = vmatprep.mubr.f32.mxu0 0.0
        %2556 = vmatmul.mubr.f32.gmra.mrb[0].mxu0 %v1949
        %v2557 = vpop.f32.mrb[0].mxu0
        %v2558 = vadd.f32 0.0, %v2557
        %v2559 = vpop.f32.mrb[0].mxu0
        %v2560 = vadd.f32 0.0, %v2559
        %2561 = vmatprep.mubr.f32.mxu0 0.0
        %2562 = vmatmul.mubr.f32.gmra.mrb[0].mxu0 %v1952
        %v2563 = vpop.f32.mrb[0].mxu0
        %v2564 = vadd.f32 0.0, %v2563
        %v2565 = vpop.f32.mrb[0].mxu0
        %v2566 = vadd.f32 0.0, %v2565
        %2567 = vmatprep.mubr.f32.mxu0 0.0
        %2568 = vmatmul.mubr.f32.gmra.mrb[0].mxu0 %v1955
        %v2569 = vpop.f32.mrb[0].mxu0
        %v2570 = vadd.f32 0.0, %v2569
        %v2571 = vpop.f32.mrb[0].mxu0
        %v2572 = vadd.f32 0.0, %v2571
        %2573 = vmatprep.mubr.f32.mxu0 0.0
        %2574 = vmatmul.mubr.f32.gmra.mrb[0].mxu0 %v1958
        %v2575 = vpop.f32.mrb[0].mxu0
        %v2576 = vadd.f32 0.0, %v2575
        %v2577 = vpop.f32.mrb[0].mxu0
        %v2578 = vadd.f32 0.0, %v2577
        %2579 = vmatprep.mubr.f32.mxu0 0.0
        %2580 = vmatmul.mubr.f32.gmra.mrb[0].mxu0 %v1961
        %v2581 = vpop.f32.mrb[0].mxu0
        %v2582 = vadd.f32 0.0, %v2581
        %v2583 = vpop.f32.mrb[0].mxu0
        %v2584 = vadd.f32 0.0, %v2583
        %2585 = vmatprep.mubr.f32.mxu0 0.0
        %2586 = vmatmul.mubr.f32.gmra.mrb[0].mxu0 %v1964
        %v2587 = vpop.f32.mrb[0].mxu0
        %v2588 = vadd.f32 0.0, %v2587
        %v2589 = vpop.f32.mrb[0].mxu0
        %v2590 = vadd.f32 0.0, %v2589
        %2591 = vmatprep.mubr.f32.mxu0 0.0
        %2592 = vmatmul.mubr.f32.gmra.mrb[0].mxu0 %v1967
        %v2593 = vpop.f32.mrb[0].mxu0
        %v2594 = vadd.f32 0.0, %v2593
        %v2595 = vpop.f32.mrb[0].mxu0
        %v2596 = vadd.f32 0.0, %v2595
        %2597 = vmatprep.mubr.f32.mxu0 0.0
        %2598 = vmatmul.mubr.f32.gmra.mrb[0].mxu0 %v1970
        %v2599 = vpop.f32.mrb[0].mxu0
        %v2600 = vadd.f32 0.0, %v2599
        %v2601 = vpop.f32.mrb[0].mxu0
        %v2602 = vadd.f32 0.0, %v2601
        %2603 = vmatprep.mubr.f32.mxu0 0.0
        %2604 = vmatmul.mubr.f32.gmra.mrb[0].mxu0 %v1973
        %v2605 = vpop.f32.mrb[0].mxu0
        %v2606 = vadd.f32 0.0, %v2605
        %v2607 = vpop.f32.mrb[0].mxu0
        %v2608 = vadd.f32 0.0, %v2607
        %2609 = vmatprep.mubr.f32.mxu0 0.0
        %2610 = vmatmul.mubr.f32.gmra.mrb[0].mxu0 %v1976
        %v2611 = vpop.f32.mrb[0].mxu0
        %v2612 = vadd.f32 0.0, %v2611
        %v2613 = vpop.f32.mrb[0].mxu0
        %v2614 = vadd.f32 0.0, %v2613
        %2615 = vmatprep.mubr.f32.mxu0 0.0
        %2616 = vmatmul.mubr.f32.gmra.mrb[0].mxu0 %v1979
        %v2617 = vpop.f32.mrb[0].mxu0
        %v2618 = vadd.f32 0.0, %v2617
        %v2619 = vpop.f32.mrb[0].mxu0
        %v2620 = vadd.f32 0.0, %v2619
        %2621 = vmatprep.mubr.f32.mxu0 0.0
        %2622 = vmatmul.mubr.f32.gmra.mrb[0].mxu0 %v1982
        %v2623 = vpop.f32.mrb[0].mxu0
        %v2624 = vadd.f32 0.0, %v2623
        %v2625 = vpop.f32.mrb[0].mxu0
        %v2626 = vadd.f32 0.0, %v2625
        %2627 = vmatprep.mubr.f32.mxu0 0.0
        %2628 = vmatmul.mubr.f32.gmra.mrb[0].mxu0 %v1985
        %v2629 = vpop.f32.mrb[0].mxu0
        %v2630 = vadd.f32 0.0, %v2629
        %v2631 = vpop.f32.mrb[0].mxu0
        %v2632 = vadd.f32 0.0, %v2631
        %2633 = vmatprep.mubr.f32.mxu0 0.0
        %2634 = vmatmul.mubr.f32.gmra.mrb[0].mxu0 %v1988
        %v2635 = vpop.f32.mrb[0].mxu0
        %v2636 = vadd.f32 0.0, %v2635
        %v2637 = vpop.f32.mrb[0].mxu0
        %v2638 = vadd.f32 0.0, %v2637
        %2639 = vmatprep.mubr.f32.mxu0 0.0
        %2640 = vmatmul.mubr.f32.gmra.mrb[0].mxu0 %v1991
        %v2641 = vpop.f32.mrb[0].mxu0
        %v2642 = vadd.f32 0.0, %v2641
        %v2643 = vpop.f32.mrb[0].mxu0
        %v2644 = vadd.f32 0.0, %v2643
        %2645 = vmatprep.mubr.f32.mxu0 0.0
        %2646 = vmatmul.mubr.f32.gmra.mrb[0].mxu0 %v1994
        %v2647 = vpop.f32.mrb[0].mxu0
        %v2648 = vadd.f32 0.0, %v2647
        %v2649 = vpop.f32.mrb[0].mxu0
        %v2650 = vadd.f32 0.0, %v2649
        %2651 = vmatprep.mubr.f32.mxu0 0.0
        %2652 = vmatmul.mubr.f32.gmra.mrb[0].mxu0 %v1997
        %v2653 = vpop.f32.mrb[0].mxu0
        %v2654 = vadd.f32 0.0, %v2653
        %v2655 = vpop.f32.mrb[0].mxu0
        %v2656 = vadd.f32 0.0, %v2655
        %2657 = vmatprep.mubr.f32.mxu0 0.0
        %2658 = vmatmul.mubr.f32.gmra.mrb[0].mxu0 %v2000
        %v2659 = vpop.f32.mrb[0].mxu0
        %v2660 = vadd.f32 0.0, %v2659
        %v2661 = vpop.f32.mrb[0].mxu0
        %v2662 = vadd.f32 0.0, %v2661
        %2663 = vmatprep.mubr.f32.mxu0 0.0
        %2664 = vmatmul.mubr.f32.gmra.mrb[0].mxu0 %v2003
        %v2665 = vpop.f32.mrb[0].mxu0
        %v2666 = vadd.f32 0.0, %v2665
        %v2667 = vpop.f32.mrb[0].mxu0
        %v2668 = vadd.f32 0.0, %v2667
        %2669 = vmatprep.mubr.f32.mxu0 0.0
        %2670 = vmatmul.mubr.f32.gmra.mrb[0].mxu0 %v2006
        %v2671 = vpop.f32.mrb[0].mxu0
        %v2672 = vadd.f32 0.0, %v2671
        %v2673 = vpop.f32.mrb[0].mxu0
        %v2674 = vadd.f32 0.0, %v2673
        %2675 = vmatprep.mubr.f32.mxu0 0.0
        %2676 = vmatmul.mubr.f32.gmra.mrb[0].mxu0 %v2009
        %v2677 = vpop.f32.mrb[0].mxu0
        %v2678 = vadd.f32 0.0, %v2677
        %v2679 = vpop.f32.mrb[0].mxu0
        %v2680 = vadd.f32 0.0, %v2679
        %2681 = vmatprep.mubr.f32.mxu0 0.0
        %2682 = vmatmul.mubr.f32.gmra.mrb[0].mxu0 %v2012
        %v2683 = vpop.f32.mrb[0].mxu0
        %v2684 = vadd.f32 0.0, %v2683
        %v2685 = vpop.f32.mrb[0].mxu0
        %v2686 = vadd.f32 0.0, %v2685
        %2687 = vmatprep.mubr.f32.mxu0 0.0
        %2688 = vmatmul.mubr.f32.gmra.mrb[0].mxu0 %v2015
        %v2689 = vpop.f32.mrb[0].mxu0
        %v2690 = vadd.f32 0.0, %v2689
        %v2691 = vpop.f32.mrb[0].mxu0
        %v2692 = vadd.f32 0.0, %v2691
        %2693 = vmatprep.mubr.f32.mxu0 0.0
        %2694 = vmatmul.mubr.f32.gmra.mrb[0].mxu0 %v2018
        %v2695 = vpop.f32.mrb[0].mxu0
        %v2696 = vadd.f32 0.0, %v2695
        %v2697 = vpop.f32.mrb[0].mxu0
        %v2698 = vadd.f32 0.0, %v2697
        %2699 = vmatprep.mubr.f32.mxu0 0.0
        %2700 = vmatmul.mubr.f32.gmra.mrb[0].mxu0 %v2021
        %v2701 = vpop.f32.mrb[0].mxu0
        %v2702 = vadd.f32 0.0, %v2701
        %v2703 = vpop.f32.mrb[0].mxu0
        %v2704 = vadd.f32 0.0, %v2703
        %2705 = vmatprep.mubr.f32.mxu0 0.0
        %2706 = vmatmul.mubr.f32.gmra.mrb[0].mxu0 %v2024
        %v2707 = vpop.f32.mrb[0].mxu0
        %v2708 = vadd.f32 0.0, %v2707
        %v2709 = vpop.f32.mrb[0].mxu0
        %v2710 = vadd.f32 0.0, %v2709
        %2711 = vmatprep.mubr.f32.mxu0 0.0
        %2712 = vmatmul.mubr.f32.gmra.mrb[0].mxu0 %v2027
        %v2713 = vpop.f32.mrb[0].mxu0
        %v2714 = vadd.f32 0.0, %v2713
        %v2715 = vpop.f32.mrb[0].mxu0
        %v2716 = vadd.f32 0.0, %v2715
        %2717 = vmatprep.mubr.f32.mxu0 0.0
        %2718 = vmatmul.mubr.f32.gmra.mrb[0].mxu0 %v2030
        %v2719 = vpop.f32.mrb[0].mxu0
        %v2720 = vadd.f32 0.0, %v2719
        %v2721 = vpop.f32.mrb[0].mxu0
        %v2722 = vadd.f32 0.0, %v2721
        %2723 = vmatprep.mubr.f32.mxu0 0.0
        %2724 = vmatmul.mubr.f32.gmra.mrb[0].mxu0 %v2033
        %v2725 = vpop.f32.mrb[0].mxu0
        %v2726 = vadd.f32 0.0, %v2725
        %v2727 = vpop.f32.mrb[0].mxu0
        %v2728 = vadd.f32 0.0, %v2727
        %2729 = vmatprep.mubr.f32.mxu0 0.0
        %2730 = vmatmul.mubr.f32.gmra.mrb[0].mxu0 %v2036
        %v2731 = vpop.f32.mrb[0].mxu0
        %v2732 = vadd.f32 0.0, %v2731
        %v2733 = vpop.f32.mrb[0].mxu0
        %v2734 = vadd.f32 0.0, %v2733
        %2735 = vmatprep.mubr.f32.mxu0 0.0
        %2736 = vmatmul.mubr.f32.gmra.mrb[0].mxu0 %v2039
        %v2737 = vpop.f32.mrb[0].mxu0
        %v2738 = vadd.f32 0.0, %v2737
        %v2739 = vpop.f32.mrb[0].mxu0
        %v2740 = vadd.f32 0.0, %v2739
        %2741 = vmatprep.mubr.f32.mxu0 0.0
        %2742 = vmatmul.mubr.f32.gmra.mrb[0].mxu0 %v2042
        %v2743 = vpop.f32.mrb[0].mxu0
        %v2744 = vadd.f32 0.0, %v2743
        %v2745 = vpop.f32.mrb[0].mxu0
        %v2746 = vadd.f32 0.0, %v2745
        %2747 = vmatprep.mubr.f32.mxu0 0.0
        %2748 = vmatmul.mubr.f32.gmra.mrb[0].mxu0 %v2045
        %v2749 = vpop.f32.mrb[0].mxu0
        %v2750 = vadd.f32 0.0, %v2749
        %v2751 = vpop.f32.mrb[0].mxu0
        %v2752 = vadd.f32 0.0, %v2751
        %2753 = vmatprep.mubr.f32.mxu0 0.0
        %2754 = vmatmul.mubr.f32.gmra.mrb[0].mxu0 %v2048
        %v2755 = vpop.f32.mrb[0].mxu0
        %v2756 = vadd.f32 0.0, %v2755
        %v2757 = vpop.f32.mrb[0].mxu0
        %v2758 = vadd.f32 0.0, %v2757
        %2759 = vmatprep.mubr.f32.mxu0 0.0
        %2760 = vmatmul.mubr.f32.gmra.mrb[0].mxu0 %v2051
        %v2761 = vpop.f32.mrb[0].mxu0
        %v2762 = vadd.f32 0.0, %v2761
        %v2763 = vpop.f32.mrb[0].mxu0
        %v2764 = vadd.f32 0.0, %v2763
        %2765 = vmatprep.mubr.f32.mxu0 0.0
        %2766 = vmatmul.mubr.f32.gmra.mrb[0].mxu0 %v2054
        %v2767 = vpop.f32.mrb[0].mxu0
        %v2768 = vadd.f32 0.0, %v2767
        %v2769 = vpop.f32.mrb[0].mxu0
        %v2770 = vadd.f32 0.0, %v2769
        %2771 = vmatprep.mubr.f32.mxu0 0.0
        %2772 = vmatmul.mubr.f32.gmra.mrb[0].mxu0 %v2057
        %v2773 = vpop.f32.mrb[0].mxu0
        %v2774 = vadd.f32 0.0, %v2773
        %v2775 = vpop.f32.mrb[0].mxu0
        %v2776 = vadd.f32 0.0, %v2775
        %2777 = vmatprep.mubr.f32.mxu0 0.0
        %2778 = vmatmul.mubr.f32.gmra.mrb[0].mxu0 %v2060
        %v2779 = vpop.f32.mrb[0].mxu0
        %v2780 = vadd.f32 0.0, %v2779
        %v2781 = vpop.f32.mrb[0].mxu0
        %v2782 = vadd.f32 0.0, %v2781
        %2783 = vmatprep.mubr.f32.mxu0 0.0
        %2784 = vmatmul.mubr.f32.gmra.mrb[0].mxu0 %v2063
        %v2785 = vpop.f32.mrb[0].mxu0
        %v2786 = vadd.f32 0.0, %v2785
        %v2787 = vpop.f32.mrb[0].mxu0
        %v2788 = vadd.f32 0.0, %v2787
        %2789 = vmatprep.mubr.f32.mxu0 0.0
        %2790 = vmatmul.mubr.f32.gmra.mrb[0].mxu0 %v2066
        %v2791 = vpop.f32.mrb[0].mxu0
        %v2792 = vadd.f32 0.0, %v2791
        %v2793 = vpop.f32.mrb[0].mxu0
        %v2794 = vadd.f32 0.0, %v2793
        %2795 = vmatprep.mubr.f32.mxu0 0.0
        %2796 = vmatmul.mubr.f32.gmra.mrb[0].mxu0 %v2069
        %v2797 = vpop.f32.mrb[0].mxu0
        %v2798 = vadd.f32 0.0, %v2797
        %v2799 = vpop.f32.mrb[0].mxu0
        %v2800 = vadd.f32 0.0, %v2799
        %2801 = vmatprep.mubr.f32.mxu0 0.0
        %2802 = vmatmul.mubr.f32.gmra.mrb[0].mxu0 %v2072
        %v2803 = vpop.f32.mrb[0].mxu0
        %v2804 = vadd.f32 0.0, %v2803
        %v2805 = vpop.f32.mrb[0].mxu0
        %v2806 = vadd.f32 0.0, %v2805
        %2807 = vmatprep.mubr.f32.mxu0 0.0
        %2808 = vmatmul.mubr.f32.gmra.mrb[0].mxu0 %v2075
        %v2809 = vpop.f32.mrb[0].mxu0
        %v2810 = vadd.f32 0.0, %v2809
        %v2811 = vpop.f32.mrb[0].mxu0
        %v2812 = vadd.f32 0.0, %v2811
        %2813 = vmatprep.mubr.f32.mxu0 0.0
        %2814 = vmatmul.mubr.f32.gmra.mrb[0].mxu0 %v2078
        %v2815 = vpop.f32.mrb[0].mxu0
        %v2816 = vadd.f32 0.0, %v2815
        %v2817 = vpop.f32.mrb[0].mxu0
        %v2818 = vadd.f32 0.0, %v2817
        %2819 = vmatprep.mubr.f32.mxu0 0.0
        %2820 = vmatmul.mubr.f32.gmra.mrb[0].mxu0 %v2081
        %v2821 = vpop.f32.mrb[0].mxu0
        %v2822 = vadd.f32 0.0, %v2821
        %v2823 = vpop.f32.mrb[0].mxu0
        %v2824 = vadd.f32 0.0, %v2823
        %2825 = vmatprep.mubr.f32.mxu0 0.0
        %2826 = vmatmul.mubr.f32.gmra.mrb[0].mxu0 %v2084
        %v2827 = vpop.f32.mrb[0].mxu0
        %v2828 = vadd.f32 0.0, %v2827
        %v2829 = vpop.f32.mrb[0].mxu0
        %v2830 = vadd.f32 0.0, %v2829
        %2831 = vmatprep.mubr.f32.mxu0 0.0
        %2832 = vmatmul.mubr.f32.gmra.mrb[0].mxu0 %v2087
        %v2833 = vpop.f32.mrb[0].mxu0
        %v2834 = vadd.f32 0.0, %v2833
        %v2835 = vpop.f32.mrb[0].mxu0
        %v2836 = vadd.f32 0.0, %v2835
        %2837 = vmatprep.mubr.f32.mxu0 0.0
        %2838 = vmatmul.mubr.f32.gmra.mrb[0].mxu0 %v2090
        %v2839 = vpop.f32.mrb[0].mxu0
        %v2840 = vadd.f32 0.0, %v2839
        %v2841 = vpop.f32.mrb[0].mxu0
        %v2842 = vadd.f32 0.0, %v2841
        %2843 = vmatprep.mubr.f32.mxu0 0.0
        %2844 = vmatmul.mubr.f32.gmra.mrb[0].mxu0 %v2093
        %v2845 = vpop.f32.mrb[0].mxu0
        %v2846 = vadd.f32 0.0, %v2845
        %v2847 = vpop.f32.mrb[0].mxu0
        %v2848 = vadd.f32 0.0, %v2847
        %2849 = vmatprep.mubr.f32.mxu0 0.0
        %2850 = vmatmul.mubr.f32.gmra.mrb[0].mxu0 %v2096
        %v2851 = vpop.f32.mrb[0].mxu0
        %v2852 = vadd.f32 0.0, %v2851
        %v2853 = vpop.f32.mrb[0].mxu0
        %v2854 = vadd.f32 0.0, %v2853
        %2855 = vmatprep.mubr.f32.mxu0 0.0
        %2856 = vmatmul.mubr.f32.gmra.mrb[0].mxu0 %v2099
        %v2857 = vpop.f32.mrb[0].mxu0
        %v2858 = vadd.f32 0.0, %v2857
        %v2859 = vpop.f32.mrb[0].mxu0
        %v2860 = vadd.f32 0.0, %v2859
        %2861 = vmatprep.mubr.f32.mxu0 0.0
        %2862 = vmatmul.mubr.f32.gmra.mrb[0].mxu0 %v2102
        %v2863 = vpop.f32.mrb[0].mxu0
        %v2864 = vadd.f32 0.0, %v2863
        %v2865 = vpop.f32.mrb[0].mxu0
        %v2866 = vadd.f32 0.0, %v2865
        %2867 = vmatprep.mubr.f32.mxu0 0.0
        %2868 = vmatmul.mubr.f32.gmra.mrb[0].mxu0 %v2105
        %v2869 = vpop.f32.mrb[0].mxu0
        %v2870 = vadd.f32 0.0, %v2869
        %v2871 = vpop.f32.mrb[0].mxu0
        %v2872 = vadd.f32 0.0, %v2871
        %2873 = vmatprep.mubr.f32.mxu0 0.0
        %2874 = vmatmul.mubr.f32.gmra.mrb[0].mxu0 %v2108
        %v2875 = vpop.f32.mrb[0].mxu0
        %v2876 = vadd.f32 0.0, %v2875
        %v2877 = vpop.f32.mrb[0].mxu0
        %v2878 = vadd.f32 0.0, %v2877
        %2879 = vmatprep.mubr.f32.mxu0 0.0
        %2880 = vmatmul.mubr.f32.gmra.mrb[0].mxu0 %v2111
        %v2881 = vpop.f32.mrb[0].mxu0
        %v2882 = vadd.f32 0.0, %v2881
        %v2883 = vpop.f32.mrb[0].mxu0
        %v2884 = vadd.f32 0.0, %v2883
        %2885 = vmatprep.mubr.f32.mxu0 0.0
        %2886 = vmatmul.mubr.f32.gmra.mrb[0].mxu0 %v2114
        %v2887 = vpop.f32.mrb[0].mxu0
        %v2888 = vadd.f32 0.0, %v2887
        %v2889 = vpop.f32.mrb[0].mxu0
        %v2890 = vadd.f32 0.0, %v2889
        %2891 = vmatprep.mubr.f32.mxu0 0.0
        %2892 = vmatmul.mubr.f32.gmra.mrb[0].mxu0 %v2117
        %v2893 = vpop.f32.mrb[0].mxu0
        %v2894 = vadd.f32 0.0, %v2893
        %v2895 = vpop.f32.mrb[0].mxu0
        %v2896 = vadd.f32 0.0, %v2895
        %2897 = vmatprep.mubr.f32.mxu0 0.0
        %2898 = vmatmul.mubr.f32.gmra.mrb[0].mxu0 %v2120
        %v2899 = vpop.f32.mrb[0].mxu0
        %v2900 = vadd.f32 0.0, %v2899
        %v2901 = vpop.f32.mrb[0].mxu0
        %v2902 = vadd.f32 0.0, %v2901
        %2903 = vmatprep.mubr.f32.mxu0 0.0
        %2904 = vmatmul.mubr.f32.gmra.mrb[0].mxu0 %v2123
        %v2905 = vpop.f32.mrb[0].mxu0
        %v2906 = vadd.f32 0.0, %v2905
        %v2907 = vpop.f32.mrb[0].mxu0
        %v2908 = vadd.f32 0.0, %v2907
        %2909 = vmatprep.mubr.f32.mxu0 0.0
        %2910 = vmatmul.mubr.f32.gmra.mrb[0].mxu0 %v2126
        %v2911 = vpop.f32.mrb[0].mxu0
        %v2912 = vadd.f32 0.0, %v2911
        %v2913 = vpop.f32.mrb[0].mxu0
        %v2914 = vadd.f32 0.0, %v2913
        %2915 = vmatprep.mubr.f32.mxu0 0.0
        %2916 = vmatmul.mubr.f32.gmra.mrb[0].mxu0 %v2129
        %v2917 = vpop.f32.mrb[0].mxu0
        %v2918 = vadd.f32 0.0, %v2917
        %v2919 = vpop.f32.mrb[0].mxu0
        %v2920 = vadd.f32 0.0, %v2919
        %2921 = vmatprep.mubr.f32.mxu0 0.0
        %2922 = vmatmul.mubr.f32.gmra.mrb[0].mxu0 %v2132
        %v2923 = vpop.f32.mrb[0].mxu0
        %v2924 = vadd.f32 0.0, %v2923
        %v2925 = vpop.f32.mrb[0].mxu0
        %v2926 = vadd.f32 0.0, %v2925
        %2927 = vmatprep.mubr.f32.mxu0 0.0
        %2928 = vmatmul.mubr.f32.gmra.mrb[0].mxu0 %v2135
        %v2929 = vpop.f32.mrb[0].mxu0
        %v2930 = vadd.f32 0.0, %v2929
        %v2931 = vpop.f32.mrb[0].mxu0
        %v2932 = vadd.f32 0.0, %v2931
        %2933 = vmatprep.mubr.f32.mxu0 0.0
        %2934 = vmatmul.mubr.f32.gmra.mrb[0].mxu0 %v2138
        %v2935 = vpop.f32.mrb[0].mxu0
        %v2936 = vadd.f32 0.0, %v2935
        %v2937 = vpop.f32.mrb[0].mxu0
        %v2938 = vadd.f32 0.0, %v2937
        %2939 = vmatprep.mubr.f32.mxu0 0.0
        %2940 = vmatmul.mubr.f32.gmra.mrb[0].mxu0 %v2141
        %v2941 = vpop.f32.mrb[0].mxu0
        %v2942 = vadd.f32 0.0, %v2941
        %v2943 = vpop.f32.mrb[0].mxu0
        %v2944 = vadd.f32 0.0, %v2943
        %2945 = vmatprep.mubr.f32.mxu0 0.0
        %2946 = vmatmul.mubr.f32.gmra.mrb[0].mxu0 %v2144
        %v2947 = vpop.f32.mrb[0].mxu0
        %v2948 = vadd.f32 0.0, %v2947
        %v2949 = vpop.f32.mrb[0].mxu0
        %v2950 = vadd.f32 0.0, %v2949
        %2951 = vmatprep.mubr.f32.mxu0 0.0
        %2952 = vmatmul.mubr.f32.gmra.mrb[0].mxu0 %v2147
        %v2953 = vpop.f32.mrb[0].mxu0
        %v2954 = vadd.f32 0.0, %v2953
        %v2955 = vpop.f32.mrb[0].mxu0
        %v2956 = vadd.f32 0.0, %v2955
        %2957 = vmatprep.mubr.f32.mxu0 0.0
        %2958 = vmatmul.mubr.f32.gmra.mrb[0].mxu0 %v2150
        %v2959 = vpop.f32.mrb[0].mxu0
        %v2960 = vadd.f32 0.0, %v2959
        %v2961 = vpop.f32.mrb[0].mxu0
        %v2962 = vadd.f32 0.0, %v2961
        %2963 = vmatprep.mubr.f32.mxu0 0.0
        %2964 = vmatmul.mubr.f32.gmra.mrb[0].mxu0 %v2153
        %v2965 = vpop.f32.mrb[0].mxu0
        %v2966 = vadd.f32 0.0, %v2965
        %v2967 = vpop.f32.mrb[0].mxu0
        %v2968 = vadd.f32 0.0, %v2967
        %2969 = vmatprep.mubr.f32.mxu0 0.0
        %2970 = vmatmul.mubr.f32.gmra.mrb[0].mxu0 %v2156
        %v2971 = vpop.f32.mrb[0].mxu0
        %v2972 = vadd.f32 0.0, %v2971
        %v2973 = vpop.f32.mrb[0].mxu0
        %v2974 = vadd.f32 0.0, %v2973
        %2975 = vmatprep.mubr.f32.mxu0 0.0
        %2976 = vmatmul.mubr.f32.gmra.mrb[0].mxu0 %v2159
        %v2977 = vpop.f32.mrb[0].mxu0
        %v2978 = vadd.f32 0.0, %v2977
        %v2979 = vpop.f32.mrb[0].mxu0
        %v2980 = vadd.f32 0.0, %v2979
        %2981 = vmatprep.mubr.f32.mxu0 0.0
        %2982 = vmatmul.mubr.f32.gmra.mrb[0].mxu0 %v2162
        %v2983 = vpop.f32.mrb[0].mxu0
        %v2984 = vadd.f32 0.0, %v2983
        %v2985 = vpop.f32.mrb[0].mxu0
        %v2986 = vadd.f32 0.0, %v2985
        %2987 = vmatprep.mubr.f32.mxu0 0.0
        %2988 = vmatmul.mubr.f32.gmra.mrb[0].mxu0 %v2165
        %v2989 = vpop.f32.mrb[0].mxu0
        %v2990 = vadd.f32 0.0, %v2989
        %v2991 = vpop.f32.mrb[0].mxu0
        %v2992 = vadd.f32 0.0, %v2991
        %2993 = vmatprep.mubr.f32.mxu0 0.0
        %2994 = vmatmul.mubr.f32.gmra.mrb[0].mxu0 %v2168
        %v2995 = vpop.f32.mrb[0].mxu0
        %v2996 = vadd.f32 0.0, %v2995
        %v2997 = vpop.f32.mrb[0].mxu0
        %v2998 = vadd.f32 0.0, %v2997
        %2999 = vmatprep.mubr.f32.mxu0 0.0
        %3000 = vmatmul.mubr.f32.gmra.mrb[0].mxu0 %v2171
        %v3001 = vpop.f32.mrb[0].mxu0
        %v3002 = vadd.f32 0.0, %v3001
        %v3003 = vpop.f32.mrb[0].mxu0
        %v3004 = vadd.f32 0.0, %v3003
        %3005 = vdwg.mxu0
        %3006 = vmatprep.subr.mxu0 %v1775
        %3007 = vmatpush1.msra.mxu0 %v1774
        %3008 = vmatprep.subr.mxu0 %v1779
        %3009 = vmatpush1.msra.mxu0 %v1778
        %3010 = vmatprep.subr.mxu0 %v1783
        %3011 = vmatpush1.msra.mxu0 %v1782
        %3012 = vmatprep.subr.mxu0 %v1787
        %3013 = vmatpush1.msra.mxu0 %v1786
        %3014 = vmatprep.subr.mxu0 0.0
        %3015 = vmatpush1.msra.mxu0 0.0
        %3016 = vmatprep.subr.mxu0 0.0
        %3017 = vmatpush1.msra.mxu0 0.0
        %3018 = vmatprep.subr.mxu0 0.0
        %3019 = vmatpush1.msra.mxu0 0.0
        %3020 = vmatprep.subr.mxu0 0.0
        %3021 = vmatpush1.msra.mxu0 0.0
        %3022 = vmatprep.subr.mxu0 0.0
        %3023 = vmatpush1.msra.mxu0 0.0
        %3024 = vmatprep.subr.mxu0 0.0
        %3025 = vmatpush1.msra.mxu0 0.0
        %3026 = vmatprep.subr.mxu0 0.0
        %3027 = vmatpush1.msra.mxu0 0.0
        %3028 = vmatprep.subr.mxu0 0.0
        %3029 = vmatpush1.msra.mxu0 0.0
        %3030 = vmatprep.subr.mxu0 0.0
        %3031 = vmatpush1.msra.mxu0 0.0
        %3032 = vmatprep.subr.mxu0 0.0
        %3033 = vmatpush1.msra.mxu0 0.0
        %3034 = vmatprep.subr.mxu0 0.0
        %3035 = vmatpush1.msra.mxu0 0.0
        %3036 = vmatprep.subr.mxu0 0.0
        %3037 = vmatpush1.msra.mxu0 0.0
        %3038 = vmatprep.subr.mxu0 0.0
        %3039 = vmatpush1.msra.mxu0 0.0
        %3040 = vmatprep.subr.mxu0 0.0
        %3041 = vmatpush1.msra.mxu0 0.0
        %3042 = vmatprep.subr.mxu0 0.0
        %3043 = vmatpush1.msra.mxu0 0.0
        %3044 = vmatprep.subr.mxu0 0.0
        %3045 = vmatpush1.msra.mxu0 0.0
        %3046 = vmatprep.subr.mxu0 0.0
        %3047 = vmatpush1.msra.mxu0 0.0
        %3048 = vmatprep.subr.mxu0 0.0
        %3049 = vmatpush1.msra.mxu0 0.0
        %3050 = vmatprep.subr.mxu0 0.0
        %3051 = vmatpush1.msra.mxu0 0.0
        %3052 = vmatprep.subr.mxu0 0.0
        %3053 = vmatpush1.msra.mxu0 0.0
        %3054 = vmatprep.subr.mxu0 0.0
        %3055 = vmatpush1.msra.mxu0 0.0
        %3056 = vmatprep.subr.mxu0 0.0
        %3057 = vmatpush1.msra.mxu0 0.0
        %3058 = vmatprep.subr.mxu0 0.0
        %3059 = vmatpush1.msra.mxu0 0.0
        %3060 = vmatprep.subr.mxu0 0.0
        %3061 = vmatpush1.msra.mxu0 0.0
        %3062 = vmatprep.subr.mxu0 0.0
        %3063 = vmatpush1.msra.mxu0 0.0
        %3064 = vmatprep.subr.mxu0 0.0
        %3065 = vmatpush1.msra.mxu0 0.0
        %3066 = vmatprep.subr.mxu0 0.0
        %3067 = vmatpush1.msra.mxu0 0.0
        %3068 = vmatprep.subr.mxu0 0.0
        %3069 = vmatpush1.msra.mxu0 0.0
        %3070 = vmatprep.mubr.f32.mxu0 0.0
        %3071 = vmatmul.mubr.f32.gmra.mrb[0].mxu0 %v1790
        %v3072 = vpop.f32.mrb[0].mxu0
        %v3073 = vadd.f32 0.0, %v3072
        %v3074 = vpop.f32.mrb[0].mxu0
        %v3075 = vadd.f32 0.0, %v3074
        %3076 = vmatprep.mubr.f32.mxu0 0.0
        %3077 = vmatmul.mubr.f32.gmra.mrb[0].mxu0 %v1793
        %v3078 = vpop.f32.mrb[0].mxu0
        %v3079 = vadd.f32 0.0, %v3078
        %v3080 = vpop.f32.mrb[0].mxu0
        %v3081 = vadd.f32 0.0, %v3080
        %3082 = vmatprep.mubr.f32.mxu0 0.0
        %3083 = vmatmul.mubr.f32.gmra.mrb[0].mxu0 %v1796
        %v3084 = vpop.f32.mrb[0].mxu0
        %v3085 = vadd.f32 0.0, %v3084
        %v3086 = vpop.f32.mrb[0].mxu0
        %v3087 = vadd.f32 0.0, %v3086
        %3088 = vmatprep.mubr.f32.mxu0 0.0
        %3089 = vmatmul.mubr.f32.gmra.mrb[0].mxu0 %v1799
        %v3090 = vpop.f32.mrb[0].mxu0
        %v3091 = vadd.f32 0.0, %v3090
        %v3092 = vpop.f32.mrb[0].mxu0
        %v3093 = vadd.f32 0.0, %v3092
        %3094 = vmatprep.mubr.f32.mxu0 0.0
        %3095 = vmatmul.mubr.f32.gmra.mrb[0].mxu0 %v1802
        %v3096 = vpop.f32.mrb[0].mxu0
        %v3097 = vadd.f32 0.0, %v3096
        %v3098 = vpop.f32.mrb[0].mxu0
        %v3099 = vadd.f32 0.0, %v3098
        %3100 = vmatprep.mubr.f32.mxu0 0.0
        %3101 = vmatmul.mubr.f32.gmra.mrb[0].mxu0 %v1805
        %v3102 = vpop.f32.mrb[0].mxu0
        %v3103 = vadd.f32 0.0, %v3102
        %v3104 = vpop.f32.mrb[0].mxu0
        %v3105 = vadd.f32 0.0, %v3104
        %3106 = vmatprep.mubr.f32.mxu0 0.0
        %3107 = vmatmul.mubr.f32.gmra.mrb[0].mxu0 %v1808
        %v3108 = vpop.f32.mrb[0].mxu0
        %v3109 = vadd.f32 0.0, %v3108
        %v3110 = vpop.f32.mrb[0].mxu0
        %v3111 = vadd.f32 0.0, %v3110
        %3112 = vmatprep.mubr.f32.mxu0 0.0
        %3113 = vmatmul.mubr.f32.gmra.mrb[0].mxu0 %v1811
        %v3114 = vpop.f32.mrb[0].mxu0
        %v3115 = vadd.f32 0.0, %v3114
        %v3116 = vpop.f32.mrb[0].mxu0
        %v3117 = vadd.f32 0.0, %v3116
        %3118 = vmatprep.mubr.f32.mxu0 0.0
        %3119 = vmatmul.mubr.f32.gmra.mrb[0].mxu0 %v1814
        %v3120 = vpop.f32.mrb[0].mxu0
        %v3121 = vadd.f32 0.0, %v3120
        %v3122 = vpop.f32.mrb[0].mxu0
        %v3123 = vadd.f32 0.0, %v3122
        %3124 = vmatprep.mubr.f32.mxu0 0.0
        %3125 = vmatmul.mubr.f32.gmra.mrb[0].mxu0 %v1817
        %v3126 = vpop.f32.mrb[0].mxu0
        %v3127 = vadd.f32 0.0, %v3126
        %v3128 = vpop.f32.mrb[0].mxu0
        %v3129 = vadd.f32 0.0, %v3128
        %3130 = vmatprep.mubr.f32.mxu0 0.0
        %3131 = vmatmul.mubr.f32.gmra.mrb[0].mxu0 %v1820
        %v3132 = vpop.f32.mrb[0].mxu0
        %v3133 = vadd.f32 0.0, %v3132
        %v3134 = vpop.f32.mrb[0].mxu0
        %v3135 = vadd.f32 0.0, %v3134
        %3136 = vmatprep.mubr.f32.mxu0 0.0
        %3137 = vmatmul.mubr.f32.gmra.mrb[0].mxu0 %v1823
        %v3138 = vpop.f32.mrb[0].mxu0
        %v3139 = vadd.f32 0.0, %v3138
        %v3140 = vpop.f32.mrb[0].mxu0
        %v3141 = vadd.f32 0.0, %v3140
        %3142 = vmatprep.mubr.f32.mxu0 0.0
        %3143 = vmatmul.mubr.f32.gmra.mrb[0].mxu0 %v1826
        %v3144 = vpop.f32.mrb[0].mxu0
        %v3145 = vadd.f32 0.0, %v3144
        %v3146 = vpop.f32.mrb[0].mxu0
        %v3147 = vadd.f32 0.0, %v3146
        %3148 = vmatprep.mubr.f32.mxu0 0.0
        %3149 = vmatmul.mubr.f32.gmra.mrb[0].mxu0 %v1829
        %v3150 = vpop.f32.mrb[0].mxu0
        %v3151 = vadd.f32 0.0, %v3150
        %v3152 = vpop.f32.mrb[0].mxu0
        %v3153 = vadd.f32 0.0, %v3152
        %3154 = vmatprep.mubr.f32.mxu0 0.0
        %3155 = vmatmul.mubr.f32.gmra.mrb[0].mxu0 %v1832
        %v3156 = vpop.f32.mrb[0].mxu0
        %v3157 = vadd.f32 0.0, %v3156
        %v3158 = vpop.f32.mrb[0].mxu0
        %v3159 = vadd.f32 0.0, %v3158
        %3160 = vmatprep.mubr.f32.mxu0 0.0
        %3161 = vmatmul.mubr.f32.gmra.mrb[0].mxu0 %v1835
        %v3162 = vpop.f32.mrb[0].mxu0
        %v3163 = vadd.f32 0.0, %v3162
        %v3164 = vpop.f32.mrb[0].mxu0
        %v3165 = vadd.f32 0.0, %v3164
        %3166 = vmatprep.mubr.f32.mxu0 0.0
        %3167 = vmatmul.mubr.f32.gmra.mrb[0].mxu0 %v1838
        %v3168 = vpop.f32.mrb[0].mxu0
        %v3169 = vadd.f32 0.0, %v3168
        %v3170 = vpop.f32.mrb[0].mxu0
        %v3171 = vadd.f32 0.0, %v3170
        %3172 = vmatprep.mubr.f32.mxu0 0.0
        %3173 = vmatmul.mubr.f32.gmra.mrb[0].mxu0 %v1841
        %v3174 = vpop.f32.mrb[0].mxu0
        %v3175 = vadd.f32 0.0, %v3174
        %v3176 = vpop.f32.mrb[0].mxu0
        %v3177 = vadd.f32 0.0, %v3176
        %3178 = vmatprep.mubr.f32.mxu0 0.0
        %3179 = vmatmul.mubr.f32.gmra.mrb[0].mxu0 %v1844
        %v3180 = vpop.f32.mrb[0].mxu0
        %v3181 = vadd.f32 0.0, %v3180
        %v3182 = vpop.f32.mrb[0].mxu0
        %v3183 = vadd.f32 0.0, %v3182
        %3184 = vmatprep.mubr.f32.mxu0 0.0
        %3185 = vmatmul.mubr.f32.gmra.mrb[0].mxu0 %v1847
        %v3186 = vpop.f32.mrb[0].mxu0
        %v3187 = vadd.f32 0.0, %v3186
        %v3188 = vpop.f32.mrb[0].mxu0
        %v3189 = vadd.f32 0.0, %v3188
        %3190 = vmatprep.mubr.f32.mxu0 0.0
        %3191 = vmatmul.mubr.f32.gmra.mrb[0].mxu0 %v1850
        %v3192 = vpop.f32.mrb[0].mxu0
        %v3193 = vadd.f32 0.0, %v3192
        %v3194 = vpop.f32.mrb[0].mxu0
        %v3195 = vadd.f32 0.0, %v3194
        %3196 = vmatprep.mubr.f32.mxu0 0.0
        %3197 = vmatmul.mubr.f32.gmra.mrb[0].mxu0 %v1853
        %v3198 = vpop.f32.mrb[0].mxu0
        %v3199 = vadd.f32 0.0, %v3198
        %v3200 = vpop.f32.mrb[0].mxu0
        %v3201 = vadd.f32 0.0, %v3200
        %3202 = vmatprep.mubr.f32.mxu0 0.0
        %3203 = vmatmul.mubr.f32.gmra.mrb[0].mxu0 %v1856
        %v3204 = vpop.f32.mrb[0].mxu0
        %v3205 = vadd.f32 0.0, %v3204
        %v3206 = vpop.f32.mrb[0].mxu0
        %v3207 = vadd.f32 0.0, %v3206
        %3208 = vmatprep.mubr.f32.mxu0 0.0
        %3209 = vmatmul.mubr.f32.gmra.mrb[0].mxu0 %v1859
        %v3210 = vpop.f32.mrb[0].mxu0
        %v3211 = vadd.f32 0.0, %v3210
        %v3212 = vpop.f32.mrb[0].mxu0
        %v3213 = vadd.f32 0.0, %v3212
        %3214 = vmatprep.mubr.f32.mxu0 0.0
        %3215 = vmatmul.mubr.f32.gmra.mrb[0].mxu0 %v1862
        %v3216 = vpop.f32.mrb[0].mxu0
        %v3217 = vadd.f32 0.0, %v3216
        %v3218 = vpop.f32.mrb[0].mxu0
        %v3219 = vadd.f32 0.0, %v3218
        %3220 = vmatprep.mubr.f32.mxu0 0.0
        %3221 = vmatmul.mubr.f32.gmra.mrb[0].mxu0 %v1865
        %v3222 = vpop.f32.mrb[0].mxu0
        %v3223 = vadd.f32 0.0, %v3222
        %v3224 = vpop.f32.mrb[0].mxu0
        %v3225 = vadd.f32 0.0, %v3224
        %3226 = vmatprep.mubr.f32.mxu0 0.0
        %3227 = vmatmul.mubr.f32.gmra.mrb[0].mxu0 %v1868
        %v3228 = vpop.f32.mrb[0].mxu0
        %v3229 = vadd.f32 0.0, %v3228
        %v3230 = vpop.f32.mrb[0].mxu0
        %v3231 = vadd.f32 0.0, %v3230
        %3232 = vmatprep.mubr.f32.mxu0 0.0
        %3233 = vmatmul.mubr.f32.gmra.mrb[0].mxu0 %v1871
        %v3234 = vpop.f32.mrb[0].mxu0
        %v3235 = vadd.f32 0.0, %v3234
        %v3236 = vpop.f32.mrb[0].mxu0
        %v3237 = vadd.f32 0.0, %v3236
        %3238 = vmatprep.mubr.f32.mxu0 0.0
        %3239 = vmatmul.mubr.f32.gmra.mrb[0].mxu0 %v1874
        %v3240 = vpop.f32.mrb[0].mxu0
        %v3241 = vadd.f32 0.0, %v3240
        %v3242 = vpop.f32.mrb[0].mxu0
        %v3243 = vadd.f32 0.0, %v3242
        %3244 = vmatprep.mubr.f32.mxu0 0.0
        %3245 = vmatmul.mubr.f32.gmra.mrb[0].mxu0 %v1877
        %v3246 = vpop.f32.mrb[0].mxu0
        %v3247 = vadd.f32 0.0, %v3246
        %v3248 = vpop.f32.mrb[0].mxu0
        %v3249 = vadd.f32 0.0, %v3248
        %3250 = vmatprep.mubr.f32.mxu0 0.0
        %3251 = vmatmul.mubr.f32.gmra.mrb[0].mxu0 %v1880
        %v3252 = vpop.f32.mrb[0].mxu0
        %v3253 = vadd.f32 0.0, %v3252
        %v3254 = vpop.f32.mrb[0].mxu0
        %v3255 = vadd.f32 0.0, %v3254
        %3256 = vmatprep.mubr.f32.mxu0 0.0
        %3257 = vmatmul.mubr.f32.gmra.mrb[0].mxu0 %v1883
        %v3258 = vpop.f32.mrb[0].mxu0
        %v3259 = vadd.f32 0.0, %v3258
        %v3260 = vpop.f32.mrb[0].mxu0
        %v3261 = vadd.f32 0.0, %v3260
        %3262 = vmatprep.mubr.f32.mxu0 0.0
        %3263 = vmatmul.mubr.f32.gmra.mrb[0].mxu0 %v1886
        %v3264 = vpop.f32.mrb[0].mxu0
        %v3265 = vadd.f32 0.0, %v3264
        %v3266 = vpop.f32.mrb[0].mxu0
        %v3267 = vadd.f32 0.0, %v3266
        %3268 = vmatprep.mubr.f32.mxu0 0.0
        %3269 = vmatmul.mubr.f32.gmra.mrb[0].mxu0 %v1889
        %v3270 = vpop.f32.mrb[0].mxu0
        %v3271 = vadd.f32 0.0, %v3270
        %v3272 = vpop.f32.mrb[0].mxu0
        %v3273 = vadd.f32 0.0, %v3272
        %3274 = vmatprep.mubr.f32.mxu0 0.0
        %3275 = vmatmul.mubr.f32.gmra.mrb[0].mxu0 %v1892
        %v3276 = vpop.f32.mrb[0].mxu0
        %v3277 = vadd.f32 0.0, %v3276
        %v3278 = vpop.f32.mrb[0].mxu0
        %v3279 = vadd.f32 0.0, %v3278
        %3280 = vmatprep.mubr.f32.mxu0 0.0
        %3281 = vmatmul.mubr.f32.gmra.mrb[0].mxu0 %v1895
        %v3282 = vpop.f32.mrb[0].mxu0
        %v3283 = vadd.f32 0.0, %v3282
        %v3284 = vpop.f32.mrb[0].mxu0
        %v3285 = vadd.f32 0.0, %v3284
        %3286 = vmatprep.mubr.f32.mxu0 0.0
        %3287 = vmatmul.mubr.f32.gmra.mrb[0].mxu0 %v1898
        %v3288 = vpop.f32.mrb[0].mxu0
        %v3289 = vadd.f32 0.0, %v3288
        %v3290 = vpop.f32.mrb[0].mxu0
        %v3291 = vadd.f32 0.0, %v3290
        %3292 = vmatprep.mubr.f32.mxu0 0.0
        %3293 = vmatmul.mubr.f32.gmra.mrb[0].mxu0 %v1901
        %v3294 = vpop.f32.mrb[0].mxu0
        %v3295 = vadd.f32 0.0, %v3294
        %v3296 = vpop.f32.mrb[0].mxu0
        %v3297 = vadd.f32 0.0, %v3296
        %3298 = vmatprep.mubr.f32.mxu0 0.0
        %3299 = vmatmul.mubr.f32.gmra.mrb[0].mxu0 %v1904
        %v3300 = vpop.f32.mrb[0].mxu0
        %v3301 = vadd.f32 0.0, %v3300
        %v3302 = vpop.f32.mrb[0].mxu0
        %v3303 = vadd.f32 0.0, %v3302
        %3304 = vmatprep.mubr.f32.mxu0 0.0
        %3305 = vmatmul.mubr.f32.gmra.mrb[0].mxu0 %v1907
        %v3306 = vpop.f32.mrb[0].mxu0
        %v3307 = vadd.f32 0.0, %v3306
        %v3308 = vpop.f32.mrb[0].mxu0
        %v3309 = vadd.f32 0.0, %v3308
        %3310 = vmatprep.mubr.f32.mxu0 0.0
        %3311 = vmatmul.mubr.f32.gmra.mrb[0].mxu0 %v1910
        %v3312 = vpop.f32.mrb[0].mxu0
        %v3313 = vadd.f32 0.0, %v3312
        %v3314 = vpop.f32.mrb[0].mxu0
        %v3315 = vadd.f32 0.0, %v3314
        %3316 = vmatprep.mubr.f32.mxu0 0.0
        %3317 = vmatmul.mubr.f32.gmra.mrb[0].mxu0 %v1913
        %v3318 = vpop.f32.mrb[0].mxu0
        %v3319 = vadd.f32 0.0, %v3318
        %v3320 = vpop.f32.mrb[0].mxu0
        %v3321 = vadd.f32 0.0, %v3320
        %3322 = vmatprep.mubr.f32.mxu0 0.0
        %3323 = vmatmul.mubr.f32.gmra.mrb[0].mxu0 %v1916
        %v3324 = vpop.f32.mrb[0].mxu0
        %v3325 = vadd.f32 0.0, %v3324
        %v3326 = vpop.f32.mrb[0].mxu0
        %v3327 = vadd.f32 0.0, %v3326
        %3328 = vmatprep.mubr.f32.mxu0 0.0
        %3329 = vmatmul.mubr.f32.gmra.mrb[0].mxu0 %v1919
        %v3330 = vpop.f32.mrb[0].mxu0
        %v3331 = vadd.f32 0.0, %v3330
        %v3332 = vpop.f32.mrb[0].mxu0
        %v3333 = vadd.f32 0.0, %v3332
        %3334 = vmatprep.mubr.f32.mxu0 0.0
        %3335 = vmatmul.mubr.f32.gmra.mrb[0].mxu0 %v1922
        %v3336 = vpop.f32.mrb[0].mxu0
        %v3337 = vadd.f32 0.0, %v3336
        %v3338 = vpop.f32.mrb[0].mxu0
        %v3339 = vadd.f32 0.0, %v3338
        %3340 = vmatprep.mubr.f32.mxu0 0.0
        %3341 = vmatmul.mubr.f32.gmra.mrb[0].mxu0 %v1925
        %v3342 = vpop.f32.mrb[0].mxu0
        %v3343 = vadd.f32 0.0, %v3342
        %v3344 = vpop.f32.mrb[0].mxu0
        %v3345 = vadd.f32 0.0, %v3344
        %3346 = vmatprep.mubr.f32.mxu0 0.0
        %3347 = vmatmul.mubr.f32.gmra.mrb[0].mxu0 %v1928
        %v3348 = vpop.f32.mrb[0].mxu0
        %v3349 = vadd.f32 0.0, %v3348
        %v3350 = vpop.f32.mrb[0].mxu0
        %v3351 = vadd.f32 0.0, %v3350
        %3352 = vmatprep.mubr.f32.mxu0 0.0
        %3353 = vmatmul.mubr.f32.gmra.mrb[0].mxu0 %v1931
        %v3354 = vpop.f32.mrb[0].mxu0
        %v3355 = vadd.f32 0.0, %v3354
        %v3356 = vpop.f32.mrb[0].mxu0
        %v3357 = vadd.f32 0.0, %v3356
        %3358 = vmatprep.mubr.f32.mxu0 0.0
        %3359 = vmatmul.mubr.f32.gmra.mrb[0].mxu0 %v1934
        %v3360 = vpop.f32.mrb[0].mxu0
        %v3361 = vadd.f32 0.0, %v3360
        %v3362 = vpop.f32.mrb[0].mxu0
        %v3363 = vadd.f32 0.0, %v3362
        %3364 = vmatprep.mubr.f32.mxu0 0.0
        %3365 = vmatmul.mubr.f32.gmra.mrb[0].mxu0 %v1937
        %v3366 = vpop.f32.mrb[0].mxu0
        %v3367 = vadd.f32 0.0, %v3366
        %v3368 = vpop.f32.mrb[0].mxu0
        %v3369 = vadd.f32 0.0, %v3368
        %3370 = vmatprep.mubr.f32.mxu0 0.0
        %3371 = vmatmul.mubr.f32.gmra.mrb[0].mxu0 %v1940
        %v3372 = vpop.f32.mrb[0].mxu0
        %v3373 = vadd.f32 0.0, %v3372
        %v3374 = vpop.f32.mrb[0].mxu0
        %v3375 = vadd.f32 0.0, %v3374
        %3376 = vmatprep.mubr.f32.mxu0 0.0
        %3377 = vmatmul.mubr.f32.gmra.mrb[0].mxu0 %v1943
        %v3378 = vpop.f32.mrb[0].mxu0
        %v3379 = vadd.f32 0.0, %v3378
        %v3380 = vpop.f32.mrb[0].mxu0
        %v3381 = vadd.f32 0.0, %v3380
        %3382 = vmatprep.mubr.f32.mxu0 0.0
        %3383 = vmatmul.mubr.f32.gmra.mrb[0].mxu0 %v1946
        %v3384 = vpop.f32.mrb[0].mxu0
        %v3385 = vadd.f32 0.0, %v3384
        %v3386 = vpop.f32.mrb[0].mxu0
        %v3387 = vadd.f32 0.0, %v3386
        %3388 = vmatprep.mubr.f32.mxu0 0.0
        %3389 = vmatmul.mubr.f32.gmra.mrb[0].mxu0 %v1949
        %v3390 = vpop.f32.mrb[0].mxu0
        %v3391 = vadd.f32 0.0, %v3390
        %v3392 = vpop.f32.mrb[0].mxu0
        %v3393 = vadd.f32 0.0, %v3392
        %3394 = vmatprep.mubr.f32.mxu0 0.0
        %3395 = vmatmul.mubr.f32.gmra.mrb[0].mxu0 %v1952
        %v3396 = vpop.f32.mrb[0].mxu0
        %v3397 = vadd.f32 0.0, %v3396
        %v3398 = vpop.f32.mrb[0].mxu0
        %v3399 = vadd.f32 0.0, %v3398
        %3400 = vmatprep.mubr.f32.mxu0 0.0
        %3401 = vmatmul.mubr.f32.gmra.mrb[0].mxu0 %v1955
        %v3402 = vpop.f32.mrb[0].mxu0
        %v3403 = vadd.f32 0.0, %v3402
        %v3404 = vpop.f32.mrb[0].mxu0
        %v3405 = vadd.f32 0.0, %v3404
        %3406 = vmatprep.mubr.f32.mxu0 0.0
        %3407 = vmatmul.mubr.f32.gmra.mrb[0].mxu0 %v1958
        %v3408 = vpop.f32.mrb[0].mxu0
        %v3409 = vadd.f32 0.0, %v3408
        %v3410 = vpop.f32.mrb[0].mxu0
        %v3411 = vadd.f32 0.0, %v3410
        %3412 = vmatprep.mubr.f32.mxu0 0.0
        %3413 = vmatmul.mubr.f32.gmra.mrb[0].mxu0 %v1961
        %v3414 = vpop.f32.mrb[0].mxu0
        %v3415 = vadd.f32 0.0, %v3414
        %v3416 = vpop.f32.mrb[0].mxu0
        %v3417 = vadd.f32 0.0, %v3416
        %3418 = vmatprep.mubr.f32.mxu0 0.0
        %3419 = vmatmul.mubr.f32.gmra.mrb[0].mxu0 %v1964
        %v3420 = vpop.f32.mrb[0].mxu0
        %v3421 = vadd.f32 0.0, %v3420
        %v3422 = vpop.f32.mrb[0].mxu0
        %v3423 = vadd.f32 0.0, %v3422
        %3424 = vmatprep.mubr.f32.mxu0 0.0
        %3425 = vmatmul.mubr.f32.gmra.mrb[0].mxu0 %v1967
        %v3426 = vpop.f32.mrb[0].mxu0
        %v3427 = vadd.f32 0.0, %v3426
        %v3428 = vpop.f32.mrb[0].mxu0
        %v3429 = vadd.f32 0.0, %v3428
        %3430 = vmatprep.mubr.f32.mxu0 0.0
        %3431 = vmatmul.mubr.f32.gmra.mrb[0].mxu0 %v1970
        %v3432 = vpop.f32.mrb[0].mxu0
        %v3433 = vadd.f32 0.0, %v3432
        %v3434 = vpop.f32.mrb[0].mxu0
        %v3435 = vadd.f32 0.0, %v3434
        %3436 = vmatprep.mubr.f32.mxu0 0.0
        %3437 = vmatmul.mubr.f32.gmra.mrb[0].mxu0 %v1973
        %v3438 = vpop.f32.mrb[0].mxu0
        %v3439 = vadd.f32 0.0, %v3438
        %v3440 = vpop.f32.mrb[0].mxu0
        %v3441 = vadd.f32 0.0, %v3440
        %3442 = vmatprep.mubr.f32.mxu0 0.0
        %3443 = vmatmul.mubr.f32.gmra.mrb[0].mxu0 %v1976
        %v3444 = vpop.f32.mrb[0].mxu0
        %v3445 = vadd.f32 0.0, %v3444
        %v3446 = vpop.f32.mrb[0].mxu0
        %v3447 = vadd.f32 0.0, %v3446
        %3448 = vmatprep.mubr.f32.mxu0 0.0
        %3449 = vmatmul.mubr.f32.gmra.mrb[0].mxu0 %v1979
        %v3450 = vpop.f32.mrb[0].mxu0
        %v3451 = vadd.f32 0.0, %v3450
        %v3452 = vpop.f32.mrb[0].mxu0
        %v3453 = vadd.f32 0.0, %v3452
        %3454 = vmatprep.mubr.f32.mxu0 0.0
        %3455 = vmatmul.mubr.f32.gmra.mrb[0].mxu0 %v1982
        %v3456 = vpop.f32.mrb[0].mxu0
        %v3457 = vadd.f32 0.0, %v3456
        %v3458 = vpop.f32.mrb[0].mxu0
        %v3459 = vadd.f32 0.0, %v3458
        %3460 = vmatprep.mubr.f32.mxu0 0.0
        %3461 = vmatmul.mubr.f32.gmra.mrb[0].mxu0 %v1985
        %v3462 = vpop.f32.mrb[0].mxu0
        %v3463 = vadd.f32 0.0, %v3462
        %v3464 = vpop.f32.mrb[0].mxu0
        %v3465 = vadd.f32 0.0, %v3464
        %3466 = vmatprep.mubr.f32.mxu0 0.0
        %3467 = vmatmul.mubr.f32.gmra.mrb[0].mxu0 %v1988
        %v3468 = vpop.f32.mrb[0].mxu0
        %v3469 = vadd.f32 0.0, %v3468
        %v3470 = vpop.f32.mrb[0].mxu0
        %v3471 = vadd.f32 0.0, %v3470
        %3472 = vmatprep.mubr.f32.mxu0 0.0
        %3473 = vmatmul.mubr.f32.gmra.mrb[0].mxu0 %v1991
        %v3474 = vpop.f32.mrb[0].mxu0
        %v3475 = vadd.f32 0.0, %v3474
        %v3476 = vpop.f32.mrb[0].mxu0
        %v3477 = vadd.f32 0.0, %v3476
        %3478 = vmatprep.mubr.f32.mxu0 0.0
        %3479 = vmatmul.mubr.f32.gmra.mrb[0].mxu0 %v1994
        %v3480 = vpop.f32.mrb[0].mxu0
        %v3481 = vadd.f32 0.0, %v3480
        %v3482 = vpop.f32.mrb[0].mxu0
        %v3483 = vadd.f32 0.0, %v3482
        %3484 = vmatprep.mubr.f32.mxu0 0.0
        %3485 = vmatmul.mubr.f32.gmra.mrb[0].mxu0 %v1997
        %v3486 = vpop.f32.mrb[0].mxu0
        %v3487 = vadd.f32 0.0, %v3486
        %v3488 = vpop.f32.mrb[0].mxu0
        %v3489 = vadd.f32 0.0, %v3488
        %3490 = vmatprep.mubr.f32.mxu0 0.0
        %3491 = vmatmul.mubr.f32.gmra.mrb[0].mxu0 %v2000
        %v3492 = vpop.f32.mrb[0].mxu0
        %v3493 = vadd.f32 0.0, %v3492
        %v3494 = vpop.f32.mrb[0].mxu0
        %v3495 = vadd.f32 0.0, %v3494
        %3496 = vmatprep.mubr.f32.mxu0 0.0
        %3497 = vmatmul.mubr.f32.gmra.mrb[0].mxu0 %v2003
        %v3498 = vpop.f32.mrb[0].mxu0
        %v3499 = vadd.f32 0.0, %v3498
        %v3500 = vpop.f32.mrb[0].mxu0
        %v3501 = vadd.f32 0.0, %v3500
        %3502 = vmatprep.mubr.f32.mxu0 0.0
        %3503 = vmatmul.mubr.f32.gmra.mrb[0].mxu0 %v2006
        %v3504 = vpop.f32.mrb[0].mxu0
        %v3505 = vadd.f32 0.0, %v3504
        %v3506 = vpop.f32.mrb[0].mxu0
        %v3507 = vadd.f32 0.0, %v3506
        %3508 = vmatprep.mubr.f32.mxu0 0.0
        %3509 = vmatmul.mubr.f32.gmra.mrb[0].mxu0 %v2009
        %v3510 = vpop.f32.mrb[0].mxu0
        %v3511 = vadd.f32 0.0, %v3510
        %v3512 = vpop.f32.mrb[0].mxu0
        %v3513 = vadd.f32 0.0, %v3512
        %3514 = vmatprep.mubr.f32.mxu0 0.0
        %3515 = vmatmul.mubr.f32.gmra.mrb[0].mxu0 %v2012
        %v3516 = vpop.f32.mrb[0].mxu0
        %v3517 = vadd.f32 0.0, %v3516
        %v3518 = vpop.f32.mrb[0].mxu0
        %v3519 = vadd.f32 0.0, %v3518
        %3520 = vmatprep.mubr.f32.mxu0 0.0
        %3521 = vmatmul.mubr.f32.gmra.mrb[0].mxu0 %v2015
        %v3522 = vpop.f32.mrb[0].mxu0
        %v3523 = vadd.f32 0.0, %v3522
        %v3524 = vpop.f32.mrb[0].mxu0
        %v3525 = vadd.f32 0.0, %v3524
        %3526 = vmatprep.mubr.f32.mxu0 0.0
        %3527 = vmatmul.mubr.f32.gmra.mrb[0].mxu0 %v2018
        %v3528 = vpop.f32.mrb[0].mxu0
        %v3529 = vadd.f32 0.0, %v3528
        %v3530 = vpop.f32.mrb[0].mxu0
        %v3531 = vadd.f32 0.0, %v3530
        %3532 = vmatprep.mubr.f32.mxu0 0.0
        %3533 = vmatmul.mubr.f32.gmra.mrb[0].mxu0 %v2021
        %v3534 = vpop.f32.mrb[0].mxu0
        %v3535 = vadd.f32 0.0, %v3534
        %v3536 = vpop.f32.mrb[0].mxu0
        %v3537 = vadd.f32 0.0, %v3536
        %3538 = vmatprep.mubr.f32.mxu0 0.0
        %3539 = vmatmul.mubr.f32.gmra.mrb[0].mxu0 %v2024
        %v3540 = vpop.f32.mrb[0].mxu0
        %v3541 = vadd.f32 0.0, %v3540
        %v3542 = vpop.f32.mrb[0].mxu0
        %v3543 = vadd.f32 0.0, %v3542
        %3544 = vmatprep.mubr.f32.mxu0 0.0
        %3545 = vmatmul.mubr.f32.gmra.mrb[0].mxu0 %v2027
        %v3546 = vpop.f32.mrb[0].mxu0
        %v3547 = vadd.f32 0.0, %v3546
        %v3548 = vpop.f32.mrb[0].mxu0
        %v3549 = vadd.f32 0.0, %v3548
        %3550 = vmatprep.mubr.f32.mxu0 0.0
        %3551 = vmatmul.mubr.f32.gmra.mrb[0].mxu0 %v2030
        %v3552 = vpop.f32.mrb[0].mxu0
        %v3553 = vadd.f32 0.0, %v3552
        %v3554 = vpop.f32.mrb[0].mxu0
        %v3555 = vadd.f32 0.0, %v3554
        %3556 = vmatprep.mubr.f32.mxu0 0.0
        %3557 = vmatmul.mubr.f32.gmra.mrb[0].mxu0 %v2033
        %v3558 = vpop.f32.mrb[0].mxu0
        %v3559 = vadd.f32 0.0, %v3558
        %v3560 = vpop.f32.mrb[0].mxu0
        %v3561 = vadd.f32 0.0, %v3560
        %3562 = vmatprep.mubr.f32.mxu0 0.0
        %3563 = vmatmul.mubr.f32.gmra.mrb[0].mxu0 %v2036
        %v3564 = vpop.f32.mrb[0].mxu0
        %v3565 = vadd.f32 0.0, %v3564
        %v3566 = vpop.f32.mrb[0].mxu0
        %v3567 = vadd.f32 0.0, %v3566
        %3568 = vmatprep.mubr.f32.mxu0 0.0
        %3569 = vmatmul.mubr.f32.gmra.mrb[0].mxu0 %v2039
        %v3570 = vpop.f32.mrb[0].mxu0
        %v3571 = vadd.f32 0.0, %v3570
        %v3572 = vpop.f32.mrb[0].mxu0
        %v3573 = vadd.f32 0.0, %v3572
        %3574 = vmatprep.mubr.f32.mxu0 0.0
        %3575 = vmatmul.mubr.f32.gmra.mrb[0].mxu0 %v2042
        %v3576 = vpop.f32.mrb[0].mxu0
        %v3577 = vadd.f32 0.0, %v3576
        %v3578 = vpop.f32.mrb[0].mxu0
        %v3579 = vadd.f32 0.0, %v3578
        %3580 = vmatprep.mubr.f32.mxu0 0.0
        %3581 = vmatmul.mubr.f32.gmra.mrb[0].mxu0 %v2045
        %v3582 = vpop.f32.mrb[0].mxu0
        %v3583 = vadd.f32 0.0, %v3582
        %v3584 = vpop.f32.mrb[0].mxu0
        %v3585 = vadd.f32 0.0, %v3584
        %3586 = vmatprep.mubr.f32.mxu0 0.0
        %3587 = vmatmul.mubr.f32.gmra.mrb[0].mxu0 %v2048
        %v3588 = vpop.f32.mrb[0].mxu0
        %v3589 = vadd.f32 0.0, %v3588
        %v3590 = vpop.f32.mrb[0].mxu0
        %v3591 = vadd.f32 0.0, %v3590
        %3592 = vmatprep.mubr.f32.mxu0 0.0
        %3593 = vmatmul.mubr.f32.gmra.mrb[0].mxu0 %v2051
        %v3594 = vpop.f32.mrb[0].mxu0
        %v3595 = vadd.f32 0.0, %v3594
        %v3596 = vpop.f32.mrb[0].mxu0
        %v3597 = vadd.f32 0.0, %v3596
        %3598 = vmatprep.mubr.f32.mxu0 0.0
        %3599 = vmatmul.mubr.f32.gmra.mrb[0].mxu0 %v2054
        %v3600 = vpop.f32.mrb[0].mxu0
        %v3601 = vadd.f32 0.0, %v3600
        %v3602 = vpop.f32.mrb[0].mxu0
        %v3603 = vadd.f32 0.0, %v3602
        %3604 = vmatprep.mubr.f32.mxu0 0.0
        %3605 = vmatmul.mubr.f32.gmra.mrb[0].mxu0 %v2057
        %v3606 = vpop.f32.mrb[0].mxu0
        %v3607 = vadd.f32 0.0, %v3606
        %v3608 = vpop.f32.mrb[0].mxu0
        %v3609 = vadd.f32 0.0, %v3608
        %3610 = vmatprep.mubr.f32.mxu0 0.0
        %3611 = vmatmul.mubr.f32.gmra.mrb[0].mxu0 %v2060
        %v3612 = vpop.f32.mrb[0].mxu0
        %v3613 = vadd.f32 0.0, %v3612
        %v3614 = vpop.f32.mrb[0].mxu0
        %v3615 = vadd.f32 0.0, %v3614
        %3616 = vmatprep.mubr.f32.mxu0 0.0
        %3617 = vmatmul.mubr.f32.gmra.mrb[0].mxu0 %v2063
        %v3618 = vpop.f32.mrb[0].mxu0
        %v3619 = vadd.f32 0.0, %v3618
        %v3620 = vpop.f32.mrb[0].mxu0
        %v3621 = vadd.f32 0.0, %v3620
        %3622 = vmatprep.mubr.f32.mxu0 0.0
        %3623 = vmatmul.mubr.f32.gmra.mrb[0].mxu0 %v2066
        %v3624 = vpop.f32.mrb[0].mxu0
        %v3625 = vadd.f32 0.0, %v3624
        %v3626 = vpop.f32.mrb[0].mxu0
        %v3627 = vadd.f32 0.0, %v3626
        %3628 = vmatprep.mubr.f32.mxu0 0.0
        %3629 = vmatmul.mubr.f32.gmra.mrb[0].mxu0 %v2069
        %v3630 = vpop.f32.mrb[0].mxu0
        %v3631 = vadd.f32 0.0, %v3630
        %v3632 = vpop.f32.mrb[0].mxu0
        %v3633 = vadd.f32 0.0, %v3632
        %3634 = vmatprep.mubr.f32.mxu0 0.0
        %3635 = vmatmul.mubr.f32.gmra.mrb[0].mxu0 %v2072
        %v3636 = vpop.f32.mrb[0].mxu0
        %v3637 = vadd.f32 0.0, %v3636
        %v3638 = vpop.f32.mrb[0].mxu0
        %v3639 = vadd.f32 0.0, %v3638
        %3640 = vmatprep.mubr.f32.mxu0 0.0
        %3641 = vmatmul.mubr.f32.gmra.mrb[0].mxu0 %v2075
        %v3642 = vpop.f32.mrb[0].mxu0
        %v3643 = vadd.f32 0.0, %v3642
        %v3644 = vpop.f32.mrb[0].mxu0
        %v3645 = vadd.f32 0.0, %v3644
        %3646 = vmatprep.mubr.f32.mxu0 0.0
        %3647 = vmatmul.mubr.f32.gmra.mrb[0].mxu0 %v2078
        %v3648 = vpop.f32.mrb[0].mxu0
        %v3649 = vadd.f32 0.0, %v3648
        %v3650 = vpop.f32.mrb[0].mxu0
        %v3651 = vadd.f32 0.0, %v3650
        %3652 = vmatprep.mubr.f32.mxu0 0.0
        %3653 = vmatmul.mubr.f32.gmra.mrb[0].mxu0 %v2081
        %v3654 = vpop.f32.mrb[0].mxu0
        %v3655 = vadd.f32 0.0, %v3654
        %v3656 = vpop.f32.mrb[0].mxu0
        %v3657 = vadd.f32 0.0, %v3656
        %3658 = vmatprep.mubr.f32.mxu0 0.0
        %3659 = vmatmul.mubr.f32.gmra.mrb[0].mxu0 %v2084
        %v3660 = vpop.f32.mrb[0].mxu0
        %v3661 = vadd.f32 0.0, %v3660
        %v3662 = vpop.f32.mrb[0].mxu0
        %v3663 = vadd.f32 0.0, %v3662
        %3664 = vmatprep.mubr.f32.mxu0 0.0
        %3665 = vmatmul.mubr.f32.gmra.mrb[0].mxu0 %v2087
        %v3666 = vpop.f32.mrb[0].mxu0
        %v3667 = vadd.f32 0.0, %v3666
        %v3668 = vpop.f32.mrb[0].mxu0
        %v3669 = vadd.f32 0.0, %v3668
        %3670 = vmatprep.mubr.f32.mxu0 0.0
        %3671 = vmatmul.mubr.f32.gmra.mrb[0].mxu0 %v2090
        %v3672 = vpop.f32.mrb[0].mxu0
        %v3673 = vadd.f32 0.0, %v3672
        %v3674 = vpop.f32.mrb[0].mxu0
        %v3675 = vadd.f32 0.0, %v3674
        %3676 = vmatprep.mubr.f32.mxu0 0.0
        %3677 = vmatmul.mubr.f32.gmra.mrb[0].mxu0 %v2093
        %v3678 = vpop.f32.mrb[0].mxu0
        %v3679 = vadd.f32 0.0, %v3678
        %v3680 = vpop.f32.mrb[0].mxu0
        %v3681 = vadd.f32 0.0, %v3680
        %3682 = vmatprep.mubr.f32.mxu0 0.0
        %3683 = vmatmul.mubr.f32.gmra.mrb[0].mxu0 %v2096
        %v3684 = vpop.f32.mrb[0].mxu0
        %v3685 = vadd.f32 0.0, %v3684
        %v3686 = vpop.f32.mrb[0].mxu0
        %v3687 = vadd.f32 0.0, %v3686
        %3688 = vmatprep.mubr.f32.mxu0 0.0
        %3689 = vmatmul.mubr.f32.gmra.mrb[0].mxu0 %v2099
        %v3690 = vpop.f32.mrb[0].mxu0
        %v3691 = vadd.f32 0.0, %v3690
        %v3692 = vpop.f32.mrb[0].mxu0
        %v3693 = vadd.f32 0.0, %v3692
        %3694 = vmatprep.mubr.f32.mxu0 0.0
        %3695 = vmatmul.mubr.f32.gmra.mrb[0].mxu0 %v2102
        %v3696 = vpop.f32.mrb[0].mxu0
        %v3697 = vadd.f32 0.0, %v3696
        %v3698 = vpop.f32.mrb[0].mxu0
        %v3699 = vadd.f32 0.0, %v3698
        %3700 = vmatprep.mubr.f32.mxu0 0.0
        %3701 = vmatmul.mubr.f32.gmra.mrb[0].mxu0 %v2105
        %v3702 = vpop.f32.mrb[0].mxu0
        %v3703 = vadd.f32 0.0, %v3702
        %v3704 = vpop.f32.mrb[0].mxu0
        %v3705 = vadd.f32 0.0, %v3704
        %3706 = vmatprep.mubr.f32.mxu0 0.0
        %3707 = vmatmul.mubr.f32.gmra.mrb[0].mxu0 %v2108
        %v3708 = vpop.f32.mrb[0].mxu0
        %v3709 = vadd.f32 0.0, %v3708
        %v3710 = vpop.f32.mrb[0].mxu0
        %v3711 = vadd.f32 0.0, %v3710
        %3712 = vmatprep.mubr.f32.mxu0 0.0
        %3713 = vmatmul.mubr.f32.gmra.mrb[0].mxu0 %v2111
        %v3714 = vpop.f32.mrb[0].mxu0
        %v3715 = vadd.f32 0.0, %v3714
        %v3716 = vpop.f32.mrb[0].mxu0
        %v3717 = vadd.f32 0.0, %v3716
        %3718 = vmatprep.mubr.f32.mxu0 0.0
        %3719 = vmatmul.mubr.f32.gmra.mrb[0].mxu0 %v2114
        %v3720 = vpop.f32.mrb[0].mxu0
        %v3721 = vadd.f32 0.0, %v3720
        %v3722 = vpop.f32.mrb[0].mxu0
        %v3723 = vadd.f32 0.0, %v3722
        %3724 = vmatprep.mubr.f32.mxu0 0.0
        %3725 = vmatmul.mubr.f32.gmra.mrb[0].mxu0 %v2117
        %v3726 = vpop.f32.mrb[0].mxu0
        %v3727 = vadd.f32 0.0, %v3726
        %v3728 = vpop.f32.mrb[0].mxu0
        %v3729 = vadd.f32 0.0, %v3728
        %3730 = vmatprep.mubr.f32.mxu0 0.0
        %3731 = vmatmul.mubr.f32.gmra.mrb[0].mxu0 %v2120
        %v3732 = vpop.f32.mrb[0].mxu0
        %v3733 = vadd.f32 0.0, %v3732
        %v3734 = vpop.f32.mrb[0].mxu0
        %v3735 = vadd.f32 0.0, %v3734
        %3736 = vmatprep.mubr.f32.mxu0 0.0
        %3737 = vmatmul.mubr.f32.gmra.mrb[0].mxu0 %v2123
        %v3738 = vpop.f32.mrb[0].mxu0
        %v3739 = vadd.f32 0.0, %v3738
        %v3740 = vpop.f32.mrb[0].mxu0
        %v3741 = vadd.f32 0.0, %v3740
        %3742 = vmatprep.mubr.f32.mxu0 0.0
        %3743 = vmatmul.mubr.f32.gmra.mrb[0].mxu0 %v2126
        %v3744 = vpop.f32.mrb[0].mxu0
        %v3745 = vadd.f32 0.0, %v3744
        %v3746 = vpop.f32.mrb[0].mxu0
        %v3747 = vadd.f32 0.0, %v3746
        %3748 = vmatprep.mubr.f32.mxu0 0.0
        %3749 = vmatmul.mubr.f32.gmra.mrb[0].mxu0 %v2129
        %v3750 = vpop.f32.mrb[0].mxu0
        %v3751 = vadd.f32 0.0, %v3750
        %v3752 = vpop.f32.mrb[0].mxu0
        %v3753 = vadd.f32 0.0, %v3752
        %3754 = vmatprep.mubr.f32.mxu0 0.0
        %3755 = vmatmul.mubr.f32.gmra.mrb[0].mxu0 %v2132
        %v3756 = vpop.f32.mrb[0].mxu0
        %v3757 = vadd.f32 0.0, %v3756
        %v3758 = vpop.f32.mrb[0].mxu0
        %v3759 = vadd.f32 0.0, %v3758
        %3760 = vmatprep.mubr.f32.mxu0 0.0
        %3761 = vmatmul.mubr.f32.gmra.mrb[0].mxu0 %v2135
        %v3762 = vpop.f32.mrb[0].mxu0
        %v3763 = vadd.f32 0.0, %v3762
        %v3764 = vpop.f32.mrb[0].mxu0
        %v3765 = vadd.f32 0.0, %v3764
        %3766 = vmatprep.mubr.f32.mxu0 0.0
        %3767 = vmatmul.mubr.f32.gmra.mrb[0].mxu0 %v2138
        %v3768 = vpop.f32.mrb[0].mxu0
        %v3769 = vadd.f32 0.0, %v3768
        %v3770 = vpop.f32.mrb[0].mxu0
        %v3771 = vadd.f32 0.0, %v3770
        %3772 = vmatprep.mubr.f32.mxu0 0.0
        %3773 = vmatmul.mubr.f32.gmra.mrb[0].mxu0 %v2141
        %v3774 = vpop.f32.mrb[0].mxu0
        %v3775 = vadd.f32 0.0, %v3774
        %v3776 = vpop.f32.mrb[0].mxu0
        %v3777 = vadd.f32 0.0, %v3776
        %3778 = vmatprep.mubr.f32.mxu0 0.0
        %3779 = vmatmul.mubr.f32.gmra.mrb[0].mxu0 %v2144
        %v3780 = vpop.f32.mrb[0].mxu0
        %v3781 = vadd.f32 0.0, %v3780
        %v3782 = vpop.f32.mrb[0].mxu0
        %v3783 = vadd.f32 0.0, %v3782
        %3784 = vmatprep.mubr.f32.mxu0 0.0
        %3785 = vmatmul.mubr.f32.gmra.mrb[0].mxu0 %v2147
        %v3786 = vpop.f32.mrb[0].mxu0
        %v3787 = vadd.f32 0.0, %v3786
        %v3788 = vpop.f32.mrb[0].mxu0
        %v3789 = vadd.f32 0.0, %v3788
        %3790 = vmatprep.mubr.f32.mxu0 0.0
        %3791 = vmatmul.mubr.f32.gmra.mrb[0].mxu0 %v2150
        %v3792 = vpop.f32.mrb[0].mxu0
        %v3793 = vadd.f32 0.0, %v3792
        %v3794 = vpop.f32.mrb[0].mxu0
        %v3795 = vadd.f32 0.0, %v3794
        %3796 = vmatprep.mubr.f32.mxu0 0.0
        %3797 = vmatmul.mubr.f32.gmra.mrb[0].mxu0 %v2153
        %v3798 = vpop.f32.mrb[0].mxu0
        %v3799 = vadd.f32 0.0, %v3798
        %v3800 = vpop.f32.mrb[0].mxu0
        %v3801 = vadd.f32 0.0, %v3800
        %3802 = vmatprep.mubr.f32.mxu0 0.0
        %3803 = vmatmul.mubr.f32.gmra.mrb[0].mxu0 %v2156
        %v3804 = vpop.f32.mrb[0].mxu0
        %v3805 = vadd.f32 0.0, %v3804
        %v3806 = vpop.f32.mrb[0].mxu0
        %v3807 = vadd.f32 0.0, %v3806
        %3808 = vmatprep.mubr.f32.mxu0 0.0
        %3809 = vmatmul.mubr.f32.gmra.mrb[0].mxu0 %v2159
        %v3810 = vpop.f32.mrb[0].mxu0
        %v3811 = vadd.f32 0.0, %v3810
        %v3812 = vpop.f32.mrb[0].mxu0
        %v3813 = vadd.f32 0.0, %v3812
        %3814 = vmatprep.mubr.f32.mxu0 0.0
        %3815 = vmatmul.mubr.f32.gmra.mrb[0].mxu0 %v2162
        %v3816 = vpop.f32.mrb[0].mxu0
        %v3817 = vadd.f32 0.0, %v3816
        %v3818 = vpop.f32.mrb[0].mxu0
        %v3819 = vadd.f32 0.0, %v3818
        %3820 = vmatprep.mubr.f32.mxu0 0.0
        %3821 = vmatmul.mubr.f32.gmra.mrb[0].mxu0 %v2165
        %v3822 = vpop.f32.mrb[0].mxu0
        %v3823 = vadd.f32 0.0, %v3822
        %v3824 = vpop.f32.mrb[0].mxu0
        %v3825 = vadd.f32 0.0, %v3824
        %3826 = vmatprep.mubr.f32.mxu0 0.0
        %3827 = vmatmul.mubr.f32.gmra.mrb[0].mxu0 %v2168
        %v3828 = vpop.f32.mrb[0].mxu0
        %v3829 = vadd.f32 0.0, %v3828
        %v3830 = vpop.f32.mrb[0].mxu0
        %v3831 = vadd.f32 0.0, %v3830
        %3832 = vmatprep.mubr.f32.mxu0 0.0
        %3833 = vmatmul.mubr.f32.gmra.mrb[0].mxu0 %v2171
        %v3834 = vpop.f32.mrb[0].mxu0
        %v3835 = vadd.f32 0.0, %v3834
        %v3836 = vpop.f32.mrb[0].mxu0
        %v3837 = vadd.f32 0.0, %v3836
        %3838 = vdwg.mxu0
        %3839 = vst [vmem:[%s211] sm:$0xff] %v2240
        %3840 = vst [vmem:[%s211 + $0x8] sm:$0xff] %v2242
        %3841 = vst [vmem:[%s211 + $0x10] sm:$0xff] %v3073
        %3842 = vst [vmem:[%s211 + $0x18] sm:$0xff] %v3075
        %3843 = vst [vmem:[%s211 + $0x20] sm:$0xff] %v2246
        %3844 = vst [vmem:[%s211 + $0x28] sm:$0xff] %v2248
        %3845 = vst [vmem:[%s211 + $0x30] sm:$0xff] %v3079
        %3846 = vst [vmem:[%s211 + $0x38] sm:$0xff] %v3081
        %3847 = vst [vmem:[%s211 + $0x40] sm:$0xff] %v2252
        %3848 = vst [vmem:[%s211 + $0x48] sm:$0xff] %v2254
        %3849 = vst [vmem:[%s211 + $0x50] sm:$0xff] %v3085
        %3850 = vst [vmem:[%s211 + $0x58] sm:$0xff] %v3087
        %3851 = vst [vmem:[%s211 + $0x60] sm:$0xff] %v2258
        %3852 = vst [vmem:[%s211 + $0x68] sm:$0xff] %v2260
        %3853 = vst [vmem:[%s211 + $0x70] sm:$0xff] %v3091
        %3854 = vst [vmem:[%s211 + $0x78] sm:$0xff] %v3093
        %3855 = vst [vmem:[%s211 + $0x80] sm:$0xff] %v2264
        %3856 = vst [vmem:[%s211 + $0x88] sm:$0xff] %v2266
        %3857 = vst [vmem:[%s211 + $0x90] sm:$0xff] %v3097
        %3858 = vst [vmem:[%s211 + $0x98] sm:$0xff] %v3099
        %3859 = vst [vmem:[%s211 + $0xa0] sm:$0xff] %v2270
        %3860 = vst [vmem:[%s211 + $0xa8] sm:$0xff] %v2272
        %3861 = vst [vmem:[%s211 + $0xb0] sm:$0xff] %v3103
        %3862 = vst [vmem:[%s211 + $0xb8] sm:$0xff] %v3105
        %3863 = vst [vmem:[%s211 + $0xc0] sm:$0xff] %v2276
        %3864 = vst [vmem:[%s211 + $0xc8] sm:$0xff] %v2278
        %3865 = vst [vmem:[%s211 + $0xd0] sm:$0xff] %v3109
        %3866 = vst [vmem:[%s211 + $0xd8] sm:$0xff] %v3111
        %3867 = vst [vmem:[%s211 + $0xe0] sm:$0xff] %v2282
        %3868 = vst [vmem:[%s211 + $0xe8] sm:$0xff] %v2284
        %3869 = vst [vmem:[%s211 + $0xf0] sm:$0xff] %v3115
        %3870 = vst [vmem:[%s211 + $0xf8] sm:$0xff] %v3117
        %3871 = vst [vmem:[%s211 + $0x100] sm:$0xff] %v2288
        %3872 = vst [vmem:[%s211 + $0x108] sm:$0xff] %v2290
        %3873 = vst [vmem:[%s211 + $0x110] sm:$0xff] %v3121
        %3874 = vst [vmem:[%s211 + $0x118] sm:$0xff] %v3123
        %3875 = vst [vmem:[%s211 + $0x120] sm:$0xff] %v2294
        %3876 = vst [vmem:[%s211 + $0x128] sm:$0xff] %v2296
        %3877 = vst [vmem:[%s211 + $0x130] sm:$0xff] %v3127
        %3878 = vst [vmem:[%s211 + $0x138] sm:$0xff] %v3129
        %3879 = vst [vmem:[%s211 + $0x140] sm:$0xff] %v2300
        %3880 = vst [vmem:[%s211 + $0x148] sm:$0xff] %v2302
        %3881 = vst [vmem:[%s211 + $0x150] sm:$0xff] %v3133
        %3882 = vst [vmem:[%s211 + $0x158] sm:$0xff] %v3135
        %3883 = vst [vmem:[%s211 + $0x160] sm:$0xff] %v2306
        %3884 = vst [vmem:[%s211 + $0x168] sm:$0xff] %v2308
        %3885 = vst [vmem:[%s211 + $0x170] sm:$0xff] %v3139
        %3886 = vst [vmem:[%s211 + $0x178] sm:$0xff] %v3141
        %3887 = vst [vmem:[%s211 + $0x180] sm:$0xff] %v2312
        %3888 = vst [vmem:[%s211 + $0x188] sm:$0xff] %v2314
        %3889 = vst [vmem:[%s211 + $0x190] sm:$0xff] %v3145
        %3890 = vst [vmem:[%s211 + $0x198] sm:$0xff] %v3147
        %3891 = vst [vmem:[%s211 + $0x1a0] sm:$0xff] %v2318
        %3892 = vst [vmem:[%s211 + $0x1a8] sm:$0xff] %v2320
        %3893 = vst [vmem:[%s211 + $0x1b0] sm:$0xff] %v3151
        %3894 = vst [vmem:[%s211 + $0x1b8] sm:$0xff] %v3153
        %3895 = vst [vmem:[%s211 + $0x1c0] sm:$0xff] %v2324
        %3896 = vst [vmem:[%s211 + $0x1c8] sm:$0xff] %v2326
        %3897 = vst [vmem:[%s211 + $0x1d0] sm:$0xff] %v3157
        %3898 = vst [vmem:[%s211 + $0x1d8] sm:$0xff] %v3159
        %3899 = vst [vmem:[%s211 + $0x1e0] sm:$0xff] %v2330
        %3900 = vst [vmem:[%s211 + $0x1e8] sm:$0xff] %v2332
        %3901 = vst [vmem:[%s211 + $0x1f0] sm:$0xff] %v3163
        %3902 = vst [vmem:[%s211 + $0x1f8] sm:$0xff] %v3165
        %3903 = vst [vmem:[%s211 + $0x200] sm:$0xff] %v2336
        %3904 = vst [vmem:[%s211 + $0x208] sm:$0xff] %v2338
        %3905 = vst [vmem:[%s211 + $0x210] sm:$0xff] %v3169
        %3906 = vst [vmem:[%s211 + $0x218] sm:$0xff] %v3171
        %3907 = vst [vmem:[%s211 + $0x220] sm:$0xff] %v2342
        %3908 = vst [vmem:[%s211 + $0x228] sm:$0xff] %v2344
        %3909 = vst [vmem:[%s211 + $0x230] sm:$0xff] %v3175
        %3910 = vst [vmem:[%s211 + $0x238] sm:$0xff] %v3177
        %3911 = vst [vmem:[%s211 + $0x240] sm:$0xff] %v2348
        %3912 = vst [vmem:[%s211 + $0x248] sm:$0xff] %v2350
        %3913 = vst [vmem:[%s211 + $0x250] sm:$0xff] %v3181
        %3914 = vst [vmem:[%s211 + $0x258] sm:$0xff] %v3183
        %3915 = vst [vmem:[%s211 + $0x260] sm:$0xff] %v2354
        %3916 = vst [vmem:[%s211 + $0x268] sm:$0xff] %v2356
        %3917 = vst [vmem:[%s211 + $0x270] sm:$0xff] %v3187
        %3918 = vst [vmem:[%s211 + $0x278] sm:$0xff] %v3189
        %3919 = vst [vmem:[%s211 + $0x280] sm:$0xff] %v2360
        %3920 = vst [vmem:[%s211 + $0x288] sm:$0xff] %v2362
        %3921 = vst [vmem:[%s211 + $0x290] sm:$0xff] %v3193
        %3922 = vst [vmem:[%s211 + $0x298] sm:$0xff] %v3195
        %3923 = vst [vmem:[%s211 + $0x2a0] sm:$0xff] %v2366
        %3924 = vst [vmem:[%s211 + $0x2a8] sm:$0xff] %v2368
        %3925 = vst [vmem:[%s211 + $0x2b0] sm:$0xff] %v3199
        %3926 = vst [vmem:[%s211 + $0x2b8] sm:$0xff] %v3201
        %3927 = vst [vmem:[%s211 + $0x2c0] sm:$0xff] %v2372
        %3928 = vst [vmem:[%s211 + $0x2c8] sm:$0xff] %v2374
        %3929 = vst [vmem:[%s211 + $0x2d0] sm:$0xff] %v3205
        %3930 = vst [vmem:[%s211 + $0x2d8] sm:$0xff] %v3207
        %3931 = vst [vmem:[%s211 + $0x2e0] sm:$0xff] %v2378
        %3932 = vst [vmem:[%s211 + $0x2e8] sm:$0xff] %v2380
        %3933 = vst [vmem:[%s211 + $0x2f0] sm:$0xff] %v3211
        %3934 = vst [vmem:[%s211 + $0x2f8] sm:$0xff] %v3213
        %3935 = vst [vmem:[%s211 + $0x300] sm:$0xff] %v2384
        %3936 = vst [vmem:[%s211 + $0x308] sm:$0xff] %v2386
        %3937 = vst [vmem:[%s211 + $0x310] sm:$0xff] %v3217
        %3938 = vst [vmem:[%s211 + $0x318] sm:$0xff] %v3219
        %3939 = vst [vmem:[%s211 + $0x320] sm:$0xff] %v2390
        %3940 = vst [vmem:[%s211 + $0x328] sm:$0xff] %v2392
        %3941 = vst [vmem:[%s211 + $0x330] sm:$0xff] %v3223
        %3942 = vst [vmem:[%s211 + $0x338] sm:$0xff] %v3225
        %3943 = vst [vmem:[%s211 + $0x340] sm:$0xff] %v2396
        %3944 = vst [vmem:[%s211 + $0x348] sm:$0xff] %v2398
        %3945 = vst [vmem:[%s211 + $0x350] sm:$0xff] %v3229
        %3946 = vst [vmem:[%s211 + $0x358] sm:$0xff] %v3231
        %3947 = vst [vmem:[%s211 + $0x360] sm:$0xff] %v2402
        %3948 = vst [vmem:[%s211 + $0x368] sm:$0xff] %v2404
        %3949 = vst [vmem:[%s211 + $0x370] sm:$0xff] %v3235
        %3950 = vst [vmem:[%s211 + $0x378] sm:$0xff] %v3237
        %3951 = vst [vmem:[%s211 + $0x380] sm:$0xff] %v2408
        %3952 = vst [vmem:[%s211 + $0x388] sm:$0xff] %v2410
        %3953 = vst [vmem:[%s211 + $0x390] sm:$0xff] %v3241
        %3954 = vst [vmem:[%s211 + $0x398] sm:$0xff] %v3243
        %3955 = vst [vmem:[%s211 + $0x3a0] sm:$0xff] %v2414
        %3956 = vst [vmem:[%s211 + $0x3a8] sm:$0xff] %v2416
        %3957 = vst [vmem:[%s211 + $0x3b0] sm:$0xff] %v3247
        %3958 = vst [vmem:[%s211 + $0x3b8] sm:$0xff] %v3249
        %3959 = vst [vmem:[%s211 + $0x3c0] sm:$0xff] %v2420
        %3960 = vst [vmem:[%s211 + $0x3c8] sm:$0xff] %v2422
        %3961 = vst [vmem:[%s211 + $0x3d0] sm:$0xff] %v3253
        %3962 = vst [vmem:[%s211 + $0x3d8] sm:$0xff] %v3255
        %3963 = vst [vmem:[%s211 + $0x3e0] sm:$0xff] %v2426
        %3964 = vst [vmem:[%s211 + $0x3e8] sm:$0xff] %v2428
        %3965 = vst [vmem:[%s211 + $0x3f0] sm:$0xff] %v3259
        %3966 = vst [vmem:[%s211 + $0x3f8] sm:$0xff] %v3261
        %3967 = vst [vmem:[%s211 + $0x400] sm:$0xff] %v2432
        %3968 = vst [vmem:[%s211 + $0x408] sm:$0xff] %v2434
        %3969 = vst [vmem:[%s211 + $0x410] sm:$0xff] %v3265
        %3970 = vst [vmem:[%s211 + $0x418] sm:$0xff] %v3267
        %3971 = vst [vmem:[%s211 + $0x420] sm:$0xff] %v2438
        %3972 = vst [vmem:[%s211 + $0x428] sm:$0xff] %v2440
        %3973 = vst [vmem:[%s211 + $0x430] sm:$0xff] %v3271
        %3974 = vst [vmem:[%s211 + $0x438] sm:$0xff] %v3273
        %3975 = vst [vmem:[%s211 + $0x440] sm:$0xff] %v2444
        %3976 = vst [vmem:[%s211 + $0x448] sm:$0xff] %v2446
        %3977 = vst [vmem:[%s211 + $0x450] sm:$0xff] %v3277
        %3978 = vst [vmem:[%s211 + $0x458] sm:$0xff] %v3279
        %3979 = vst [vmem:[%s211 + $0x460] sm:$0xff] %v2450
        %3980 = vst [vmem:[%s211 + $0x468] sm:$0xff] %v2452
        %3981 = vst [vmem:[%s211 + $0x470] sm:$0xff] %v3283
        %3982 = vst [vmem:[%s211 + $0x478] sm:$0xff] %v3285
        %3983 = vst [vmem:[%s211 + $0x480] sm:$0xff] %v2456
        %3984 = vst [vmem:[%s211 + $0x488] sm:$0xff] %v2458
        %3985 = vst [vmem:[%s211 + $0x490] sm:$0xff] %v3289
        %3986 = vst [vmem:[%s211 + $0x498] sm:$0xff] %v3291
        %3987 = vst [vmem:[%s211 + $0x4a0] sm:$0xff] %v2462
        %3988 = vst [vmem:[%s211 + $0x4a8] sm:$0xff] %v2464
        %3989 = vst [vmem:[%s211 + $0x4b0] sm:$0xff] %v3295
        %3990 = vst [vmem:[%s211 + $0x4b8] sm:$0xff] %v3297
        %3991 = vst [vmem:[%s211 + $0x4c0] sm:$0xff] %v2468
        %3992 = vst [vmem:[%s211 + $0x4c8] sm:$0xff] %v2470
        %3993 = vst [vmem:[%s211 + $0x4d0] sm:$0xff] %v3301
        %3994 = vst [vmem:[%s211 + $0x4d8] sm:$0xff] %v3303
        %3995 = vst [vmem:[%s211 + $0x4e0] sm:$0xff] %v2474
        %3996 = vst [vmem:[%s211 + $0x4e8] sm:$0xff] %v2476
        %3997 = vst [vmem:[%s211 + $0x4f0] sm:$0xff] %v3307
        %3998 = vst [vmem:[%s211 + $0x4f8] sm:$0xff] %v3309
        %3999 = vst [vmem:[%s211 + $0x500] sm:$0xff] %v2480
        %4000 = vst [vmem:[%s211 + $0x508] sm:$0xff] %v2482
        %4001 = vst [vmem:[%s211 + $0x510] sm:$0xff] %v3313
        %4002 = vst [vmem:[%s211 + $0x518] sm:$0xff] %v3315
        %4003 = vst [vmem:[%s211 + $0x520] sm:$0xff] %v2486
        %4004 = vst [vmem:[%s211 + $0x528] sm:$0xff] %v2488
        %4005 = vst [vmem:[%s211 + $0x530] sm:$0xff] %v3319
        %4006 = vst [vmem:[%s211 + $0x538] sm:$0xff] %v3321
        %4007 = vst [vmem:[%s211 + $0x540] sm:$0xff] %v2492
        %4008 = vst [vmem:[%s211 + $0x548] sm:$0xff] %v2494
        %4009 = vst [vmem:[%s211 + $0x550] sm:$0xff] %v3325
        %4010 = vst [vmem:[%s211 + $0x558] sm:$0xff] %v3327
        %4011 = vst [vmem:[%s211 + $0x560] sm:$0xff] %v2498
        %4012 = vst [vmem:[%s211 + $0x568] sm:$0xff] %v2500
        %4013 = vst [vmem:[%s211 + $0x570] sm:$0xff] %v3331
        %4014 = vst [vmem:[%s211 + $0x578] sm:$0xff] %v3333
        %4015 = vst [vmem:[%s211 + $0x580] sm:$0xff] %v2504
        %4016 = vst [vmem:[%s211 + $0x588] sm:$0xff] %v2506
        %4017 = vst [vmem:[%s211 + $0x590] sm:$0xff] %v3337
        %4018 = vst [vmem:[%s211 + $0x598] sm:$0xff] %v3339
        %4019 = vst [vmem:[%s211 + $0x5a0] sm:$0xff] %v2510
        %4020 = vst [vmem:[%s211 + $0x5a8] sm:$0xff] %v2512
        %4021 = vst [vmem:[%s211 + $0x5b0] sm:$0xff] %v3343
        %4022 = vst [vmem:[%s211 + $0x5b8] sm:$0xff] %v3345
        %4023 = vst [vmem:[%s211 + $0x5c0] sm:$0xff] %v2516
        %4024 = vst [vmem:[%s211 + $0x5c8] sm:$0xff] %v2518
        %4025 = vst [vmem:[%s211 + $0x5d0] sm:$0xff] %v3349
        %4026 = vst [vmem:[%s211 + $0x5d8] sm:$0xff] %v3351
        %4027 = vst [vmem:[%s211 + $0x5e0] sm:$0xff] %v2522
        %4028 = vst [vmem:[%s211 + $0x5e8] sm:$0xff] %v2524
        %4029 = vst [vmem:[%s211 + $0x5f0] sm:$0xff] %v3355
        %4030 = vst [vmem:[%s211 + $0x5f8] sm:$0xff] %v3357
        %4031 = vst [vmem:[%s211 + $0x600] sm:$0xff] %v2528
        %4032 = vst [vmem:[%s211 + $0x608] sm:$0xff] %v2530
        %4033 = vst [vmem:[%s211 + $0x610] sm:$0xff] %v3361
        %4034 = vst [vmem:[%s211 + $0x618] sm:$0xff] %v3363
        %4035 = vst [vmem:[%s211 + $0x620] sm:$0xff] %v2534
        %4036 = vst [vmem:[%s211 + $0x628] sm:$0xff] %v2536
        %4037 = vst [vmem:[%s211 + $0x630] sm:$0xff] %v3367
        %4038 = vst [vmem:[%s211 + $0x638] sm:$0xff] %v3369
        %4039 = vst [vmem:[%s211 + $0x640] sm:$0xff] %v2540
        %4040 = vst [vmem:[%s211 + $0x648] sm:$0xff] %v2542
        %4041 = vst [vmem:[%s211 + $0x650] sm:$0xff] %v3373
        %4042 = vst [vmem:[%s211 + $0x658] sm:$0xff] %v3375
        %4043 = vst [vmem:[%s211 + $0x660] sm:$0xff] %v2546
        %4044 = vst [vmem:[%s211 + $0x668] sm:$0xff] %v2548
        %4045 = vst [vmem:[%s211 + $0x670] sm:$0xff] %v3379
        %4046 = vst [vmem:[%s211 + $0x678] sm:$0xff] %v3381
        %4047 = vst [vmem:[%s211 + $0x680] sm:$0xff] %v2552
        %4048 = vst [vmem:[%s211 + $0x688] sm:$0xff] %v2554
        %4049 = vst [vmem:[%s211 + $0x690] sm:$0xff] %v3385
        %4050 = vst [vmem:[%s211 + $0x698] sm:$0xff] %v3387
        %4051 = vst [vmem:[%s211 + $0x6a0] sm:$0xff] %v2558
        %4052 = vst [vmem:[%s211 + $0x6a8] sm:$0xff] %v2560
        %4053 = vst [vmem:[%s211 + $0x6b0] sm:$0xff] %v3391
        %4054 = vst [vmem:[%s211 + $0x6b8] sm:$0xff] %v3393
        %4055 = vst [vmem:[%s211 + $0x6c0] sm:$0xff] %v2564
        %4056 = vst [vmem:[%s211 + $0x6c8] sm:$0xff] %v2566
        %4057 = vst [vmem:[%s211 + $0x6d0] sm:$0xff] %v3397
        %4058 = vst [vmem:[%s211 + $0x6d8] sm:$0xff] %v3399
        %4059 = vst [vmem:[%s211 + $0x6e0] sm:$0xff] %v2570
        %4060 = vst [vmem:[%s211 + $0x6e8] sm:$0xff] %v2572
        %4061 = vst [vmem:[%s211 + $0x6f0] sm:$0xff] %v3403
        %4062 = vst [vmem:[%s211 + $0x6f8] sm:$0xff] %v3405
        %4063 = vst [vmem:[%s211 + $0x700] sm:$0xff] %v2576
        %4064 = vst [vmem:[%s211 + $0x708] sm:$0xff] %v2578
        %4065 = vst [vmem:[%s211 + $0x710] sm:$0xff] %v3409
        %4066 = vst [vmem:[%s211 + $0x718] sm:$0xff] %v3411
        %4067 = vst [vmem:[%s211 + $0x720] sm:$0xff] %v2582
        %4068 = vst [vmem:[%s211 + $0x728] sm:$0xff] %v2584
        %4069 = vst [vmem:[%s211 + $0x730] sm:$0xff] %v3415
        %4070 = vst [vmem:[%s211 + $0x738] sm:$0xff] %v3417
        %4071 = vst [vmem:[%s211 + $0x740] sm:$0xff] %v2588
        %4072 = vst [vmem:[%s211 + $0x748] sm:$0xff] %v2590
        %4073 = vst [vmem:[%s211 + $0x750] sm:$0xff] %v3421
        %4074 = vst [vmem:[%s211 + $0x758] sm:$0xff] %v3423
        %4075 = vst [vmem:[%s211 + $0x760] sm:$0xff] %v2594
        %4076 = vst [vmem:[%s211 + $0x768] sm:$0xff] %v2596
        %4077 = vst [vmem:[%s211 + $0x770] sm:$0xff] %v3427
        %4078 = vst [vmem:[%s211 + $0x778] sm:$0xff] %v3429
        %4079 = vst [vmem:[%s211 + $0x780] sm:$0xff] %v2600
        %4080 = vst [vmem:[%s211 + $0x788] sm:$0xff] %v2602
        %4081 = vst [vmem:[%s211 + $0x790] sm:$0xff] %v3433
        %4082 = vst [vmem:[%s211 + $0x798] sm:$0xff] %v3435
        %4083 = vst [vmem:[%s211 + $0x7a0] sm:$0xff] %v2606
        %4084 = vst [vmem:[%s211 + $0x7a8] sm:$0xff] %v2608
        %4085 = vst [vmem:[%s211 + $0x7b0] sm:$0xff] %v3439
        %4086 = vst [vmem:[%s211 + $0x7b8] sm:$0xff] %v3441
        %4087 = vst [vmem:[%s211 + $0x7c0] sm:$0xff] %v2612
        %4088 = vst [vmem:[%s211 + $0x7c8] sm:$0xff] %v2614
        %4089 = vst [vmem:[%s211 + $0x7d0] sm:$0xff] %v3445
        %4090 = vst [vmem:[%s211 + $0x7d8] sm:$0xff] %v3447
        %4091 = vst [vmem:[%s211 + $0x7e0] sm:$0xff] %v2618
        %4092 = vst [vmem:[%s211 + $0x7e8] sm:$0xff] %v2620
        %4093 = vst [vmem:[%s211 + $0x7f0] sm:$0xff] %v3451
        %4094 = vst [vmem:[%s211 + $0x7f8] sm:$0xff] %v3453
        %4095 = vst [vmem:[%s211 + $0x800] sm:$0xff] %v2624
        %4096 = vst [vmem:[%s211 + $0x808] sm:$0xff] %v2626
        %4097 = vst [vmem:[%s211 + $0x810] sm:$0xff] %v3457
        %4098 = vst [vmem:[%s211 + $0x818] sm:$0xff] %v3459
        %4099 = vst [vmem:[%s211 + $0x820] sm:$0xff] %v2630
        %4100 = vst [vmem:[%s211 + $0x828] sm:$0xff] %v2632
        %4101 = vst [vmem:[%s211 + $0x830] sm:$0xff] %v3463
        %4102 = vst [vmem:[%s211 + $0x838] sm:$0xff] %v3465
        %4103 = vst [vmem:[%s211 + $0x840] sm:$0xff] %v2636
        %4104 = vst [vmem:[%s211 + $0x848] sm:$0xff] %v2638
        %4105 = vst [vmem:[%s211 + $0x850] sm:$0xff] %v3469
        %4106 = vst [vmem:[%s211 + $0x858] sm:$0xff] %v3471
        %4107 = vst [vmem:[%s211 + $0x860] sm:$0xff] %v2642
        %4108 = vst [vmem:[%s211 + $0x868] sm:$0xff] %v2644
        %4109 = vst [vmem:[%s211 + $0x870] sm:$0xff] %v3475
        %4110 = vst [vmem:[%s211 + $0x878] sm:$0xff] %v3477
        %4111 = vst [vmem:[%s211 + $0x880] sm:$0xff] %v2648
        %4112 = vst [vmem:[%s211 + $0x888] sm:$0xff] %v2650
        %4113 = vst [vmem:[%s211 + $0x890] sm:$0xff] %v3481
        %4114 = vst [vmem:[%s211 + $0x898] sm:$0xff] %v3483
        %4115 = vst [vmem:[%s211 + $0x8a0] sm:$0xff] %v2654
        %4116 = vst [vmem:[%s211 + $0x8a8] sm:$0xff] %v2656
        %4117 = vst [vmem:[%s211 + $0x8b0] sm:$0xff] %v3487
        %4118 = vst [vmem:[%s211 + $0x8b8] sm:$0xff] %v3489
        %4119 = vst [vmem:[%s211 + $0x8c0] sm:$0xff] %v2660
        %4120 = vst [vmem:[%s211 + $0x8c8] sm:$0xff] %v2662
        %4121 = vst [vmem:[%s211 + $0x8d0] sm:$0xff] %v3493
        %4122 = vst [vmem:[%s211 + $0x8d8] sm:$0xff] %v3495
        %4123 = vst [vmem:[%s211 + $0x8e0] sm:$0xff] %v2666
        %4124 = vst [vmem:[%s211 + $0x8e8] sm:$0xff] %v2668
        %4125 = vst [vmem:[%s211 + $0x8f0] sm:$0xff] %v3499
        %4126 = vst [vmem:[%s211 + $0x8f8] sm:$0xff] %v3501
        %4127 = vst [vmem:[%s211 + $0x900] sm:$0xff] %v2672
        %4128 = vst [vmem:[%s211 + $0x908] sm:$0xff] %v2674
        %4129 = vst [vmem:[%s211 + $0x910] sm:$0xff] %v3505
        %4130 = vst [vmem:[%s211 + $0x918] sm:$0xff] %v3507
        %4131 = vst [vmem:[%s211 + $0x920] sm:$0xff] %v2678
        %4132 = vst [vmem:[%s211 + $0x928] sm:$0xff] %v2680
        %4133 = vst [vmem:[%s211 + $0x930] sm:$0xff] %v3511
        %4134 = vst [vmem:[%s211 + $0x938] sm:$0xff] %v3513
        %4135 = vst [vmem:[%s211 + $0x940] sm:$0xff] %v2684
        %4136 = vst [vmem:[%s211 + $0x948] sm:$0xff] %v2686
        %4137 = vst [vmem:[%s211 + $0x950] sm:$0xff] %v3517
        %4138 = vst [vmem:[%s211 + $0x958] sm:$0xff] %v3519
        %4139 = vst [vmem:[%s211 + $0x960] sm:$0xff] %v2690
        %4140 = vst [vmem:[%s211 + $0x968] sm:$0xff] %v2692
        %4141 = vst [vmem:[%s211 + $0x970] sm:$0xff] %v3523
        %4142 = vst [vmem:[%s211 + $0x978] sm:$0xff] %v3525
        %4143 = vst [vmem:[%s211 + $0x980] sm:$0xff] %v2696
        %4144 = vst [vmem:[%s211 + $0x988] sm:$0xff] %v2698
        %4145 = vst [vmem:[%s211 + $0x990] sm:$0xff] %v3529
        %4146 = vst [vmem:[%s211 + $0x998] sm:$0xff] %v3531
        %4147 = vst [vmem:[%s211 + $0x9a0] sm:$0xff] %v2702
        %4148 = vst [vmem:[%s211 + $0x9a8] sm:$0xff] %v2704
        %4149 = vst [vmem:[%s211 + $0x9b0] sm:$0xff] %v3535
        %4150 = vst [vmem:[%s211 + $0x9b8] sm:$0xff] %v3537
        %4151 = vst [vmem:[%s211 + $0x9c0] sm:$0xff] %v2708
        %4152 = vst [vmem:[%s211 + $0x9c8] sm:$0xff] %v2710
        %4153 = vst [vmem:[%s211 + $0x9d0] sm:$0xff] %v3541
        %4154 = vst [vmem:[%s211 + $0x9d8] sm:$0xff] %v3543
        %4155 = vst [vmem:[%s211 + $0x9e0] sm:$0xff] %v2714
        %4156 = vst [vmem:[%s211 + $0x9e8] sm:$0xff] %v2716
        %4157 = vst [vmem:[%s211 + $0x9f0] sm:$0xff] %v3547
        %4158 = vst [vmem:[%s211 + $0x9f8] sm:$0xff] %v3549
        %4159 = vst [vmem:[%s211 + $0xa00] sm:$0xff] %v2720
        %4160 = vst [vmem:[%s211 + $0xa08] sm:$0xff] %v2722
        %4161 = vst [vmem:[%s211 + $0xa10] sm:$0xff] %v3553
        %4162 = vst [vmem:[%s211 + $0xa18] sm:$0xff] %v3555
        %4163 = vst [vmem:[%s211 + $0xa20] sm:$0xff] %v2726
        %4164 = vst [vmem:[%s211 + $0xa28] sm:$0xff] %v2728
        %4165 = vst [vmem:[%s211 + $0xa30] sm:$0xff] %v3559
        %4166 = vst [vmem:[%s211 + $0xa38] sm:$0xff] %v3561
        %4167 = vst [vmem:[%s211 + $0xa40] sm:$0xff] %v2732
        %4168 = vst [vmem:[%s211 + $0xa48] sm:$0xff] %v2734
        %4169 = vst [vmem:[%s211 + $0xa50] sm:$0xff] %v3565
        %4170 = vst [vmem:[%s211 + $0xa58] sm:$0xff] %v3567
        %4171 = vst [vmem:[%s211 + $0xa60] sm:$0xff] %v2738
        %4172 = vst [vmem:[%s211 + $0xa68] sm:$0xff] %v2740
        %4173 = vst [vmem:[%s211 + $0xa70] sm:$0xff] %v3571
        %4174 = vst [vmem:[%s211 + $0xa78] sm:$0xff] %v3573
        %4175 = vst [vmem:[%s211 + $0xa80] sm:$0xff] %v2744
        %4176 = vst [vmem:[%s211 + $0xa88] sm:$0xff] %v2746
        %4177 = vst [vmem:[%s211 + $0xa90] sm:$0xff] %v3577
        %4178 = vst [vmem:[%s211 + $0xa98] sm:$0xff] %v3579
        %4179 = vst [vmem:[%s211 + $0xaa0] sm:$0xff] %v2750
        %4180 = vst [vmem:[%s211 + $0xaa8] sm:$0xff] %v2752
        %4181 = vst [vmem:[%s211 + $0xab0] sm:$0xff] %v3583
        %4182 = vst [vmem:[%s211 + $0xab8] sm:$0xff] %v3585
        %4183 = vst [vmem:[%s211 + $0xac0] sm:$0xff] %v2756
        %4184 = vst [vmem:[%s211 + $0xac8] sm:$0xff] %v2758
        %4185 = vst [vmem:[%s211 + $0xad0] sm:$0xff] %v3589
        %4186 = vst [vmem:[%s211 + $0xad8] sm:$0xff] %v3591
        %4187 = vst [vmem:[%s211 + $0xae0] sm:$0xff] %v2762
        %4188 = vst [vmem:[%s211 + $0xae8] sm:$0xff] %v2764
        %4189 = vst [vmem:[%s211 + $0xaf0] sm:$0xff] %v3595
        %4190 = vst [vmem:[%s211 + $0xaf8] sm:$0xff] %v3597
        %4191 = vst [vmem:[%s211 + $0xb00] sm:$0xff] %v2768
        %4192 = vst [vmem:[%s211 + $0xb08] sm:$0xff] %v2770
        %4193 = vst [vmem:[%s211 + $0xb10] sm:$0xff] %v3601
        %4194 = vst [vmem:[%s211 + $0xb18] sm:$0xff] %v3603
        %4195 = vst [vmem:[%s211 + $0xb20] sm:$0xff] %v2774
        %4196 = vst [vmem:[%s211 + $0xb28] sm:$0xff] %v2776
        %4197 = vst [vmem:[%s211 + $0xb30] sm:$0xff] %v3607
        %4198 = vst [vmem:[%s211 + $0xb38] sm:$0xff] %v3609
        %4199 = vst [vmem:[%s211 + $0xb40] sm:$0xff] %v2780
        %4200 = vst [vmem:[%s211 + $0xb48] sm:$0xff] %v2782
        %4201 = vst [vmem:[%s211 + $0xb50] sm:$0xff] %v3613
        %4202 = vst [vmem:[%s211 + $0xb58] sm:$0xff] %v3615
        %4203 = vst [vmem:[%s211 + $0xb60] sm:$0xff] %v2786
        %4204 = vst [vmem:[%s211 + $0xb68] sm:$0xff] %v2788
        %4205 = vst [vmem:[%s211 + $0xb70] sm:$0xff] %v3619
        %4206 = vst [vmem:[%s211 + $0xb78] sm:$0xff] %v3621
        %4207 = vst [vmem:[%s211 + $0xb80] sm:$0xff] %v2792
        %4208 = vst [vmem:[%s211 + $0xb88] sm:$0xff] %v2794
        %4209 = vst [vmem:[%s211 + $0xb90] sm:$0xff] %v3625
        %4210 = vst [vmem:[%s211 + $0xb98] sm:$0xff] %v3627
        %4211 = vst [vmem:[%s211 + $0xba0] sm:$0xff] %v2798
        %4212 = vst [vmem:[%s211 + $0xba8] sm:$0xff] %v2800
        %4213 = vst [vmem:[%s211 + $0xbb0] sm:$0xff] %v3631
        %4214 = vst [vmem:[%s211 + $0xbb8] sm:$0xff] %v3633
        %4215 = vst [vmem:[%s211 + $0xbc0] sm:$0xff] %v2804
        %4216 = vst [vmem:[%s211 + $0xbc8] sm:$0xff] %v2806
        %4217 = vst [vmem:[%s211 + $0xbd0] sm:$0xff] %v3637
        %4218 = vst [vmem:[%s211 + $0xbd8] sm:$0xff] %v3639
        %4219 = vst [vmem:[%s211 + $0xbe0] sm:$0xff] %v2810
        %4220 = vst [vmem:[%s211 + $0xbe8] sm:$0xff] %v2812
        %4221 = vst [vmem:[%s211 + $0xbf0] sm:$0xff] %v3643
        %4222 = vst [vmem:[%s211 + $0xbf8] sm:$0xff] %v3645
        %4223 = vst [vmem:[%s211 + $0xc00] sm:$0xff] %v2816
        %4224 = vst [vmem:[%s211 + $0xc08] sm:$0xff] %v2818
        %4225 = vst [vmem:[%s211 + $0xc10] sm:$0xff] %v3649
        %4226 = vst [vmem:[%s211 + $0xc18] sm:$0xff] %v3651
        %4227 = vst [vmem:[%s211 + $0xc20] sm:$0xff] %v2822
        %4228 = vst [vmem:[%s211 + $0xc28] sm:$0xff] %v2824
        %4229 = vst [vmem:[%s211 + $0xc30] sm:$0xff] %v3655
        %4230 = vst [vmem:[%s211 + $0xc38] sm:$0xff] %v3657
        %4231 = vst [vmem:[%s211 + $0xc40] sm:$0xff] %v2828
        %4232 = vst [vmem:[%s211 + $0xc48] sm:$0xff] %v2830
        %4233 = vst [vmem:[%s211 + $0xc50] sm:$0xff] %v3661
        %4234 = vst [vmem:[%s211 + $0xc58] sm:$0xff] %v3663
        %4235 = vst [vmem:[%s211 + $0xc60] sm:$0xff] %v2834
        %4236 = vst [vmem:[%s211 + $0xc68] sm:$0xff] %v2836
        %4237 = vst [vmem:[%s211 + $0xc70] sm:$0xff] %v3667
        %4238 = vst [vmem:[%s211 + $0xc78] sm:$0xff] %v3669
        %4239 = vst [vmem:[%s211 + $0xc80] sm:$0xff] %v2840
        %4240 = vst [vmem:[%s211 + $0xc88] sm:$0xff] %v2842
        %4241 = vst [vmem:[%s211 + $0xc90] sm:$0xff] %v3673
        %4242 = vst [vmem:[%s211 + $0xc98] sm:$0xff] %v3675
        %4243 = vst [vmem:[%s211 + $0xca0] sm:$0xff] %v2846
        %4244 = vst [vmem:[%s211 + $0xca8] sm:$0xff] %v2848
        %4245 = vst [vmem:[%s211 + $0xcb0] sm:$0xff] %v3679
        %4246 = vst [vmem:[%s211 + $0xcb8] sm:$0xff] %v3681
        %4247 = vst [vmem:[%s211 + $0xcc0] sm:$0xff] %v2852
        %4248 = vst [vmem:[%s211 + $0xcc8] sm:$0xff] %v2854
        %4249 = vst [vmem:[%s211 + $0xcd0] sm:$0xff] %v3685
        %4250 = vst [vmem:[%s211 + $0xcd8] sm:$0xff] %v3687
        %4251 = vst [vmem:[%s211 + $0xce0] sm:$0xff] %v2858
        %4252 = vst [vmem:[%s211 + $0xce8] sm:$0xff] %v2860
        %4253 = vst [vmem:[%s211 + $0xcf0] sm:$0xff] %v3691
        %4254 = vst [vmem:[%s211 + $0xcf8] sm:$0xff] %v3693
        %4255 = vst [vmem:[%s211 + $0xd00] sm:$0xff] %v2864
        %4256 = vst [vmem:[%s211 + $0xd08] sm:$0xff] %v2866
        %4257 = vst [vmem:[%s211 + $0xd10] sm:$0xff] %v3697
        %4258 = vst [vmem:[%s211 + $0xd18] sm:$0xff] %v3699
        %4259 = vst [vmem:[%s211 + $0xd20] sm:$0xff] %v2870
        %4260 = vst [vmem:[%s211 + $0xd28] sm:$0xff] %v2872
        %4261 = vst [vmem:[%s211 + $0xd30] sm:$0xff] %v3703
        %4262 = vst [vmem:[%s211 + $0xd38] sm:$0xff] %v3705
        %4263 = vst [vmem:[%s211 + $0xd40] sm:$0xff] %v2876
        %4264 = vst [vmem:[%s211 + $0xd48] sm:$0xff] %v2878
        %4265 = vst [vmem:[%s211 + $0xd50] sm:$0xff] %v3709
        %4266 = vst [vmem:[%s211 + $0xd58] sm:$0xff] %v3711
        %4267 = vst [vmem:[%s211 + $0xd60] sm:$0xff] %v2882
        %4268 = vst [vmem:[%s211 + $0xd68] sm:$0xff] %v2884
        %4269 = vst [vmem:[%s211 + $0xd70] sm:$0xff] %v3715
        %4270 = vst [vmem:[%s211 + $0xd78] sm:$0xff] %v3717
        %4271 = vst [vmem:[%s211 + $0xd80] sm:$0xff] %v2888
        %4272 = vst [vmem:[%s211 + $0xd88] sm:$0xff] %v2890
        %4273 = vst [vmem:[%s211 + $0xd90] sm:$0xff] %v3721
        %4274 = vst [vmem:[%s211 + $0xd98] sm:$0xff] %v3723
        %4275 = vst [vmem:[%s211 + $0xda0] sm:$0xff] %v2894
        %4276 = vst [vmem:[%s211 + $0xda8] sm:$0xff] %v2896
        %4277 = vst [vmem:[%s211 + $0xdb0] sm:$0xff] %v3727
        %4278 = vst [vmem:[%s211 + $0xdb8] sm:$0xff] %v3729
        %4279 = vst [vmem:[%s211 + $0xdc0] sm:$0xff] %v2900
        %4280 = vst [vmem:[%s211 + $0xdc8] sm:$0xff] %v2902
        %4281 = vst [vmem:[%s211 + $0xdd0] sm:$0xff] %v3733
        %4282 = vst [vmem:[%s211 + $0xdd8] sm:$0xff] %v3735
        %4283 = vst [vmem:[%s211 + $0xde0] sm:$0xff] %v2906
        %4284 = vst [vmem:[%s211 + $0xde8] sm:$0xff] %v2908
        %4285 = vst [vmem:[%s211 + $0xdf0] sm:$0xff] %v3739
        %4286 = vst [vmem:[%s211 + $0xdf8] sm:$0xff] %v3741
        %4287 = vst [vmem:[%s211 + $0xe00] sm:$0xff] %v2912
        %4288 = vst [vmem:[%s211 + $0xe08] sm:$0xff] %v2914
        %4289 = vst [vmem:[%s211 + $0xe10] sm:$0xff] %v3745
        %4290 = vst [vmem:[%s211 + $0xe18] sm:$0xff] %v3747
        %4291 = vst [vmem:[%s211 + $0xe20] sm:$0xff] %v2918
        %4292 = vst [vmem:[%s211 + $0xe28] sm:$0xff] %v2920
        %4293 = vst [vmem:[%s211 + $0xe30] sm:$0xff] %v3751
        %4294 = vst [vmem:[%s211 + $0xe38] sm:$0xff] %v3753
        %4295 = vst [vmem:[%s211 + $0xe40] sm:$0xff] %v2924
        %4296 = vst [vmem:[%s211 + $0xe48] sm:$0xff] %v2926
        %4297 = vst [vmem:[%s211 + $0xe50] sm:$0xff] %v3757
        %4298 = vst [vmem:[%s211 + $0xe58] sm:$0xff] %v3759
        %4299 = vst [vmem:[%s211 + $0xe60] sm:$0xff] %v2930
        %4300 = vst [vmem:[%s211 + $0xe68] sm:$0xff] %v2932
        %4301 = vst [vmem:[%s211 + $0xe70] sm:$0xff] %v3763
        %4302 = vst [vmem:[%s211 + $0xe78] sm:$0xff] %v3765
        %4303 = vst [vmem:[%s211 + $0xe80] sm:$0xff] %v2936
        %4304 = vst [vmem:[%s211 + $0xe88] sm:$0xff] %v2938
        %4305 = vst [vmem:[%s211 + $0xe90] sm:$0xff] %v3769
        %4306 = vst [vmem:[%s211 + $0xe98] sm:$0xff] %v3771
        %4307 = vst [vmem:[%s211 + $0xea0] sm:$0xff] %v2942
        %4308 = vst [vmem:[%s211 + $0xea8] sm:$0xff] %v2944
        %4309 = vst [vmem:[%s211 + $0xeb0] sm:$0xff] %v3775
        %4310 = vst [vmem:[%s211 + $0xeb8] sm:$0xff] %v3777
        %4311 = vst [vmem:[%s211 + $0xec0] sm:$0xff] %v2948
        %4312 = vst [vmem:[%s211 + $0xec8] sm:$0xff] %v2950
        %4313 = vst [vmem:[%s211 + $0xed0] sm:$0xff] %v3781
        %4314 = vst [vmem:[%s211 + $0xed8] sm:$0xff] %v3783
        %4315 = vst [vmem:[%s211 + $0xee0] sm:$0xff] %v2954
        %4316 = vst [vmem:[%s211 + $0xee8] sm:$0xff] %v2956
        %4317 = vst [vmem:[%s211 + $0xef0] sm:$0xff] %v3787
        %4318 = vst [vmem:[%s211 + $0xef8] sm:$0xff] %v3789
        %4319 = vst [vmem:[%s211 + $0xf00] sm:$0xff] %v2960
        %4320 = vst [vmem:[%s211 + $0xf08] sm:$0xff] %v2962
        %4321 = vst [vmem:[%s211 + $0xf10] sm:$0xff] %v3793
        %4322 = vst [vmem:[%s211 + $0xf18] sm:$0xff] %v3795
        %4323 = vst [vmem:[%s211 + $0xf20] sm:$0xff] %v2966
        %4324 = vst [vmem:[%s211 + $0xf28] sm:$0xff] %v2968
        %4325 = vst [vmem:[%s211 + $0xf30] sm:$0xff] %v3799
        %4326 = vst [vmem:[%s211 + $0xf38] sm:$0xff] %v3801
        %4327 = vst [vmem:[%s211 + $0xf40] sm:$0xff] %v2972
        %4328 = vst [vmem:[%s211 + $0xf48] sm:$0xff] %v2974
        %4329 = vst [vmem:[%s211 + $0xf50] sm:$0xff] %v3805
        %4330 = vst [vmem:[%s211 + $0xf58] sm:$0xff] %v3807
        %4331 = vst [vmem:[%s211 + $0xf60] sm:$0xff] %v2978
        %4332 = vst [vmem:[%s211 + $0xf68] sm:$0xff] %v2980
        %4333 = vst [vmem:[%s211 + $0xf70] sm:$0xff] %v3811
        %4334 = vst [vmem:[%s211 + $0xf78] sm:$0xff] %v3813
        %4335 = vst [vmem:[%s211 + $0xf80] sm:$0xff] %v2984
        %4336 = vst [vmem:[%s211 + $0xf88] sm:$0xff] %v2986
        %4337 = vst [vmem:[%s211 + $0xf90] sm:$0xff] %v3817
        %4338 = vst [vmem:[%s211 + $0xf98] sm:$0xff] %v3819
        %4339 = vst [vmem:[%s211 + $0xfa0] sm:$0xff] %v2990
        %4340 = vst [vmem:[%s211 + $0xfa8] sm:$0xff] %v2992
        %4341 = vst [vmem:[%s211 + $0xfb0] sm:$0xff] %v3823
        %4342 = vst [vmem:[%s211 + $0xfb8] sm:$0xff] %v3825
        %4343 = vst [vmem:[%s211 + $0xfc0] sm:$0xff] %v2996
        %4344 = vst [vmem:[%s211 + $0xfc8] sm:$0xff] %v2998
        %4345 = vst [vmem:[%s211 + $0xfd0] sm:$0xff] %v3829
        %4346 = vst [vmem:[%s211 + $0xfd8] sm:$0xff] %v3831
        %4347 = vst [vmem:[%s211 + $0xfe0] sm:$0xff] %v3002
        %4348 = vst [vmem:[%s211 + $0xfe8] sm:$0xff] %v3004
        %4349 = vst [vmem:[%s211 + $0xff0] sm:$0xff] %v3835
        %4350 = vst [vmem:[%s211 + $0xff8] sm:$0xff] %v3837
        %s4351 = sand.u32 %s92, 1
        %s4352 = sand.u32 %s92, 1
        %s4353 = smul.addr %s4352, 4096
        %s4354 = scalar_lea.vmem [#allocation9], %s4353
        // Predicated region
        $region49: #{fsa_forward.1} parent=31 // pred_check
          %p4355 = pneg %p102
        $region50: #{fsa_forward.1} parent=31 // pred_check_branch
          %4357 = sbr.rel (%p4355) target = $region52
        $region51: #{fsa_forward.1} parent=31 // pred_region
          %s4358 = smul.u32 4, %s16
          %s4359 = smul.addr %s4358, 8
          %s4360 = scalar_lea.vmem %s3, %s4359
          // Predicated region
          $region53: #{fsa_forward.1} parent=51 // pred_check
            _
          $region54: #{fsa_forward.1} parent=51 // pred_check_branch
            %4362 = sbr.rel (0) target = $region56
          $region55: #{fsa_forward.1} parent=51 // pred_region
            // Predicated region
            $region57: #{fsa_forward.1} parent=55 // pred_check
              _
            $region58: #{fsa_forward.1} parent=55 // pred_check_branch
              %4364 = sbr.rel (0) target = $region60
            $region59: #{fsa_forward.1} parent=55 // pred_region
              loop: start=0, step=1, limit=1
              $region61: #{fsa_forward.1} parent=59 // loop_pre_header
                _
              $region62: #{fsa_forward.1} parent=59 // loop_header
                %s4366 = sphi 0, %s4370
                %p4367 = scmp.ge.s32.totalorder %s4366, 1
                %s4371 = sphi %s4354, %s4354
                %s4372 = sphi %s4360, %s4360
              $region63: #{fsa_forward.1} parent=59 // loop_header_branch
                %4369 = sbr.rel (%p4367) target = $region67
              $region64: #{fsa_forward.1} parent=59 // loop_body
                %v4373 = vld [vmem:[%s4371] sm:$0xff]
                %4374 = vst [vmem:[%s4372] sm:$0xff] %v4373
                %v4375 = vld [vmem:[%s4371 + $0x8] sm:$0xff]
                %4376 = vst [vmem:[%s4372 + $0x8] sm:$0xff] %v4375
                %v4377 = vld [vmem:[%s4371 + $0x10] sm:$0xff]
                %4378 = vst [vmem:[%s4372 + $0x10] sm:$0xff] %v4377
                %v4379 = vld [vmem:[%s4371 + $0x18] sm:$0xff]
                %4380 = vst [vmem:[%s4372 + $0x18] sm:$0xff] %v4379
                %v4381 = vld [vmem:[%s4371 + $0x20] sm:$0xff]
                %4382 = vst [vmem:[%s4372 + $0x80] sm:$0xff] %v4381
                %v4383 = vld [vmem:[%s4371 + $0x28] sm:$0xff]
                %4384 = vst [vmem:[%s4372 + $0x88] sm:$0xff] %v4383
                %v4385 = vld [vmem:[%s4371 + $0x30] sm:$0xff]
                %4386 = vst [vmem:[%s4372 + $0x90] sm:$0xff] %v4385
                %v4387 = vld [vmem:[%s4371 + $0x38] sm:$0xff]
                %4388 = vst [vmem:[%s4372 + $0x98] sm:$0xff] %v4387
                %v4389 = vld [vmem:[%s4371 + $0x40] sm:$0xff]
                %4390 = vst [vmem:[%s4372 + $0x100] sm:$0xff] %v4389
                %v4391 = vld [vmem:[%s4371 + $0x48] sm:$0xff]
                %4392 = vst [vmem:[%s4372 + $0x108] sm:$0xff] %v4391
                %v4393 = vld [vmem:[%s4371 + $0x50] sm:$0xff]
                %4394 = vst [vmem:[%s4372 + $0x110] sm:$0xff] %v4393
                %v4395 = vld [vmem:[%s4371 + $0x58] sm:$0xff]
                %4396 = vst [vmem:[%s4372 + $0x118] sm:$0xff] %v4395
                %v4397 = vld [vmem:[%s4371 + $0x60] sm:$0xff]
                %4398 = vst [vmem:[%s4372 + $0x180] sm:$0xff] %v4397
                %v4399 = vld [vmem:[%s4371 + $0x68] sm:$0xff]
                %4400 = vst [vmem:[%s4372 + $0x188] sm:$0xff] %v4399
                %v4401 = vld [vmem:[%s4371 + $0x70] sm:$0xff]
                %4402 = vst [vmem:[%s4372 + $0x190] sm:$0xff] %v4401
                %v4403 = vld [vmem:[%s4371 + $0x78] sm:$0xff]
                %4404 = vst [vmem:[%s4372 + $0x198] sm:$0xff] %v4403
                %v4405 = vld [vmem:[%s4371 + $0x80] sm:$0xff]
                %4406 = vst [vmem:[%s4372 + $0x200] sm:$0xff] %v4405
                %v4407 = vld [vmem:[%s4371 + $0x88] sm:$0xff]
                %4408 = vst [vmem:[%s4372 + $0x208] sm:$0xff] %v4407
                %v4409 = vld [vmem:[%s4371 + $0x90] sm:$0xff]
                %4410 = vst [vmem:[%s4372 + $0x210] sm:$0xff] %v4409
                %v4411 = vld [vmem:[%s4371 + $0x98] sm:$0xff]
                %4412 = vst [vmem:[%s4372 + $0x218] sm:$0xff] %v4411
                %v4413 = vld [vmem:[%s4371 + $0xa0] sm:$0xff]
                %4414 = vst [vmem:[%s4372 + $0x280] sm:$0xff] %v4413
                %v4415 = vld [vmem:[%s4371 + $0xa8] sm:$0xff]
                %4416 = vst [vmem:[%s4372 + $0x288] sm:$0xff] %v4415
                %v4417 = vld [vmem:[%s4371 + $0xb0] sm:$0xff]
                %4418 = vst [vmem:[%s4372 + $0x290] sm:$0xff] %v4417
                %v4419 = vld [vmem:[%s4371 + $0xb8] sm:$0xff]
                %4420 = vst [vmem:[%s4372 + $0x298] sm:$0xff] %v4419
                %v4421 = vld [vmem:[%s4371 + $0xc0] sm:$0xff]
                %4422 = vst [vmem:[%s4372 + $0x300] sm:$0xff] %v4421
                %v4423 = vld [vmem:[%s4371 + $0xc8] sm:$0xff]
                %4424 = vst [vmem:[%s4372 + $0x308] sm:$0xff] %v4423
                %v4425 = vld [vmem:[%s4371 + $0xd0] sm:$0xff]
                %4426 = vst [vmem:[%s4372 + $0x310] sm:$0xff] %v4425
                %v4427 = vld [vmem:[%s4371 + $0xd8] sm:$0xff]
                %4428 = vst [vmem:[%s4372 + $0x318] sm:$0xff] %v4427
                %v4429 = vld [vmem:[%s4371 + $0xe0] sm:$0xff]
                %4430 = vst [vmem:[%s4372 + $0x380] sm:$0xff] %v4429
                %v4431 = vld [vmem:[%s4371 + $0xe8] sm:$0xff]
                %4432 = vst [vmem:[%s4372 + $0x388] sm:$0xff] %v4431
                %v4433 = vld [vmem:[%s4371 + $0xf0] sm:$0xff]
                %4434 = vst [vmem:[%s4372 + $0x390] sm:$0xff] %v4433
                %v4435 = vld [vmem:[%s4371 + $0xf8] sm:$0xff]
                %4436 = vst [vmem:[%s4372 + $0x398] sm:$0xff] %v4435
                %v4437 = vld [vmem:[%s4371 + $0x100] sm:$0xff]
                %4438 = vst [vmem:[%s4372 + $0x400] sm:$0xff] %v4437
                %v4439 = vld [vmem:[%s4371 + $0x108] sm:$0xff]
                %4440 = vst [vmem:[%s4372 + $0x408] sm:$0xff] %v4439
                %v4441 = vld [vmem:[%s4371 + $0x110] sm:$0xff]
                %4442 = vst [vmem:[%s4372 + $0x410] sm:$0xff] %v4441
                %v4443 = vld [vmem:[%s4371 + $0x118] sm:$0xff]
                %4444 = vst [vmem:[%s4372 + $0x418] sm:$0xff] %v4443
                %v4445 = vld [vmem:[%s4371 + $0x120] sm:$0xff]
                %4446 = vst [vmem:[%s4372 + $0x480] sm:$0xff] %v4445
                %v4447 = vld [vmem:[%s4371 + $0x128] sm:$0xff]
                %4448 = vst [vmem:[%s4372 + $0x488] sm:$0xff] %v4447
                %v4449 = vld [vmem:[%s4371 + $0x130] sm:$0xff]
                %4450 = vst [vmem:[%s4372 + $0x490] sm:$0xff] %v4449
                %v4451 = vld [vmem:[%s4371 + $0x138] sm:$0xff]
                %4452 = vst [vmem:[%s4372 + $0x498] sm:$0xff] %v4451
                %v4453 = vld [vmem:[%s4371 + $0x140] sm:$0xff]
                %4454 = vst [vmem:[%s4372 + $0x500] sm:$0xff] %v4453
                %v4455 = vld [vmem:[%s4371 + $0x148] sm:$0xff]
                %4456 = vst [vmem:[%s4372 + $0x508] sm:$0xff] %v4455
                %v4457 = vld [vmem:[%s4371 + $0x150] sm:$0xff]
                %4458 = vst [vmem:[%s4372 + $0x510] sm:$0xff] %v4457
                %v4459 = vld [vmem:[%s4371 + $0x158] sm:$0xff]
                %4460 = vst [vmem:[%s4372 + $0x518] sm:$0xff] %v4459
                %v4461 = vld [vmem:[%s4371 + $0x160] sm:$0xff]
                %4462 = vst [vmem:[%s4372 + $0x580] sm:$0xff] %v4461
                %v4463 = vld [vmem:[%s4371 + $0x168] sm:$0xff]
                %4464 = vst [vmem:[%s4372 + $0x588] sm:$0xff] %v4463
                %v4465 = vld [vmem:[%s4371 + $0x170] sm:$0xff]
                %4466 = vst [vmem:[%s4372 + $0x590] sm:$0xff] %v4465
                %v4467 = vld [vmem:[%s4371 + $0x178] sm:$0xff]
                %4468 = vst [vmem:[%s4372 + $0x598] sm:$0xff] %v4467
                %v4469 = vld [vmem:[%s4371 + $0x180] sm:$0xff]
                %4470 = vst [vmem:[%s4372 + $0x600] sm:$0xff] %v4469
                %v4471 = vld [vmem:[%s4371 + $0x188] sm:$0xff]
                %4472 = vst [vmem:[%s4372 + $0x608] sm:$0xff] %v4471
                %v4473 = vld [vmem:[%s4371 + $0x190] sm:$0xff]
                %4474 = vst [vmem:[%s4372 + $0x610] sm:$0xff] %v4473
                %v4475 = vld [vmem:[%s4371 + $0x198] sm:$0xff]
                %4476 = vst [vmem:[%s4372 + $0x618] sm:$0xff] %v4475
                %v4477 = vld [vmem:[%s4371 + $0x1a0] sm:$0xff]
                %4478 = vst [vmem:[%s4372 + $0x680] sm:$0xff] %v4477
                %v4479 = vld [vmem:[%s4371 + $0x1a8] sm:$0xff]
                %4480 = vst [vmem:[%s4372 + $0x688] sm:$0xff] %v4479
                %v4481 = vld [vmem:[%s4371 + $0x1b0] sm:$0xff]
                %4482 = vst [vmem:[%s4372 + $0x690] sm:$0xff] %v4481
                %v4483 = vld [vmem:[%s4371 + $0x1b8] sm:$0xff]
                %4484 = vst [vmem:[%s4372 + $0x698] sm:$0xff] %v4483
                %v4485 = vld [vmem:[%s4371 + $0x1c0] sm:$0xff]
                %4486 = vst [vmem:[%s4372 + $0x700] sm:$0xff] %v4485
                %v4487 = vld [vmem:[%s4371 + $0x1c8] sm:$0xff]
                %4488 = vst [vmem:[%s4372 + $0x708] sm:$0xff] %v4487
                %v4489 = vld [vmem:[%s4371 + $0x1d0] sm:$0xff]
                %4490 = vst [vmem:[%s4372 + $0x710] sm:$0xff] %v4489
                %v4491 = vld [vmem:[%s4371 + $0x1d8] sm:$0xff]
                %4492 = vst [vmem:[%s4372 + $0x718] sm:$0xff] %v4491
                %v4493 = vld [vmem:[%s4371 + $0x1e0] sm:$0xff]
                %4494 = vst [vmem:[%s4372 + $0x780] sm:$0xff] %v4493
                %v4495 = vld [vmem:[%s4371 + $0x1e8] sm:$0xff]
                %4496 = vst [vmem:[%s4372 + $0x788] sm:$0xff] %v4495
                %v4497 = vld [vmem:[%s4371 + $0x1f0] sm:$0xff]
                %4498 = vst [vmem:[%s4372 + $0x790] sm:$0xff] %v4497
                %v4499 = vld [vmem:[%s4371 + $0x1f8] sm:$0xff]
                %4500 = vst [vmem:[%s4372 + $0x798] sm:$0xff] %v4499
                %v4501 = vld [vmem:[%s4371 + $0x200] sm:$0xff]
                %4502 = vst [vmem:[%s4372 + $0x800] sm:$0xff] %v4501
                %v4503 = vld [vmem:[%s4371 + $0x208] sm:$0xff]
                %4504 = vst [vmem:[%s4372 + $0x808] sm:$0xff] %v4503
                %v4505 = vld [vmem:[%s4371 + $0x210] sm:$0xff]
                %4506 = vst [vmem:[%s4372 + $0x810] sm:$0xff] %v4505
                %v4507 = vld [vmem:[%s4371 + $0x218] sm:$0xff]
                %4508 = vst [vmem:[%s4372 + $0x818] sm:$0xff] %v4507
                %v4509 = vld [vmem:[%s4371 + $0x220] sm:$0xff]
                %4510 = vst [vmem:[%s4372 + $0x880] sm:$0xff] %v4509
                %v4511 = vld [vmem:[%s4371 + $0x228] sm:$0xff]
                %4512 = vst [vmem:[%s4372 + $0x888] sm:$0xff] %v4511
                %v4513 = vld [vmem:[%s4371 + $0x230] sm:$0xff]
                %4514 = vst [vmem:[%s4372 + $0x890] sm:$0xff] %v4513
                %v4515 = vld [vmem:[%s4371 + $0x238] sm:$0xff]
                %4516 = vst [vmem:[%s4372 + $0x898] sm:$0xff] %v4515
                %v4517 = vld [vmem:[%s4371 + $0x240] sm:$0xff]
                %4518 = vst [vmem:[%s4372 + $0x900] sm:$0xff] %v4517
                %v4519 = vld [vmem:[%s4371 + $0x248] sm:$0xff]
                %4520 = vst [vmem:[%s4372 + $0x908] sm:$0xff] %v4519
                %v4521 = vld [vmem:[%s4371 + $0x250] sm:$0xff]
                %4522 = vst [vmem:[%s4372 + $0x910] sm:$0xff] %v4521
                %v4523 = vld [vmem:[%s4371 + $0x258] sm:$0xff]
                %4524 = vst [vmem:[%s4372 + $0x918] sm:$0xff] %v4523
                %v4525 = vld [vmem:[%s4371 + $0x260] sm:$0xff]
                %4526 = vst [vmem:[%s4372 + $0x980] sm:$0xff] %v4525
                %v4527 = vld [vmem:[%s4371 + $0x268] sm:$0xff]
                %4528 = vst [vmem:[%s4372 + $0x988] sm:$0xff] %v4527
                %v4529 = vld [vmem:[%s4371 + $0x270] sm:$0xff]
                %4530 = vst [vmem:[%s4372 + $0x990] sm:$0xff] %v4529
                %v4531 = vld [vmem:[%s4371 + $0x278] sm:$0xff]
                %4532 = vst [vmem:[%s4372 + $0x998] sm:$0xff] %v4531
                %v4533 = vld [vmem:[%s4371 + $0x280] sm:$0xff]
                %4534 = vst [vmem:[%s4372 + $0xa00] sm:$0xff] %v4533
                %v4535 = vld [vmem:[%s4371 + $0x288] sm:$0xff]
                %4536 = vst [vmem:[%s4372 + $0xa08] sm:$0xff] %v4535
                %v4537 = vld [vmem:[%s4371 + $0x290] sm:$0xff]
                %4538 = vst [vmem:[%s4372 + $0xa10] sm:$0xff] %v4537
                %v4539 = vld [vmem:[%s4371 + $0x298] sm:$0xff]
                %4540 = vst [vmem:[%s4372 + $0xa18] sm:$0xff] %v4539
                %v4541 = vld [vmem:[%s4371 + $0x2a0] sm:$0xff]
                %4542 = vst [vmem:[%s4372 + $0xa80] sm:$0xff] %v4541
                %v4543 = vld [vmem:[%s4371 + $0x2a8] sm:$0xff]
                %4544 = vst [vmem:[%s4372 + $0xa88] sm:$0xff] %v4543
                %v4545 = vld [vmem:[%s4371 + $0x2b0] sm:$0xff]
                %4546 = vst [vmem:[%s4372 + $0xa90] sm:$0xff] %v4545
                %v4547 = vld [vmem:[%s4371 + $0x2b8] sm:$0xff]
                %4548 = vst [vmem:[%s4372 + $0xa98] sm:$0xff] %v4547
                %v4549 = vld [vmem:[%s4371 + $0x2c0] sm:$0xff]
                %4550 = vst [vmem:[%s4372 + $0xb00] sm:$0xff] %v4549
                %v4551 = vld [vmem:[%s4371 + $0x2c8] sm:$0xff]
                %4552 = vst [vmem:[%s4372 + $0xb08] sm:$0xff] %v4551
                %v4553 = vld [vmem:[%s4371 + $0x2d0] sm:$0xff]
                %4554 = vst [vmem:[%s4372 + $0xb10] sm:$0xff] %v4553
                %v4555 = vld [vmem:[%s4371 + $0x2d8] sm:$0xff]
                %4556 = vst [vmem:[%s4372 + $0xb18] sm:$0xff] %v4555
                %v4557 = vld [vmem:[%s4371 + $0x2e0] sm:$0xff]
                %4558 = vst [vmem:[%s4372 + $0xb80] sm:$0xff] %v4557
                %v4559 = vld [vmem:[%s4371 + $0x2e8] sm:$0xff]
                %4560 = vst [vmem:[%s4372 + $0xb88] sm:$0xff] %v4559
                %v4561 = vld [vmem:[%s4371 + $0x2f0] sm:$0xff]
                %4562 = vst [vmem:[%s4372 + $0xb90] sm:$0xff] %v4561
                %v4563 = vld [vmem:[%s4371 + $0x2f8] sm:$0xff]
                %4564 = vst [vmem:[%s4372 + $0xb98] sm:$0xff] %v4563
                %v4565 = vld [vmem:[%s4371 + $0x300] sm:$0xff]
                %4566 = vst [vmem:[%s4372 + $0xc00] sm:$0xff] %v4565
                %v4567 = vld [vmem:[%s4371 + $0x308] sm:$0xff]
                %4568 = vst [vmem:[%s4372 + $0xc08] sm:$0xff] %v4567
                %v4569 = vld [vmem:[%s4371 + $0x310] sm:$0xff]
                %4570 = vst [vmem:[%s4372 + $0xc10] sm:$0xff] %v4569
                %v4571 = vld [vmem:[%s4371 + $0x318] sm:$0xff]
                %4572 = vst [vmem:[%s4372 + $0xc18] sm:$0xff] %v4571
                %v4573 = vld [vmem:[%s4371 + $0x320] sm:$0xff]
                %4574 = vst [vmem:[%s4372 + $0xc80] sm:$0xff] %v4573
                %v4575 = vld [vmem:[%s4371 + $0x328] sm:$0xff]
                %4576 = vst [vmem:[%s4372 + $0xc88] sm:$0xff] %v4575
                %v4577 = vld [vmem:[%s4371 + $0x330] sm:$0xff]
                %4578 = vst [vmem:[%s4372 + $0xc90] sm:$0xff] %v4577
                %v4579 = vld [vmem:[%s4371 + $0x338] sm:$0xff]
                %4580 = vst [vmem:[%s4372 + $0xc98] sm:$0xff] %v4579
                %v4581 = vld [vmem:[%s4371 + $0x340] sm:$0xff]
                %4582 = vst [vmem:[%s4372 + $0xd00] sm:$0xff] %v4581
                %v4583 = vld [vmem:[%s4371 + $0x348] sm:$0xff]
                %4584 = vst [vmem:[%s4372 + $0xd08] sm:$0xff] %v4583
                %v4585 = vld [vmem:[%s4371 + $0x350] sm:$0xff]
                %4586 = vst [vmem:[%s4372 + $0xd10] sm:$0xff] %v4585
                %v4587 = vld [vmem:[%s4371 + $0x358] sm:$0xff]
                %4588 = vst [vmem:[%s4372 + $0xd18] sm:$0xff] %v4587
                %v4589 = vld [vmem:[%s4371 + $0x360] sm:$0xff]
                %4590 = vst [vmem:[%s4372 + $0xd80] sm:$0xff] %v4589
                %v4591 = vld [vmem:[%s4371 + $0x368] sm:$0xff]
                %4592 = vst [vmem:[%s4372 + $0xd88] sm:$0xff] %v4591
                %v4593 = vld [vmem:[%s4371 + $0x370] sm:$0xff]
                %4594 = vst [vmem:[%s4372 + $0xd90] sm:$0xff] %v4593
                %v4595 = vld [vmem:[%s4371 + $0x378] sm:$0xff]
                %4596 = vst [vmem:[%s4372 + $0xd98] sm:$0xff] %v4595
                %v4597 = vld [vmem:[%s4371 + $0x380] sm:$0xff]
                %4598 = vst [vmem:[%s4372 + $0xe00] sm:$0xff] %v4597
                %v4599 = vld [vmem:[%s4371 + $0x388] sm:$0xff]
                %4600 = vst [vmem:[%s4372 + $0xe08] sm:$0xff] %v4599
                %v4601 = vld [vmem:[%s4371 + $0x390] sm:$0xff]
                %4602 = vst [vmem:[%s4372 + $0xe10] sm:$0xff] %v4601
                %v4603 = vld [vmem:[%s4371 + $0x398] sm:$0xff]
                %4604 = vst [vmem:[%s4372 + $0xe18] sm:$0xff] %v4603
                %v4605 = vld [vmem:[%s4371 + $0x3a0] sm:$0xff]
                %4606 = vst [vmem:[%s4372 + $0xe80] sm:$0xff] %v4605
                %v4607 = vld [vmem:[%s4371 + $0x3a8] sm:$0xff]
                %4608 = vst [vmem:[%s4372 + $0xe88] sm:$0xff] %v4607
                %v4609 = vld [vmem:[%s4371 + $0x3b0] sm:$0xff]
                %4610 = vst [vmem:[%s4372 + $0xe90] sm:$0xff] %v4609
                %v4611 = vld [vmem:[%s4371 + $0x3b8] sm:$0xff]
                %4612 = vst [vmem:[%s4372 + $0xe98] sm:$0xff] %v4611
                %v4613 = vld [vmem:[%s4371 + $0x3c0] sm:$0xff]
                %4614 = vst [vmem:[%s4372 + $0xf00] sm:$0xff] %v4613
                %v4615 = vld [vmem:[%s4371 + $0x3c8] sm:$0xff]
                %4616 = vst [vmem:[%s4372 + $0xf08] sm:$0xff] %v4615
                %v4617 = vld [vmem:[%s4371 + $0x3d0] sm:$0xff]
                %4618 = vst [vmem:[%s4372 + $0xf10] sm:$0xff] %v4617
                %v4619 = vld [vmem:[%s4371 + $0x3d8] sm:$0xff]
                %4620 = vst [vmem:[%s4372 + $0xf18] sm:$0xff] %v4619
                %v4621 = vld [vmem:[%s4371 + $0x3e0] sm:$0xff]
                %4622 = vst [vmem:[%s4372 + $0xf80] sm:$0xff] %v4621
                %v4623 = vld [vmem:[%s4371 + $0x3e8] sm:$0xff]
                %4624 = vst [vmem:[%s4372 + $0xf88] sm:$0xff] %v4623
                %v4625 = vld [vmem:[%s4371 + $0x3f0] sm:$0xff]
                %4626 = vst [vmem:[%s4372 + $0xf90] sm:$0xff] %v4625
                %v4627 = vld [vmem:[%s4371 + $0x3f8] sm:$0xff]
                %4628 = vst [vmem:[%s4372 + $0xf98] sm:$0xff] %v4627
                %v4629 = vld [vmem:[%s4371 + $0x400] sm:$0xff]
                %4630 = vst [vmem:[%s4372 + $0x1000] sm:$0xff] %v4629
                %v4631 = vld [vmem:[%s4371 + $0x408] sm:$0xff]
                %4632 = vst [vmem:[%s4372 + $0x1008] sm:$0xff] %v4631
                %v4633 = vld [vmem:[%s4371 + $0x410] sm:$0xff]
                %4634 = vst [vmem:[%s4372 + $0x1010] sm:$0xff] %v4633
                %v4635 = vld [vmem:[%s4371 + $0x418] sm:$0xff]
                %4636 = vst [vmem:[%s4372 + $0x1018] sm:$0xff] %v4635
                %v4637 = vld [vmem:[%s4371 + $0x420] sm:$0xff]
                %4638 = vst [vmem:[%s4372 + $0x1080] sm:$0xff] %v4637
                %v4639 = vld [vmem:[%s4371 + $0x428] sm:$0xff]
                %4640 = vst [vmem:[%s4372 + $0x1088] sm:$0xff] %v4639
                %v4641 = vld [vmem:[%s4371 + $0x430] sm:$0xff]
                %4642 = vst [vmem:[%s4372 + $0x1090] sm:$0xff] %v4641
                %v4643 = vld [vmem:[%s4371 + $0x438] sm:$0xff]
                %4644 = vst [vmem:[%s4372 + $0x1098] sm:$0xff] %v4643
                %v4645 = vld [vmem:[%s4371 + $0x440] sm:$0xff]
                %4646 = vst [vmem:[%s4372 + $0x1100] sm:$0xff] %v4645
                %v4647 = vld [vmem:[%s4371 + $0x448] sm:$0xff]
                %4648 = vst [vmem:[%s4372 + $0x1108] sm:$0xff] %v4647
                %v4649 = vld [vmem:[%s4371 + $0x450] sm:$0xff]
                %4650 = vst [vmem:[%s4372 + $0x1110] sm:$0xff] %v4649
                %v4651 = vld [vmem:[%s4371 + $0x458] sm:$0xff]
                %4652 = vst [vmem:[%s4372 + $0x1118] sm:$0xff] %v4651
                %v4653 = vld [vmem:[%s4371 + $0x460] sm:$0xff]
                %4654 = vst [vmem:[%s4372 + $0x1180] sm:$0xff] %v4653
                %v4655 = vld [vmem:[%s4371 + $0x468] sm:$0xff]
                %4656 = vst [vmem:[%s4372 + $0x1188] sm:$0xff] %v4655
                %v4657 = vld [vmem:[%s4371 + $0x470] sm:$0xff]
                %4658 = vst [vmem:[%s4372 + $0x1190] sm:$0xff] %v4657
                %v4659 = vld [vmem:[%s4371 + $0x478] sm:$0xff]
                %4660 = vst [vmem:[%s4372 + $0x1198] sm:$0xff] %v4659
                %v4661 = vld [vmem:[%s4371 + $0x480] sm:$0xff]
                %4662 = vst [vmem:[%s4372 + $0x1200] sm:$0xff] %v4661
                %v4663 = vld [vmem:[%s4371 + $0x488] sm:$0xff]
                %4664 = vst [vmem:[%s4372 + $0x1208] sm:$0xff] %v4663
                %v4665 = vld [vmem:[%s4371 + $0x490] sm:$0xff]
                %4666 = vst [vmem:[%s4372 + $0x1210] sm:$0xff] %v4665
                %v4667 = vld [vmem:[%s4371 + $0x498] sm:$0xff]
                %4668 = vst [vmem:[%s4372 + $0x1218] sm:$0xff] %v4667
                %v4669 = vld [vmem:[%s4371 + $0x4a0] sm:$0xff]
                %4670 = vst [vmem:[%s4372 + $0x1280] sm:$0xff] %v4669
                %v4671 = vld [vmem:[%s4371 + $0x4a8] sm:$0xff]
                %4672 = vst [vmem:[%s4372 + $0x1288] sm:$0xff] %v4671
                %v4673 = vld [vmem:[%s4371 + $0x4b0] sm:$0xff]
                %4674 = vst [vmem:[%s4372 + $0x1290] sm:$0xff] %v4673
                %v4675 = vld [vmem:[%s4371 + $0x4b8] sm:$0xff]
                %4676 = vst [vmem:[%s4372 + $0x1298] sm:$0xff] %v4675
                %v4677 = vld [vmem:[%s4371 + $0x4c0] sm:$0xff]
                %4678 = vst [vmem:[%s4372 + $0x1300] sm:$0xff] %v4677
                %v4679 = vld [vmem:[%s4371 + $0x4c8] sm:$0xff]
                %4680 = vst [vmem:[%s4372 + $0x1308] sm:$0xff] %v4679
                %v4681 = vld [vmem:[%s4371 + $0x4d0] sm:$0xff]
                %4682 = vst [vmem:[%s4372 + $0x1310] sm:$0xff] %v4681
                %v4683 = vld [vmem:[%s4371 + $0x4d8] sm:$0xff]
                %4684 = vst [vmem:[%s4372 + $0x1318] sm:$0xff] %v4683
                %v4685 = vld [vmem:[%s4371 + $0x4e0] sm:$0xff]
                %4686 = vst [vmem:[%s4372 + $0x1380] sm:$0xff] %v4685
                %v4687 = vld [vmem:[%s4371 + $0x4e8] sm:$0xff]
                %4688 = vst [vmem:[%s4372 + $0x1388] sm:$0xff] %v4687
                %v4689 = vld [vmem:[%s4371 + $0x4f0] sm:$0xff]
                %4690 = vst [vmem:[%s4372 + $0x1390] sm:$0xff] %v4689
                %v4691 = vld [vmem:[%s4371 + $0x4f8] sm:$0xff]
                %4692 = vst [vmem:[%s4372 + $0x1398] sm:$0xff] %v4691
                %v4693 = vld [vmem:[%s4371 + $0x500] sm:$0xff]
                %4694 = vst [vmem:[%s4372 + $0x1400] sm:$0xff] %v4693
                %v4695 = vld [vmem:[%s4371 + $0x508] sm:$0xff]
                %4696 = vst [vmem:[%s4372 + $0x1408] sm:$0xff] %v4695
                %v4697 = vld [vmem:[%s4371 + $0x510] sm:$0xff]
                %4698 = vst [vmem:[%s4372 + $0x1410] sm:$0xff] %v4697
                %v4699 = vld [vmem:[%s4371 + $0x518] sm:$0xff]
                %4700 = vst [vmem:[%s4372 + $0x1418] sm:$0xff] %v4699
                %v4701 = vld [vmem:[%s4371 + $0x520] sm:$0xff]
                %4702 = vst [vmem:[%s4372 + $0x1480] sm:$0xff] %v4701
                %v4703 = vld [vmem:[%s4371 + $0x528] sm:$0xff]
                %4704 = vst [vmem:[%s4372 + $0x1488] sm:$0xff] %v4703
                %v4705 = vld [vmem:[%s4371 + $0x530] sm:$0xff]
                %4706 = vst [vmem:[%s4372 + $0x1490] sm:$0xff] %v4705
                %v4707 = vld [vmem:[%s4371 + $0x538] sm:$0xff]
                %4708 = vst [vmem:[%s4372 + $0x1498] sm:$0xff] %v4707
                %v4709 = vld [vmem:[%s4371 + $0x540] sm:$0xff]
                %4710 = vst [vmem:[%s4372 + $0x1500] sm:$0xff] %v4709
                %v4711 = vld [vmem:[%s4371 + $0x548] sm:$0xff]
                %4712 = vst [vmem:[%s4372 + $0x1508] sm:$0xff] %v4711
                %v4713 = vld [vmem:[%s4371 + $0x550] sm:$0xff]
                %4714 = vst [vmem:[%s4372 + $0x1510] sm:$0xff] %v4713
                %v4715 = vld [vmem:[%s4371 + $0x558] sm:$0xff]
                %4716 = vst [vmem:[%s4372 + $0x1518] sm:$0xff] %v4715
                %v4717 = vld [vmem:[%s4371 + $0x560] sm:$0xff]
                %4718 = vst [vmem:[%s4372 + $0x1580] sm:$0xff] %v4717
                %v4719 = vld [vmem:[%s4371 + $0x568] sm:$0xff]
                %4720 = vst [vmem:[%s4372 + $0x1588] sm:$0xff] %v4719
                %v4721 = vld [vmem:[%s4371 + $0x570] sm:$0xff]
                %4722 = vst [vmem:[%s4372 + $0x1590] sm:$0xff] %v4721
                %v4723 = vld [vmem:[%s4371 + $0x578] sm:$0xff]
                %4724 = vst [vmem:[%s4372 + $0x1598] sm:$0xff] %v4723
                %v4725 = vld [vmem:[%s4371 + $0x580] sm:$0xff]
                %4726 = vst [vmem:[%s4372 + $0x1600] sm:$0xff] %v4725
                %v4727 = vld [vmem:[%s4371 + $0x588] sm:$0xff]
                %4728 = vst [vmem:[%s4372 + $0x1608] sm:$0xff] %v4727
                %v4729 = vld [vmem:[%s4371 + $0x590] sm:$0xff]
                %4730 = vst [vmem:[%s4372 + $0x1610] sm:$0xff] %v4729
                %v4731 = vld [vmem:[%s4371 + $0x598] sm:$0xff]
                %4732 = vst [vmem:[%s4372 + $0x1618] sm:$0xff] %v4731
                %v4733 = vld [vmem:[%s4371 + $0x5a0] sm:$0xff]
                %4734 = vst [vmem:[%s4372 + $0x1680] sm:$0xff] %v4733
                %v4735 = vld [vmem:[%s4371 + $0x5a8] sm:$0xff]
                %4736 = vst [vmem:[%s4372 + $0x1688] sm:$0xff] %v4735
                %v4737 = vld [vmem:[%s4371 + $0x5b0] sm:$0xff]
                %4738 = vst [vmem:[%s4372 + $0x1690] sm:$0xff] %v4737
                %v4739 = vld [vmem:[%s4371 + $0x5b8] sm:$0xff]
                %4740 = vst [vmem:[%s4372 + $0x1698] sm:$0xff] %v4739
                %v4741 = vld [vmem:[%s4371 + $0x5c0] sm:$0xff]
                %4742 = vst [vmem:[%s4372 + $0x1700] sm:$0xff] %v4741
                %v4743 = vld [vmem:[%s4371 + $0x5c8] sm:$0xff]
                %4744 = vst [vmem:[%s4372 + $0x1708] sm:$0xff] %v4743
                %v4745 = vld [vmem:[%s4371 + $0x5d0] sm:$0xff]
                %4746 = vst [vmem:[%s4372 + $0x1710] sm:$0xff] %v4745
                %v4747 = vld [vmem:[%s4371 + $0x5d8] sm:$0xff]
                %4748 = vst [vmem:[%s4372 + $0x1718] sm:$0xff] %v4747
                %v4749 = vld [vmem:[%s4371 + $0x5e0] sm:$0xff]
                %4750 = vst [vmem:[%s4372 + $0x1780] sm:$0xff] %v4749
                %v4751 = vld [vmem:[%s4371 + $0x5e8] sm:$0xff]
                %4752 = vst [vmem:[%s4372 + $0x1788] sm:$0xff] %v4751
                %v4753 = vld [vmem:[%s4371 + $0x5f0] sm:$0xff]
                %4754 = vst [vmem:[%s4372 + $0x1790] sm:$0xff] %v4753
                %v4755 = vld [vmem:[%s4371 + $0x5f8] sm:$0xff]
                %4756 = vst [vmem:[%s4372 + $0x1798] sm:$0xff] %v4755
                %v4757 = vld [vmem:[%s4371 + $0x600] sm:$0xff]
                %4758 = vst [vmem:[%s4372 + $0x1800] sm:$0xff] %v4757
                %v4759 = vld [vmem:[%s4371 + $0x608] sm:$0xff]
                %4760 = vst [vmem:[%s4372 + $0x1808] sm:$0xff] %v4759
                %v4761 = vld [vmem:[%s4371 + $0x610] sm:$0xff]
                %4762 = vst [vmem:[%s4372 + $0x1810] sm:$0xff] %v4761
                %v4763 = vld [vmem:[%s4371 + $0x618] sm:$0xff]
                %4764 = vst [vmem:[%s4372 + $0x1818] sm:$0xff] %v4763
                %v4765 = vld [vmem:[%s4371 + $0x620] sm:$0xff]
                %4766 = vst [vmem:[%s4372 + $0x1880] sm:$0xff] %v4765
                %v4767 = vld [vmem:[%s4371 + $0x628] sm:$0xff]
                %4768 = vst [vmem:[%s4372 + $0x1888] sm:$0xff] %v4767
                %v4769 = vld [vmem:[%s4371 + $0x630] sm:$0xff]
                %4770 = vst [vmem:[%s4372 + $0x1890] sm:$0xff] %v4769
                %v4771 = vld [vmem:[%s4371 + $0x638] sm:$0xff]
                %4772 = vst [vmem:[%s4372 + $0x1898] sm:$0xff] %v4771
                %v4773 = vld [vmem:[%s4371 + $0x640] sm:$0xff]
                %4774 = vst [vmem:[%s4372 + $0x1900] sm:$0xff] %v4773
                %v4775 = vld [vmem:[%s4371 + $0x648] sm:$0xff]
                %4776 = vst [vmem:[%s4372 + $0x1908] sm:$0xff] %v4775
                %v4777 = vld [vmem:[%s4371 + $0x650] sm:$0xff]
                %4778 = vst [vmem:[%s4372 + $0x1910] sm:$0xff] %v4777
                %v4779 = vld [vmem:[%s4371 + $0x658] sm:$0xff]
                %4780 = vst [vmem:[%s4372 + $0x1918] sm:$0xff] %v4779
                %v4781 = vld [vmem:[%s4371 + $0x660] sm:$0xff]
                %4782 = vst [vmem:[%s4372 + $0x1980] sm:$0xff] %v4781
                %v4783 = vld [vmem:[%s4371 + $0x668] sm:$0xff]
                %4784 = vst [vmem:[%s4372 + $0x1988] sm:$0xff] %v4783
                %v4785 = vld [vmem:[%s4371 + $0x670] sm:$0xff]
                %4786 = vst [vmem:[%s4372 + $0x1990] sm:$0xff] %v4785
                %v4787 = vld [vmem:[%s4371 + $0x678] sm:$0xff]
                %4788 = vst [vmem:[%s4372 + $0x1998] sm:$0xff] %v4787
                %v4789 = vld [vmem:[%s4371 + $0x680] sm:$0xff]
                %4790 = vst [vmem:[%s4372 + $0x1a00] sm:$0xff] %v4789
                %v4791 = vld [vmem:[%s4371 + $0x688] sm:$0xff]
                %4792 = vst [vmem:[%s4372 + $0x1a08] sm:$0xff] %v4791
                %v4793 = vld [vmem:[%s4371 + $0x690] sm:$0xff]
                %4794 = vst [vmem:[%s4372 + $0x1a10] sm:$0xff] %v4793
                %v4795 = vld [vmem:[%s4371 + $0x698] sm:$0xff]
                %4796 = vst [vmem:[%s4372 + $0x1a18] sm:$0xff] %v4795
                %v4797 = vld [vmem:[%s4371 + $0x6a0] sm:$0xff]
                %4798 = vst [vmem:[%s4372 + $0x1a80] sm:$0xff] %v4797
                %v4799 = vld [vmem:[%s4371 + $0x6a8] sm:$0xff]
                %4800 = vst [vmem:[%s4372 + $0x1a88] sm:$0xff] %v4799
                %v4801 = vld [vmem:[%s4371 + $0x6b0] sm:$0xff]
                %4802 = vst [vmem:[%s4372 + $0x1a90] sm:$0xff] %v4801
                %v4803 = vld [vmem:[%s4371 + $0x6b8] sm:$0xff]
                %4804 = vst [vmem:[%s4372 + $0x1a98] sm:$0xff] %v4803
                %v4805 = vld [vmem:[%s4371 + $0x6c0] sm:$0xff]
                %4806 = vst [vmem:[%s4372 + $0x1b00] sm:$0xff] %v4805
                %v4807 = vld [vmem:[%s4371 + $0x6c8] sm:$0xff]
                %4808 = vst [vmem:[%s4372 + $0x1b08] sm:$0xff] %v4807
                %v4809 = vld [vmem:[%s4371 + $0x6d0] sm:$0xff]
                %4810 = vst [vmem:[%s4372 + $0x1b10] sm:$0xff] %v4809
                %v4811 = vld [vmem:[%s4371 + $0x6d8] sm:$0xff]
                %4812 = vst [vmem:[%s4372 + $0x1b18] sm:$0xff] %v4811
                %v4813 = vld [vmem:[%s4371 + $0x6e0] sm:$0xff]
                %4814 = vst [vmem:[%s4372 + $0x1b80] sm:$0xff] %v4813
                %v4815 = vld [vmem:[%s4371 + $0x6e8] sm:$0xff]
                %4816 = vst [vmem:[%s4372 + $0x1b88] sm:$0xff] %v4815
                %v4817 = vld [vmem:[%s4371 + $0x6f0] sm:$0xff]
                %4818 = vst [vmem:[%s4372 + $0x1b90] sm:$0xff] %v4817
                %v4819 = vld [vmem:[%s4371 + $0x6f8] sm:$0xff]
                %4820 = vst [vmem:[%s4372 + $0x1b98] sm:$0xff] %v4819
                %v4821 = vld [vmem:[%s4371 + $0x700] sm:$0xff]
                %4822 = vst [vmem:[%s4372 + $0x1c00] sm:$0xff] %v4821
                %v4823 = vld [vmem:[%s4371 + $0x708] sm:$0xff]
                %4824 = vst [vmem:[%s4372 + $0x1c08] sm:$0xff] %v4823
                %v4825 = vld [vmem:[%s4371 + $0x710] sm:$0xff]
                %4826 = vst [vmem:[%s4372 + $0x1c10] sm:$0xff] %v4825
                %v4827 = vld [vmem:[%s4371 + $0x718] sm:$0xff]
                %4828 = vst [vmem:[%s4372 + $0x1c18] sm:$0xff] %v4827
                %v4829 = vld [vmem:[%s4371 + $0x720] sm:$0xff]
                %4830 = vst [vmem:[%s4372 + $0x1c80] sm:$0xff] %v4829
                %v4831 = vld [vmem:[%s4371 + $0x728] sm:$0xff]
                %4832 = vst [vmem:[%s4372 + $0x1c88] sm:$0xff] %v4831
                %v4833 = vld [vmem:[%s4371 + $0x730] sm:$0xff]
                %4834 = vst [vmem:[%s4372 + $0x1c90] sm:$0xff] %v4833
                %v4835 = vld [vmem:[%s4371 + $0x738] sm:$0xff]
                %4836 = vst [vmem:[%s4372 + $0x1c98] sm:$0xff] %v4835
                %v4837 = vld [vmem:[%s4371 + $0x740] sm:$0xff]
                %4838 = vst [vmem:[%s4372 + $0x1d00] sm:$0xff] %v4837
                %v4839 = vld [vmem:[%s4371 + $0x748] sm:$0xff]
                %4840 = vst [vmem:[%s4372 + $0x1d08] sm:$0xff] %v4839
                %v4841 = vld [vmem:[%s4371 + $0x750] sm:$0xff]
                %4842 = vst [vmem:[%s4372 + $0x1d10] sm:$0xff] %v4841
                %v4843 = vld [vmem:[%s4371 + $0x758] sm:$0xff]
                %4844 = vst [vmem:[%s4372 + $0x1d18] sm:$0xff] %v4843
                %v4845 = vld [vmem:[%s4371 + $0x760] sm:$0xff]
                %4846 = vst [vmem:[%s4372 + $0x1d80] sm:$0xff] %v4845
                %v4847 = vld [vmem:[%s4371 + $0x768] sm:$0xff]
                %4848 = vst [vmem:[%s4372 + $0x1d88] sm:$0xff] %v4847
                %v4849 = vld [vmem:[%s4371 + $0x770] sm:$0xff]
                %4850 = vst [vmem:[%s4372 + $0x1d90] sm:$0xff] %v4849
                %v4851 = vld [vmem:[%s4371 + $0x778] sm:$0xff]
                %4852 = vst [vmem:[%s4372 + $0x1d98] sm:$0xff] %v4851
                %v4853 = vld [vmem:[%s4371 + $0x780] sm:$0xff]
                %4854 = vst [vmem:[%s4372 + $0x1e00] sm:$0xff] %v4853
                %v4855 = vld [vmem:[%s4371 + $0x788] sm:$0xff]
                %4856 = vst [vmem:[%s4372 + $0x1e08] sm:$0xff] %v4855
                %v4857 = vld [vmem:[%s4371 + $0x790] sm:$0xff]
                %4858 = vst [vmem:[%s4372 + $0x1e10] sm:$0xff] %v4857
                %v4859 = vld [vmem:[%s4371 + $0x798] sm:$0xff]
                %4860 = vst [vmem:[%s4372 + $0x1e18] sm:$0xff] %v4859
                %v4861 = vld [vmem:[%s4371 + $0x7a0] sm:$0xff]
                %4862 = vst [vmem:[%s4372 + $0x1e80] sm:$0xff] %v4861
                %v4863 = vld [vmem:[%s4371 + $0x7a8] sm:$0xff]
                %4864 = vst [vmem:[%s4372 + $0x1e88] sm:$0xff] %v4863
                %v4865 = vld [vmem:[%s4371 + $0x7b0] sm:$0xff]
                %4866 = vst [vmem:[%s4372 + $0x1e90] sm:$0xff] %v4865
                %v4867 = vld [vmem:[%s4371 + $0x7b8] sm:$0xff]
                %4868 = vst [vmem:[%s4372 + $0x1e98] sm:$0xff] %v4867
                %v4869 = vld [vmem:[%s4371 + $0x7c0] sm:$0xff]
                %4870 = vst [vmem:[%s4372 + $0x1f00] sm:$0xff] %v4869
                %v4871 = vld [vmem:[%s4371 + $0x7c8] sm:$0xff]
                %4872 = vst [vmem:[%s4372 + $0x1f08] sm:$0xff] %v4871
                %v4873 = vld [vmem:[%s4371 + $0x7d0] sm:$0xff]
                %4874 = vst [vmem:[%s4372 + $0x1f10] sm:$0xff] %v4873
                %v4875 = vld [vmem:[%s4371 + $0x7d8] sm:$0xff]
                %4876 = vst [vmem:[%s4372 + $0x1f18] sm:$0xff] %v4875
                %v4877 = vld [vmem:[%s4371 + $0x7e0] sm:$0xff]
                %4878 = vst [vmem:[%s4372 + $0x1f80] sm:$0xff] %v4877
                %v4879 = vld [vmem:[%s4371 + $0x7e8] sm:$0xff]
                %4880 = vst [vmem:[%s4372 + $0x1f88] sm:$0xff] %v4879
                %v4881 = vld [vmem:[%s4371 + $0x7f0] sm:$0xff]
                %4882 = vst [vmem:[%s4372 + $0x1f90] sm:$0xff] %v4881
                %v4883 = vld [vmem:[%s4371 + $0x7f8] sm:$0xff]
                %4884 = vst [vmem:[%s4372 + $0x1f98] sm:$0xff] %v4883
                %v4885 = vld [vmem:[%s4371 + $0x800] sm:$0xff]
                %4886 = vst [vmem:[%s4372 + $0x2000] sm:$0xff] %v4885
                %v4887 = vld [vmem:[%s4371 + $0x808] sm:$0xff]
                %4888 = vst [vmem:[%s4372 + $0x2008] sm:$0xff] %v4887
                %v4889 = vld [vmem:[%s4371 + $0x810] sm:$0xff]
                %4890 = vst [vmem:[%s4372 + $0x2010] sm:$0xff] %v4889
                %v4891 = vld [vmem:[%s4371 + $0x818] sm:$0xff]
                %4892 = vst [vmem:[%s4372 + $0x2018] sm:$0xff] %v4891
                %v4893 = vld [vmem:[%s4371 + $0x820] sm:$0xff]
                %4894 = vst [vmem:[%s4372 + $0x2080] sm:$0xff] %v4893
                %v4895 = vld [vmem:[%s4371 + $0x828] sm:$0xff]
                %4896 = vst [vmem:[%s4372 + $0x2088] sm:$0xff] %v4895
                %v4897 = vld [vmem:[%s4371 + $0x830] sm:$0xff]
                %4898 = vst [vmem:[%s4372 + $0x2090] sm:$0xff] %v4897
                %v4899 = vld [vmem:[%s4371 + $0x838] sm:$0xff]
                %4900 = vst [vmem:[%s4372 + $0x2098] sm:$0xff] %v4899
                %v4901 = vld [vmem:[%s4371 + $0x840] sm:$0xff]
                %4902 = vst [vmem:[%s4372 + $0x2100] sm:$0xff] %v4901
                %v4903 = vld [vmem:[%s4371 + $0x848] sm:$0xff]
                %4904 = vst [vmem:[%s4372 + $0x2108] sm:$0xff] %v4903
                %v4905 = vld [vmem:[%s4371 + $0x850] sm:$0xff]
                %4906 = vst [vmem:[%s4372 + $0x2110] sm:$0xff] %v4905
                %v4907 = vld [vmem:[%s4371 + $0x858] sm:$0xff]
                %4908 = vst [vmem:[%s4372 + $0x2118] sm:$0xff] %v4907
                %v4909 = vld [vmem:[%s4371 + $0x860] sm:$0xff]
                %4910 = vst [vmem:[%s4372 + $0x2180] sm:$0xff] %v4909
                %v4911 = vld [vmem:[%s4371 + $0x868] sm:$0xff]
                %4912 = vst [vmem:[%s4372 + $0x2188] sm:$0xff] %v4911
                %v4913 = vld [vmem:[%s4371 + $0x870] sm:$0xff]
                %4914 = vst [vmem:[%s4372 + $0x2190] sm:$0xff] %v4913
                %v4915 = vld [vmem:[%s4371 + $0x878] sm:$0xff]
                %4916 = vst [vmem:[%s4372 + $0x2198] sm:$0xff] %v4915
                %v4917 = vld [vmem:[%s4371 + $0x880] sm:$0xff]
                %4918 = vst [vmem:[%s4372 + $0x2200] sm:$0xff] %v4917
                %v4919 = vld [vmem:[%s4371 + $0x888] sm:$0xff]
                %4920 = vst [vmem:[%s4372 + $0x2208] sm:$0xff] %v4919
                %v4921 = vld [vmem:[%s4371 + $0x890] sm:$0xff]
                %4922 = vst [vmem:[%s4372 + $0x2210] sm:$0xff] %v4921
                %v4923 = vld [vmem:[%s4371 + $0x898] sm:$0xff]
                %4924 = vst [vmem:[%s4372 + $0x2218] sm:$0xff] %v4923
                %v4925 = vld [vmem:[%s4371 + $0x8a0] sm:$0xff]
                %4926 = vst [vmem:[%s4372 + $0x2280] sm:$0xff] %v4925
                %v4927 = vld [vmem:[%s4371 + $0x8a8] sm:$0xff]
                %4928 = vst [vmem:[%s4372 + $0x2288] sm:$0xff] %v4927
                %v4929 = vld [vmem:[%s4371 + $0x8b0] sm:$0xff]
                %4930 = vst [vmem:[%s4372 + $0x2290] sm:$0xff] %v4929
                %v4931 = vld [vmem:[%s4371 + $0x8b8] sm:$0xff]
                %4932 = vst [vmem:[%s4372 + $0x2298] sm:$0xff] %v4931
                %v4933 = vld [vmem:[%s4371 + $0x8c0] sm:$0xff]
                %4934 = vst [vmem:[%s4372 + $0x2300] sm:$0xff] %v4933
                %v4935 = vld [vmem:[%s4371 + $0x8c8] sm:$0xff]
                %4936 = vst [vmem:[%s4372 + $0x2308] sm:$0xff] %v4935
                %v4937 = vld [vmem:[%s4371 + $0x8d0] sm:$0xff]
                %4938 = vst [vmem:[%s4372 + $0x2310] sm:$0xff] %v4937
                %v4939 = vld [vmem:[%s4371 + $0x8d8] sm:$0xff]
                %4940 = vst [vmem:[%s4372 + $0x2318] sm:$0xff] %v4939
                %v4941 = vld [vmem:[%s4371 + $0x8e0] sm:$0xff]
                %4942 = vst [vmem:[%s4372 + $0x2380] sm:$0xff] %v4941
                %v4943 = vld [vmem:[%s4371 + $0x8e8] sm:$0xff]
                %4944 = vst [vmem:[%s4372 + $0x2388] sm:$0xff] %v4943
                %v4945 = vld [vmem:[%s4371 + $0x8f0] sm:$0xff]
                %4946 = vst [vmem:[%s4372 + $0x2390] sm:$0xff] %v4945
                %v4947 = vld [vmem:[%s4371 + $0x8f8] sm:$0xff]
                %4948 = vst [vmem:[%s4372 + $0x2398] sm:$0xff] %v4947
                %v4949 = vld [vmem:[%s4371 + $0x900] sm:$0xff]
                %4950 = vst [vmem:[%s4372 + $0x2400] sm:$0xff] %v4949
                %v4951 = vld [vmem:[%s4371 + $0x908] sm:$0xff]
                %4952 = vst [vmem:[%s4372 + $0x2408] sm:$0xff] %v4951
                %v4953 = vld [vmem:[%s4371 + $0x910] sm:$0xff]
                %4954 = vst [vmem:[%s4372 + $0x2410] sm:$0xff] %v4953
                %v4955 = vld [vmem:[%s4371 + $0x918] sm:$0xff]
                %4956 = vst [vmem:[%s4372 + $0x2418] sm:$0xff] %v4955
                %v4957 = vld [vmem:[%s4371 + $0x920] sm:$0xff]
                %4958 = vst [vmem:[%s4372 + $0x2480] sm:$0xff] %v4957
                %v4959 = vld [vmem:[%s4371 + $0x928] sm:$0xff]
                %4960 = vst [vmem:[%s4372 + $0x2488] sm:$0xff] %v4959
                %v4961 = vld [vmem:[%s4371 + $0x930] sm:$0xff]
                %4962 = vst [vmem:[%s4372 + $0x2490] sm:$0xff] %v4961
                %v4963 = vld [vmem:[%s4371 + $0x938] sm:$0xff]
                %4964 = vst [vmem:[%s4372 + $0x2498] sm:$0xff] %v4963
                %v4965 = vld [vmem:[%s4371 + $0x940] sm:$0xff]
                %4966 = vst [vmem:[%s4372 + $0x2500] sm:$0xff] %v4965
                %v4967 = vld [vmem:[%s4371 + $0x948] sm:$0xff]
                %4968 = vst [vmem:[%s4372 + $0x2508] sm:$0xff] %v4967
                %v4969 = vld [vmem:[%s4371 + $0x950] sm:$0xff]
                %4970 = vst [vmem:[%s4372 + $0x2510] sm:$0xff] %v4969
                %v4971 = vld [vmem:[%s4371 + $0x958] sm:$0xff]
                %4972 = vst [vmem:[%s4372 + $0x2518] sm:$0xff] %v4971
                %v4973 = vld [vmem:[%s4371 + $0x960] sm:$0xff]
                %4974 = vst [vmem:[%s4372 + $0x2580] sm:$0xff] %v4973
                %v4975 = vld [vmem:[%s4371 + $0x968] sm:$0xff]
                %4976 = vst [vmem:[%s4372 + $0x2588] sm:$0xff] %v4975
                %v4977 = vld [vmem:[%s4371 + $0x970] sm:$0xff]
                %4978 = vst [vmem:[%s4372 + $0x2590] sm:$0xff] %v4977
                %v4979 = vld [vmem:[%s4371 + $0x978] sm:$0xff]
                %4980 = vst [vmem:[%s4372 + $0x2598] sm:$0xff] %v4979
                %v4981 = vld [vmem:[%s4371 + $0x980] sm:$0xff]
                %4982 = vst [vmem:[%s4372 + $0x2600] sm:$0xff] %v4981
                %v4983 = vld [vmem:[%s4371 + $0x988] sm:$0xff]
                %4984 = vst [vmem:[%s4372 + $0x2608] sm:$0xff] %v4983
                %v4985 = vld [vmem:[%s4371 + $0x990] sm:$0xff]
                %4986 = vst [vmem:[%s4372 + $0x2610] sm:$0xff] %v4985
                %v4987 = vld [vmem:[%s4371 + $0x998] sm:$0xff]
                %4988 = vst [vmem:[%s4372 + $0x2618] sm:$0xff] %v4987
                %v4989 = vld [vmem:[%s4371 + $0x9a0] sm:$0xff]
                %4990 = vst [vmem:[%s4372 + $0x2680] sm:$0xff] %v4989
                %v4991 = vld [vmem:[%s4371 + $0x9a8] sm:$0xff]
                %4992 = vst [vmem:[%s4372 + $0x2688] sm:$0xff] %v4991
                %v4993 = vld [vmem:[%s4371 + $0x9b0] sm:$0xff]
                %4994 = vst [vmem:[%s4372 + $0x2690] sm:$0xff] %v4993
                %v4995 = vld [vmem:[%s4371 + $0x9b8] sm:$0xff]
                %4996 = vst [vmem:[%s4372 + $0x2698] sm:$0xff] %v4995
                %v4997 = vld [vmem:[%s4371 + $0x9c0] sm:$0xff]
                %4998 = vst [vmem:[%s4372 + $0x2700] sm:$0xff] %v4997
                %v4999 = vld [vmem:[%s4371 + $0x9c8] sm:$0xff]
                %5000 = vst [vmem:[%s4372 + $0x2708] sm:$0xff] %v4999
                %v5001 = vld [vmem:[%s4371 + $0x9d0] sm:$0xff]
                %5002 = vst [vmem:[%s4372 + $0x2710] sm:$0xff] %v5001
                %v5003 = vld [vmem:[%s4371 + $0x9d8] sm:$0xff]
                %5004 = vst [vmem:[%s4372 + $0x2718] sm:$0xff] %v5003
                %v5005 = vld [vmem:[%s4371 + $0x9e0] sm:$0xff]
                %5006 = vst [vmem:[%s4372 + $0x2780] sm:$0xff] %v5005
                %v5007 = vld [vmem:[%s4371 + $0x9e8] sm:$0xff]
                %5008 = vst [vmem:[%s4372 + $0x2788] sm:$0xff] %v5007
                %v5009 = vld [vmem:[%s4371 + $0x9f0] sm:$0xff]
                %5010 = vst [vmem:[%s4372 + $0x2790] sm:$0xff] %v5009
                %v5011 = vld [vmem:[%s4371 + $0x9f8] sm:$0xff]
                %5012 = vst [vmem:[%s4372 + $0x2798] sm:$0xff] %v5011
                %v5013 = vld [vmem:[%s4371 + $0xa00] sm:$0xff]
                %5014 = vst [vmem:[%s4372 + $0x2800] sm:$0xff] %v5013
                %v5015 = vld [vmem:[%s4371 + $0xa08] sm:$0xff]
                %5016 = vst [vmem:[%s4372 + $0x2808] sm:$0xff] %v5015
                %v5017 = vld [vmem:[%s4371 + $0xa10] sm:$0xff]
                %5018 = vst [vmem:[%s4372 + $0x2810] sm:$0xff] %v5017
                %v5019 = vld [vmem:[%s4371 + $0xa18] sm:$0xff]
                %5020 = vst [vmem:[%s4372 + $0x2818] sm:$0xff] %v5019
                %v5021 = vld [vmem:[%s4371 + $0xa20] sm:$0xff]
                %5022 = vst [vmem:[%s4372 + $0x2880] sm:$0xff] %v5021
                %v5023 = vld [vmem:[%s4371 + $0xa28] sm:$0xff]
                %5024 = vst [vmem:[%s4372 + $0x2888] sm:$0xff] %v5023
                %v5025 = vld [vmem:[%s4371 + $0xa30] sm:$0xff]
                %5026 = vst [vmem:[%s4372 + $0x2890] sm:$0xff] %v5025
                %v5027 = vld [vmem:[%s4371 + $0xa38] sm:$0xff]
                %5028 = vst [vmem:[%s4372 + $0x2898] sm:$0xff] %v5027
                %v5029 = vld [vmem:[%s4371 + $0xa40] sm:$0xff]
                %5030 = vst [vmem:[%s4372 + $0x2900] sm:$0xff] %v5029
                %v5031 = vld [vmem:[%s4371 + $0xa48] sm:$0xff]
                %5032 = vst [vmem:[%s4372 + $0x2908] sm:$0xff] %v5031
                %v5033 = vld [vmem:[%s4371 + $0xa50] sm:$0xff]
                %5034 = vst [vmem:[%s4372 + $0x2910] sm:$0xff] %v5033
                %v5035 = vld [vmem:[%s4371 + $0xa58] sm:$0xff]
                %5036 = vst [vmem:[%s4372 + $0x2918] sm:$0xff] %v5035
                %v5037 = vld [vmem:[%s4371 + $0xa60] sm:$0xff]
                %5038 = vst [vmem:[%s4372 + $0x2980] sm:$0xff] %v5037
                %v5039 = vld [vmem:[%s4371 + $0xa68] sm:$0xff]
                %5040 = vst [vmem:[%s4372 + $0x2988] sm:$0xff] %v5039
                %v5041 = vld [vmem:[%s4371 + $0xa70] sm:$0xff]
                %5042 = vst [vmem:[%s4372 + $0x2990] sm:$0xff] %v5041
                %v5043 = vld [vmem:[%s4371 + $0xa78] sm:$0xff]
                %5044 = vst [vmem:[%s4372 + $0x2998] sm:$0xff] %v5043
                %v5045 = vld [vmem:[%s4371 + $0xa80] sm:$0xff]
                %5046 = vst [vmem:[%s4372 + $0x2a00] sm:$0xff] %v5045
                %v5047 = vld [vmem:[%s4371 + $0xa88] sm:$0xff]
                %5048 = vst [vmem:[%s4372 + $0x2a08] sm:$0xff] %v5047
                %v5049 = vld [vmem:[%s4371 + $0xa90] sm:$0xff]
                %5050 = vst [vmem:[%s4372 + $0x2a10] sm:$0xff] %v5049
                %v5051 = vld [vmem:[%s4371 + $0xa98] sm:$0xff]
                %5052 = vst [vmem:[%s4372 + $0x2a18] sm:$0xff] %v5051
                %v5053 = vld [vmem:[%s4371 + $0xaa0] sm:$0xff]
                %5054 = vst [vmem:[%s4372 + $0x2a80] sm:$0xff] %v5053
                %v5055 = vld [vmem:[%s4371 + $0xaa8] sm:$0xff]
                %5056 = vst [vmem:[%s4372 + $0x2a88] sm:$0xff] %v5055
                %v5057 = vld [vmem:[%s4371 + $0xab0] sm:$0xff]
                %5058 = vst [vmem:[%s4372 + $0x2a90] sm:$0xff] %v5057
                %v5059 = vld [vmem:[%s4371 + $0xab8] sm:$0xff]
                %5060 = vst [vmem:[%s4372 + $0x2a98] sm:$0xff] %v5059
                %v5061 = vld [vmem:[%s4371 + $0xac0] sm:$0xff]
                %5062 = vst [vmem:[%s4372 + $0x2b00] sm:$0xff] %v5061
                %v5063 = vld [vmem:[%s4371 + $0xac8] sm:$0xff]
                %5064 = vst [vmem:[%s4372 + $0x2b08] sm:$0xff] %v5063
                %v5065 = vld [vmem:[%s4371 + $0xad0] sm:$0xff]
                %5066 = vst [vmem:[%s4372 + $0x2b10] sm:$0xff] %v5065
                %v5067 = vld [vmem:[%s4371 + $0xad8] sm:$0xff]
                %5068 = vst [vmem:[%s4372 + $0x2b18] sm:$0xff] %v5067
                %v5069 = vld [vmem:[%s4371 + $0xae0] sm:$0xff]
                %5070 = vst [vmem:[%s4372 + $0x2b80] sm:$0xff] %v5069
                %v5071 = vld [vmem:[%s4371 + $0xae8] sm:$0xff]
                %5072 = vst [vmem:[%s4372 + $0x2b88] sm:$0xff] %v5071
                %v5073 = vld [vmem:[%s4371 + $0xaf0] sm:$0xff]
                %5074 = vst [vmem:[%s4372 + $0x2b90] sm:$0xff] %v5073
                %v5075 = vld [vmem:[%s4371 + $0xaf8] sm:$0xff]
                %5076 = vst [vmem:[%s4372 + $0x2b98] sm:$0xff] %v5075
                %v5077 = vld [vmem:[%s4371 + $0xb00] sm:$0xff]
                %5078 = vst [vmem:[%s4372 + $0x2c00] sm:$0xff] %v5077
                %v5079 = vld [vmem:[%s4371 + $0xb08] sm:$0xff]
                %5080 = vst [vmem:[%s4372 + $0x2c08] sm:$0xff] %v5079
                %v5081 = vld [vmem:[%s4371 + $0xb10] sm:$0xff]
                %5082 = vst [vmem:[%s4372 + $0x2c10] sm:$0xff] %v5081
                %v5083 = vld [vmem:[%s4371 + $0xb18] sm:$0xff]
                %5084 = vst [vmem:[%s4372 + $0x2c18] sm:$0xff] %v5083
                %v5085 = vld [vmem:[%s4371 + $0xb20] sm:$0xff]
                %5086 = vst [vmem:[%s4372 + $0x2c80] sm:$0xff] %v5085
                %v5087 = vld [vmem:[%s4371 + $0xb28] sm:$0xff]
                %5088 = vst [vmem:[%s4372 + $0x2c88] sm:$0xff] %v5087
                %v5089 = vld [vmem:[%s4371 + $0xb30] sm:$0xff]
                %5090 = vst [vmem:[%s4372 + $0x2c90] sm:$0xff] %v5089
                %v5091 = vld [vmem:[%s4371 + $0xb38] sm:$0xff]
                %5092 = vst [vmem:[%s4372 + $0x2c98] sm:$0xff] %v5091
                %v5093 = vld [vmem:[%s4371 + $0xb40] sm:$0xff]
                %5094 = vst [vmem:[%s4372 + $0x2d00] sm:$0xff] %v5093
                %v5095 = vld [vmem:[%s4371 + $0xb48] sm:$0xff]
                %5096 = vst [vmem:[%s4372 + $0x2d08] sm:$0xff] %v5095
                %v5097 = vld [vmem:[%s4371 + $0xb50] sm:$0xff]
                %5098 = vst [vmem:[%s4372 + $0x2d10] sm:$0xff] %v5097
                %v5099 = vld [vmem:[%s4371 + $0xb58] sm:$0xff]
                %5100 = vst [vmem:[%s4372 + $0x2d18] sm:$0xff] %v5099
                %v5101 = vld [vmem:[%s4371 + $0xb60] sm:$0xff]
                %5102 = vst [vmem:[%s4372 + $0x2d80] sm:$0xff] %v5101
                %v5103 = vld [vmem:[%s4371 + $0xb68] sm:$0xff]
                %5104 = vst [vmem:[%s4372 + $0x2d88] sm:$0xff] %v5103
                %v5105 = vld [vmem:[%s4371 + $0xb70] sm:$0xff]
                %5106 = vst [vmem:[%s4372 + $0x2d90] sm:$0xff] %v5105
                %v5107 = vld [vmem:[%s4371 + $0xb78] sm:$0xff]
                %5108 = vst [vmem:[%s4372 + $0x2d98] sm:$0xff] %v5107
                %v5109 = vld [vmem:[%s4371 + $0xb80] sm:$0xff]
                %5110 = vst [vmem:[%s4372 + $0x2e00] sm:$0xff] %v5109
                %v5111 = vld [vmem:[%s4371 + $0xb88] sm:$0xff]
                %5112 = vst [vmem:[%s4372 + $0x2e08] sm:$0xff] %v5111
                %v5113 = vld [vmem:[%s4371 + $0xb90] sm:$0xff]
                %5114 = vst [vmem:[%s4372 + $0x2e10] sm:$0xff] %v5113
                %v5115 = vld [vmem:[%s4371 + $0xb98] sm:$0xff]
                %5116 = vst [vmem:[%s4372 + $0x2e18] sm:$0xff] %v5115
                %v5117 = vld [vmem:[%s4371 + $0xba0] sm:$0xff]
                %5118 = vst [vmem:[%s4372 + $0x2e80] sm:$0xff] %v5117
                %v5119 = vld [vmem:[%s4371 + $0xba8] sm:$0xff]
                %5120 = vst [vmem:[%s4372 + $0x2e88] sm:$0xff] %v5119
                %v5121 = vld [vmem:[%s4371 + $0xbb0] sm:$0xff]
                %5122 = vst [vmem:[%s4372 + $0x2e90] sm:$0xff] %v5121
                %v5123 = vld [vmem:[%s4371 + $0xbb8] sm:$0xff]
                %5124 = vst [vmem:[%s4372 + $0x2e98] sm:$0xff] %v5123
                %v5125 = vld [vmem:[%s4371 + $0xbc0] sm:$0xff]
                %5126 = vst [vmem:[%s4372 + $0x2f00] sm:$0xff] %v5125
                %v5127 = vld [vmem:[%s4371 + $0xbc8] sm:$0xff]
                %5128 = vst [vmem:[%s4372 + $0x2f08] sm:$0xff] %v5127
                %v5129 = vld [vmem:[%s4371 + $0xbd0] sm:$0xff]
                %5130 = vst [vmem:[%s4372 + $0x2f10] sm:$0xff] %v5129
                %v5131 = vld [vmem:[%s4371 + $0xbd8] sm:$0xff]
                %5132 = vst [vmem:[%s4372 + $0x2f18] sm:$0xff] %v5131
                %v5133 = vld [vmem:[%s4371 + $0xbe0] sm:$0xff]
                %5134 = vst [vmem:[%s4372 + $0x2f80] sm:$0xff] %v5133
                %v5135 = vld [vmem:[%s4371 + $0xbe8] sm:$0xff]
                %5136 = vst [vmem:[%s4372 + $0x2f88] sm:$0xff] %v5135
                %v5137 = vld [vmem:[%s4371 + $0xbf0] sm:$0xff]
                %5138 = vst [vmem:[%s4372 + $0x2f90] sm:$0xff] %v5137
                %v5139 = vld [vmem:[%s4371 + $0xbf8] sm:$0xff]
                %5140 = vst [vmem:[%s4372 + $0x2f98] sm:$0xff] %v5139
                %v5141 = vld [vmem:[%s4371 + $0xc00] sm:$0xff]
                %5142 = vst [vmem:[%s4372 + $0x3000] sm:$0xff] %v5141
                %v5143 = vld [vmem:[%s4371 + $0xc08] sm:$0xff]
                %5144 = vst [vmem:[%s4372 + $0x3008] sm:$0xff] %v5143
                %v5145 = vld [vmem:[%s4371 + $0xc10] sm:$0xff]
                %5146 = vst [vmem:[%s4372 + $0x3010] sm:$0xff] %v5145
                %v5147 = vld [vmem:[%s4371 + $0xc18] sm:$0xff]
                %5148 = vst [vmem:[%s4372 + $0x3018] sm:$0xff] %v5147
                %v5149 = vld [vmem:[%s4371 + $0xc20] sm:$0xff]
                %5150 = vst [vmem:[%s4372 + $0x3080] sm:$0xff] %v5149
                %v5151 = vld [vmem:[%s4371 + $0xc28] sm:$0xff]
                %5152 = vst [vmem:[%s4372 + $0x3088] sm:$0xff] %v5151
                %v5153 = vld [vmem:[%s4371 + $0xc30] sm:$0xff]
                %5154 = vst [vmem:[%s4372 + $0x3090] sm:$0xff] %v5153
                %v5155 = vld [vmem:[%s4371 + $0xc38] sm:$0xff]
                %5156 = vst [vmem:[%s4372 + $0x3098] sm:$0xff] %v5155
                %v5157 = vld [vmem:[%s4371 + $0xc40] sm:$0xff]
                %5158 = vst [vmem:[%s4372 + $0x3100] sm:$0xff] %v5157
                %v5159 = vld [vmem:[%s4371 + $0xc48] sm:$0xff]
                %5160 = vst [vmem:[%s4372 + $0x3108] sm:$0xff] %v5159
                %v5161 = vld [vmem:[%s4371 + $0xc50] sm:$0xff]
                %5162 = vst [vmem:[%s4372 + $0x3110] sm:$0xff] %v5161
                %v5163 = vld [vmem:[%s4371 + $0xc58] sm:$0xff]
                %5164 = vst [vmem:[%s4372 + $0x3118] sm:$0xff] %v5163
                %v5165 = vld [vmem:[%s4371 + $0xc60] sm:$0xff]
                %5166 = vst [vmem:[%s4372 + $0x3180] sm:$0xff] %v5165
                %v5167 = vld [vmem:[%s4371 + $0xc68] sm:$0xff]
                %5168 = vst [vmem:[%s4372 + $0x3188] sm:$0xff] %v5167
                %v5169 = vld [vmem:[%s4371 + $0xc70] sm:$0xff]
                %5170 = vst [vmem:[%s4372 + $0x3190] sm:$0xff] %v5169
                %v5171 = vld [vmem:[%s4371 + $0xc78] sm:$0xff]
                %5172 = vst [vmem:[%s4372 + $0x3198] sm:$0xff] %v5171
                %v5173 = vld [vmem:[%s4371 + $0xc80] sm:$0xff]
                %5174 = vst [vmem:[%s4372 + $0x3200] sm:$0xff] %v5173
                %v5175 = vld [vmem:[%s4371 + $0xc88] sm:$0xff]
                %5176 = vst [vmem:[%s4372 + $0x3208] sm:$0xff] %v5175
                %v5177 = vld [vmem:[%s4371 + $0xc90] sm:$0xff]
                %5178 = vst [vmem:[%s4372 + $0x3210] sm:$0xff] %v5177
                %v5179 = vld [vmem:[%s4371 + $0xc98] sm:$0xff]
                %5180 = vst [vmem:[%s4372 + $0x3218] sm:$0xff] %v5179
                %v5181 = vld [vmem:[%s4371 + $0xca0] sm:$0xff]
                %5182 = vst [vmem:[%s4372 + $0x3280] sm:$0xff] %v5181
                %v5183 = vld [vmem:[%s4371 + $0xca8] sm:$0xff]
                %5184 = vst [vmem:[%s4372 + $0x3288] sm:$0xff] %v5183
                %v5185 = vld [vmem:[%s4371 + $0xcb0] sm:$0xff]
                %5186 = vst [vmem:[%s4372 + $0x3290] sm:$0xff] %v5185
                %v5187 = vld [vmem:[%s4371 + $0xcb8] sm:$0xff]
                %5188 = vst [vmem:[%s4372 + $0x3298] sm:$0xff] %v5187
                %v5189 = vld [vmem:[%s4371 + $0xcc0] sm:$0xff]
                %5190 = vst [vmem:[%s4372 + $0x3300] sm:$0xff] %v5189
                %v5191 = vld [vmem:[%s4371 + $0xcc8] sm:$0xff]
                %5192 = vst [vmem:[%s4372 + $0x3308] sm:$0xff] %v5191
                %v5193 = vld [vmem:[%s4371 + $0xcd0] sm:$0xff]
                %5194 = vst [vmem:[%s4372 + $0x3310] sm:$0xff] %v5193
                %v5195 = vld [vmem:[%s4371 + $0xcd8] sm:$0xff]
                %5196 = vst [vmem:[%s4372 + $0x3318] sm:$0xff] %v5195
                %v5197 = vld [vmem:[%s4371 + $0xce0] sm:$0xff]
                %5198 = vst [vmem:[%s4372 + $0x3380] sm:$0xff] %v5197
                %v5199 = vld [vmem:[%s4371 + $0xce8] sm:$0xff]
                %5200 = vst [vmem:[%s4372 + $0x3388] sm:$0xff] %v5199
                %v5201 = vld [vmem:[%s4371 + $0xcf0] sm:$0xff]
                %5202 = vst [vmem:[%s4372 + $0x3390] sm:$0xff] %v5201
                %v5203 = vld [vmem:[%s4371 + $0xcf8] sm:$0xff]
                %5204 = vst [vmem:[%s4372 + $0x3398] sm:$0xff] %v5203
                %v5205 = vld [vmem:[%s4371 + $0xd00] sm:$0xff]
                %5206 = vst [vmem:[%s4372 + $0x3400] sm:$0xff] %v5205
                %v5207 = vld [vmem:[%s4371 + $0xd08] sm:$0xff]
                %5208 = vst [vmem:[%s4372 + $0x3408] sm:$0xff] %v5207
                %v5209 = vld [vmem:[%s4371 + $0xd10] sm:$0xff]
                %5210 = vst [vmem:[%s4372 + $0x3410] sm:$0xff] %v5209
                %v5211 = vld [vmem:[%s4371 + $0xd18] sm:$0xff]
                %5212 = vst [vmem:[%s4372 + $0x3418] sm:$0xff] %v5211
                %v5213 = vld [vmem:[%s4371 + $0xd20] sm:$0xff]
                %5214 = vst [vmem:[%s4372 + $0x3480] sm:$0xff] %v5213
                %v5215 = vld [vmem:[%s4371 + $0xd28] sm:$0xff]
                %5216 = vst [vmem:[%s4372 + $0x3488] sm:$0xff] %v5215
                %v5217 = vld [vmem:[%s4371 + $0xd30] sm:$0xff]
                %5218 = vst [vmem:[%s4372 + $0x3490] sm:$0xff] %v5217
                %v5219 = vld [vmem:[%s4371 + $0xd38] sm:$0xff]
                %5220 = vst [vmem:[%s4372 + $0x3498] sm:$0xff] %v5219
                %v5221 = vld [vmem:[%s4371 + $0xd40] sm:$0xff]
                %5222 = vst [vmem:[%s4372 + $0x3500] sm:$0xff] %v5221
                %v5223 = vld [vmem:[%s4371 + $0xd48] sm:$0xff]
                %5224 = vst [vmem:[%s4372 + $0x3508] sm:$0xff] %v5223
                %v5225 = vld [vmem:[%s4371 + $0xd50] sm:$0xff]
                %5226 = vst [vmem:[%s4372 + $0x3510] sm:$0xff] %v5225
                %v5227 = vld [vmem:[%s4371 + $0xd58] sm:$0xff]
                %5228 = vst [vmem:[%s4372 + $0x3518] sm:$0xff] %v5227
                %v5229 = vld [vmem:[%s4371 + $0xd60] sm:$0xff]
                %5230 = vst [vmem:[%s4372 + $0x3580] sm:$0xff] %v5229
                %v5231 = vld [vmem:[%s4371 + $0xd68] sm:$0xff]
                %5232 = vst [vmem:[%s4372 + $0x3588] sm:$0xff] %v5231
                %v5233 = vld [vmem:[%s4371 + $0xd70] sm:$0xff]
                %5234 = vst [vmem:[%s4372 + $0x3590] sm:$0xff] %v5233
                %v5235 = vld [vmem:[%s4371 + $0xd78] sm:$0xff]
                %5236 = vst [vmem:[%s4372 + $0x3598] sm:$0xff] %v5235
                %v5237 = vld [vmem:[%s4371 + $0xd80] sm:$0xff]
                %5238 = vst [vmem:[%s4372 + $0x3600] sm:$0xff] %v5237
                %v5239 = vld [vmem:[%s4371 + $0xd88] sm:$0xff]
                %5240 = vst [vmem:[%s4372 + $0x3608] sm:$0xff] %v5239
                %v5241 = vld [vmem:[%s4371 + $0xd90] sm:$0xff]
                %5242 = vst [vmem:[%s4372 + $0x3610] sm:$0xff] %v5241
                %v5243 = vld [vmem:[%s4371 + $0xd98] sm:$0xff]
                %5244 = vst [vmem:[%s4372 + $0x3618] sm:$0xff] %v5243
                %v5245 = vld [vmem:[%s4371 + $0xda0] sm:$0xff]
                %5246 = vst [vmem:[%s4372 + $0x3680] sm:$0xff] %v5245
                %v5247 = vld [vmem:[%s4371 + $0xda8] sm:$0xff]
                %5248 = vst [vmem:[%s4372 + $0x3688] sm:$0xff] %v5247
                %v5249 = vld [vmem:[%s4371 + $0xdb0] sm:$0xff]
                %5250 = vst [vmem:[%s4372 + $0x3690] sm:$0xff] %v5249
                %v5251 = vld [vmem:[%s4371 + $0xdb8] sm:$0xff]
                %5252 = vst [vmem:[%s4372 + $0x3698] sm:$0xff] %v5251
                %v5253 = vld [vmem:[%s4371 + $0xdc0] sm:$0xff]
                %5254 = vst [vmem:[%s4372 + $0x3700] sm:$0xff] %v5253
                %v5255 = vld [vmem:[%s4371 + $0xdc8] sm:$0xff]
                %5256 = vst [vmem:[%s4372 + $0x3708] sm:$0xff] %v5255
                %v5257 = vld [vmem:[%s4371 + $0xdd0] sm:$0xff]
                %5258 = vst [vmem:[%s4372 + $0x3710] sm:$0xff] %v5257
                %v5259 = vld [vmem:[%s4371 + $0xdd8] sm:$0xff]
                %5260 = vst [vmem:[%s4372 + $0x3718] sm:$0xff] %v5259
                %v5261 = vld [vmem:[%s4371 + $0xde0] sm:$0xff]
                %5262 = vst [vmem:[%s4372 + $0x3780] sm:$0xff] %v5261
                %v5263 = vld [vmem:[%s4371 + $0xde8] sm:$0xff]
                %5264 = vst [vmem:[%s4372 + $0x3788] sm:$0xff] %v5263
                %v5265 = vld [vmem:[%s4371 + $0xdf0] sm:$0xff]
                %5266 = vst [vmem:[%s4372 + $0x3790] sm:$0xff] %v5265
                %v5267 = vld [vmem:[%s4371 + $0xdf8] sm:$0xff]
                %5268 = vst [vmem:[%s4372 + $0x3798] sm:$0xff] %v5267
                %v5269 = vld [vmem:[%s4371 + $0xe00] sm:$0xff]
                %5270 = vst [vmem:[%s4372 + $0x3800] sm:$0xff] %v5269
                %v5271 = vld [vmem:[%s4371 + $0xe08] sm:$0xff]
                %5272 = vst [vmem:[%s4372 + $0x3808] sm:$0xff] %v5271
                %v5273 = vld [vmem:[%s4371 + $0xe10] sm:$0xff]
                %5274 = vst [vmem:[%s4372 + $0x3810] sm:$0xff] %v5273
                %v5275 = vld [vmem:[%s4371 + $0xe18] sm:$0xff]
                %5276 = vst [vmem:[%s4372 + $0x3818] sm:$0xff] %v5275
                %v5277 = vld [vmem:[%s4371 + $0xe20] sm:$0xff]
                %5278 = vst [vmem:[%s4372 + $0x3880] sm:$0xff] %v5277
                %v5279 = vld [vmem:[%s4371 + $0xe28] sm:$0xff]
                %5280 = vst [vmem:[%s4372 + $0x3888] sm:$0xff] %v5279
                %v5281 = vld [vmem:[%s4371 + $0xe30] sm:$0xff]
                %5282 = vst [vmem:[%s4372 + $0x3890] sm:$0xff] %v5281
                %v5283 = vld [vmem:[%s4371 + $0xe38] sm:$0xff]
                %5284 = vst [vmem:[%s4372 + $0x3898] sm:$0xff] %v5283
                %v5285 = vld [vmem:[%s4371 + $0xe40] sm:$0xff]
                %5286 = vst [vmem:[%s4372 + $0x3900] sm:$0xff] %v5285
                %v5287 = vld [vmem:[%s4371 + $0xe48] sm:$0xff]
                %5288 = vst [vmem:[%s4372 + $0x3908] sm:$0xff] %v5287
                %v5289 = vld [vmem:[%s4371 + $0xe50] sm:$0xff]
                %5290 = vst [vmem:[%s4372 + $0x3910] sm:$0xff] %v5289
                %v5291 = vld [vmem:[%s4371 + $0xe58] sm:$0xff]
                %5292 = vst [vmem:[%s4372 + $0x3918] sm:$0xff] %v5291
                %v5293 = vld [vmem:[%s4371 + $0xe60] sm:$0xff]
                %5294 = vst [vmem:[%s4372 + $0x3980] sm:$0xff] %v5293
                %v5295 = vld [vmem:[%s4371 + $0xe68] sm:$0xff]
                %5296 = vst [vmem:[%s4372 + $0x3988] sm:$0xff] %v5295
                %v5297 = vld [vmem:[%s4371 + $0xe70] sm:$0xff]
                %5298 = vst [vmem:[%s4372 + $0x3990] sm:$0xff] %v5297
                %v5299 = vld [vmem:[%s4371 + $0xe78] sm:$0xff]
                %5300 = vst [vmem:[%s4372 + $0x3998] sm:$0xff] %v5299
                %v5301 = vld [vmem:[%s4371 + $0xe80] sm:$0xff]
                %5302 = vst [vmem:[%s4372 + $0x3a00] sm:$0xff] %v5301
                %v5303 = vld [vmem:[%s4371 + $0xe88] sm:$0xff]
                %5304 = vst [vmem:[%s4372 + $0x3a08] sm:$0xff] %v5303
                %v5305 = vld [vmem:[%s4371 + $0xe90] sm:$0xff]
                %5306 = vst [vmem:[%s4372 + $0x3a10] sm:$0xff] %v5305
                %v5307 = vld [vmem:[%s4371 + $0xe98] sm:$0xff]
                %5308 = vst [vmem:[%s4372 + $0x3a18] sm:$0xff] %v5307
                %v5309 = vld [vmem:[%s4371 + $0xea0] sm:$0xff]
                %5310 = vst [vmem:[%s4372 + $0x3a80] sm:$0xff] %v5309
                %v5311 = vld [vmem:[%s4371 + $0xea8] sm:$0xff]
                %5312 = vst [vmem:[%s4372 + $0x3a88] sm:$0xff] %v5311
                %v5313 = vld [vmem:[%s4371 + $0xeb0] sm:$0xff]
                %5314 = vst [vmem:[%s4372 + $0x3a90] sm:$0xff] %v5313
                %v5315 = vld [vmem:[%s4371 + $0xeb8] sm:$0xff]
                %5316 = vst [vmem:[%s4372 + $0x3a98] sm:$0xff] %v5315
                %v5317 = vld [vmem:[%s4371 + $0xec0] sm:$0xff]
                %5318 = vst [vmem:[%s4372 + $0x3b00] sm:$0xff] %v5317
                %v5319 = vld [vmem:[%s4371 + $0xec8] sm:$0xff]
                %5320 = vst [vmem:[%s4372 + $0x3b08] sm:$0xff] %v5319
                %v5321 = vld [vmem:[%s4371 + $0xed0] sm:$0xff]
                %5322 = vst [vmem:[%s4372 + $0x3b10] sm:$0xff] %v5321
                %v5323 = vld [vmem:[%s4371 + $0xed8] sm:$0xff]
                %5324 = vst [vmem:[%s4372 + $0x3b18] sm:$0xff] %v5323
                %v5325 = vld [vmem:[%s4371 + $0xee0] sm:$0xff]
                %5326 = vst [vmem:[%s4372 + $0x3b80] sm:$0xff] %v5325
                %v5327 = vld [vmem:[%s4371 + $0xee8] sm:$0xff]
                %5328 = vst [vmem:[%s4372 + $0x3b88] sm:$0xff] %v5327
                %v5329 = vld [vmem:[%s4371 + $0xef0] sm:$0xff]
                %5330 = vst [vmem:[%s4372 + $0x3b90] sm:$0xff] %v5329
                %v5331 = vld [vmem:[%s4371 + $0xef8] sm:$0xff]
                %5332 = vst [vmem:[%s4372 + $0x3b98] sm:$0xff] %v5331
                %v5333 = vld [vmem:[%s4371 + $0xf00] sm:$0xff]
                %5334 = vst [vmem:[%s4372 + $0x3c00] sm:$0xff] %v5333
                %v5335 = vld [vmem:[%s4371 + $0xf08] sm:$0xff]
                %5336 = vst [vmem:[%s4372 + $0x3c08] sm:$0xff] %v5335
                %v5337 = vld [vmem:[%s4371 + $0xf10] sm:$0xff]
                %5338 = vst [vmem:[%s4372 + $0x3c10] sm:$0xff] %v5337
                %v5339 = vld [vmem:[%s4371 + $0xf18] sm:$0xff]
                %5340 = vst [vmem:[%s4372 + $0x3c18] sm:$0xff] %v5339
                %v5341 = vld [vmem:[%s4371 + $0xf20] sm:$0xff]
                %5342 = vst [vmem:[%s4372 + $0x3c80] sm:$0xff] %v5341
                %v5343 = vld [vmem:[%s4371 + $0xf28] sm:$0xff]
                %5344 = vst [vmem:[%s4372 + $0x3c88] sm:$0xff] %v5343
                %v5345 = vld [vmem:[%s4371 + $0xf30] sm:$0xff]
                %5346 = vst [vmem:[%s4372 + $0x3c90] sm:$0xff] %v5345
                %v5347 = vld [vmem:[%s4371 + $0xf38] sm:$0xff]
                %5348 = vst [vmem:[%s4372 + $0x3c98] sm:$0xff] %v5347
                %v5349 = vld [vmem:[%s4371 + $0xf40] sm:$0xff]
                %5350 = vst [vmem:[%s4372 + $0x3d00] sm:$0xff] %v5349
                %v5351 = vld [vmem:[%s4371 + $0xf48] sm:$0xff]
                %5352 = vst [vmem:[%s4372 + $0x3d08] sm:$0xff] %v5351
                %v5353 = vld [vmem:[%s4371 + $0xf50] sm:$0xff]
                %5354 = vst [vmem:[%s4372 + $0x3d10] sm:$0xff] %v5353
                %v5355 = vld [vmem:[%s4371 + $0xf58] sm:$0xff]
                %5356 = vst [vmem:[%s4372 + $0x3d18] sm:$0xff] %v5355
                %v5357 = vld [vmem:[%s4371 + $0xf60] sm:$0xff]
                %5358 = vst [vmem:[%s4372 + $0x3d80] sm:$0xff] %v5357
                %v5359 = vld [vmem:[%s4371 + $0xf68] sm:$0xff]
                %5360 = vst [vmem:[%s4372 + $0x3d88] sm:$0xff] %v5359
                %v5361 = vld [vmem:[%s4371 + $0xf70] sm:$0xff]
                %5362 = vst [vmem:[%s4372 + $0x3d90] sm:$0xff] %v5361
                %v5363 = vld [vmem:[%s4371 + $0xf78] sm:$0xff]
                %5364 = vst [vmem:[%s4372 + $0x3d98] sm:$0xff] %v5363
                %v5365 = vld [vmem:[%s4371 + $0xf80] sm:$0xff]
                %5366 = vst [vmem:[%s4372 + $0x3e00] sm:$0xff] %v5365
                %v5367 = vld [vmem:[%s4371 + $0xf88] sm:$0xff]
                %5368 = vst [vmem:[%s4372 + $0x3e08] sm:$0xff] %v5367
                %v5369 = vld [vmem:[%s4371 + $0xf90] sm:$0xff]
                %5370 = vst [vmem:[%s4372 + $0x3e10] sm:$0xff] %v5369
                %v5371 = vld [vmem:[%s4371 + $0xf98] sm:$0xff]
                %5372 = vst [vmem:[%s4372 + $0x3e18] sm:$0xff] %v5371
                %v5373 = vld [vmem:[%s4371 + $0xfa0] sm:$0xff]
                %5374 = vst [vmem:[%s4372 + $0x3e80] sm:$0xff] %v5373
                %v5375 = vld [vmem:[%s4371 + $0xfa8] sm:$0xff]
                %5376 = vst [vmem:[%s4372 + $0x3e88] sm:$0xff] %v5375
                %v5377 = vld [vmem:[%s4371 + $0xfb0] sm:$0xff]
                %5378 = vst [vmem:[%s4372 + $0x3e90] sm:$0xff] %v5377
                %v5379 = vld [vmem:[%s4371 + $0xfb8] sm:$0xff]
                %5380 = vst [vmem:[%s4372 + $0x3e98] sm:$0xff] %v5379
                %v5381 = vld [vmem:[%s4371 + $0xfc0] sm:$0xff]
                %5382 = vst [vmem:[%s4372 + $0x3f00] sm:$0xff] %v5381
                %v5383 = vld [vmem:[%s4371 + $0xfc8] sm:$0xff]
                %5384 = vst [vmem:[%s4372 + $0x3f08] sm:$0xff] %v5383
                %v5385 = vld [vmem:[%s4371 + $0xfd0] sm:$0xff]
                %5386 = vst [vmem:[%s4372 + $0x3f10] sm:$0xff] %v5385
                %v5387 = vld [vmem:[%s4371 + $0xfd8] sm:$0xff]
                %5388 = vst [vmem:[%s4372 + $0x3f18] sm:$0xff] %v5387
                %v5389 = vld [vmem:[%s4371 + $0xfe0] sm:$0xff]
                %5390 = vst [vmem:[%s4372 + $0x3f80] sm:$0xff] %v5389
                %v5391 = vld [vmem:[%s4371 + $0xfe8] sm:$0xff]
                %5392 = vst [vmem:[%s4372 + $0x3f88] sm:$0xff] %v5391
                %v5393 = vld [vmem:[%s4371 + $0xff0] sm:$0xff]
                %5394 = vst [vmem:[%s4372 + $0x3f90] sm:$0xff] %v5393
                %v5395 = vld [vmem:[%s4371 + $0xff8] sm:$0xff]
                %5396 = vst [vmem:[%s4372 + $0x3f98] sm:$0xff] %v5395
              $region65: #{fsa_forward.1} parent=59 // loop_footer
                %s4370 = sadd.s32 1, %s4366
              $region66: #{fsa_forward.1} parent=59 // loop_footer_branch
                %4365 = sbr.rel target = $region62
              $region67: #{fsa_forward.1} parent=59 // loop_exit
                _
            $region60: #{fsa_forward.1} parent=55 // pred_fallthru
              _
            // Predicated region
            $region68: #{fsa_forward.1} parent=55 // pred_check
              _
            $region69: #{fsa_forward.1} parent=55 // pred_check_branch
              %5398 = sbr.rel target = $region71
            $region70: #{fsa_forward.1} parent=55 // pred_region
              _
            $region71: #{fsa_forward.1} parent=55 // pred_fallthru
              _
          $region56: #{fsa_forward.1} parent=51 // pred_fallthru
            _
          %5399 = vnop
        $region52: #{fsa_forward.1} parent=31 // pred_fallthru
          _
      $region32: #{fsa_forward.1} parent=5 // pred_fallthru
        _
      %p5400 = scmp.le.s32.totalorder 2, %s11
      // Predicated region
      $region72: #{fsa_forward.1} parent=5 // pred_check
        %p5401 = pneg %p5400
      $region73: #{fsa_forward.1} parent=5 // pred_check_branch
        %5403 = sbr.rel (%p5401) target = $region75
      $region74: #{fsa_forward.1} parent=5 // pred_region
        %s5404 = ssub.s32 %s11, 2
        // Predicated region
        $region76: #{fsa_forward.1} parent=74 // pred_check
          %p5405 = pneg %p108
        $region77: #{fsa_forward.1} parent=74 // pred_check_branch
          %5407 = sbr.rel (%p5405) target = $region79
        $region78: #{fsa_forward.1} parent=74 // pred_region
          %s5408 = sand.u32 %s93, 1
          %s5409 = sand.u32 %s93, 1
          %s5410 = smul.addr %s5409, 4096
          %s5411 = scalar_lea.vmem [#allocation9], %s5410
        $region79: #{fsa_forward.1} parent=74 // pred_fallthru
          _
      $region75: #{fsa_forward.1} parent=5 // pred_fallthru
        _
    $region6: #{fsa_forward.1} parent=1 // loop_footer
      %s15 = sadd.s32 1, %s11
    $region7: #{fsa_forward.1} parent=1 // loop_footer_branch
      %10 = sbr.rel target = $region3
    $region8: #{fsa_forward.1} parent=1 // loop_exit
      _
    %5412 = vsyncpa [#allocation5], 1
    %s5413 = scalar_lea.sflag [#allocation5], 1
    %5414 = vsyncpa %s5413, 1
    %5415 = vsyncpa [#allocation7], 1

</llo_original>
